<compile_context>
chip_gen: v7x
topology: tpu7x:2x2x1
jax: 0.10.0
libtpu: 0.0.40
codegen_flags: <defaults>
</compile_context>

<pallas_src>
import functools

import jax
import jax.numpy as jnp
from jax import lax
from jax.experimental import pallas as pl
from jax.experimental.pallas import tpu as pltpu


def _align8(x):
    return (x + 7) // 8 * 8


class _Alloc:
    """Row allocator for the packed weight slabs (8-aligned slots)."""

    def __init__(self):
        self.layout = {}
        self.cur = 0

    def put(self, name, rows, align=True):
        if align:
            self.cur = _align8(self.cur)
        self.layout[name] = (self.cur, rows)
        self.cur += rows


def _build_layouts(cfg):
    hidden, F, k = cfg["hidden"], cfg["F"], cfg["k"]
    nl = cfg["num_layers"] + 1                    # NGNN layers in the stack
    c0 = hidden + F                               # use_feature=True input width
    SW = _align8(max(hidden, 32))                 # packed slab column width
    assert k % 2 == 0, "MaxPool partner trick assumes even k"
    lout = k // 2 - 5 + 1                         # conv2 output length
    assert lout >= 1

    m = _Alloc()
    cins = [c0] + [SW] * (nl - 1)
    for li in range(nl):
        m.put(f"wc{li}", cins[li]); m.put(f"wc{li}_b", 1, align=False)
        m.put(f"wf{li}", SW);       m.put(f"wf{li}_b", 1, align=False)
        m.put(f"wf2{li}", SW);      m.put(f"wf2{li}_b", 1, align=False)
    for li in range(nl):
        m.put(f"c1w{li}", SW)                     # conv1 block per GCN layer
    m.put("c1b", 1, align=False)
    for j in range(5):
        m.put(f"c2w{j}", SW)                      # conv2 taps
    m.put("c2b", 1, align=False)

    t = _Alloc()
    for l in range(lout):
        t.put(f"l1w{l}", SW)                      # lin1 row blocks
    t.put("l1b", 1, align=False)
    t.put("l2w", 128)
    t.put("l2b", 1, align=False)

    return dict(main=m.layout, main_rows=_align8(m.cur),
                top=t.layout, top_rows=_align8(t.cur),
                sw=SW, lout=lout, nl=nl, c0=c0)


def _pick_graphs_per_step(B, max_g=8):
    """Graphs per grid step: maximize work/step while keeping the grid even
    (two v7x TensorCores) when possible."""
    best = 1
    for g in range(1, min(B, max_g) + 1):
        if B % g == 0 and (B // g) % 2 == 0:
            best = g
    if best == 1 and B % 2 == 1 and B <= max_g:
        return B
    return best


# ----------------------------------------------------------------------------
# Fully fused DGCNN forward kernel: one grid program handles G graphs.
# ----------------------------------------------------------------------------
def _dgcnn_fused_kernel(adj_ref, h0_ref, wm_ref, wt_ref, o_ref, *,
                        G, N, k, nl, sw, lout, main, top):
    f32 = jnp.float32
    half = k // 2

    # ---- constants & weight views hoisted out of the per-graph loop ----
    row = lax.broadcasted_iota(jnp.int32, (N, N), 0)
    col = lax.broadcasted_iota(jnp.int32, (N, N), 1)
    eye = (row == col).astype(f32)
    i_lt_j = row < col
    r_iota = lax.broadcasted_iota(jnp.int32, (k, 1), 0)
    # Row r of the selection matrix picks sorted rank 2r (r<half) or
    # 2(r-half)+1 (r>=half), so MaxPool1d(2,2) == max(first half, second half).
    tgt_rank = jnp.where(r_iota < half, 2 * r_iota,
                         2 * (r_iota - half) + 1).astype(f32)

    def wm(name):
        off, rows = main[name]
        return wm_ref[off:off + rows, :]

    def wt(name):
        off, rows = top[name]
        return wt_ref[off:off + rows, :]

    gcn = [(wm(f"wc{li}"), wm(f"wc{li}_b"), wm(f"wf{li}"), wm(f"wf{li}_b"),
            wm(f"wf2{li}"), wm(f"wf2{li}_b")) for li in range(nl)]
    c1_blk = [wm(f"c1w{li}") for li in range(nl)]
    c1_b = wm("c1b")
    c2_tap = [wm(f"c2w{j}") for j in range(5)]
    c2_b = wm("c2b")
    l1_blk = [wt(f"l1w{l}") for l in range(lout)]
    l1_b, l2_w, l2_b = wt("l1b"), wt("l2w"), wt("l2b")

    def mm(a, b):
        return jnp.dot(a, b, preferred_element_type=f32)

    for g in range(G):                             # static unroll over graphs
        # --- GCN normalization D^-1/2 (A + I) D^-1/2 (adj: symmetric, no self-loops) ---
        a = adj_ref[g] + eye                       # [N, N]
        dr = jnp.sum(a, axis=-1, keepdims=True)    # [N, 1]
        dc = jnp.sum(a, axis=-2, keepdims=True)    # [1, N]
        a_norm = a * lax.rsqrt(dr) * lax.rsqrt(dc)

        # --- NGNN_GCNConv stack: GCNConv -> relu -> fc -> relu -> fc2, tanh outside ---
        h = h0_ref[g]                              # [N, c0]
        hs = []
        for li in range(nl):
            wc, bc, wf, bf, wf2, bf2 = gcn[li]
            t = mm(a_norm, mm(h, wc)) + bc         # A_norm @ (H @ W) + b
            t = jnp.maximum(t, 0.0)
            t = jnp.maximum(mm(t, wf) + bf, 0.0)
            h = jnp.tanh(mm(t, wf2) + bf2)         # [N, sw] (last layer: col 0 real)
            hs.append(h)

        # --- global_sort_pool: in-kernel rank-based top-k (desc score, index tie-break) ---
        score = hs[-1][:, 0:1]                                        # [N, 1]
        score_row = jnp.sum(eye * score, axis=-2, keepdims=True)      # exact [1, N] copy
        before = (score > score_row) | ((score == score_row) & i_lt_j)
        rank = jnp.sum(before.astype(f32), axis=-2, keepdims=True)    # [1, N]
        sel = (rank == tgt_rank).astype(f32)                          # [k, N]

        # --- conv1 folded through the layer concat: sel @ (sum_l h_l @ W1_l) + b1 ---
        proj = mm(hs[0], c1_blk[0])
        for li in range(1, nl):
            proj = proj + mm(hs[li], c1_blk[li])
        c1 = jnp.maximum(mm(sel, proj) + c1_b, 0.0)                   # [k, sw]

        # --- MaxPool1d(2,2): pool partners live in the two halves by construction ---
        c1p = jnp.maximum(c1[:half, :], c1[half:, :])                 # [half, sw]

        # --- conv2 (kernel size 5) as 5 accumulated tap matmuls ---
        c2 = mm(c1p[0:lout, :], c2_tap[0])
        for j in range(1, 5):
            c2 = c2 + mm(c1p[j:j + lout, :], c2_tap[j])
        c2 = jnp.maximum(c2 + c2_b, 0.0)                              # [lout, sw]

        # --- lin1 as accumulated row-block matmuls; dropout(eval) = identity ---
        z1 = mm(c2[0:1, :], l1_blk[0])
        for l in range(1, lout):
            z1 = z1 + mm(c2[l:l + 1, :], l1_blk[l])
        z1 = jnp.maximum(z1 + l1_b, 0.0)                              # [1, 128]

        # --- lin2 ---
        z2 = mm(z1, l2_w) + l2_b                                      # [1, 128] (col 0 real)
        o_ref[g] = z2[:, 0:1]


# ----------------------------------------------------------------------------
# Forward wrapper: embedding gather in XLA, everything else in one kernel.
# ----------------------------------------------------------------------------
def dgcnn_forward(params, adj, z, x, cfg):
    B, N = z.shape
    L = _build_layouts(cfg)

    # z-label embedding + raw node features (use_feature=True); gather stays in XLA.
    h0 = jnp.concatenate([params["z_emb"][z], x.astype(jnp.float32)], axis=-1)
    c0 = h0.shape[-1]
    assert c0 == L["c0"]

    G = _pick_graphs_per_step(B)
    kern = functools.partial(
        _dgcnn_fused_kernel, G=G, N=N, k=cfg["k"], nl=L["nl"],
        sw=L["sw"], lout=L["lout"], main=L["main"], top=L["top"])

    out = pl.pallas_call(
        kern,
        grid=(B // G,),
        out_shape=jax.ShapeDtypeStruct((B, 1, 1), jnp.float32),
        in_specs=[
            pl.BlockSpec((G, N, N), lambda b: (b, 0, 0)),
            pl.BlockSpec((G, N, c0), lambda b: (b, 0, 0)),
            pl.BlockSpec(params["w_main"].shape, lambda b: (0, 0)),
            pl.BlockSpec(params["w_top"].shape, lambda b: (0, 0)),
        ],
        out_specs=pl.BlockSpec((G, 1, 1), lambda b: (b, 0, 0)),
        compiler_params=pltpu.CompilerParams(dimension_semantics=("parallel",)),
    )(adj, h0, params["w_main"], params["w_top"])
    return out.reshape(B, 1)


# ----------------------------------------------------------------------------
# Deterministic parameter init: weights packed into the two slabs.
# ----------------------------------------------------------------------------
def init_params(key, cfg):
    L = _build_layouts(cfg)
    ml, tl = L["main"], L["top"]
    SW, lout, nl = L["sw"], L["lout"], L["nl"]
    hidden, F = cfg["hidden"], cfg["F"]
    c0 = hidden + F

    keys = iter(jax.random.split(key, 128))

    def rnd(shape, scale=0.1):
        return scale * jax.random.normal(next(keys), shape, dtype=jnp.float32)

    wm = jnp.zeros((L["main_rows"], SW), jnp.float32)

    def put_m(buf, name, arr):
        off, _ = ml[name]
        r, c = arr.shape
        return buf.at[off:off + r, :c].set(arr)

    cins = [c0] + [hidden] * (nl - 1)
    couts = [hidden] * (nl - 1) + [1]
    for li in range(nl):
        wm = put_m(wm, f"wc{li}", rnd((cins[li], hidden)))
        wm = put_m(wm, f"wc{li}_b", rnd((1, hidden), 0.01))
        wm = put_m(wm, f"wf{li}", rnd((hidden, hidden)))
        wm = put_m(wm, f"wf{li}_b", rnd((1, hidden), 0.01))
        wm = put_m(wm, f"wf2{li}", rnd((hidden, couts[li])))
        wm = put_m(wm, f"wf2{li}_b", rnd((1, couts[li]), 0.01))
    for li in range(nl):
        wm = put_m(wm, f"c1w{li}", rnd((couts[li], 16)))   # conv1 block per layer width
    wm = put_m(wm, "c1b", rnd((1, 16), 0.01))
    for j in range(5):
        wm = put_m(wm, f"c2w{j}", rnd((16, 32)))
    wm = put_m(wm, "c2b", rnd((1, 32), 0.01))

    wt = jnp.zeros((L["top_rows"], 128), jnp.float32)

    def put_t(buf, name, arr):
        off, _ = tl[name]
        r, c = arr.shape
        return buf.at[off:off + r, :c].set(arr)

    for l in range(lout):
        wt = put_t(wt, f"l1w{l}", rnd((32, 128)))
    wt = put_t(wt, "l1b", rnd((1, 128), 0.01))
    wt = put_t(wt, "l2w", rnd((128, 1)))
    wt = put_t(wt, "l2b", rnd((1, 1), 0.01))

    return {
        "z_emb": 0.1 * jax.random.normal(next(keys), (cfg["max_z"], hidden),
                                         dtype=jnp.float32),
        "w_main": wm,
        "w_top": wt,
    }


# ----------------------------------------------------------------------------
if __name__ == "__main__":
    cfg = dict(B=4, N=32, F=16, hidden=32, num_layers=3, max_z=10, k=16)
    B, N, F = cfg["B"], cfg["N"], cfg["F"]

    key = jax.random.PRNGKey(0)
    kz, kx, ka, kp = jax.random.split(key, 4)

    z = jax.random.randint(kz, (B, N), 0, cfg["max_z"])               # node labels
    x = jax.random.normal(kx, (B, N, F), dtype=jnp.float32)           # node features
    a = jax.random.uniform(ka, (B, N, N))
    adj = (((a + a.transpose(0, 2, 1)) * 0.5) > 0.7).astype(jnp.float32)
    adj = adj * (1.0 - jnp.eye(N, dtype=jnp.float32)[None])           # no self-loops

    params = init_params(kp, cfg)

    fwd = jax.jit(functools.partial(dgcnn_forward, cfg=cfg))
    out = jax.block_until_ready(fwd(params, adj, z, x))
    assert out.shape == (B, 1) and out.dtype == jnp.float32
    assert bool(jnp.all(jnp.isfinite(out)))
    print("KERNEL_OK")
</pallas_src>

<mosaic_0001>
module attributes {stable_mosaic.version = 11 : i64} {
  func.func @_dgcnn_fused_kernel(%arg0: i32, %arg1: memref<2x32x32xf32, #tpu.memory_space<vmem>>, %arg2: memref<2x32x48xf32, #tpu.memory_space<vmem>>, %arg3: memref<800x32xf32, #tpu.memory_space<vmem>>, %arg4: memref<272x128xf32, #tpu.memory_space<vmem>>, %arg5: memref<2x1x1xf32, #tpu.memory_space<vmem>>) attributes {dimension_semantics = [#tpu.dimension_semantics<parallel>], iteration_bounds = array<i64: 2>, scalar_prefetch = 0 : i64, scratch_operands = 0 : i64, tpu.core_type = #tpu.core_type<tc>, window_params = [{transform_indices = @transform_0, window_bounds = array<i64: 2, 32, 32>}, {transform_indices = @transform_1, window_bounds = array<i64: 2, 32, 48>}, {pipeline_mode = #tpu.pipeline_mode<synchronous>, transform_indices = @transform_2, window_bounds = array<i64: 800, 32>}, {pipeline_mode = #tpu.pipeline_mode<synchronous>, transform_indices = @transform_3, window_bounds = array<i64: 272, 128>}, {transform_indices = @transform_4, window_bounds = array<i64: 2, 1, 1>}]} {
    %0 = tpu.iota {dimensions = array<i32: 0>} : vector<32x32xi32>
    %1 = tpu.iota {dimensions = array<i32: 1>} : vector<32x32xi32>
    %2 = arith.cmpi eq, %0, %1 : vector<32x32xi32>
    %3 = arith.extui %2 : vector<32x32xi1> to vector<32x32xi32>
    %4 = arith.sitofp %3 : vector<32x32xi32> to vector<32x32xf32>
    %5 = arith.cmpi slt, %0, %1 : vector<32x32xi32>
    %6 = tpu.iota {dimensions = array<i32: 0>} : vector<16x1xi32>
    %c8_i32 = arith.constant 8 : i32
    %7 = vector.broadcast %c8_i32 : i32 to vector<16x1xi32>
    %8 = arith.cmpi slt, %6, %7 : vector<16x1xi32>
    %c2_i32 = arith.constant 2 : i32
    %9 = vector.broadcast %c2_i32 : i32 to vector<16x1xi32>
    %10 = arith.muli %9, %6 : vector<16x1xi32>
    %c8_i32_0 = arith.constant 8 : i32
    %11 = vector.broadcast %c8_i32_0 : i32 to vector<16x1xi32>
    %12 = arith.subi %6, %11 : vector<16x1xi32>
    %c2_i32_1 = arith.constant 2 : i32
    %13 = vector.broadcast %c2_i32_1 : i32 to vector<16x1xi32>
    %14 = arith.muli %13, %12 : vector<16x1xi32>
    %c1_i32 = arith.constant 1 : i32
    %15 = vector.broadcast %c1_i32 : i32 to vector<16x1xi32>
    %16 = arith.addi %14, %15 : vector<16x1xi32>
    %17 = arith.select %8, %10, %16 : vector<16x1xi1>, vector<16x1xi32>
    %18 = arith.sitofp %17 : vector<16x1xi32> to vector<16x1xf32>
    %c0 = arith.constant 0 : index
    %c0_2 = arith.constant 0 : index
    %19 = vector.load %arg3[%c0, %c0_2] : memref<800x32xf32, #tpu.memory_space<vmem>>, vector<48x32xf32>
    %c48 = arith.constant 48 : index
    %c0_3 = arith.constant 0 : index
    %20 = vector.load %arg3[%c48, %c0_3] : memref<800x32xf32, #tpu.memory_space<vmem>>, vector<1x32xf32>
    %c56 = arith.constant 56 : index
    %c0_4 = arith.constant 0 : index
    %21 = vector.load %arg3[%c56, %c0_4] : memref<800x32xf32, #tpu.memory_space<vmem>>, vector<32x32xf32>
    %c88 = arith.constant 88 : index
    %c0_5 = arith.constant 0 : index
    %22 = vector.load %arg3[%c88, %c0_5] : memref<800x32xf32, #tpu.memory_space<vmem>>, vector<1x32xf32>
    %c96 = arith.constant 96 : index
    %c0_6 = arith.constant 0 : index
    %23 = vector.load %arg3[%c96, %c0_6] : memref<800x32xf32, #tpu.memory_space<vmem>>, vector<32x32xf32>
    %c128 = arith.constant 128 : index
    %c0_7 = arith.constant 0 : index
    %24 = vector.load %arg3[%c128, %c0_7] : memref<800x32xf32, #tpu.memory_space<vmem>>, vector<1x32xf32>
    %c136 = arith.constant 136 : index
    %c0_8 = arith.constant 0 : index
    %25 = vector.load %arg3[%c136, %c0_8] : memref<800x32xf32, #tpu.memory_space<vmem>>, vector<32x32xf32>
    %c168 = arith.constant 168 : index
    %c0_9 = arith.constant 0 : index
    %26 = vector.load %arg3[%c168, %c0_9] : memref<800x32xf32, #tpu.memory_space<vmem>>, vector<1x32xf32>
    %c176 = arith.constant 176 : index
    %c0_10 = arith.constant 0 : index
    %27 = vector.load %arg3[%c176, %c0_10] : memref<800x32xf32, #tpu.memory_space<vmem>>, vector<32x32xf32>
    %c208 = arith.constant 208 : index
    %c0_11 = arith.constant 0 : index
    %28 = vector.load %arg3[%c208, %c0_11] : memref<800x32xf32, #tpu.memory_space<vmem>>, vector<1x32xf32>
    %c216 = arith.constant 216 : index
    %c0_12 = arith.constant 0 : index
    %29 = vector.load %arg3[%c216, %c0_12] : memref<800x32xf32, #tpu.memory_space<vmem>>, vector<32x32xf32>
    %c248 = arith.constant 248 : index
    %c0_13 = arith.constant 0 : index
    %30 = vector.load %arg3[%c248, %c0_13] : memref<800x32xf32, #tpu.memory_space<vmem>>, vector<1x32xf32>
    %c256 = arith.constant 256 : index
    %c0_14 = arith.constant 0 : index
    %31 = vector.load %arg3[%c256, %c0_14] : memref<800x32xf32, #tpu.memory_space<vmem>>, vector<32x32xf32>
    %c288 = arith.constant 288 : index
    %c0_15 = arith.constant 0 : index
    %32 = vector.load %arg3[%c288, %c0_15] : memref<800x32xf32, #tpu.memory_space<vmem>>, vector<1x32xf32>
    %c296 = arith.constant 296 : index
    %c0_16 = arith.constant 0 : index
    %33 = vector.load %arg3[%c296, %c0_16] : memref<800x32xf32, #tpu.memory_space<vmem>>, vector<32x32xf32>
    %c328 = arith.constant 328 : index
    %c0_17 = arith.constant 0 : index
    %34 = vector.load %arg3[%c328, %c0_17] : memref<800x32xf32, #tpu.memory_space<vmem>>, vector<1x32xf32>
    %c336 = arith.constant 336 : index
    %c0_18 = arith.constant 0 : index
    %35 = vector.load %arg3[%c336, %c0_18] : memref<800x32xf32, #tpu.memory_space<vmem>>, vector<32x32xf32>
    %c368 = arith.constant 368 : index
    %c0_19 = arith.constant 0 : index
    %36 = vector.load %arg3[%c368, %c0_19] : memref<800x32xf32, #tpu.memory_space<vmem>>, vector<1x32xf32>
    %c376 = arith.constant 376 : index
    %c0_20 = arith.constant 0 : index
    %37 = vector.load %arg3[%c376, %c0_20] : memref<800x32xf32, #tpu.memory_space<vmem>>, vector<32x32xf32>
    %c408 = arith.constant 408 : index
    %c0_21 = arith.constant 0 : index
    %38 = vector.load %arg3[%c408, %c0_21] : memref<800x32xf32, #tpu.memory_space<vmem>>, vector<1x32xf32>
    %c416 = arith.constant 416 : index
    %c0_22 = arith.constant 0 : index
    %39 = vector.load %arg3[%c416, %c0_22] : memref<800x32xf32, #tpu.memory_space<vmem>>, vector<32x32xf32>
    %c448 = arith.constant 448 : index
    %c0_23 = arith.constant 0 : index
    %40 = vector.load %arg3[%c448, %c0_23] : memref<800x32xf32, #tpu.memory_space<vmem>>, vector<1x32xf32>
    %c456 = arith.constant 456 : index
    %c0_24 = arith.constant 0 : index
    %41 = vector.load %arg3[%c456, %c0_24] : memref<800x32xf32, #tpu.memory_space<vmem>>, vector<32x32xf32>
    %c488 = arith.constant 488 : index
    %c0_25 = arith.constant 0 : index
    %42 = vector.load %arg3[%c488, %c0_25] : memref<800x32xf32, #tpu.memory_space<vmem>>, vector<1x32xf32>
    %c496 = arith.constant 496 : index
    %c0_26 = arith.constant 0 : index
    %43 = vector.load %arg3[%c496, %c0_26] : memref<800x32xf32, #tpu.memory_space<vmem>>, vector<32x32xf32>
    %c528 = arith.constant 528 : index
    %c0_27 = arith.constant 0 : index
    %44 = vector.load %arg3[%c528, %c0_27] : memref<800x32xf32, #tpu.memory_space<vmem>>, vector<32x32xf32>
    %c560 = arith.constant 560 : index
    %c0_28 = arith.constant 0 : index
    %45 = vector.load %arg3[%c560, %c0_28] : memref<800x32xf32, #tpu.memory_space<vmem>>, vector<32x32xf32>
    %c592 = arith.constant 592 : index
    %c0_29 = arith.constant 0 : index
    %46 = vector.load %arg3[%c592, %c0_29] : memref<800x32xf32, #tpu.memory_space<vmem>>, vector<32x32xf32>
    %c624 = arith.constant 624 : index
    %c0_30 = arith.constant 0 : index
    %47 = vector.load %arg3[%c624, %c0_30] : memref<800x32xf32, #tpu.memory_space<vmem>>, vector<1x32xf32>
    %c632 = arith.constant 632 : index
    %c0_31 = arith.constant 0 : index
    %48 = vector.load %arg3[%c632, %c0_31] : memref<800x32xf32, #tpu.memory_space<vmem>>, vector<32x32xf32>
    %c664 = arith.constant 664 : index
    %c0_32 = arith.constant 0 : index
    %49 = vector.load %arg3[%c664, %c0_32] : memref<800x32xf32, #tpu.memory_space<vmem>>, vector<32x32xf32>
    %c696 = arith.constant 696 : index
    %c0_33 = arith.constant 0 : index
    %50 = vector.load %arg3[%c696, %c0_33] : memref<800x32xf32, #tpu.memory_space<vmem>>, vector<32x32xf32>
    %c728 = arith.constant 728 : index
    %c0_34 = arith.constant 0 : index
    %51 = vector.load %arg3[%c728, %c0_34] : memref<800x32xf32, #tpu.memory_space<vmem>>, vector<32x32xf32>
    %c760 = arith.constant 760 : index
    %c0_35 = arith.constant 0 : index
    %52 = vector.load %arg3[%c760, %c0_35] : memref<800x32xf32, #tpu.memory_space<vmem>>, vector<32x32xf32>
    %c792 = arith.constant 792 : index
    %c0_36 = arith.constant 0 : index
    %53 = vector.load %arg3[%c792, %c0_36] : memref<800x32xf32, #tpu.memory_space<vmem>>, vector<1x32xf32>
    %c0_37 = arith.constant 0 : index
    %c0_38 = arith.constant 0 : index
    %54 = vector.load %arg4[%c0_37, %c0_38] : memref<272x128xf32, #tpu.memory_space<vmem>>, vector<32x128xf32>
    %c32 = arith.constant 32 : index
    %c0_39 = arith.constant 0 : index
    %55 = vector.load %arg4[%c32, %c0_39] : memref<272x128xf32, #tpu.memory_space<vmem>>, vector<32x128xf32>
    %c64 = arith.constant 64 : index
    %c0_40 = arith.constant 0 : index
    %56 = vector.load %arg4[%c64, %c0_40] : memref<272x128xf32, #tpu.memory_space<vmem>>, vector<32x128xf32>
    %c96_41 = arith.constant 96 : index
    %c0_42 = arith.constant 0 : index
    %57 = vector.load %arg4[%c96_41, %c0_42] : memref<272x128xf32, #tpu.memory_space<vmem>>, vector<32x128xf32>
    %c128_43 = arith.constant 128 : index
    %c0_44 = arith.constant 0 : index
    %58 = vector.load %arg4[%c128_43, %c0_44] : memref<272x128xf32, #tpu.memory_space<vmem>>, vector<1x128xf32>
    %c136_45 = arith.constant 136 : index
    %c0_46 = arith.constant 0 : index
    %59 = vector.load %arg4[%c136_45, %c0_46] : memref<272x128xf32, #tpu.memory_space<vmem>>, vector<128x128xf32>
    %c264 = arith.constant 264 : index
    %c0_47 = arith.constant 0 : index
    %60 = vector.load %arg4[%c264, %c0_47] : memref<272x128xf32, #tpu.memory_space<vmem>>, vector<1x128xf32>
    %c0_48 = arith.constant 0 : index
    %c0_49 = arith.constant 0 : index
    %c0_50 = arith.constant 0 : index
    %61 = vector.load %arg1[%c0_48, %c0_49, %c0_50] : memref<2x32x32xf32, #tpu.memory_space<vmem>>, vector<1x32x32xf32>
    %62 = vector.shape_cast %61 : vector<1x32x32xf32> to vector<32x32xf32>
    %63 = arith.addf %62, %4 : vector<32x32xf32>
    %cst = arith.constant dense<0.000000e+00> : vector<32xf32>
    %64 = vector.multi_reduction <add>, %63, %cst [1] : vector<32x32xf32> to vector<32xf32>
    %65 = vector.shape_cast %64 : vector<32xf32> to vector<32x1xf32>
    %cst_51 = arith.constant dense<0.000000e+00> : vector<32xf32>
    %66 = vector.multi_reduction <add>, %63, %cst_51 [0] : vector<32x32xf32> to vector<32xf32>
    %67 = vector.shape_cast %66 : vector<32xf32> to vector<1x32xf32>
    %68 = math.rsqrt %65 : vector<32x1xf32>
    %69 = vector.broadcast %68 : vector<32x1xf32> to vector<32x32xf32>
    %70 = arith.mulf %63, %69 : vector<32x32xf32>
    %71 = math.rsqrt %67 : vector<1x32xf32>
    %72 = vector.broadcast %71 : vector<1x32xf32> to vector<32x32xf32>
    %73 = arith.mulf %70, %72 : vector<32x32xf32>
    %c0_52 = arith.constant 0 : index
    %c0_53 = arith.constant 0 : index
    %c0_54 = arith.constant 0 : index
    %74 = vector.load %arg2[%c0_52, %c0_53, %c0_54] : memref<2x32x48xf32, #tpu.memory_space<vmem>>, vector<1x32x48xf32>
    %75 = vector.shape_cast %74 : vector<1x32x48xf32> to vector<32x48xf32>
    %cst_55 = arith.constant dense<0.000000e+00> : vector<32x32xf32>
    %76 = tpu.matmul %75, %19, %cst_55 {dimension_numbers = #tpu.dot_dimension_numbers<[1], [0], [0], [1], [0, 0, 1, 1], [], []>} : vector<32x48xf32>, vector<48x32xf32>, vector<32x32xf32> -> vector<32x32xf32>
    %cst_56 = arith.constant dense<0.000000e+00> : vector<32x32xf32>
    %77 = tpu.matmul %73, %76, %cst_56 {dimension_numbers = #tpu.dot_dimension_numbers<[1], [0], [0], [1], [0, 0, 1, 1], [], []>} : vector<32x32xf32>, vector<32x32xf32>, vector<32x32xf32> -> vector<32x32xf32>
    %78 = vector.broadcast %20 : vector<1x32xf32> to vector<32x32xf32>
    %79 = arith.addf %77, %78 : vector<32x32xf32>
    %cst_57 = arith.constant 0.000000e+00 : f32
    %80 = vector.broadcast %cst_57 : f32 to vector<32x32xf32>
    %81 = arith.maximumf %79, %80 : vector<32x32xf32>
    %cst_58 = arith.constant dense<0.000000e+00> : vector<32x32xf32>
    %82 = tpu.matmul %81, %21, %cst_58 {dimension_numbers = #tpu.dot_dimension_numbers<[1], [0], [0], [1], [0, 0, 1, 1], [], []>} : vector<32x32xf32>, vector<32x32xf32>, vector<32x32xf32> -> vector<32x32xf32>
    %83 = vector.broadcast %22 : vector<1x32xf32> to vector<32x32xf32>
    %84 = arith.addf %82, %83 : vector<32x32xf32>
    %cst_59 = arith.constant 0.000000e+00 : f32
    %85 = vector.broadcast %cst_59 : f32 to vector<32x32xf32>
    %86 = arith.maximumf %84, %85 : vector<32x32xf32>
    %cst_60 = arith.constant dense<0.000000e+00> : vector<32x32xf32>
    %87 = tpu.matmul %86, %23, %cst_60 {dimension_numbers = #tpu.dot_dimension_numbers<[1], [0], [0], [1], [0, 0, 1, 1], [], []>} : vector<32x32xf32>, vector<32x32xf32>, vector<32x32xf32> -> vector<32x32xf32>
    %88 = vector.broadcast %24 : vector<1x32xf32> to vector<32x32xf32>
    %89 = arith.addf %87, %88 : vector<32x32xf32>
    %90 = math.tanh %89 : vector<32x32xf32>
    %cst_61 = arith.constant dense<0.000000e+00> : vector<32x32xf32>
    %91 = tpu.matmul %90, %25, %cst_61 {dimension_numbers = #tpu.dot_dimension_numbers<[1], [0], [0], [1], [0, 0, 1, 1], [], []>} : vector<32x32xf32>, vector<32x32xf32>, vector<32x32xf32> -> vector<32x32xf32>
    %cst_62 = arith.constant dense<0.000000e+00> : vector<32x32xf32>
    %92 = tpu.matmul %73, %91, %cst_62 {dimension_numbers = #tpu.dot_dimension_numbers<[1], [0], [0], [1], [0, 0, 1, 1], [], []>} : vector<32x32xf32>, vector<32x32xf32>, vector<32x32xf32> -> vector<32x32xf32>
    %93 = vector.broadcast %26 : vector<1x32xf32> to vector<32x32xf32>
    %94 = arith.addf %92, %93 : vector<32x32xf32>
    %cst_63 = arith.constant 0.000000e+00 : f32
    %95 = vector.broadcast %cst_63 : f32 to vector<32x32xf32>
    %96 = arith.maximumf %94, %95 : vector<32x32xf32>
    %cst_64 = arith.constant dense<0.000000e+00> : vector<32x32xf32>
    %97 = tpu.matmul %96, %27, %cst_64 {dimension_numbers = #tpu.dot_dimension_numbers<[1], [0], [0], [1], [0, 0, 1, 1], [], []>} : vector<32x32xf32>, vector<32x32xf32>, vector<32x32xf32> -> vector<32x32xf32>
    %98 = vector.broadcast %28 : vector<1x32xf32> to vector<32x32xf32>
    %99 = arith.addf %97, %98 : vector<32x32xf32>
    %cst_65 = arith.constant 0.000000e+00 : f32
    %100 = vector.broadcast %cst_65 : f32 to vector<32x32xf32>
    %101 = arith.maximumf %99, %100 : vector<32x32xf32>
    %cst_66 = arith.constant dense<0.000000e+00> : vector<32x32xf32>
    %102 = tpu.matmul %101, %29, %cst_66 {dimension_numbers = #tpu.dot_dimension_numbers<[1], [0], [0], [1], [0, 0, 1, 1], [], []>} : vector<32x32xf32>, vector<32x32xf32>, vector<32x32xf32> -> vector<32x32xf32>
    %103 = vector.broadcast %30 : vector<1x32xf32> to vector<32x32xf32>
    %104 = arith.addf %102, %103 : vector<32x32xf32>
    %105 = math.tanh %104 : vector<32x32xf32>
    %cst_67 = arith.constant dense<0.000000e+00> : vector<32x32xf32>
    %106 = tpu.matmul %105, %31, %cst_67 {dimension_numbers = #tpu.dot_dimension_numbers<[1], [0], [0], [1], [0, 0, 1, 1], [], []>} : vector<32x32xf32>, vector<32x32xf32>, vector<32x32xf32> -> vector<32x32xf32>
    %cst_68 = arith.constant dense<0.000000e+00> : vector<32x32xf32>
    %107 = tpu.matmul %73, %106, %cst_68 {dimension_numbers = #tpu.dot_dimension_numbers<[1], [0], [0], [1], [0, 0, 1, 1], [], []>} : vector<32x32xf32>, vector<32x32xf32>, vector<32x32xf32> -> vector<32x32xf32>
    %108 = vector.broadcast %32 : vector<1x32xf32> to vector<32x32xf32>
    %109 = arith.addf %107, %108 : vector<32x32xf32>
    %cst_69 = arith.constant 0.000000e+00 : f32
    %110 = vector.broadcast %cst_69 : f32 to vector<32x32xf32>
    %111 = arith.maximumf %109, %110 : vector<32x32xf32>
    %cst_70 = arith.constant dense<0.000000e+00> : vector<32x32xf32>
    %112 = tpu.matmul %111, %33, %cst_70 {dimension_numbers = #tpu.dot_dimension_numbers<[1], [0], [0], [1], [0, 0, 1, 1], [], []>} : vector<32x32xf32>, vector<32x32xf32>, vector<32x32xf32> -> vector<32x32xf32>
    %113 = vector.broadcast %34 : vector<1x32xf32> to vector<32x32xf32>
    %114 = arith.addf %112, %113 : vector<32x32xf32>
    %cst_71 = arith.constant 0.000000e+00 : f32
    %115 = vector.broadcast %cst_71 : f32 to vector<32x32xf32>
    %116 = arith.maximumf %114, %115 : vector<32x32xf32>
    %cst_72 = arith.constant dense<0.000000e+00> : vector<32x32xf32>
    %117 = tpu.matmul %116, %35, %cst_72 {dimension_numbers = #tpu.dot_dimension_numbers<[1], [0], [0], [1], [0, 0, 1, 1], [], []>} : vector<32x32xf32>, vector<32x32xf32>, vector<32x32xf32> -> vector<32x32xf32>
    %118 = vector.broadcast %36 : vector<1x32xf32> to vector<32x32xf32>
    %119 = arith.addf %117, %118 : vector<32x32xf32>
    %120 = math.tanh %119 : vector<32x32xf32>
    %cst_73 = arith.constant dense<0.000000e+00> : vector<32x32xf32>
    %121 = tpu.matmul %120, %37, %cst_73 {dimension_numbers = #tpu.dot_dimension_numbers<[1], [0], [0], [1], [0, 0, 1, 1], [], []>} : vector<32x32xf32>, vector<32x32xf32>, vector<32x32xf32> -> vector<32x32xf32>
    %cst_74 = arith.constant dense<0.000000e+00> : vector<32x32xf32>
    %122 = tpu.matmul %73, %121, %cst_74 {dimension_numbers = #tpu.dot_dimension_numbers<[1], [0], [0], [1], [0, 0, 1, 1], [], []>} : vector<32x32xf32>, vector<32x32xf32>, vector<32x32xf32> -> vector<32x32xf32>
    %123 = vector.broadcast %38 : vector<1x32xf32> to vector<32x32xf32>
    %124 = arith.addf %122, %123 : vector<32x32xf32>
    %cst_75 = arith.constant 0.000000e+00 : f32
    %125 = vector.broadcast %cst_75 : f32 to vector<32x32xf32>
    %126 = arith.maximumf %124, %125 : vector<32x32xf32>
    %cst_76 = arith.constant dense<0.000000e+00> : vector<32x32xf32>
    %127 = tpu.matmul %126, %39, %cst_76 {dimension_numbers = #tpu.dot_dimension_numbers<[1], [0], [0], [1], [0, 0, 1, 1], [], []>} : vector<32x32xf32>, vector<32x32xf32>, vector<32x32xf32> -> vector<32x32xf32>
    %128 = vector.broadcast %40 : vector<1x32xf32> to vector<32x32xf32>
    %129 = arith.addf %127, %128 : vector<32x32xf32>
    %cst_77 = arith.constant 0.000000e+00 : f32
    %130 = vector.broadcast %cst_77 : f32 to vector<32x32xf32>
    %131 = arith.maximumf %129, %130 : vector<32x32xf32>
    %cst_78 = arith.constant dense<0.000000e+00> : vector<32x32xf32>
    %132 = tpu.matmul %131, %41, %cst_78 {dimension_numbers = #tpu.dot_dimension_numbers<[1], [0], [0], [1], [0, 0, 1, 1], [], []>} : vector<32x32xf32>, vector<32x32xf32>, vector<32x32xf32> -> vector<32x32xf32>
    %133 = vector.broadcast %42 : vector<1x32xf32> to vector<32x32xf32>
    %134 = arith.addf %132, %133 : vector<32x32xf32>
    %135 = math.tanh %134 : vector<32x32xf32>
    %136 = vector.extract_strided_slice %135 {offsets = [0, 0], sizes = [32, 1], strides = [1, 1]} : vector<32x32xf32> to vector<32x1xf32>
    %137 = vector.broadcast %136 : vector<32x1xf32> to vector<32x32xf32>
    %138 = arith.mulf %4, %137 : vector<32x32xf32>
    %cst_79 = arith.constant dense<0.000000e+00> : vector<32xf32>
    %139 = vector.multi_reduction <add>, %138, %cst_79 [0] : vector<32x32xf32> to vector<32xf32>
    %140 = vector.shape_cast %139 : vector<32xf32> to vector<1x32xf32>
    %141 = vector.broadcast %136 : vector<32x1xf32> to vector<32x32xf32>
    %142 = vector.broadcast %140 : vector<1x32xf32> to vector<32x32xf32>
    %143 = arith.cmpf ogt, %141, %142 : vector<32x32xf32>
    %144 = vector.broadcast %136 : vector<32x1xf32> to vector<32x32xf32>
    %145 = vector.broadcast %140 : vector<1x32xf32> to vector<32x32xf32>
    %146 = arith.cmpf oeq, %144, %145 : vector<32x32xf32>
    %147 = arith.andi %146, %5 : vector<32x32xi1>
    %148 = arith.ori %143, %147 : vector<32x32xi1>
    %149 = arith.extui %148 : vector<32x32xi1> to vector<32x32xi32>
    %150 = arith.sitofp %149 : vector<32x32xi32> to vector<32x32xf32>
    %cst_80 = arith.constant dense<0.000000e+00> : vector<32xf32>
    %151 = vector.multi_reduction <add>, %150, %cst_80 [0] : vector<32x32xf32> to vector<32xf32>
    %152 = vector.shape_cast %151 : vector<32xf32> to vector<1x32xf32>
    %153 = vector.broadcast %152 : vector<1x32xf32> to vector<16x32xf32>
    %154 = vector.broadcast %18 : vector<16x1xf32> to vector<16x32xf32>
    %155 = arith.cmpf oeq, %153, %154 : vector<16x32xf32>
    %156 = arith.extui %155 : vector<16x32xi1> to vector<16x32xi32>
    %157 = arith.sitofp %156 : vector<16x32xi32> to vector<16x32xf32>
    %cst_81 = arith.constant dense<0.000000e+00> : vector<32x32xf32>
    %158 = tpu.matmul %90, %43, %cst_81 {dimension_numbers = #tpu.dot_dimension_numbers<[1], [0], [0], [1], [0, 0, 1, 1], [], []>} : vector<32x32xf32>, vector<32x32xf32>, vector<32x32xf32> -> vector<32x32xf32>
    %cst_82 = arith.constant dense<0.000000e+00> : vector<32x32xf32>
    %159 = tpu.matmul %105, %44, %cst_82 {dimension_numbers = #tpu.dot_dimension_numbers<[1], [0], [0], [1], [0, 0, 1, 1], [], []>} : vector<32x32xf32>, vector<32x32xf32>, vector<32x32xf32> -> vector<32x32xf32>
    %160 = arith.addf %158, %159 : vector<32x32xf32>
    %cst_83 = arith.constant dense<0.000000e+00> : vector<32x32xf32>
    %161 = tpu.matmul %120, %45, %cst_83 {dimension_numbers = #tpu.dot_dimension_numbers<[1], [0], [0], [1], [0, 0, 1, 1], [], []>} : vector<32x32xf32>, vector<32x32xf32>, vector<32x32xf32> -> vector<32x32xf32>
    %162 = arith.addf %160, %161 : vector<32x32xf32>
    %cst_84 = arith.constant dense<0.000000e+00> : vector<32x32xf32>
    %163 = tpu.matmul %135, %46, %cst_84 {dimension_numbers = #tpu.dot_dimension_numbers<[1], [0], [0], [1], [0, 0, 1, 1], [], []>} : vector<32x32xf32>, vector<32x32xf32>, vector<32x32xf32> -> vector<32x32xf32>
    %164 = arith.addf %162, %163 : vector<32x32xf32>
    %cst_85 = arith.constant dense<0.000000e+00> : vector<16x32xf32>
    %165 = tpu.matmul %157, %164, %cst_85 {dimension_numbers = #tpu.dot_dimension_numbers<[1], [0], [0], [1], [0, 0, 1, 1], [], []>} : vector<16x32xf32>, vector<32x32xf32>, vector<16x32xf32> -> vector<16x32xf32>
    %166 = vector.broadcast %47 : vector<1x32xf32> to vector<16x32xf32>
    %167 = arith.addf %165, %166 : vector<16x32xf32>
    %cst_86 = arith.constant 0.000000e+00 : f32
    %168 = vector.broadcast %cst_86 : f32 to vector<16x32xf32>
    %169 = arith.maximumf %167, %168 : vector<16x32xf32>
    %170 = vector.extract_strided_slice %169 {offsets = [0, 0], sizes = [8, 32], strides = [1, 1]} : vector<16x32xf32> to vector<8x32xf32>
    %171 = vector.extract_strided_slice %169 {offsets = [8, 0], sizes = [8, 32], strides = [1, 1]} : vector<16x32xf32> to vector<8x32xf32>
    %172 = arith.maximumf %170, %171 : vector<8x32xf32>
    %173 = vector.extract_strided_slice %172 {offsets = [0, 0], sizes = [4, 32], strides = [1, 1]} : vector<8x32xf32> to vector<4x32xf32>
    %cst_87 = arith.constant dense<0.000000e+00> : vector<4x32xf32>
    %174 = tpu.matmul %173, %48, %cst_87 {dimension_numbers = #tpu.dot_dimension_numbers<[1], [0], [0], [1], [0, 0, 1, 1], [], []>} : vector<4x32xf32>, vector<32x32xf32>, vector<4x32xf32> -> vector<4x32xf32>
    %175 = vector.extract_strided_slice %172 {offsets = [1, 0], sizes = [4, 32], strides = [1, 1]} : vector<8x32xf32> to vector<4x32xf32>
    %cst_88 = arith.constant dense<0.000000e+00> : vector<4x32xf32>
    %176 = tpu.matmul %175, %49, %cst_88 {dimension_numbers = #tpu.dot_dimension_numbers<[1], [0], [0], [1], [0, 0, 1, 1], [], []>} : vector<4x32xf32>, vector<32x32xf32>, vector<4x32xf32> -> vector<4x32xf32>
    %177 = arith.addf %174, %176 : vector<4x32xf32>
    %178 = vector.extract_strided_slice %172 {offsets = [2, 0], sizes = [4, 32], strides = [1, 1]} : vector<8x32xf32> to vector<4x32xf32>
    %cst_89 = arith.constant dense<0.000000e+00> : vector<4x32xf32>
    %179 = tpu.matmul %178, %50, %cst_89 {dimension_numbers = #tpu.dot_dimension_numbers<[1], [0], [0], [1], [0, 0, 1, 1], [], []>} : vector<4x32xf32>, vector<32x32xf32>, vector<4x32xf32> -> vector<4x32xf32>
    %180 = arith.addf %177, %179 : vector<4x32xf32>
    %181 = vector.extract_strided_slice %172 {offsets = [3, 0], sizes = [4, 32], strides = [1, 1]} : vector<8x32xf32> to vector<4x32xf32>
    %cst_90 = arith.constant dense<0.000000e+00> : vector<4x32xf32>
    %182 = tpu.matmul %181, %51, %cst_90 {dimension_numbers = #tpu.dot_dimension_numbers<[1], [0], [0], [1], [0, 0, 1, 1], [], []>} : vector<4x32xf32>, vector<32x32xf32>, vector<4x32xf32> -> vector<4x32xf32>
    %183 = arith.addf %180, %182 : vector<4x32xf32>
    %184 = vector.extract_strided_slice %172 {offsets = [4, 0], sizes = [4, 32], strides = [1, 1]} : vector<8x32xf32> to vector<4x32xf32>
    %cst_91 = arith.constant dense<0.000000e+00> : vector<4x32xf32>
    %185 = tpu.matmul %184, %52, %cst_91 {dimension_numbers = #tpu.dot_dimension_numbers<[1], [0], [0], [1], [0, 0, 1, 1], [], []>} : vector<4x32xf32>, vector<32x32xf32>, vector<4x32xf32> -> vector<4x32xf32>
    %186 = arith.addf %183, %185 : vector<4x32xf32>
    %187 = vector.broadcast %53 : vector<1x32xf32> to vector<4x32xf32>
    %188 = arith.addf %186, %187 : vector<4x32xf32>
    %cst_92 = arith.constant 0.000000e+00 : f32
    %189 = vector.broadcast %cst_92 : f32 to vector<4x32xf32>
    %190 = arith.maximumf %188, %189 : vector<4x32xf32>
    %191 = vector.extract_strided_slice %190 {offsets = [0, 0], sizes = [1, 32], strides = [1, 1]} : vector<4x32xf32> to vector<1x32xf32>
    %cst_93 = arith.constant dense<0.000000e+00> : vector<1x128xf32>
    %192 = tpu.matmul %191, %54, %cst_93 {dimension_numbers = #tpu.dot_dimension_numbers<[1], [0], [0], [1], [0, 0, 1, 1], [], []>} : vector<1x32xf32>, vector<32x128xf32>, vector<1x128xf32> -> vector<1x128xf32>
    %193 = vector.extract_strided_slice %190 {offsets = [1, 0], sizes = [1, 32], strides = [1, 1]} : vector<4x32xf32> to vector<1x32xf32>
    %cst_94 = arith.constant dense<0.000000e+00> : vector<1x128xf32>
    %194 = tpu.matmul %193, %55, %cst_94 {dimension_numbers = #tpu.dot_dimension_numbers<[1], [0], [0], [1], [0, 0, 1, 1], [], []>} : vector<1x32xf32>, vector<32x128xf32>, vector<1x128xf32> -> vector<1x128xf32>
    %195 = arith.addf %192, %194 : vector<1x128xf32>
    %196 = vector.extract_strided_slice %190 {offsets = [2, 0], sizes = [1, 32], strides = [1, 1]} : vector<4x32xf32> to vector<1x32xf32>
    %cst_95 = arith.constant dense<0.000000e+00> : vector<1x128xf32>
    %197 = tpu.matmul %196, %56, %cst_95 {dimension_numbers = #tpu.dot_dimension_numbers<[1], [0], [0], [1], [0, 0, 1, 1], [], []>} : vector<1x32xf32>, vector<32x128xf32>, vector<1x128xf32> -> vector<1x128xf32>
    %198 = arith.addf %195, %197 : vector<1x128xf32>
    %199 = vector.extract_strided_slice %190 {offsets = [3, 0], sizes = [1, 32], strides = [1, 1]} : vector<4x32xf32> to vector<1x32xf32>
    %cst_96 = arith.constant dense<0.000000e+00> : vector<1x128xf32>
    %200 = tpu.matmul %199, %57, %cst_96 {dimension_numbers = #tpu.dot_dimension_numbers<[1], [0], [0], [1], [0, 0, 1, 1], [], []>} : vector<1x32xf32>, vector<32x128xf32>, vector<1x128xf32> -> vector<1x128xf32>
    %201 = arith.addf %198, %200 : vector<1x128xf32>
    %202 = arith.addf %201, %58 : vector<1x128xf32>
    %cst_97 = arith.constant 0.000000e+00 : f32
    %203 = vector.broadcast %cst_97 : f32 to vector<1x128xf32>
    %204 = arith.maximumf %202, %203 : vector<1x128xf32>
    %cst_98 = arith.constant dense<0.000000e+00> : vector<1x128xf32>
    %205 = tpu.matmul %204, %59, %cst_98 {dimension_numbers = #tpu.dot_dimension_numbers<[1], [0], [0], [1], [0, 0, 1, 1], [], []>} : vector<1x128xf32>, vector<128x128xf32>, vector<1x128xf32> -> vector<1x128xf32>
    %206 = arith.addf %205, %60 : vector<1x128xf32>
    %207 = vector.extract_strided_slice %206 {offsets = [0, 0], sizes = [1, 1], strides = [1, 1]} : vector<1x128xf32> to vector<1x1xf32>
    %c0_99 = arith.constant 0 : index
    %c0_100 = arith.constant 0 : index
    %c0_101 = arith.constant 0 : index
    %208 = vector.load %arg5[%c0_99, %c0_100, %c0_101] : memref<2x1x1xf32, #tpu.memory_space<vmem>>, vector<1x1x1xf32>
    %209 = vector.shape_cast %208 : vector<1x1x1xf32> to vector<1x1xf32>
    %210 = vector.shape_cast %207 : vector<1x1xf32> to vector<1x1x1xf32>
    tpu.vector_store %arg5[%c0_99, %c0_100, %c0_101], %210 {strides = array<i32>} : memref<2x1x1xf32, #tpu.memory_space<vmem>>, vector<1x1x1xf32>,
    %c1 = arith.constant 1 : index
    %c0_102 = arith.constant 0 : index
    %c0_103 = arith.constant 0 : index
    %211 = vector.load %arg1[%c1, %c0_102, %c0_103] : memref<2x32x32xf32, #tpu.memory_space<vmem>>, vector<1x32x32xf32>
    %212 = vector.shape_cast %211 : vector<1x32x32xf32> to vector<32x32xf32>
    %213 = arith.addf %212, %4 : vector<32x32xf32>
    %cst_104 = arith.constant dense<0.000000e+00> : vector<32xf32>
    %214 = vector.multi_reduction <add>, %213, %cst_104 [1] : vector<32x32xf32> to vector<32xf32>
    %215 = vector.shape_cast %214 : vector<32xf32> to vector<32x1xf32>
    %cst_105 = arith.constant dense<0.000000e+00> : vector<32xf32>
    %216 = vector.multi_reduction <add>, %213, %cst_105 [0] : vector<32x32xf32> to vector<32xf32>
    %217 = vector.shape_cast %216 : vector<32xf32> to vector<1x32xf32>
    %218 = math.rsqrt %215 : vector<32x1xf32>
    %219 = vector.broadcast %218 : vector<32x1xf32> to vector<32x32xf32>
    %220 = arith.mulf %213, %219 : vector<32x32xf32>
    %221 = math.rsqrt %217 : vector<1x32xf32>
    %222 = vector.broadcast %221 : vector<1x32xf32> to vector<32x32xf32>
    %223 = arith.mulf %220, %222 : vector<32x32xf32>
    %c1_106 = arith.constant 1 : index
    %c0_107 = arith.constant 0 : index
    %c0_108 = arith.constant 0 : index
    %224 = vector.load %arg2[%c1_106, %c0_107, %c0_108] : memref<2x32x48xf32, #tpu.memory_space<vmem>>, vector<1x32x48xf32>
    %225 = vector.shape_cast %224 : vector<1x32x48xf32> to vector<32x48xf32>
    %cst_109 = arith.constant dense<0.000000e+00> : vector<32x32xf32>
    %226 = tpu.matmul %225, %19, %cst_109 {dimension_numbers = #tpu.dot_dimension_numbers<[1], [0], [0], [1], [0, 0, 1, 1], [], []>} : vector<32x48xf32>, vector<48x32xf32>, vector<32x32xf32> -> vector<32x32xf32>
    %cst_110 = arith.constant dense<0.000000e+00> : vector<32x32xf32>
    %227 = tpu.matmul %223, %226, %cst_110 {dimension_numbers = #tpu.dot_dimension_numbers<[1], [0], [0], [1], [0, 0, 1, 1], [], []>} : vector<32x32xf32>, vector<32x32xf32>, vector<32x32xf32> -> vector<32x32xf32>
    %228 = vector.broadcast %20 : vector<1x32xf32> to vector<32x32xf32>
    %229 = arith.addf %227, %228 : vector<32x32xf32>
    %cst_111 = arith.constant 0.000000e+00 : f32
    %230 = vector.broadcast %cst_111 : f32 to vector<32x32xf32>
    %231 = arith.maximumf %229, %230 : vector<32x32xf32>
    %cst_112 = arith.constant dense<0.000000e+00> : vector<32x32xf32>
    %232 = tpu.matmul %231, %21, %cst_112 {dimension_numbers = #tpu.dot_dimension_numbers<[1], [0], [0], [1], [0, 0, 1, 1], [], []>} : vector<32x32xf32>, vector<32x32xf32>, vector<32x32xf32> -> vector<32x32xf32>
    %233 = vector.broadcast %22 : vector<1x32xf32> to vector<32x32xf32>
    %234 = arith.addf %232, %233 : vector<32x32xf32>
    %cst_113 = arith.constant 0.000000e+00 : f32
    %235 = vector.broadcast %cst_113 : f32 to vector<32x32xf32>
    %236 = arith.maximumf %234, %235 : vector<32x32xf32>
    %cst_114 = arith.constant dense<0.000000e+00> : vector<32x32xf32>
    %237 = tpu.matmul %236, %23, %cst_114 {dimension_numbers = #tpu.dot_dimension_numbers<[1], [0], [0], [1], [0, 0, 1, 1], [], []>} : vector<32x32xf32>, vector<32x32xf32>, vector<32x32xf32> -> vector<32x32xf32>
    %238 = vector.broadcast %24 : vector<1x32xf32> to vector<32x32xf32>
    %239 = arith.addf %237, %238 : vector<32x32xf32>
    %240 = math.tanh %239 : vector<32x32xf32>
    %cst_115 = arith.constant dense<0.000000e+00> : vector<32x32xf32>
    %241 = tpu.matmul %240, %25, %cst_115 {dimension_numbers = #tpu.dot_dimension_numbers<[1], [0], [0], [1], [0, 0, 1, 1], [], []>} : vector<32x32xf32>, vector<32x32xf32>, vector<32x32xf32> -> vector<32x32xf32>
    %cst_116 = arith.constant dense<0.000000e+00> : vector<32x32xf32>
    %242 = tpu.matmul %223, %241, %cst_116 {dimension_numbers = #tpu.dot_dimension_numbers<[1], [0], [0], [1], [0, 0, 1, 1], [], []>} : vector<32x32xf32>, vector<32x32xf32>, vector<32x32xf32> -> vector<32x32xf32>
    %243 = vector.broadcast %26 : vector<1x32xf32> to vector<32x32xf32>
    %244 = arith.addf %242, %243 : vector<32x32xf32>
    %cst_117 = arith.constant 0.000000e+00 : f32
    %245 = vector.broadcast %cst_117 : f32 to vector<32x32xf32>
    %246 = arith.maximumf %244, %245 : vector<32x32xf32>
    %cst_118 = arith.constant dense<0.000000e+00> : vector<32x32xf32>
    %247 = tpu.matmul %246, %27, %cst_118 {dimension_numbers = #tpu.dot_dimension_numbers<[1], [0], [0], [1], [0, 0, 1, 1], [], []>} : vector<32x32xf32>, vector<32x32xf32>, vector<32x32xf32> -> vector<32x32xf32>
    %248 = vector.broadcast %28 : vector<1x32xf32> to vector<32x32xf32>
    %249 = arith.addf %247, %248 : vector<32x32xf32>
    %cst_119 = arith.constant 0.000000e+00 : f32
    %250 = vector.broadcast %cst_119 : f32 to vector<32x32xf32>
    %251 = arith.maximumf %249, %250 : vector<32x32xf32>
    %cst_120 = arith.constant dense<0.000000e+00> : vector<32x32xf32>
    %252 = tpu.matmul %251, %29, %cst_120 {dimension_numbers = #tpu.dot_dimension_numbers<[1], [0], [0], [1], [0, 0, 1, 1], [], []>} : vector<32x32xf32>, vector<32x32xf32>, vector<32x32xf32> -> vector<32x32xf32>
    %253 = vector.broadcast %30 : vector<1x32xf32> to vector<32x32xf32>
    %254 = arith.addf %252, %253 : vector<32x32xf32>
    %255 = math.tanh %254 : vector<32x32xf32>
    %cst_121 = arith.constant dense<0.000000e+00> : vector<32x32xf32>
    %256 = tpu.matmul %255, %31, %cst_121 {dimension_numbers = #tpu.dot_dimension_numbers<[1], [0], [0], [1], [0, 0, 1, 1], [], []>} : vector<32x32xf32>, vector<32x32xf32>, vector<32x32xf32> -> vector<32x32xf32>
    %cst_122 = arith.constant dense<0.000000e+00> : vector<32x32xf32>
    %257 = tpu.matmul %223, %256, %cst_122 {dimension_numbers = #tpu.dot_dimension_numbers<[1], [0], [0], [1], [0, 0, 1, 1], [], []>} : vector<32x32xf32>, vector<32x32xf32>, vector<32x32xf32> -> vector<32x32xf32>
    %258 = vector.broadcast %32 : vector<1x32xf32> to vector<32x32xf32>
    %259 = arith.addf %257, %258 : vector<32x32xf32>
    %cst_123 = arith.constant 0.000000e+00 : f32
    %260 = vector.broadcast %cst_123 : f32 to vector<32x32xf32>
    %261 = arith.maximumf %259, %260 : vector<32x32xf32>
    %cst_124 = arith.constant dense<0.000000e+00> : vector<32x32xf32>
    %262 = tpu.matmul %261, %33, %cst_124 {dimension_numbers = #tpu.dot_dimension_numbers<[1], [0], [0], [1], [0, 0, 1, 1], [], []>} : vector<32x32xf32>, vector<32x32xf32>, vector<32x32xf32> -> vector<32x32xf32>
    %263 = vector.broadcast %34 : vector<1x32xf32> to vector<32x32xf32>
    %264 = arith.addf %262, %263 : vector<32x32xf32>
    %cst_125 = arith.constant 0.000000e+00 : f32
    %265 = vector.broadcast %cst_125 : f32 to vector<32x32xf32>
    %266 = arith.maximumf %264, %265 : vector<32x32xf32>
    %cst_126 = arith.constant dense<0.000000e+00> : vector<32x32xf32>
    %267 = tpu.matmul %266, %35, %cst_126 {dimension_numbers = #tpu.dot_dimension_numbers<[1], [0], [0], [1], [0, 0, 1, 1], [], []>} : vector<32x32xf32>, vector<32x32xf32>, vector<32x32xf32> -> vector<32x32xf32>
    %268 = vector.broadcast %36 : vector<1x32xf32> to vector<32x32xf32>
    %269 = arith.addf %267, %268 : vector<32x32xf32>
    %270 = math.tanh %269 : vector<32x32xf32>
    %cst_127 = arith.constant dense<0.000000e+00> : vector<32x32xf32>
    %271 = tpu.matmul %270, %37, %cst_127 {dimension_numbers = #tpu.dot_dimension_numbers<[1], [0], [0], [1], [0, 0, 1, 1], [], []>} : vector<32x32xf32>, vector<32x32xf32>, vector<32x32xf32> -> vector<32x32xf32>
    %cst_128 = arith.constant dense<0.000000e+00> : vector<32x32xf32>
    %272 = tpu.matmul %223, %271, %cst_128 {dimension_numbers = #tpu.dot_dimension_numbers<[1], [0], [0], [1], [0, 0, 1, 1], [], []>} : vector<32x32xf32>, vector<32x32xf32>, vector<32x32xf32> -> vector<32x32xf32>
    %273 = vector.broadcast %38 : vector<1x32xf32> to vector<32x32xf32>
    %274 = arith.addf %272, %273 : vector<32x32xf32>
    %cst_129 = arith.constant 0.000000e+00 : f32
    %275 = vector.broadcast %cst_129 : f32 to vector<32x32xf32>
    %276 = arith.maximumf %274, %275 : vector<32x32xf32>
    %cst_130 = arith.constant dense<0.000000e+00> : vector<32x32xf32>
    %277 = tpu.matmul %276, %39, %cst_130 {dimension_numbers = #tpu.dot_dimension_numbers<[1], [0], [0], [1], [0, 0, 1, 1], [], []>} : vector<32x32xf32>, vector<32x32xf32>, vector<32x32xf32> -> vector<32x32xf32>
    %278 = vector.broadcast %40 : vector<1x32xf32> to vector<32x32xf32>
    %279 = arith.addf %277, %278 : vector<32x32xf32>
    %cst_131 = arith.constant 0.000000e+00 : f32
    %280 = vector.broadcast %cst_131 : f32 to vector<32x32xf32>
    %281 = arith.maximumf %279, %280 : vector<32x32xf32>
    %cst_132 = arith.constant dense<0.000000e+00> : vector<32x32xf32>
    %282 = tpu.matmul %281, %41, %cst_132 {dimension_numbers = #tpu.dot_dimension_numbers<[1], [0], [0], [1], [0, 0, 1, 1], [], []>} : vector<32x32xf32>, vector<32x32xf32>, vector<32x32xf32> -> vector<32x32xf32>
    %283 = vector.broadcast %42 : vector<1x32xf32> to vector<32x32xf32>
    %284 = arith.addf %282, %283 : vector<32x32xf32>
    %285 = math.tanh %284 : vector<32x32xf32>
    %286 = vector.extract_strided_slice %285 {offsets = [0, 0], sizes = [32, 1], strides = [1, 1]} : vector<32x32xf32> to vector<32x1xf32>
    %287 = vector.broadcast %286 : vector<32x1xf32> to vector<32x32xf32>
    %288 = arith.mulf %4, %287 : vector<32x32xf32>
    %cst_133 = arith.constant dense<0.000000e+00> : vector<32xf32>
    %289 = vector.multi_reduction <add>, %288, %cst_133 [0] : vector<32x32xf32> to vector<32xf32>
    %290 = vector.shape_cast %289 : vector<32xf32> to vector<1x32xf32>
    %291 = vector.broadcast %286 : vector<32x1xf32> to vector<32x32xf32>
    %292 = vector.broadcast %290 : vector<1x32xf32> to vector<32x32xf32>
    %293 = arith.cmpf ogt, %291, %292 : vector<32x32xf32>
    %294 = vector.broadcast %286 : vector<32x1xf32> to vector<32x32xf32>
    %295 = vector.broadcast %290 : vector<1x32xf32> to vector<32x32xf32>
    %296 = arith.cmpf oeq, %294, %295 : vector<32x32xf32>
    %297 = arith.andi %296, %5 : vector<32x32xi1>
    %298 = arith.ori %293, %297 : vector<32x32xi1>
    %299 = arith.extui %298 : vector<32x32xi1> to vector<32x32xi32>
    %300 = arith.sitofp %299 : vector<32x32xi32> to vector<32x32xf32>
    %cst_134 = arith.constant dense<0.000000e+00> : vector<32xf32>
    %301 = vector.multi_reduction <add>, %300, %cst_134 [0] : vector<32x32xf32> to vector<32xf32>
    %302 = vector.shape_cast %301 : vector<32xf32> to vector<1x32xf32>
    %303 = vector.broadcast %302 : vector<1x32xf32> to vector<16x32xf32>
    %304 = vector.broadcast %18 : vector<16x1xf32> to vector<16x32xf32>
    %305 = arith.cmpf oeq, %303, %304 : vector<16x32xf32>
    %306 = arith.extui %305 : vector<16x32xi1> to vector<16x32xi32>
    %307 = arith.sitofp %306 : vector<16x32xi32> to vector<16x32xf32>
    %cst_135 = arith.constant dense<0.000000e+00> : vector<32x32xf32>
    %308 = tpu.matmul %240, %43, %cst_135 {dimension_numbers = #tpu.dot_dimension_numbers<[1], [0], [0], [1], [0, 0, 1, 1], [], []>} : vector<32x32xf32>, vector<32x32xf32>, vector<32x32xf32> -> vector<32x32xf32>
    %cst_136 = arith.constant dense<0.000000e+00> : vector<32x32xf32>
    %309 = tpu.matmul %255, %44, %cst_136 {dimension_numbers = #tpu.dot_dimension_numbers<[1], [0], [0], [1], [0, 0, 1, 1], [], []>} : vector<32x32xf32>, vector<32x32xf32>, vector<32x32xf32> -> vector<32x32xf32>
    %310 = arith.addf %308, %309 : vector<32x32xf32>
    %cst_137 = arith.constant dense<0.000000e+00> : vector<32x32xf32>
    %311 = tpu.matmul %270, %45, %cst_137 {dimension_numbers = #tpu.dot_dimension_numbers<[1], [0], [0], [1], [0, 0, 1, 1], [], []>} : vector<32x32xf32>, vector<32x32xf32>, vector<32x32xf32> -> vector<32x32xf32>
    %312 = arith.addf %310, %311 : vector<32x32xf32>
    %cst_138 = arith.constant dense<0.000000e+00> : vector<32x32xf32>
    %313 = tpu.matmul %285, %46, %cst_138 {dimension_numbers = #tpu.dot_dimension_numbers<[1], [0], [0], [1], [0, 0, 1, 1], [], []>} : vector<32x32xf32>, vector<32x32xf32>, vector<32x32xf32> -> vector<32x32xf32>
    %314 = arith.addf %312, %313 : vector<32x32xf32>
    %cst_139 = arith.constant dense<0.000000e+00> : vector<16x32xf32>
    %315 = tpu.matmul %307, %314, %cst_139 {dimension_numbers = #tpu.dot_dimension_numbers<[1], [0], [0], [1], [0, 0, 1, 1], [], []>} : vector<16x32xf32>, vector<32x32xf32>, vector<16x32xf32> -> vector<16x32xf32>
    %316 = vector.broadcast %47 : vector<1x32xf32> to vector<16x32xf32>
    %317 = arith.addf %315, %316 : vector<16x32xf32>
    %cst_140 = arith.constant 0.000000e+00 : f32
    %318 = vector.broadcast %cst_140 : f32 to vector<16x32xf32>
    %319 = arith.maximumf %317, %318 : vector<16x32xf32>
    %320 = vector.extract_strided_slice %319 {offsets = [0, 0], sizes = [8, 32], strides = [1, 1]} : vector<16x32xf32> to vector<8x32xf32>
    %321 = vector.extract_strided_slice %319 {offsets = [8, 0], sizes = [8, 32], strides = [1, 1]} : vector<16x32xf32> to vector<8x32xf32>
    %322 = arith.maximumf %320, %321 : vector<8x32xf32>
    %323 = vector.extract_strided_slice %322 {offsets = [0, 0], sizes = [4, 32], strides = [1, 1]} : vector<8x32xf32> to vector<4x32xf32>
    %cst_141 = arith.constant dense<0.000000e+00> : vector<4x32xf32>
    %324 = tpu.matmul %323, %48, %cst_141 {dimension_numbers = #tpu.dot_dimension_numbers<[1], [0], [0], [1], [0, 0, 1, 1], [], []>} : vector<4x32xf32>, vector<32x32xf32>, vector<4x32xf32> -> vector<4x32xf32>
    %325 = vector.extract_strided_slice %322 {offsets = [1, 0], sizes = [4, 32], strides = [1, 1]} : vector<8x32xf32> to vector<4x32xf32>
    %cst_142 = arith.constant dense<0.000000e+00> : vector<4x32xf32>
    %326 = tpu.matmul %325, %49, %cst_142 {dimension_numbers = #tpu.dot_dimension_numbers<[1], [0], [0], [1], [0, 0, 1, 1], [], []>} : vector<4x32xf32>, vector<32x32xf32>, vector<4x32xf32> -> vector<4x32xf32>
    %327 = arith.addf %324, %326 : vector<4x32xf32>
    %328 = vector.extract_strided_slice %322 {offsets = [2, 0], sizes = [4, 32], strides = [1, 1]} : vector<8x32xf32> to vector<4x32xf32>
    %cst_143 = arith.constant dense<0.000000e+00> : vector<4x32xf32>
    %329 = tpu.matmul %328, %50, %cst_143 {dimension_numbers = #tpu.dot_dimension_numbers<[1], [0], [0], [1], [0, 0, 1, 1], [], []>} : vector<4x32xf32>, vector<32x32xf32>, vector<4x32xf32> -> vector<4x32xf32>
    %330 = arith.addf %327, %329 : vector<4x32xf32>
    %331 = vector.extract_strided_slice %322 {offsets = [3, 0], sizes = [4, 32], strides = [1, 1]} : vector<8x32xf32> to vector<4x32xf32>
    %cst_144 = arith.constant dense<0.000000e+00> : vector<4x32xf32>
    %332 = tpu.matmul %331, %51, %cst_144 {dimension_numbers = #tpu.dot_dimension_numbers<[1], [0], [0], [1], [0, 0, 1, 1], [], []>} : vector<4x32xf32>, vector<32x32xf32>, vector<4x32xf32> -> vector<4x32xf32>
    %333 = arith.addf %330, %332 : vector<4x32xf32>
    %334 = vector.extract_strided_slice %322 {offsets = [4, 0], sizes = [4, 32], strides = [1, 1]} : vector<8x32xf32> to vector<4x32xf32>
    %cst_145 = arith.constant dense<0.000000e+00> : vector<4x32xf32>
    %335 = tpu.matmul %334, %52, %cst_145 {dimension_numbers = #tpu.dot_dimension_numbers<[1], [0], [0], [1], [0, 0, 1, 1], [], []>} : vector<4x32xf32>, vector<32x32xf32>, vector<4x32xf32> -> vector<4x32xf32>
    %336 = arith.addf %333, %335 : vector<4x32xf32>
    %337 = vector.broadcast %53 : vector<1x32xf32> to vector<4x32xf32>
    %338 = arith.addf %336, %337 : vector<4x32xf32>
    %cst_146 = arith.constant 0.000000e+00 : f32
    %339 = vector.broadcast %cst_146 : f32 to vector<4x32xf32>
    %340 = arith.maximumf %338, %339 : vector<4x32xf32>
    %341 = vector.extract_strided_slice %340 {offsets = [0, 0], sizes = [1, 32], strides = [1, 1]} : vector<4x32xf32> to vector<1x32xf32>
    %cst_147 = arith.constant dense<0.000000e+00> : vector<1x128xf32>
    %342 = tpu.matmul %341, %54, %cst_147 {dimension_numbers = #tpu.dot_dimension_numbers<[1], [0], [0], [1], [0, 0, 1, 1], [], []>} : vector<1x32xf32>, vector<32x128xf32>, vector<1x128xf32> -> vector<1x128xf32>
    %343 = vector.extract_strided_slice %340 {offsets = [1, 0], sizes = [1, 32], strides = [1, 1]} : vector<4x32xf32> to vector<1x32xf32>
    %cst_148 = arith.constant dense<0.000000e+00> : vector<1x128xf32>
    %344 = tpu.matmul %343, %55, %cst_148 {dimension_numbers = #tpu.dot_dimension_numbers<[1], [0], [0], [1], [0, 0, 1, 1], [], []>} : vector<1x32xf32>, vector<32x128xf32>, vector<1x128xf32> -> vector<1x128xf32>
    %345 = arith.addf %342, %344 : vector<1x128xf32>
    %346 = vector.extract_strided_slice %340 {offsets = [2, 0], sizes = [1, 32], strides = [1, 1]} : vector<4x32xf32> to vector<1x32xf32>
    %cst_149 = arith.constant dense<0.000000e+00> : vector<1x128xf32>
    %347 = tpu.matmul %346, %56, %cst_149 {dimension_numbers = #tpu.dot_dimension_numbers<[1], [0], [0], [1], [0, 0, 1, 1], [], []>} : vector<1x32xf32>, vector<32x128xf32>, vector<1x128xf32> -> vector<1x128xf32>
    %348 = arith.addf %345, %347 : vector<1x128xf32>
    %349 = vector.extract_strided_slice %340 {offsets = [3, 0], sizes = [1, 32], strides = [1, 1]} : vector<4x32xf32> to vector<1x32xf32>
    %cst_150 = arith.constant dense<0.000000e+00> : vector<1x128xf32>
    %350 = tpu.matmul %349, %57, %cst_150 {dimension_numbers = #tpu.dot_dimension_numbers<[1], [0], [0], [1], [0, 0, 1, 1], [], []>} : vector<1x32xf32>, vector<32x128xf32>, vector<1x128xf32> -> vector<1x128xf32>
    %351 = arith.addf %348, %350 : vector<1x128xf32>
    %352 = arith.addf %351, %58 : vector<1x128xf32>
    %cst_151 = arith.constant 0.000000e+00 : f32
    %353 = vector.broadcast %cst_151 : f32 to vector<1x128xf32>
    %354 = arith.maximumf %352, %353 : vector<1x128xf32>
    %cst_152 = arith.constant dense<0.000000e+00> : vector<1x128xf32>
    %355 = tpu.matmul %354, %59, %cst_152 {dimension_numbers = #tpu.dot_dimension_numbers<[1], [0], [0], [1], [0, 0, 1, 1], [], []>} : vector<1x128xf32>, vector<128x128xf32>, vector<1x128xf32> -> vector<1x128xf32>
    %356 = arith.addf %355, %60 : vector<1x128xf32>
    %357 = vector.extract_strided_slice %356 {offsets = [0, 0], sizes = [1, 1], strides = [1, 1]} : vector<1x128xf32> to vector<1x1xf32>
    %c1_153 = arith.constant 1 : index
    %c0_154 = arith.constant 0 : index
    %c0_155 = arith.constant 0 : index
    %358 = vector.load %arg5[%c1_153, %c0_154, %c0_155] : memref<2x1x1xf32, #tpu.memory_space<vmem>>, vector<1x1x1xf32>
    %359 = vector.shape_cast %358 : vector<1x1x1xf32> to vector<1x1xf32>
    %360 = vector.shape_cast %357 : vector<1x1xf32> to vector<1x1x1xf32>
    tpu.vector_store %arg5[%c1_153, %c0_154, %c0_155], %360 {strides = array<i32>} : memref<2x1x1xf32, #tpu.memory_space<vmem>>, vector<1x1x1xf32>,
    return
  }
  func.func @transform_0(%arg0: i32) -> (i32, i32, i32) {
    %c0_i32 = arith.constant 0 : i32
    %c0_i32_0 = arith.constant 0 : i32
    %c0_i32_1 = arith.constant 0 : i32
    return %arg0, %c0_i32, %c0_i32_0 : i32, i32, i32
  }
  func.func @transform_1(%arg0: i32) -> (i32, i32, i32) {
    %c0_i32 = arith.constant 0 : i32
    %c0_i32_0 = arith.constant 0 : i32
    %c0_i32_1 = arith.constant 0 : i32
    return %arg0, %c0_i32, %c0_i32_0 : i32, i32, i32
  }
  func.func @transform_2(%arg0: i32) -> (i32, i32) {
    %c0_i32 = arith.constant 0 : i32
    %c0_i32_0 = arith.constant 0 : i32
    %c0_i32_1 = arith.constant 0 : i32
    return %c0_i32, %c0_i32_0 : i32, i32
  }
  func.func @transform_3(%arg0: i32) -> (i32, i32) {
    %c0_i32 = arith.constant 0 : i32
    %c0_i32_0 = arith.constant 0 : i32
    %c0_i32_1 = arith.constant 0 : i32
    return %c0_i32, %c0_i32_0 : i32, i32
  }
  func.func @transform_4(%arg0: i32) -> (i32, i32, i32) {
    %c0_i32 = arith.constant 0 : i32
    %c0_i32_0 = arith.constant 0 : i32
    %c0_i32_1 = arith.constant 0 : i32
    return %arg0, %c0_i32, %c0_i32_0 : i32, i32, i32
  }
}

</mosaic_0001>

<llo_original>
// kernel: dgcnn_forward.1
$region0: #{dgcnn_forward.1}
  #allocation0 [shape = 'u32[]', space=smem, size = 0x4, offset = 0x4, fixed_abs, tag = 'smem constant byte address 0x4 - core index']
  #allocation1 [shape = 'u32[144,128]{1,0:T(1,128)}', space=vmem, size = 0x12000, scoped, tag = 'internal scratch']
  %s0 = inlined_call_operand.vmem [shape: f32[4,32,32], index: 0, kind: input, shape index: {}]
  %s1 = inlined_call_operand.vmem [shape: f32[4,32,48], index: 1, kind: input, shape index: {}]
  %s2 = inlined_call_operand.vmem [shape: f32[800,32], index: 2, kind: input, shape index: {}]
  %s3 = inlined_call_operand.vmem [shape: f32[272,128], index: 3, kind: input, shape index: {}]
  %s4 = inlined_call_operand.vmem [shape: f32[4,1,1], index: 4, kind: output, shape index: {}]
  %s5 = sld [smem:[#allocation0]]
  $region49: #{dgcnn_forward.1} parent=0
    _
  %s7 = ssub.s32 1, %s5
  %s8 = scalar_select 0, %s7, %s5
  loop: start=0, step=1, limit=4
  $region2: #{dgcnn_forward.1} parent=0 // loop_pre_header
    _
  $region3: #{dgcnn_forward.1} parent=0 // loop_header
    %s10 = sphi 0, %s14
    %p11 = scmp.ge.s32.totalorder %s10, 4
    %s20 = sphi 0, %s22
    %s23 = sphi 0, %s20
    %s24 = sphi 0, %s23
    %s40 = sphi 0, %s24
    %s46 = sphi 0, %s48
    %s49 = sphi 0, %s46
    %s50 = sphi 0, %s49
    %s66 = sphi 0, %s50
    %s70 = sphi 0, %s70
    %s72 = sphi 0, %s70
    %s73 = sphi 0, %s72
    %s87 = sphi 0, %s73
    %s91 = sphi 0, %s91
    %s93 = sphi 0, %s91
    %s94 = sphi 0, %s93
    %s108 = sphi 0, %s94
    %s114 = sphi 0, %s116
    %s117 = sphi 0, %s114
    %s118 = sphi 0, %s117
    %s134 = sphi 0, %s118
  $region4: #{dgcnn_forward.1} parent=0 // loop_header_branch
    %13 = sbr.rel (%p11) target = $region8
  $region5: #{dgcnn_forward.1} parent=0 // loop_body
    %s15 = ssub.s32 %s10, 1
    %s16 = ssub.s32 %s10, 2
    %s17 = sadd.s32 %s10, 1
    %s18 = ssub.s32 %s10, %s17
    %p19 = scmp.eq.s32.totalorder %s18, 0
    %s21 = sadd.s32 %s20, 1
    %s22 = scalar_select %p19, %s20, %s21
    %p25 = pneg %p19
    %p26 = scmp.eq.s32.totalorder %s10, 1
    %p27 = por %p25, %p26
    %p28 = scmp.ne.s32.totalorder %s20, %s23
    %p29 = scmp.eq.s32.totalorder %s10, 0
    %p30 = por %p28, %p29
    %p31 = scmp.ne.s32.totalorder %s20, %s23
    %p32 = scmp.eq.s32.totalorder %s15, 1
    %p33 = por %p31, %p32
    %p34 = scmp.ne.s32.totalorder %s23, %s24
    %p35 = scmp.eq.s32.totalorder %s15, 0
    %p36 = por %p34, %p35
    %p37 = scmp.ne.s32.totalorder %s23, %s24
    %p38 = scmp.eq.s32.totalorder %s16, 1
    %p39 = por %p37, %p38
    %p41 = scmp.ne.s32.totalorder %s24, %s40
    %p42 = scmp.eq.s32.totalorder %s16, 0
    %p43 = por %p41, %p42
    %s44 = ssub.s32 %s10, %s17
    %p45 = scmp.eq.s32.totalorder %s44, 0
    %s47 = sadd.s32 %s46, 1
    %s48 = scalar_select %p45, %s46, %s47
    %p51 = pneg %p45
    %p52 = scmp.eq.s32.totalorder %s10, 1
    %p53 = por %p51, %p52
    %p54 = scmp.ne.s32.totalorder %s46, %s49
    %p55 = scmp.eq.s32.totalorder %s10, 0
    %p56 = por %p54, %p55
    %p57 = scmp.ne.s32.totalorder %s46, %s49
    %p58 = scmp.eq.s32.totalorder %s15, 1
    %p59 = por %p57, %p58
    %p60 = scmp.ne.s32.totalorder %s49, %s50
    %p61 = scmp.eq.s32.totalorder %s15, 0
    %p62 = por %p60, %p61
    %p63 = scmp.ne.s32.totalorder %s49, %s50
    %p64 = scmp.eq.s32.totalorder %s16, 1
    %p65 = por %p63, %p64
    %p67 = scmp.ne.s32.totalorder %s50, %s66
    %p68 = scmp.eq.s32.totalorder %s16, 0
    %p69 = por %p67, %p68
    %s71 = sadd.s32 %s70, 1
    %p74 = scmp.eq.s32.totalorder %s10, 1
    %p75 = scmp.ne.s32.totalorder %s70, %s72
    %p76 = scmp.eq.s32.totalorder %s10, 0
    %p77 = por %p75, %p76
    %p78 = scmp.ne.s32.totalorder %s70, %s72
    %p79 = scmp.eq.s32.totalorder %s15, 1
    %p80 = por %p78, %p79
    %p81 = scmp.ne.s32.totalorder %s72, %s73
    %p82 = scmp.eq.s32.totalorder %s15, 0
    %p83 = por %p81, %p82
    %p84 = scmp.ne.s32.totalorder %s72, %s73
    %p85 = scmp.eq.s32.totalorder %s16, 1
    %p86 = por %p84, %p85
    %p88 = scmp.ne.s32.totalorder %s73, %s87
    %p89 = scmp.eq.s32.totalorder %s16, 0
    %p90 = por %p88, %p89
    %s92 = sadd.s32 %s91, 1
    %p95 = scmp.eq.s32.totalorder %s10, 1
    %p96 = scmp.ne.s32.totalorder %s91, %s93
    %p97 = scmp.eq.s32.totalorder %s10, 0
    %p98 = por %p96, %p97
    %p99 = scmp.ne.s32.totalorder %s91, %s93
    %p100 = scmp.eq.s32.totalorder %s15, 1
    %p101 = por %p99, %p100
    %p102 = scmp.ne.s32.totalorder %s93, %s94
    %p103 = scmp.eq.s32.totalorder %s15, 0
    %p104 = por %p102, %p103
    %p105 = scmp.ne.s32.totalorder %s93, %s94
    %p106 = scmp.eq.s32.totalorder %s16, 1
    %p107 = por %p105, %p106
    %p109 = scmp.ne.s32.totalorder %s94, %s108
    %p110 = scmp.eq.s32.totalorder %s16, 0
    %p111 = por %p109, %p110
    %s112 = ssub.s32 %s10, %s17
    %p113 = scmp.eq.s32.totalorder %s112, 0
    %s115 = sadd.s32 %s114, 1
    %s116 = scalar_select %p113, %s114, %s115
    %p119 = pneg %p113
    %p120 = scmp.eq.s32.totalorder %s10, 1
    %p121 = por %p119, %p120
    %p122 = scmp.ne.s32.totalorder %s114, %s117
    %p123 = scmp.eq.s32.totalorder %s10, 0
    %p124 = por %p122, %p123
    %p125 = scmp.ne.s32.totalorder %s114, %s117
    %p126 = scmp.eq.s32.totalorder %s15, 1
    %p127 = por %p125, %p126
    %p128 = scmp.ne.s32.totalorder %s117, %s118
    %p129 = scmp.eq.s32.totalorder %s15, 0
    %p130 = por %p128, %p129
    %p131 = scmp.ne.s32.totalorder %s117, %s118
    %p132 = scmp.eq.s32.totalorder %s16, 1
    %p133 = por %p131, %p132
    %p135 = scmp.ne.s32.totalorder %s118, %s134
    %p136 = scmp.eq.s32.totalorder %s16, 0
    %p137 = por %p135, %p136
    %p138 = scmp.le.s32.totalorder 1, %s10
    %p139 = scmp.lt.s32.totalorder %s10, 3
    %p140 = pnand %p138, %p139
    %p141 = pneg %p140
    // Predicated region
    $region9: #{dgcnn_forward.1} parent=5 // pred_check
      _
    $region10: #{dgcnn_forward.1} parent=5 // pred_check_branch
      %143 = sbr.rel (%p140) target = $region12
    $region11: #{dgcnn_forward.1} parent=5 // pred_region
      %s144 = ssub.s32 %s10, 1
      // Predicated region
      $region13: #{dgcnn_forward.1} parent=11 // pred_check
        %p145 = pneg %p83
      $region14: #{dgcnn_forward.1} parent=11 // pred_check_branch
        %147 = sbr.rel (%p145) target = $region16
      $region15: #{dgcnn_forward.1} parent=11 // pred_region
        _
      $region16: #{dgcnn_forward.1} parent=11 // pred_fallthru
        _
      // Predicated region
      $region17: #{dgcnn_forward.1} parent=11 // pred_check
        %p148 = pneg %p104
      $region18: #{dgcnn_forward.1} parent=11 // pred_check_branch
        %150 = sbr.rel (%p148) target = $region20
      $region19: #{dgcnn_forward.1} parent=11 // pred_region
        _
      $region20: #{dgcnn_forward.1} parent=11 // pred_fallthru
        _
    $region12: #{dgcnn_forward.1} parent=5 // pred_fallthru
      _
    %p151 = scmp.lt.s32.totalorder %s10, 2
    // Predicated region
    $region21: #{dgcnn_forward.1} parent=5 // pred_check
      %p152 = pneg %p151
    $region22: #{dgcnn_forward.1} parent=5 // pred_check_branch
      %154 = sbr.rel (%p152) target = $region24
    $region23: #{dgcnn_forward.1} parent=5 // pred_region
      // Predicated region
      $region25: #{dgcnn_forward.1} parent=23 // pred_check
        %p155 = pneg %p30
      $region26: #{dgcnn_forward.1} parent=23 // pred_check_branch
        %157 = sbr.rel (%p155) target = $region28
      $region27: #{dgcnn_forward.1} parent=23 // pred_region
        %s158 = smul.u32 2, %s10
        %p159 = scmp.lt.s32.totalorder %s158, 3
        %s160 = scalar_select %p159, %s158, 3
        %s161 = smul.addr %s160, 4
        %s162 = smul.addr %s161, 8
        %s163 = scalar_lea.vmem %s0, %s162
        %s164 = smul.u32 2, %s10
      $region28: #{dgcnn_forward.1} parent=23 // pred_fallthru
        _
      // Predicated region
      $region29: #{dgcnn_forward.1} parent=23 // pred_check
        %p165 = pneg %p56
      $region30: #{dgcnn_forward.1} parent=23 // pred_check_branch
        %167 = sbr.rel (%p165) target = $region32
      $region31: #{dgcnn_forward.1} parent=23 // pred_region
        %s168 = smul.u32 2, %s10
        %p169 = scmp.lt.s32.totalorder %s168, 3
        %s170 = scalar_select %p169, %s168, 3
        %s171 = smul.addr %s170, 4
        %s172 = smul.addr %s171, 8
        %s173 = scalar_lea.vmem %s1, %s172
        %s174 = smul.u32 2, %s10
      $region32: #{dgcnn_forward.1} parent=23 // pred_fallthru
        _
    $region24: #{dgcnn_forward.1} parent=5 // pred_fallthru
      _
    %p175 = scmp.le.s32.totalorder 1, %s10
    %p176 = scmp.lt.s32.totalorder %s10, 3
    %p177 = pnand %p175, %p176
    %p178 = pneg %p177
    // Predicated region
    $region33: #{dgcnn_forward.1} parent=5 // pred_check
      _
    $region34: #{dgcnn_forward.1} parent=5 // pred_check_branch
      %180 = sbr.rel (%p177) target = $region36
    $region35: #{dgcnn_forward.1} parent=5 // pred_region
      %s181 = ssub.s32 %s10, 1
      %s182 = smul.u32 2, %s15
      %p183 = scmp.lt.s32.totalorder %s182, 3
      %s184 = scalar_select %p183, %s182, 3
      %s185 = smul.addr %s184, 4
      %s186 = smul.addr %s185, 8
      %s187 = scalar_lea.vmem %s0, %s186
      %p188 = pneg %p36
      %p189 = pneg %p33
      %s190 = smul.u32 2, %s15
      %p191 = scmp.lt.s32.totalorder %s190, 3
      %s192 = scalar_select %p191, %s190, 3
      %s193 = smul.addr %s192, 4
      %s194 = smul.addr %s193, 8
      %s195 = scalar_lea.vmem %s1, %s194
      %p196 = pneg %p62
      %p197 = pneg %p59
      %p198 = pneg %p83
      %p199 = pneg %p80
      %p200 = pneg %p104
      %p201 = pneg %p101
      %p202 = pneg %p130
      %p203 = pneg %p127
      %s204 = smul.u32 2, %s15
      %p205 = scmp.lt.s32.totalorder %s204, 3
      %s206 = scalar_select %p205, %s204, 3
      %s207 = scalar_lea.vmem %s4, %s206
      %s208 = smul.u32 2, %s15
      %p209 = scmp.lt.s32.totalorder %s208, 3
      %s210 = scalar_select %p209, %s208, 3
      %s211 = smul.addr %s210, 4
      %s212 = smul.addr %s211, 8
      %s213 = scalar_lea.vmem %s0, %s212
      %s214 = smul.u32 2, %s15
      %s215 = smul.u32 2, %s15
      %p216 = scmp.lt.s32.totalorder %s215, 3
      %s217 = scalar_select %p216, %s215, 3
      %s218 = smul.addr %s217, 4
      %s219 = smul.addr %s218, 8
      %s220 = scalar_lea.vmem %s1, %s219
      %s221 = smul.u32 2, %s15
      %s222 = smul.u32 2, %s15
      %p223 = scmp.lt.s32.totalorder %s222, 3
      %s224 = scalar_select %p223, %s222, 3
      %s225 = scalar_lea.vmem %s4, %s224
      %s226 = smul.u32 2, %s15
      %v227 = vlaneseq
      %v228 = vshrl.u32 %v227, 7
      %v229 = vadd.s32 %v228, 8
      %v230 = vadd.s32 %v228, 16
      %v231 = vadd.s32 %v228, 24
      %v232 = vlaneseq
      %v233 = vand.u32 %v232, 127
      %vm234 = vcmp.eq.s32.totalorder %v228, %v233
      %vm235 = vcmp.eq.s32.totalorder %v229, %v233
      %vm236 = vcmp.eq.s32.totalorder %v230, %v233
      %vm237 = vcmp.eq.s32.totalorder %v231, %v233
      %v238 = vsel %vm234, 1, 0
      %v239 = vsel %vm235, 1, 0
      %v240 = vsel %vm236, 1, 0
      %v241 = vsel %vm237, 1, 0
      %v242 = vcvt.s32.f32 %v238
      %v243 = vcvt.s32.f32 %v239
      %v244 = vcvt.s32.f32 %v240
      %v245 = vcvt.s32.f32 %v241
      %vm246 = vcmp.lt.s32.totalorder %v228, %v233
      %vm247 = vcmp.lt.s32.totalorder %v229, %v233
      %vm248 = vcmp.lt.s32.totalorder %v230, %v233
      %vm249 = vcmp.lt.s32.totalorder %v231, %v233
      %vm250 = vcmp.lt.s32.totalorder %v228, 8
      %vm251 = vcmp.lt.s32.totalorder %v229, 8
      %v252 = vmul.u32 %v228, 2
      %v253 = vmul.u32 %v229, 2
      %v254 = vsub.s32 %v228, 8
      %v255 = vmul.u32 %v254, 2
      %v256 = vadd.s32 %v255, 1
      %v257 = vadd.s32 %v252, 1
      %v258 = vsel %vm250, %v252, %v256
      %v259 = vsel %vm251, %v253, %v257
      %v260 = vcvt.s32.f32 %v258
      %v261 = vcvt.s32.f32 %v259
      %v262 = vld [vmem:[%s2] sm:$0xff]
      %v263 = vld [vmem:[%s2 + $0x8] sm:$0xff]
      %v264 = vld [vmem:[%s2 + $0x10] sm:$0xff]
      %v265 = vld [vmem:[%s2 + $0x18] sm:$0xff]
      %v266 = vld [vmem:[%s2 + $0x20] sm:$0xff]
      %v267 = vld [vmem:[%s2 + $0x28] sm:$0xff]
      %v268 = vld [vmem:[%s2 + $0x30] sm:$0x1]
      %v269 = vld [vmem:[%s2 + $0x38] sm:$0xff]
      %v270 = vld [vmem:[%s2 + $0x40] sm:$0xff]
      %v271 = vld [vmem:[%s2 + $0x48] sm:$0xff]
      %v272 = vld [vmem:[%s2 + $0x50] sm:$0xff]
      %v273 = vld [vmem:[%s2 + $0x58] sm:$0x1]
      %v274 = vld [vmem:[%s2 + $0x60] sm:$0xff]
      %v275 = vld [vmem:[%s2 + $0x68] sm:$0xff]
      %v276 = vld [vmem:[%s2 + $0x70] sm:$0xff]
      %v277 = vld [vmem:[%s2 + $0x78] sm:$0xff]
      %v278 = vld [vmem:[%s2 + $0x80] sm:$0x1]
      %v279 = vld [vmem:[%s2 + $0x88] sm:$0xff]
      %v280 = vld [vmem:[%s2 + $0x90] sm:$0xff]
      %v281 = vld [vmem:[%s2 + $0x98] sm:$0xff]
      %v282 = vld [vmem:[%s2 + $0xa0] sm:$0xff]
      %v283 = vld [vmem:[%s2 + $0xa8] sm:$0x1]
      %v284 = vld [vmem:[%s2 + $0xb0] sm:$0xff]
      %v285 = vld [vmem:[%s2 + $0xb8] sm:$0xff]
      %v286 = vld [vmem:[%s2 + $0xc0] sm:$0xff]
      %v287 = vld [vmem:[%s2 + $0xc8] sm:$0xff]
      %v288 = vld [vmem:[%s2 + $0xd0] sm:$0x1]
      %v289 = vld [vmem:[%s2 + $0xd8] sm:$0xff]
      %v290 = vld [vmem:[%s2 + $0xe0] sm:$0xff]
      %v291 = vld [vmem:[%s2 + $0xe8] sm:$0xff]
      %v292 = vld [vmem:[%s2 + $0xf0] sm:$0xff]
      %v293 = vld [vmem:[%s2 + $0xf8] sm:$0x1]
      %v294 = vld [vmem:[%s2 + $0x100] sm:$0xff]
      %v295 = vld [vmem:[%s2 + $0x108] sm:$0xff]
      %v296 = vld [vmem:[%s2 + $0x110] sm:$0xff]
      %v297 = vld [vmem:[%s2 + $0x118] sm:$0xff]
      %v298 = vld [vmem:[%s2 + $0x120] sm:$0x1]
      %v299 = vld [vmem:[%s2 + $0x128] sm:$0xff]
      %v300 = vld [vmem:[%s2 + $0x130] sm:$0xff]
      %v301 = vld [vmem:[%s2 + $0x138] sm:$0xff]
      %v302 = vld [vmem:[%s2 + $0x140] sm:$0xff]
      %v303 = vld [vmem:[%s2 + $0x148] sm:$0x1]
      %v304 = vld [vmem:[%s2 + $0x150] sm:$0xff]
      %v305 = vld [vmem:[%s2 + $0x158] sm:$0xff]
      %v306 = vld [vmem:[%s2 + $0x160] sm:$0xff]
      %v307 = vld [vmem:[%s2 + $0x168] sm:$0xff]
      %v308 = vld [vmem:[%s2 + $0x170] sm:$0x1]
      %v309 = vld [vmem:[%s2 + $0x178] sm:$0xff]
      %v310 = vld [vmem:[%s2 + $0x180] sm:$0xff]
      %v311 = vld [vmem:[%s2 + $0x188] sm:$0xff]
      %v312 = vld [vmem:[%s2 + $0x190] sm:$0xff]
      %v313 = vld [vmem:[%s2 + $0x198] sm:$0x1]
      %v314 = vld [vmem:[%s2 + $0x1a0] sm:$0xff]
      %v315 = vld [vmem:[%s2 + $0x1a8] sm:$0xff]
      %v316 = vld [vmem:[%s2 + $0x1b0] sm:$0xff]
      %v317 = vld [vmem:[%s2 + $0x1b8] sm:$0xff]
      %v318 = vld [vmem:[%s2 + $0x1c0] sm:$0x1]
      %v319 = vld [vmem:[%s2 + $0x1c8] sm:$0xff]
      %v320 = vld [vmem:[%s2 + $0x1d0] sm:$0xff]
      %v321 = vld [vmem:[%s2 + $0x1d8] sm:$0xff]
      %v322 = vld [vmem:[%s2 + $0x1e0] sm:$0xff]
      %v323 = vld [vmem:[%s2 + $0x1e8] sm:$0x1]
      %v324 = vld [vmem:[%s2 + $0x1f0] sm:$0xff]
      %v325 = vld [vmem:[%s2 + $0x1f8] sm:$0xff]
      %v326 = vld [vmem:[%s2 + $0x200] sm:$0xff]
      %v327 = vld [vmem:[%s2 + $0x208] sm:$0xff]
      %v328 = vld [vmem:[%s2 + $0x210] sm:$0xff]
      %v329 = vld [vmem:[%s2 + $0x218] sm:$0xff]
      %v330 = vld [vmem:[%s2 + $0x220] sm:$0xff]
      %v331 = vld [vmem:[%s2 + $0x228] sm:$0xff]
      %v332 = vld [vmem:[%s2 + $0x230] sm:$0xff]
      %v333 = vld [vmem:[%s2 + $0x238] sm:$0xff]
      %v334 = vld [vmem:[%s2 + $0x240] sm:$0xff]
      %v335 = vld [vmem:[%s2 + $0x248] sm:$0xff]
      %v336 = vld [vmem:[%s2 + $0x250] sm:$0xff]
      %v337 = vld [vmem:[%s2 + $0x258] sm:$0xff]
      %v338 = vld [vmem:[%s2 + $0x260] sm:$0xff]
      %v339 = vld [vmem:[%s2 + $0x268] sm:$0xff]
      %v340 = vld [vmem:[%s2 + $0x270] sm:$0x1]
      %v341 = vld [vmem:[%s2 + $0x278] sm:$0xff]
      %v342 = vld [vmem:[%s2 + $0x280] sm:$0xff]
      %v343 = vld [vmem:[%s2 + $0x288] sm:$0xff]
      %v344 = vld [vmem:[%s2 + $0x290] sm:$0xff]
      %v345 = vld [vmem:[%s2 + $0x298] sm:$0xff]
      %v346 = vld [vmem:[%s2 + $0x2a0] sm:$0xff]
      %v347 = vld [vmem:[%s2 + $0x2a8] sm:$0xff]
      %v348 = vld [vmem:[%s2 + $0x2b0] sm:$0xff]
      %v349 = vld [vmem:[%s2 + $0x2b8] sm:$0xff]
      %v350 = vld [vmem:[%s2 + $0x2c0] sm:$0xff]
      %v351 = vld [vmem:[%s2 + $0x2c8] sm:$0xff]
      %v352 = vld [vmem:[%s2 + $0x2d0] sm:$0xff]
      %v353 = vld [vmem:[%s2 + $0x2d8] sm:$0xff]
      %v354 = vld [vmem:[%s2 + $0x2e0] sm:$0xff]
      %v355 = vld [vmem:[%s2 + $0x2e8] sm:$0xff]
      %v356 = vld [vmem:[%s2 + $0x2f0] sm:$0xff]
      %v357 = vld [vmem:[%s2 + $0x2f8] sm:$0xff]
      %v358 = vld [vmem:[%s2 + $0x300] sm:$0xff]
      %v359 = vld [vmem:[%s2 + $0x308] sm:$0xff]
      %v360 = vld [vmem:[%s2 + $0x310] sm:$0xff]
      %v361 = vld [vmem:[%s2 + $0x318] sm:$0x1]
      %v362 = vld [vmem:[%s3] sm:$0xff]
      %v363 = vld [vmem:[%s3 + $0x8] sm:$0xff]
      %v364 = vld [vmem:[%s3 + $0x10] sm:$0xff]
      %v365 = vld [vmem:[%s3 + $0x18] sm:$0xff]
      %v366 = vld [vmem:[%s3 + $0x20] sm:$0xff]
      %v367 = vld [vmem:[%s3 + $0x28] sm:$0xff]
      %v368 = vld [vmem:[%s3 + $0x30] sm:$0xff]
      %v369 = vld [vmem:[%s3 + $0x38] sm:$0xff]
      %v370 = vld [vmem:[%s3 + $0x40] sm:$0xff]
      %v371 = vld [vmem:[%s3 + $0x48] sm:$0xff]
      %v372 = vld [vmem:[%s3 + $0x50] sm:$0xff]
      %v373 = vld [vmem:[%s3 + $0x58] sm:$0xff]
      %v374 = vld [vmem:[%s3 + $0x60] sm:$0xff]
      %v375 = vld [vmem:[%s3 + $0x68] sm:$0xff]
      %v376 = vld [vmem:[%s3 + $0x70] sm:$0xff]
      %v377 = vld [vmem:[%s3 + $0x78] sm:$0xff]
      %v378 = vld [vmem:[%s3 + $0x80] sm:$0x1]
      %v379 = vld [vmem:[%s3 + $0x88] sm:$0xff]
      %v380 = vld [vmem:[%s3 + $0x90] sm:$0xff]
      %v381 = vld [vmem:[%s3 + $0x98] sm:$0xff]
      %v382 = vld [vmem:[%s3 + $0xa0] sm:$0xff]
      %v383 = vld [vmem:[%s3 + $0xa8] sm:$0xff]
      %v384 = vld [vmem:[%s3 + $0xb0] sm:$0xff]
      %v385 = vld [vmem:[%s3 + $0xb8] sm:$0xff]
      %v386 = vld [vmem:[%s3 + $0xc0] sm:$0xff]
      %v387 = vld [vmem:[%s3 + $0xc8] sm:$0xff]
      %v388 = vld [vmem:[%s3 + $0xd0] sm:$0xff]
      %v389 = vld [vmem:[%s3 + $0xd8] sm:$0xff]
      %v390 = vld [vmem:[%s3 + $0xe0] sm:$0xff]
      %v391 = vld [vmem:[%s3 + $0xe8] sm:$0xff]
      %v392 = vld [vmem:[%s3 + $0xf0] sm:$0xff]
      %v393 = vld [vmem:[%s3 + $0xf8] sm:$0xff]
      %v394 = vld [vmem:[%s3 + $0x100] sm:$0xff]
      %v395 = vld [vmem:[%s3 + $0x108] sm:$0x1]
      %v396 = vld [vmem:[%s213] sm:$0xff]
      %v397 = vld [vmem:[%s213 + $0x8] sm:$0xff]
      %v398 = vld [vmem:[%s213 + $0x10] sm:$0xff]
      %v399 = vld [vmem:[%s213 + $0x18] sm:$0xff]
      %v400 = vadd.f32 %v396, %v242
      %v401 = vadd.f32 %v397, %v243
      %v402 = vadd.f32 %v398, %v244
      %v403 = vadd.f32 %v399, %v245
      %vm404 = vcmask 261120
      %v405 = vsel %vm404, %v400, 0.0
      %406 = vadd.xlane.f32.xlu0 %v405
      %v407 = vpop.xlane.xlu0 %406
      %v408 = vsel %vm404, %v401, 0.0
      %409 = vadd.xlane.f32.xlu0 %v408
      %v410 = vpop.xlane.xlu0 %409
      %v411 = vsel %vm404, %v402, 0.0
      %412 = vadd.xlane.f32.xlu0 %v411
      %v413 = vpop.xlane.xlu0 %412
      %v414 = vsel %vm404, %v403, 0.0
      %415 = vadd.xlane.f32.xlu0 %v414
      %v416 = vpop.xlane.xlu0 %415
      %v417 = vadd.f32 %v405, %v408
      %v418 = vadd.f32 %v417, %v411
      %v419 = vadd.f32 %v418, %v414
      %v420 = vrot.slane %v419, 4
      %v421 = vadd.f32 %v419, %v420
      %v422 = vrot.slane %v421, 2
      %v423 = vadd.f32 %v421, %v422
      %v424 = vrot.slane %v423, 1
      %v425 = vadd.f32 %v423, %v424
      %v426 = vrsqrt.pop %v407
      %v427 = vrsqrt.pop %v410
      %v428 = vrsqrt.pop %v413
      %v429 = vrsqrt.pop %v416
      %v430 = vmul.f32 %v400, %v426
      %v431 = vmul.f32 %v401, %v427
      %v432 = vmul.f32 %v402, %v428
      %v433 = vmul.f32 %v403, %v429
      %v434 = vrsqrt.pop %v425
      %v435 = vmul.f32 %v430, %v434
      %v436 = vmul.f32 %v431, %v434
      %v437 = vmul.f32 %v432, %v434
      %v438 = vmul.f32 %v433, %v434
      %v439 = vld [vmem:[%s220] sm:$0xff]
      %v440 = vld [vmem:[%s220 + $0x8] sm:$0xff]
      %v441 = vld [vmem:[%s220 + $0x10] sm:$0xff]
      %v442 = vld [vmem:[%s220 + $0x18] sm:$0xff]
      %vm443 = vcmask 392192
      %v445 = vsel %vm443, %v439, 0
      %v448 = vsel %vm443, %v440, 0
      %v451 = vsel %vm443, %v441, 0
      %v454 = vsel %vm443, %v442, 0
      %456 = vmatprep.subr.mxu0 0.0
      %457 = vmatpush1.msra.mxu0 %v262
      %458 = vmatprep.subr.mxu0 0.0
      %459 = vmatpush1.msra.mxu0 %v263
      %460 = vmatprep.subr.mxu0 0.0
      %461 = vmatpush1.msra.mxu0 %v264
      %462 = vmatprep.subr.mxu0 0.0
      %463 = vmatpush1.msra.mxu0 %v265
      %464 = vmatprep.subr.mxu0 0.0
      %465 = vmatpush1.msra.mxu0 %v266
      %466 = vmatprep.subr.mxu0 0.0
      %467 = vmatpush1.msra.mxu0 %v267
      %468 = vmatprep.subr.mxu0 0.0
      %469 = vmatpush1.msra.mxu0 0.0
      %470 = vmatprep.subr.mxu0 0.0
      %471 = vmatpush1.msra.mxu0 0.0
      %472 = vmatprep.subr.mxu0 0.0
      %473 = vmatpush1.msra.mxu0 0.0
      %474 = vmatprep.subr.mxu0 0.0
      %475 = vmatpush1.msra.mxu0 0.0
      %476 = vmatprep.subr.mxu0 0.0
      %477 = vmatpush1.msra.mxu0 0.0
      %478 = vmatprep.subr.mxu0 0.0
      %479 = vmatpush1.msra.mxu0 0.0
      %480 = vmatprep.subr.mxu0 0.0
      %481 = vmatpush1.msra.mxu0 0.0
      %482 = vmatprep.subr.mxu0 0.0
      %483 = vmatpush1.msra.mxu0 0.0
      %484 = vmatprep.subr.mxu0 0.0
      %485 = vmatpush1.msra.mxu0 0.0
      %486 = vmatprep.subr.mxu0 0.0
      %487 = vmatpush1.msra.mxu0 0.0
      %488 = vmatprep.subr.mxu0 0.0
      %489 = vmatpush1.msra.mxu0 0.0
      %490 = vmatprep.subr.mxu0 0.0
      %491 = vmatpush1.msra.mxu0 0.0
      %492 = vmatprep.subr.mxu0 0.0
      %493 = vmatpush1.msra.mxu0 0.0
      %494 = vmatprep.subr.mxu0 0.0
      %495 = vmatpush1.msra.mxu0 0.0
      %496 = vmatprep.subr.mxu0 0.0
      %497 = vmatpush1.msra.mxu0 0.0
      %498 = vmatprep.subr.mxu0 0.0
      %499 = vmatpush1.msra.mxu0 0.0
      %500 = vmatprep.subr.mxu0 0.0
      %501 = vmatpush1.msra.mxu0 0.0
      %502 = vmatprep.subr.mxu0 0.0
      %503 = vmatpush1.msra.mxu0 0.0
      %504 = vmatprep.subr.mxu0 0.0
      %505 = vmatpush1.msra.mxu0 0.0
      %506 = vmatprep.subr.mxu0 0.0
      %507 = vmatpush1.msra.mxu0 0.0
      %508 = vmatprep.subr.mxu0 0.0
      %509 = vmatpush1.msra.mxu0 0.0
      %510 = vmatprep.subr.mxu0 0.0
      %511 = vmatpush1.msra.mxu0 0.0
      %512 = vmatprep.subr.mxu0 0.0
      %513 = vmatpush1.msra.mxu0 0.0
      %514 = vmatprep.subr.mxu0 0.0
      %515 = vmatpush1.msra.mxu0 0.0
      %516 = vmatprep.subr.mxu0 0.0
      %517 = vmatpush1.msra.mxu0 0.0
      %518 = vmatprep.subr.mxu0 0.0
      %519 = vmatpush1.msra.mxu0 0.0
      %520 = vmatprep.mubr.f32.mxu0 0.0
      %521 = vmatmul.mubr.f32.gmra.mrb[0].mxu0 %v445
      %v522 = vpop.f32.mrb[0].mxu0
      %v523 = vadd.f32 0.0, %v522
      %v524 = vpop.f32.mrb[0].mxu0
      %525 = vmatprep.mubr.f32.mxu0 0.0
      %526 = vmatmul.mubr.f32.gmra.mrb[0].mxu0 %v448
      %v527 = vpop.f32.mrb[0].mxu0
      %v528 = vadd.f32 0.0, %v527
      %v529 = vpop.f32.mrb[0].mxu0
      %530 = vmatprep.mubr.f32.mxu0 0.0
      %531 = vmatmul.mubr.f32.gmra.mrb[0].mxu0 %v451
      %v532 = vpop.f32.mrb[0].mxu0
      %v533 = vadd.f32 0.0, %v532
      %v534 = vpop.f32.mrb[0].mxu0
      %535 = vmatprep.mubr.f32.mxu0 0.0
      %536 = vmatmul.mubr.f32.gmra.mrb[0].mxu0 %v454
      %v537 = vpop.f32.mrb[0].mxu0
      %v538 = vadd.f32 0.0, %v537
      %v539 = vpop.f32.mrb[0].mxu0
      %540 = vdwg.mxu0
      %v541 = vlaneseq
      %v542 = vshrl.u32 %v541, 7
      %v543 = vsub.s32 0, %v542
      %v544 = vrot.slane %v268, %v543
      %v546 = vsel %vm404, %v435, 0
      %v549 = vsel %vm404, %v436, 0
      %v552 = vsel %vm404, %v437, 0
      %v555 = vsel %vm404, %v438, 0
      %557 = vmatprep.subr.mxu0 0.0
      %558 = vmatpush1.msra.mxu0 %v523
      %559 = vmatprep.subr.mxu0 0.0
      %560 = vmatpush1.msra.mxu0 %v528
      %561 = vmatprep.subr.mxu0 0.0
      %562 = vmatpush1.msra.mxu0 %v533
      %563 = vmatprep.subr.mxu0 0.0
      %564 = vmatpush1.msra.mxu0 %v538
      %565 = vmatprep.subr.mxu0 0.0
      %566 = vmatpush1.msra.mxu0 0.0
      %567 = vmatprep.subr.mxu0 0.0
      %568 = vmatpush1.msra.mxu0 0.0
      %569 = vmatprep.subr.mxu0 0.0
      %570 = vmatpush1.msra.mxu0 0.0
      %571 = vmatprep.subr.mxu0 0.0
      %572 = vmatpush1.msra.mxu0 0.0
      %573 = vmatprep.subr.mxu0 0.0
      %574 = vmatpush1.msra.mxu0 0.0
      %575 = vmatprep.subr.mxu0 0.0
      %576 = vmatpush1.msra.mxu0 0.0
      %577 = vmatprep.subr.mxu0 0.0
      %578 = vmatpush1.msra.mxu0 0.0
      %579 = vmatprep.subr.mxu0 0.0
      %580 = vmatpush1.msra.mxu0 0.0
      %581 = vmatprep.subr.mxu0 0.0
      %582 = vmatpush1.msra.mxu0 0.0
      %583 = vmatprep.subr.mxu0 0.0
      %584 = vmatpush1.msra.mxu0 0.0
      %585 = vmatprep.subr.mxu0 0.0
      %586 = vmatpush1.msra.mxu0 0.0
      %587 = vmatprep.subr.mxu0 0.0
      %588 = vmatpush1.msra.mxu0 0.0
      %589 = vmatprep.subr.mxu0 0.0
      %590 = vmatpush1.msra.mxu0 0.0
      %591 = vmatprep.subr.mxu0 0.0
      %592 = vmatpush1.msra.mxu0 0.0
      %593 = vmatprep.subr.mxu0 0.0
      %594 = vmatpush1.msra.mxu0 0.0
      %595 = vmatprep.subr.mxu0 0.0
      %596 = vmatpush1.msra.mxu0 0.0
      %597 = vmatprep.subr.mxu0 0.0
      %598 = vmatpush1.msra.mxu0 0.0
      %599 = vmatprep.subr.mxu0 0.0
      %600 = vmatpush1.msra.mxu0 0.0
      %601 = vmatprep.subr.mxu0 0.0
      %602 = vmatpush1.msra.mxu0 0.0
      %603 = vmatprep.subr.mxu0 0.0
      %604 = vmatpush1.msra.mxu0 0.0
      %605 = vmatprep.subr.mxu0 0.0
      %606 = vmatpush1.msra.mxu0 0.0
      %607 = vmatprep.subr.mxu0 0.0
      %608 = vmatpush1.msra.mxu0 0.0
      %609 = vmatprep.subr.mxu0 0.0
      %610 = vmatpush1.msra.mxu0 0.0
      %611 = vmatprep.subr.mxu0 0.0
      %612 = vmatpush1.msra.mxu0 0.0
      %613 = vmatprep.subr.mxu0 0.0
      %614 = vmatpush1.msra.mxu0 0.0
      %615 = vmatprep.subr.mxu0 0.0
      %616 = vmatpush1.msra.mxu0 0.0
      %617 = vmatprep.subr.mxu0 0.0
      %618 = vmatpush1.msra.mxu0 0.0
      %619 = vmatprep.subr.mxu0 0.0
      %620 = vmatpush1.msra.mxu0 0.0
      %621 = vmatprep.mubr.f32.mxu0 0.0
      %622 = vmatmul.mubr.f32.gmra.mrb[0].mxu0 %v546
      %v623 = vpop.f32.mrb[0].mxu0
      %v624 = vadd.f32 %v544, %v623
      %v625 = vpop.f32.mrb[0].mxu0
      %626 = vmatprep.mubr.f32.mxu0 0.0
      %627 = vmatmul.mubr.f32.gmra.mrb[0].mxu0 %v549
      %v628 = vpop.f32.mrb[0].mxu0
      %v629 = vadd.f32 %v544, %v628
      %v630 = vpop.f32.mrb[0].mxu0
      %631 = vmatprep.mubr.f32.mxu0 0.0
      %632 = vmatmul.mubr.f32.gmra.mrb[0].mxu0 %v552
      %v633 = vpop.f32.mrb[0].mxu0
      %v634 = vadd.f32 %v544, %v633
      %v635 = vpop.f32.mrb[0].mxu0
      %636 = vmatprep.mubr.f32.mxu0 0.0
      %637 = vmatmul.mubr.f32.gmra.mrb[0].mxu0 %v555
      %v638 = vpop.f32.mrb[0].mxu0
      %v639 = vadd.f32 %v544, %v638
      %v640 = vpop.f32.mrb[0].mxu0
      %641 = vdwg.mxu0
      %v642 = vmax.f32 %v624, 0.0
      %v643 = vmax.f32 %v629, 0.0
      %v644 = vmax.f32 %v634, 0.0
      %v645 = vmax.f32 %v639, 0.0
      %v646 = vlaneseq
      %v647 = vshrl.u32 %v646, 7
      %v648 = vsub.s32 0, %v647
      %v649 = vrot.slane %v273, %v648
      %v651 = vsel %vm404, %v642, 0
      %v654 = vsel %vm404, %v643, 0
      %v657 = vsel %vm404, %v644, 0
      %v660 = vsel %vm404, %v645, 0
      %662 = vmatprep.subr.mxu0 0.0
      %663 = vmatpush1.msra.mxu0 %v269
      %664 = vmatprep.subr.mxu0 0.0
      %665 = vmatpush1.msra.mxu0 %v270
      %666 = vmatprep.subr.mxu0 0.0
      %667 = vmatpush1.msra.mxu0 %v271
      %668 = vmatprep.subr.mxu0 0.0
      %669 = vmatpush1.msra.mxu0 %v272
      %670 = vmatprep.subr.mxu0 0.0
      %671 = vmatpush1.msra.mxu0 0.0
      %672 = vmatprep.subr.mxu0 0.0
      %673 = vmatpush1.msra.mxu0 0.0
      %674 = vmatprep.subr.mxu0 0.0
      %675 = vmatpush1.msra.mxu0 0.0
      %676 = vmatprep.subr.mxu0 0.0
      %677 = vmatpush1.msra.mxu0 0.0
      %678 = vmatprep.subr.mxu0 0.0
      %679 = vmatpush1.msra.mxu0 0.0
      %680 = vmatprep.subr.mxu0 0.0
      %681 = vmatpush1.msra.mxu0 0.0
      %682 = vmatprep.subr.mxu0 0.0
      %683 = vmatpush1.msra.mxu0 0.0
      %684 = vmatprep.subr.mxu0 0.0
      %685 = vmatpush1.msra.mxu0 0.0
      %686 = vmatprep.subr.mxu0 0.0
      %687 = vmatpush1.msra.mxu0 0.0
      %688 = vmatprep.subr.mxu0 0.0
      %689 = vmatpush1.msra.mxu0 0.0
      %690 = vmatprep.subr.mxu0 0.0
      %691 = vmatpush1.msra.mxu0 0.0
      %692 = vmatprep.subr.mxu0 0.0
      %693 = vmatpush1.msra.mxu0 0.0
      %694 = vmatprep.subr.mxu0 0.0
      %695 = vmatpush1.msra.mxu0 0.0
      %696 = vmatprep.subr.mxu0 0.0
      %697 = vmatpush1.msra.mxu0 0.0
      %698 = vmatprep.subr.mxu0 0.0
      %699 = vmatpush1.msra.mxu0 0.0
      %700 = vmatprep.subr.mxu0 0.0
      %701 = vmatpush1.msra.mxu0 0.0
      %702 = vmatprep.subr.mxu0 0.0
      %703 = vmatpush1.msra.mxu0 0.0
      %704 = vmatprep.subr.mxu0 0.0
      %705 = vmatpush1.msra.mxu0 0.0
      %706 = vmatprep.subr.mxu0 0.0
      %707 = vmatpush1.msra.mxu0 0.0
      %708 = vmatprep.subr.mxu0 0.0
      %709 = vmatpush1.msra.mxu0 0.0
      %710 = vmatprep.subr.mxu0 0.0
      %711 = vmatpush1.msra.mxu0 0.0
      %712 = vmatprep.subr.mxu0 0.0
      %713 = vmatpush1.msra.mxu0 0.0
      %714 = vmatprep.subr.mxu0 0.0
      %715 = vmatpush1.msra.mxu0 0.0
      %716 = vmatprep.subr.mxu0 0.0
      %717 = vmatpush1.msra.mxu0 0.0
      %718 = vmatprep.subr.mxu0 0.0
      %719 = vmatpush1.msra.mxu0 0.0
      %720 = vmatprep.subr.mxu0 0.0
      %721 = vmatpush1.msra.mxu0 0.0
      %722 = vmatprep.subr.mxu0 0.0
      %723 = vmatpush1.msra.mxu0 0.0
      %724 = vmatprep.subr.mxu0 0.0
      %725 = vmatpush1.msra.mxu0 0.0
      %726 = vmatprep.mubr.f32.mxu0 0.0
      %727 = vmatmul.mubr.f32.gmra.mrb[0].mxu0 %v651
      %v728 = vpop.f32.mrb[0].mxu0
      %v729 = vadd.f32 %v649, %v728
      %v730 = vpop.f32.mrb[0].mxu0
      %731 = vmatprep.mubr.f32.mxu0 0.0
      %732 = vmatmul.mubr.f32.gmra.mrb[0].mxu0 %v654
      %v733 = vpop.f32.mrb[0].mxu0
      %v734 = vadd.f32 %v649, %v733
      %v735 = vpop.f32.mrb[0].mxu0
      %736 = vmatprep.mubr.f32.mxu0 0.0
      %737 = vmatmul.mubr.f32.gmra.mrb[0].mxu0 %v657
      %v738 = vpop.f32.mrb[0].mxu0
      %v739 = vadd.f32 %v649, %v738
      %v740 = vpop.f32.mrb[0].mxu0
      %741 = vmatprep.mubr.f32.mxu0 0.0
      %742 = vmatmul.mubr.f32.gmra.mrb[0].mxu0 %v660
      %v743 = vpop.f32.mrb[0].mxu0
      %v744 = vadd.f32 %v649, %v743
      %v745 = vpop.f32.mrb[0].mxu0
      %746 = vdwg.mxu0
      %v747 = vmax.f32 %v729, 0.0
      %v748 = vmax.f32 %v734, 0.0
      %v749 = vmax.f32 %v739, 0.0
      %v750 = vmax.f32 %v744, 0.0
      %v751 = vlaneseq
      %v752 = vshrl.u32 %v751, 7
      %v753 = vsub.s32 0, %v752
      %v754 = vrot.slane %v278, %v753
      %v756 = vsel %vm404, %v747, 0
      %v759 = vsel %vm404, %v748, 0
      %v762 = vsel %vm404, %v749, 0
      %v765 = vsel %vm404, %v750, 0
      %767 = vmatprep.subr.mxu0 0.0
      %768 = vmatpush1.msra.mxu0 %v274
      %769 = vmatprep.subr.mxu0 0.0
      %770 = vmatpush1.msra.mxu0 %v275
      %771 = vmatprep.subr.mxu0 0.0
      %772 = vmatpush1.msra.mxu0 %v276
      %773 = vmatprep.subr.mxu0 0.0
      %774 = vmatpush1.msra.mxu0 %v277
      %775 = vmatprep.subr.mxu0 0.0
      %776 = vmatpush1.msra.mxu0 0.0
      %777 = vmatprep.subr.mxu0 0.0
      %778 = vmatpush1.msra.mxu0 0.0
      %779 = vmatprep.subr.mxu0 0.0
      %780 = vmatpush1.msra.mxu0 0.0
      %781 = vmatprep.subr.mxu0 0.0
      %782 = vmatpush1.msra.mxu0 0.0
      %783 = vmatprep.subr.mxu0 0.0
      %784 = vmatpush1.msra.mxu0 0.0
      %785 = vmatprep.subr.mxu0 0.0
      %786 = vmatpush1.msra.mxu0 0.0
      %787 = vmatprep.subr.mxu0 0.0
      %788 = vmatpush1.msra.mxu0 0.0
      %789 = vmatprep.subr.mxu0 0.0
      %790 = vmatpush1.msra.mxu0 0.0
      %791 = vmatprep.subr.mxu0 0.0
      %792 = vmatpush1.msra.mxu0 0.0
      %793 = vmatprep.subr.mxu0 0.0
      %794 = vmatpush1.msra.mxu0 0.0
      %795 = vmatprep.subr.mxu0 0.0
      %796 = vmatpush1.msra.mxu0 0.0
      %797 = vmatprep.subr.mxu0 0.0
      %798 = vmatpush1.msra.mxu0 0.0
      %799 = vmatprep.subr.mxu0 0.0
      %800 = vmatpush1.msra.mxu0 0.0
      %801 = vmatprep.subr.mxu0 0.0
      %802 = vmatpush1.msra.mxu0 0.0
      %803 = vmatprep.subr.mxu0 0.0
      %804 = vmatpush1.msra.mxu0 0.0
      %805 = vmatprep.subr.mxu0 0.0
      %806 = vmatpush1.msra.mxu0 0.0
      %807 = vmatprep.subr.mxu0 0.0
      %808 = vmatpush1.msra.mxu0 0.0
      %809 = vmatprep.subr.mxu0 0.0
      %810 = vmatpush1.msra.mxu0 0.0
      %811 = vmatprep.subr.mxu0 0.0
      %812 = vmatpush1.msra.mxu0 0.0
      %813 = vmatprep.subr.mxu0 0.0
      %814 = vmatpush1.msra.mxu0 0.0
      %815 = vmatprep.subr.mxu0 0.0
      %816 = vmatpush1.msra.mxu0 0.0
      %817 = vmatprep.subr.mxu0 0.0
      %818 = vmatpush1.msra.mxu0 0.0
      %819 = vmatprep.subr.mxu0 0.0
      %820 = vmatpush1.msra.mxu0 0.0
      %821 = vmatprep.subr.mxu0 0.0
      %822 = vmatpush1.msra.mxu0 0.0
      %823 = vmatprep.subr.mxu0 0.0
      %824 = vmatpush1.msra.mxu0 0.0
      %825 = vmatprep.subr.mxu0 0.0
      %826 = vmatpush1.msra.mxu0 0.0
      %827 = vmatprep.subr.mxu0 0.0
      %828 = vmatpush1.msra.mxu0 0.0
      %829 = vmatprep.subr.mxu0 0.0
      %830 = vmatpush1.msra.mxu0 0.0
      %831 = vmatprep.mubr.f32.mxu0 0.0
      %832 = vmatmul.mubr.f32.gmra.mrb[0].mxu0 %v756
      %v833 = vpop.f32.mrb[0].mxu0
      %v834 = vadd.f32 %v754, %v833
      %v835 = vpop.f32.mrb[0].mxu0
      %836 = vmatprep.mubr.f32.mxu0 0.0
      %837 = vmatmul.mubr.f32.gmra.mrb[0].mxu0 %v759
      %v838 = vpop.f32.mrb[0].mxu0
      %v839 = vadd.f32 %v754, %v838
      %v840 = vpop.f32.mrb[0].mxu0
      %841 = vmatprep.mubr.f32.mxu0 0.0
      %842 = vmatmul.mubr.f32.gmra.mrb[0].mxu0 %v762
      %v843 = vpop.f32.mrb[0].mxu0
      %v844 = vadd.f32 %v754, %v843
      %v845 = vpop.f32.mrb[0].mxu0
      %846 = vmatprep.mubr.f32.mxu0 0.0
      %847 = vmatmul.mubr.f32.gmra.mrb[0].mxu0 %v765
      %v848 = vpop.f32.mrb[0].mxu0
      %v849 = vadd.f32 %v754, %v848
      %v850 = vpop.f32.mrb[0].mxu0
      %851 = vdwg.mxu0
      %v852 = vtanh.pop %v834
      %v853 = vtanh.pop %v839
      %v854 = vtanh.pop %v844
      %v855 = vtanh.pop %v849
      %v857 = vsel %vm404, %v852, 0
      %v860 = vsel %vm404, %v853, 0
      %v863 = vsel %vm404, %v854, 0
      %v866 = vsel %vm404, %v855, 0
      %868 = vmatprep.subr.mxu0 0.0
      %869 = vmatpush1.msra.mxu0 %v279
      %870 = vmatprep.subr.mxu0 0.0
      %871 = vmatpush1.msra.mxu0 %v280
      %872 = vmatprep.subr.mxu0 0.0
      %873 = vmatpush1.msra.mxu0 %v281
      %874 = vmatprep.subr.mxu0 0.0
      %875 = vmatpush1.msra.mxu0 %v282
      %876 = vmatprep.subr.mxu0 0.0
      %877 = vmatpush1.msra.mxu0 0.0
      %878 = vmatprep.subr.mxu0 0.0
      %879 = vmatpush1.msra.mxu0 0.0
      %880 = vmatprep.subr.mxu0 0.0
      %881 = vmatpush1.msra.mxu0 0.0
      %882 = vmatprep.subr.mxu0 0.0
      %883 = vmatpush1.msra.mxu0 0.0
      %884 = vmatprep.subr.mxu0 0.0
      %885 = vmatpush1.msra.mxu0 0.0
      %886 = vmatprep.subr.mxu0 0.0
      %887 = vmatpush1.msra.mxu0 0.0
      %888 = vmatprep.subr.mxu0 0.0
      %889 = vmatpush1.msra.mxu0 0.0
      %890 = vmatprep.subr.mxu0 0.0
      %891 = vmatpush1.msra.mxu0 0.0
      %892 = vmatprep.subr.mxu0 0.0
      %893 = vmatpush1.msra.mxu0 0.0
      %894 = vmatprep.subr.mxu0 0.0
      %895 = vmatpush1.msra.mxu0 0.0
      %896 = vmatprep.subr.mxu0 0.0
      %897 = vmatpush1.msra.mxu0 0.0
      %898 = vmatprep.subr.mxu0 0.0
      %899 = vmatpush1.msra.mxu0 0.0
      %900 = vmatprep.subr.mxu0 0.0
      %901 = vmatpush1.msra.mxu0 0.0
      %902 = vmatprep.subr.mxu0 0.0
      %903 = vmatpush1.msra.mxu0 0.0
      %904 = vmatprep.subr.mxu0 0.0
      %905 = vmatpush1.msra.mxu0 0.0
      %906 = vmatprep.subr.mxu0 0.0
      %907 = vmatpush1.msra.mxu0 0.0
      %908 = vmatprep.subr.mxu0 0.0
      %909 = vmatpush1.msra.mxu0 0.0
      %910 = vmatprep.subr.mxu0 0.0
      %911 = vmatpush1.msra.mxu0 0.0
      %912 = vmatprep.subr.mxu0 0.0
      %913 = vmatpush1.msra.mxu0 0.0
      %914 = vmatprep.subr.mxu0 0.0
      %915 = vmatpush1.msra.mxu0 0.0
      %916 = vmatprep.subr.mxu0 0.0
      %917 = vmatpush1.msra.mxu0 0.0
      %918 = vmatprep.subr.mxu0 0.0
      %919 = vmatpush1.msra.mxu0 0.0
      %920 = vmatprep.subr.mxu0 0.0
      %921 = vmatpush1.msra.mxu0 0.0
      %922 = vmatprep.subr.mxu0 0.0
      %923 = vmatpush1.msra.mxu0 0.0
      %924 = vmatprep.subr.mxu0 0.0
      %925 = vmatpush1.msra.mxu0 0.0
      %926 = vmatprep.subr.mxu0 0.0
      %927 = vmatpush1.msra.mxu0 0.0
      %928 = vmatprep.subr.mxu0 0.0
      %929 = vmatpush1.msra.mxu0 0.0
      %930 = vmatprep.subr.mxu0 0.0
      %931 = vmatpush1.msra.mxu0 0.0
      %932 = vmatprep.mubr.f32.mxu0 0.0
      %933 = vmatmul.mubr.f32.gmra.mrb[0].mxu0 %v857
      %v934 = vpop.f32.mrb[0].mxu0
      %v935 = vadd.f32 0.0, %v934
      %v936 = vpop.f32.mrb[0].mxu0
      %937 = vmatprep.mubr.f32.mxu0 0.0
      %938 = vmatmul.mubr.f32.gmra.mrb[0].mxu0 %v860
      %v939 = vpop.f32.mrb[0].mxu0
      %v940 = vadd.f32 0.0, %v939
      %v941 = vpop.f32.mrb[0].mxu0
      %942 = vmatprep.mubr.f32.mxu0 0.0
      %943 = vmatmul.mubr.f32.gmra.mrb[0].mxu0 %v863
      %v944 = vpop.f32.mrb[0].mxu0
      %v945 = vadd.f32 0.0, %v944
      %v946 = vpop.f32.mrb[0].mxu0
      %947 = vmatprep.mubr.f32.mxu0 0.0
      %948 = vmatmul.mubr.f32.gmra.mrb[0].mxu0 %v866
      %v949 = vpop.f32.mrb[0].mxu0
      %v950 = vadd.f32 0.0, %v949
      %v951 = vpop.f32.mrb[0].mxu0
      %952 = vdwg.mxu0
      %v953 = vlaneseq
      %v954 = vshrl.u32 %v953, 7
      %v955 = vsub.s32 0, %v954
      %v956 = vrot.slane %v283, %v955
      %957 = vmatprep.subr.mxu0 0.0
      %958 = vmatpush1.msra.mxu0 %v935
      %959 = vmatprep.subr.mxu0 0.0
      %960 = vmatpush1.msra.mxu0 %v940
      %961 = vmatprep.subr.mxu0 0.0
      %962 = vmatpush1.msra.mxu0 %v945
      %963 = vmatprep.subr.mxu0 0.0
      %964 = vmatpush1.msra.mxu0 %v950
      %965 = vmatprep.subr.mxu0 0.0
      %966 = vmatpush1.msra.mxu0 0.0
      %967 = vmatprep.subr.mxu0 0.0
      %968 = vmatpush1.msra.mxu0 0.0
      %969 = vmatprep.subr.mxu0 0.0
      %970 = vmatpush1.msra.mxu0 0.0
      %971 = vmatprep.subr.mxu0 0.0
      %972 = vmatpush1.msra.mxu0 0.0
      %973 = vmatprep.subr.mxu0 0.0
      %974 = vmatpush1.msra.mxu0 0.0
      %975 = vmatprep.subr.mxu0 0.0
      %976 = vmatpush1.msra.mxu0 0.0
      %977 = vmatprep.subr.mxu0 0.0
      %978 = vmatpush1.msra.mxu0 0.0
      %979 = vmatprep.subr.mxu0 0.0
      %980 = vmatpush1.msra.mxu0 0.0
      %981 = vmatprep.subr.mxu0 0.0
      %982 = vmatpush1.msra.mxu0 0.0
      %983 = vmatprep.subr.mxu0 0.0
      %984 = vmatpush1.msra.mxu0 0.0
      %985 = vmatprep.subr.mxu0 0.0
      %986 = vmatpush1.msra.mxu0 0.0
      %987 = vmatprep.subr.mxu0 0.0
      %988 = vmatpush1.msra.mxu0 0.0
      %989 = vmatprep.subr.mxu0 0.0
      %990 = vmatpush1.msra.mxu0 0.0
      %991 = vmatprep.subr.mxu0 0.0
      %992 = vmatpush1.msra.mxu0 0.0
      %993 = vmatprep.subr.mxu0 0.0
      %994 = vmatpush1.msra.mxu0 0.0
      %995 = vmatprep.subr.mxu0 0.0
      %996 = vmatpush1.msra.mxu0 0.0
      %997 = vmatprep.subr.mxu0 0.0
      %998 = vmatpush1.msra.mxu0 0.0
      %999 = vmatprep.subr.mxu0 0.0
      %1000 = vmatpush1.msra.mxu0 0.0
      %1001 = vmatprep.subr.mxu0 0.0
      %1002 = vmatpush1.msra.mxu0 0.0
      %1003 = vmatprep.subr.mxu0 0.0
      %1004 = vmatpush1.msra.mxu0 0.0
      %1005 = vmatprep.subr.mxu0 0.0
      %1006 = vmatpush1.msra.mxu0 0.0
      %1007 = vmatprep.subr.mxu0 0.0
      %1008 = vmatpush1.msra.mxu0 0.0
      %1009 = vmatprep.subr.mxu0 0.0
      %1010 = vmatpush1.msra.mxu0 0.0
      %1011 = vmatprep.subr.mxu0 0.0
      %1012 = vmatpush1.msra.mxu0 0.0
      %1013 = vmatprep.subr.mxu0 0.0
      %1014 = vmatpush1.msra.mxu0 0.0
      %1015 = vmatprep.subr.mxu0 0.0
      %1016 = vmatpush1.msra.mxu0 0.0
      %1017 = vmatprep.subr.mxu0 0.0
      %1018 = vmatpush1.msra.mxu0 0.0
      %1019 = vmatprep.subr.mxu0 0.0
      %1020 = vmatpush1.msra.mxu0 0.0
      %1021 = vmatprep.mubr.f32.mxu0 0.0
      %1022 = vmatmul.mubr.f32.gmra.mrb[0].mxu0 %v546
      %v1023 = vpop.f32.mrb[0].mxu0
      %v1024 = vadd.f32 %v956, %v1023
      %v1025 = vpop.f32.mrb[0].mxu0
      %1026 = vmatprep.mubr.f32.mxu0 0.0
      %1027 = vmatmul.mubr.f32.gmra.mrb[0].mxu0 %v549
      %v1028 = vpop.f32.mrb[0].mxu0
      %v1029 = vadd.f32 %v956, %v1028
      %v1030 = vpop.f32.mrb[0].mxu0
      %1031 = vmatprep.mubr.f32.mxu0 0.0
      %1032 = vmatmul.mubr.f32.gmra.mrb[0].mxu0 %v552
      %v1033 = vpop.f32.mrb[0].mxu0
      %v1034 = vadd.f32 %v956, %v1033
      %v1035 = vpop.f32.mrb[0].mxu0
      %1036 = vmatprep.mubr.f32.mxu0 0.0
      %1037 = vmatmul.mubr.f32.gmra.mrb[0].mxu0 %v555
      %v1038 = vpop.f32.mrb[0].mxu0
      %v1039 = vadd.f32 %v956, %v1038
      %v1040 = vpop.f32.mrb[0].mxu0
      %1041 = vdwg.mxu0
      %v1042 = vmax.f32 %v1024, 0.0
      %v1043 = vmax.f32 %v1029, 0.0
      %v1044 = vmax.f32 %v1034, 0.0
      %v1045 = vmax.f32 %v1039, 0.0
      %v1046 = vlaneseq
      %v1047 = vshrl.u32 %v1046, 7
      %v1048 = vsub.s32 0, %v1047
      %v1049 = vrot.slane %v288, %v1048
      %v1051 = vsel %vm404, %v1042, 0
      %v1054 = vsel %vm404, %v1043, 0
      %v1057 = vsel %vm404, %v1044, 0
      %v1060 = vsel %vm404, %v1045, 0
      %1062 = vmatprep.subr.mxu0 0.0
      %1063 = vmatpush1.msra.mxu0 %v284
      %1064 = vmatprep.subr.mxu0 0.0
      %1065 = vmatpush1.msra.mxu0 %v285
      %1066 = vmatprep.subr.mxu0 0.0
      %1067 = vmatpush1.msra.mxu0 %v286
      %1068 = vmatprep.subr.mxu0 0.0
      %1069 = vmatpush1.msra.mxu0 %v287
      %1070 = vmatprep.subr.mxu0 0.0
      %1071 = vmatpush1.msra.mxu0 0.0
      %1072 = vmatprep.subr.mxu0 0.0
      %1073 = vmatpush1.msra.mxu0 0.0
      %1074 = vmatprep.subr.mxu0 0.0
      %1075 = vmatpush1.msra.mxu0 0.0
      %1076 = vmatprep.subr.mxu0 0.0
      %1077 = vmatpush1.msra.mxu0 0.0
      %1078 = vmatprep.subr.mxu0 0.0
      %1079 = vmatpush1.msra.mxu0 0.0
      %1080 = vmatprep.subr.mxu0 0.0
      %1081 = vmatpush1.msra.mxu0 0.0
      %1082 = vmatprep.subr.mxu0 0.0
      %1083 = vmatpush1.msra.mxu0 0.0
      %1084 = vmatprep.subr.mxu0 0.0
      %1085 = vmatpush1.msra.mxu0 0.0
      %1086 = vmatprep.subr.mxu0 0.0
      %1087 = vmatpush1.msra.mxu0 0.0
      %1088 = vmatprep.subr.mxu0 0.0
      %1089 = vmatpush1.msra.mxu0 0.0
      %1090 = vmatprep.subr.mxu0 0.0
      %1091 = vmatpush1.msra.mxu0 0.0
      %1092 = vmatprep.subr.mxu0 0.0
      %1093 = vmatpush1.msra.mxu0 0.0
      %1094 = vmatprep.subr.mxu0 0.0
      %1095 = vmatpush1.msra.mxu0 0.0
      %1096 = vmatprep.subr.mxu0 0.0
      %1097 = vmatpush1.msra.mxu0 0.0
      %1098 = vmatprep.subr.mxu0 0.0
      %1099 = vmatpush1.msra.mxu0 0.0
      %1100 = vmatprep.subr.mxu0 0.0
      %1101 = vmatpush1.msra.mxu0 0.0
      %1102 = vmatprep.subr.mxu0 0.0
      %1103 = vmatpush1.msra.mxu0 0.0
      %1104 = vmatprep.subr.mxu0 0.0
      %1105 = vmatpush1.msra.mxu0 0.0
      %1106 = vmatprep.subr.mxu0 0.0
      %1107 = vmatpush1.msra.mxu0 0.0
      %1108 = vmatprep.subr.mxu0 0.0
      %1109 = vmatpush1.msra.mxu0 0.0
      %1110 = vmatprep.subr.mxu0 0.0
      %1111 = vmatpush1.msra.mxu0 0.0
      %1112 = vmatprep.subr.mxu0 0.0
      %1113 = vmatpush1.msra.mxu0 0.0
      %1114 = vmatprep.subr.mxu0 0.0
      %1115 = vmatpush1.msra.mxu0 0.0
      %1116 = vmatprep.subr.mxu0 0.0
      %1117 = vmatpush1.msra.mxu0 0.0
      %1118 = vmatprep.subr.mxu0 0.0
      %1119 = vmatpush1.msra.mxu0 0.0
      %1120 = vmatprep.subr.mxu0 0.0
      %1121 = vmatpush1.msra.mxu0 0.0
      %1122 = vmatprep.subr.mxu0 0.0
      %1123 = vmatpush1.msra.mxu0 0.0
      %1124 = vmatprep.subr.mxu0 0.0
      %1125 = vmatpush1.msra.mxu0 0.0
      %1126 = vmatprep.mubr.f32.mxu0 0.0
      %1127 = vmatmul.mubr.f32.gmra.mrb[0].mxu0 %v1051
      %v1128 = vpop.f32.mrb[0].mxu0
      %v1129 = vadd.f32 %v1049, %v1128
      %v1130 = vpop.f32.mrb[0].mxu0
      %1131 = vmatprep.mubr.f32.mxu0 0.0
      %1132 = vmatmul.mubr.f32.gmra.mrb[0].mxu0 %v1054
      %v1133 = vpop.f32.mrb[0].mxu0
      %v1134 = vadd.f32 %v1049, %v1133
      %v1135 = vpop.f32.mrb[0].mxu0
      %1136 = vmatprep.mubr.f32.mxu0 0.0
      %1137 = vmatmul.mubr.f32.gmra.mrb[0].mxu0 %v1057
      %v1138 = vpop.f32.mrb[0].mxu0
      %v1139 = vadd.f32 %v1049, %v1138
      %v1140 = vpop.f32.mrb[0].mxu0
      %1141 = vmatprep.mubr.f32.mxu0 0.0
      %1142 = vmatmul.mubr.f32.gmra.mrb[0].mxu0 %v1060
      %v1143 = vpop.f32.mrb[0].mxu0
      %v1144 = vadd.f32 %v1049, %v1143
      %v1145 = vpop.f32.mrb[0].mxu0
      %1146 = vdwg.mxu0
      %v1147 = vmax.f32 %v1129, 0.0
      %v1148 = vmax.f32 %v1134, 0.0
      %v1149 = vmax.f32 %v1139, 0.0
      %v1150 = vmax.f32 %v1144, 0.0
      %v1151 = vlaneseq
      %v1152 = vshrl.u32 %v1151, 7
      %v1153 = vsub.s32 0, %v1152
      %v1154 = vrot.slane %v293, %v1153
      %v1156 = vsel %vm404, %v1147, 0
      %v1159 = vsel %vm404, %v1148, 0
      %v1162 = vsel %vm404, %v1149, 0
      %v1165 = vsel %vm404, %v1150, 0
      %1167 = vmatprep.subr.mxu0 0.0
      %1168 = vmatpush1.msra.mxu0 %v289
      %1169 = vmatprep.subr.mxu0 0.0
      %1170 = vmatpush1.msra.mxu0 %v290
      %1171 = vmatprep.subr.mxu0 0.0
      %1172 = vmatpush1.msra.mxu0 %v291
      %1173 = vmatprep.subr.mxu0 0.0
      %1174 = vmatpush1.msra.mxu0 %v292
      %1175 = vmatprep.subr.mxu0 0.0
      %1176 = vmatpush1.msra.mxu0 0.0
      %1177 = vmatprep.subr.mxu0 0.0
      %1178 = vmatpush1.msra.mxu0 0.0
      %1179 = vmatprep.subr.mxu0 0.0
      %1180 = vmatpush1.msra.mxu0 0.0
      %1181 = vmatprep.subr.mxu0 0.0
      %1182 = vmatpush1.msra.mxu0 0.0
      %1183 = vmatprep.subr.mxu0 0.0
      %1184 = vmatpush1.msra.mxu0 0.0
      %1185 = vmatprep.subr.mxu0 0.0
      %1186 = vmatpush1.msra.mxu0 0.0
      %1187 = vmatprep.subr.mxu0 0.0
      %1188 = vmatpush1.msra.mxu0 0.0
      %1189 = vmatprep.subr.mxu0 0.0
      %1190 = vmatpush1.msra.mxu0 0.0
      %1191 = vmatprep.subr.mxu0 0.0
      %1192 = vmatpush1.msra.mxu0 0.0
      %1193 = vmatprep.subr.mxu0 0.0
      %1194 = vmatpush1.msra.mxu0 0.0
      %1195 = vmatprep.subr.mxu0 0.0
      %1196 = vmatpush1.msra.mxu0 0.0
      %1197 = vmatprep.subr.mxu0 0.0
      %1198 = vmatpush1.msra.mxu0 0.0
      %1199 = vmatprep.subr.mxu0 0.0
      %1200 = vmatpush1.msra.mxu0 0.0
      %1201 = vmatprep.subr.mxu0 0.0
      %1202 = vmatpush1.msra.mxu0 0.0
      %1203 = vmatprep.subr.mxu0 0.0
      %1204 = vmatpush1.msra.mxu0 0.0
      %1205 = vmatprep.subr.mxu0 0.0
      %1206 = vmatpush1.msra.mxu0 0.0
      %1207 = vmatprep.subr.mxu0 0.0
      %1208 = vmatpush1.msra.mxu0 0.0
      %1209 = vmatprep.subr.mxu0 0.0
      %1210 = vmatpush1.msra.mxu0 0.0
      %1211 = vmatprep.subr.mxu0 0.0
      %1212 = vmatpush1.msra.mxu0 0.0
      %1213 = vmatprep.subr.mxu0 0.0
      %1214 = vmatpush1.msra.mxu0 0.0
      %1215 = vmatprep.subr.mxu0 0.0
      %1216 = vmatpush1.msra.mxu0 0.0
      %1217 = vmatprep.subr.mxu0 0.0
      %1218 = vmatpush1.msra.mxu0 0.0
      %1219 = vmatprep.subr.mxu0 0.0
      %1220 = vmatpush1.msra.mxu0 0.0
      %1221 = vmatprep.subr.mxu0 0.0
      %1222 = vmatpush1.msra.mxu0 0.0
      %1223 = vmatprep.subr.mxu0 0.0
      %1224 = vmatpush1.msra.mxu0 0.0
      %1225 = vmatprep.subr.mxu0 0.0
      %1226 = vmatpush1.msra.mxu0 0.0
      %1227 = vmatprep.subr.mxu0 0.0
      %1228 = vmatpush1.msra.mxu0 0.0
      %1229 = vmatprep.subr.mxu0 0.0
      %1230 = vmatpush1.msra.mxu0 0.0
      %1231 = vmatprep.mubr.f32.mxu0 0.0
      %1232 = vmatmul.mubr.f32.gmra.mrb[0].mxu0 %v1156
      %v1233 = vpop.f32.mrb[0].mxu0
      %v1234 = vadd.f32 %v1154, %v1233
      %v1235 = vpop.f32.mrb[0].mxu0
      %1236 = vmatprep.mubr.f32.mxu0 0.0
      %1237 = vmatmul.mubr.f32.gmra.mrb[0].mxu0 %v1159
      %v1238 = vpop.f32.mrb[0].mxu0
      %v1239 = vadd.f32 %v1154, %v1238
      %v1240 = vpop.f32.mrb[0].mxu0
      %1241 = vmatprep.mubr.f32.mxu0 0.0
      %1242 = vmatmul.mubr.f32.gmra.mrb[0].mxu0 %v1162
      %v1243 = vpop.f32.mrb[0].mxu0
      %v1244 = vadd.f32 %v1154, %v1243
      %v1245 = vpop.f32.mrb[0].mxu0
      %1246 = vmatprep.mubr.f32.mxu0 0.0
      %1247 = vmatmul.mubr.f32.gmra.mrb[0].mxu0 %v1165
      %v1248 = vpop.f32.mrb[0].mxu0
      %v1249 = vadd.f32 %v1154, %v1248
      %v1250 = vpop.f32.mrb[0].mxu0
      %1251 = vdwg.mxu0
      %v1252 = vtanh.pop %v1234
      %v1253 = vtanh.pop %v1239
      %v1254 = vtanh.pop %v1244
      %v1255 = vtanh.pop %v1249
      %v1257 = vsel %vm404, %v1252, 0
      %v1260 = vsel %vm404, %v1253, 0
      %v1263 = vsel %vm404, %v1254, 0
      %v1266 = vsel %vm404, %v1255, 0
      %1268 = vmatprep.subr.mxu0 0.0
      %1269 = vmatpush1.msra.mxu0 %v294
      %1270 = vmatprep.subr.mxu0 0.0
      %1271 = vmatpush1.msra.mxu0 %v295
      %1272 = vmatprep.subr.mxu0 0.0
      %1273 = vmatpush1.msra.mxu0 %v296
      %1274 = vmatprep.subr.mxu0 0.0
      %1275 = vmatpush1.msra.mxu0 %v297
      %1276 = vmatprep.subr.mxu0 0.0
      %1277 = vmatpush1.msra.mxu0 0.0
      %1278 = vmatprep.subr.mxu0 0.0
      %1279 = vmatpush1.msra.mxu0 0.0
      %1280 = vmatprep.subr.mxu0 0.0
      %1281 = vmatpush1.msra.mxu0 0.0
      %1282 = vmatprep.subr.mxu0 0.0
      %1283 = vmatpush1.msra.mxu0 0.0
      %1284 = vmatprep.subr.mxu0 0.0
      %1285 = vmatpush1.msra.mxu0 0.0
      %1286 = vmatprep.subr.mxu0 0.0
      %1287 = vmatpush1.msra.mxu0 0.0
      %1288 = vmatprep.subr.mxu0 0.0
      %1289 = vmatpush1.msra.mxu0 0.0
      %1290 = vmatprep.subr.mxu0 0.0
      %1291 = vmatpush1.msra.mxu0 0.0
      %1292 = vmatprep.subr.mxu0 0.0
      %1293 = vmatpush1.msra.mxu0 0.0
      %1294 = vmatprep.subr.mxu0 0.0
      %1295 = vmatpush1.msra.mxu0 0.0
      %1296 = vmatprep.subr.mxu0 0.0
      %1297 = vmatpush1.msra.mxu0 0.0
      %1298 = vmatprep.subr.mxu0 0.0
      %1299 = vmatpush1.msra.mxu0 0.0
      %1300 = vmatprep.subr.mxu0 0.0
      %1301 = vmatpush1.msra.mxu0 0.0
      %1302 = vmatprep.subr.mxu0 0.0
      %1303 = vmatpush1.msra.mxu0 0.0
      %1304 = vmatprep.subr.mxu0 0.0
      %1305 = vmatpush1.msra.mxu0 0.0
      %1306 = vmatprep.subr.mxu0 0.0
      %1307 = vmatpush1.msra.mxu0 0.0
      %1308 = vmatprep.subr.mxu0 0.0
      %1309 = vmatpush1.msra.mxu0 0.0
      %1310 = vmatprep.subr.mxu0 0.0
      %1311 = vmatpush1.msra.mxu0 0.0
      %1312 = vmatprep.subr.mxu0 0.0
      %1313 = vmatpush1.msra.mxu0 0.0
      %1314 = vmatprep.subr.mxu0 0.0
      %1315 = vmatpush1.msra.mxu0 0.0
      %1316 = vmatprep.subr.mxu0 0.0
      %1317 = vmatpush1.msra.mxu0 0.0
      %1318 = vmatprep.subr.mxu0 0.0
      %1319 = vmatpush1.msra.mxu0 0.0
      %1320 = vmatprep.subr.mxu0 0.0
      %1321 = vmatpush1.msra.mxu0 0.0
      %1322 = vmatprep.subr.mxu0 0.0
      %1323 = vmatpush1.msra.mxu0 0.0
      %1324 = vmatprep.subr.mxu0 0.0
      %1325 = vmatpush1.msra.mxu0 0.0
      %1326 = vmatprep.subr.mxu0 0.0
      %1327 = vmatpush1.msra.mxu0 0.0
      %1328 = vmatprep.subr.mxu0 0.0
      %1329 = vmatpush1.msra.mxu0 0.0
      %1330 = vmatprep.subr.mxu0 0.0
      %1331 = vmatpush1.msra.mxu0 0.0
      %1332 = vmatprep.mubr.f32.mxu0 0.0
      %1333 = vmatmul.mubr.f32.gmra.mrb[0].mxu0 %v1257
      %v1334 = vpop.f32.mrb[0].mxu0
      %v1335 = vadd.f32 0.0, %v1334
      %v1336 = vpop.f32.mrb[0].mxu0
      %1337 = vmatprep.mubr.f32.mxu0 0.0
      %1338 = vmatmul.mubr.f32.gmra.mrb[0].mxu0 %v1260
      %v1339 = vpop.f32.mrb[0].mxu0
      %v1340 = vadd.f32 0.0, %v1339
      %v1341 = vpop.f32.mrb[0].mxu0
      %1342 = vmatprep.mubr.f32.mxu0 0.0
      %1343 = vmatmul.mubr.f32.gmra.mrb[0].mxu0 %v1263
      %v1344 = vpop.f32.mrb[0].mxu0
      %v1345 = vadd.f32 0.0, %v1344
      %v1346 = vpop.f32.mrb[0].mxu0
      %1347 = vmatprep.mubr.f32.mxu0 0.0
      %1348 = vmatmul.mubr.f32.gmra.mrb[0].mxu0 %v1266
      %v1349 = vpop.f32.mrb[0].mxu0
      %v1350 = vadd.f32 0.0, %v1349
      %v1351 = vpop.f32.mrb[0].mxu0
      %1352 = vdwg.mxu0
      %v1353 = vlaneseq
      %v1354 = vshrl.u32 %v1353, 7
      %v1355 = vsub.s32 0, %v1354
      %v1356 = vrot.slane %v298, %v1355
      %1357 = vmatprep.subr.mxu0 0.0
      %1358 = vmatpush1.msra.mxu0 %v1335
      %1359 = vmatprep.subr.mxu0 0.0
      %1360 = vmatpush1.msra.mxu0 %v1340
      %1361 = vmatprep.subr.mxu0 0.0
      %1362 = vmatpush1.msra.mxu0 %v1345
      %1363 = vmatprep.subr.mxu0 0.0
      %1364 = vmatpush1.msra.mxu0 %v1350
      %1365 = vmatprep.subr.mxu0 0.0
      %1366 = vmatpush1.msra.mxu0 0.0
      %1367 = vmatprep.subr.mxu0 0.0
      %1368 = vmatpush1.msra.mxu0 0.0
      %1369 = vmatprep.subr.mxu0 0.0
      %1370 = vmatpush1.msra.mxu0 0.0
      %1371 = vmatprep.subr.mxu0 0.0
      %1372 = vmatpush1.msra.mxu0 0.0
      %1373 = vmatprep.subr.mxu0 0.0
      %1374 = vmatpush1.msra.mxu0 0.0
      %1375 = vmatprep.subr.mxu0 0.0
      %1376 = vmatpush1.msra.mxu0 0.0
      %1377 = vmatprep.subr.mxu0 0.0
      %1378 = vmatpush1.msra.mxu0 0.0
      %1379 = vmatprep.subr.mxu0 0.0
      %1380 = vmatpush1.msra.mxu0 0.0
      %1381 = vmatprep.subr.mxu0 0.0
      %1382 = vmatpush1.msra.mxu0 0.0
      %1383 = vmatprep.subr.mxu0 0.0
      %1384 = vmatpush1.msra.mxu0 0.0
      %1385 = vmatprep.subr.mxu0 0.0
      %1386 = vmatpush1.msra.mxu0 0.0
      %1387 = vmatprep.subr.mxu0 0.0
      %1388 = vmatpush1.msra.mxu0 0.0
      %1389 = vmatprep.subr.mxu0 0.0
      %1390 = vmatpush1.msra.mxu0 0.0
      %1391 = vmatprep.subr.mxu0 0.0
      %1392 = vmatpush1.msra.mxu0 0.0
      %1393 = vmatprep.subr.mxu0 0.0
      %1394 = vmatpush1.msra.mxu0 0.0
      %1395 = vmatprep.subr.mxu0 0.0
      %1396 = vmatpush1.msra.mxu0 0.0
      %1397 = vmatprep.subr.mxu0 0.0
      %1398 = vmatpush1.msra.mxu0 0.0
      %1399 = vmatprep.subr.mxu0 0.0
      %1400 = vmatpush1.msra.mxu0 0.0
      %1401 = vmatprep.subr.mxu0 0.0
      %1402 = vmatpush1.msra.mxu0 0.0
      %1403 = vmatprep.subr.mxu0 0.0
      %1404 = vmatpush1.msra.mxu0 0.0
      %1405 = vmatprep.subr.mxu0 0.0
      %1406 = vmatpush1.msra.mxu0 0.0
      %1407 = vmatprep.subr.mxu0 0.0
      %1408 = vmatpush1.msra.mxu0 0.0
      %1409 = vmatprep.subr.mxu0 0.0
      %1410 = vmatpush1.msra.mxu0 0.0
      %1411 = vmatprep.subr.mxu0 0.0
      %1412 = vmatpush1.msra.mxu0 0.0
      %1413 = vmatprep.subr.mxu0 0.0
      %1414 = vmatpush1.msra.mxu0 0.0
      %1415 = vmatprep.subr.mxu0 0.0
      %1416 = vmatpush1.msra.mxu0 0.0
      %1417 = vmatprep.subr.mxu0 0.0
      %1418 = vmatpush1.msra.mxu0 0.0
      %1419 = vmatprep.subr.mxu0 0.0
      %1420 = vmatpush1.msra.mxu0 0.0
      %1421 = vmatprep.mubr.f32.mxu0 0.0
      %1422 = vmatmul.mubr.f32.gmra.mrb[0].mxu0 %v546
      %v1423 = vpop.f32.mrb[0].mxu0
      %v1424 = vadd.f32 %v1356, %v1423
      %v1425 = vpop.f32.mrb[0].mxu0
      %1426 = vmatprep.mubr.f32.mxu0 0.0
      %1427 = vmatmul.mubr.f32.gmra.mrb[0].mxu0 %v549
      %v1428 = vpop.f32.mrb[0].mxu0
      %v1429 = vadd.f32 %v1356, %v1428
      %v1430 = vpop.f32.mrb[0].mxu0
      %1431 = vmatprep.mubr.f32.mxu0 0.0
      %1432 = vmatmul.mubr.f32.gmra.mrb[0].mxu0 %v552
      %v1433 = vpop.f32.mrb[0].mxu0
      %v1434 = vadd.f32 %v1356, %v1433
      %v1435 = vpop.f32.mrb[0].mxu0
      %1436 = vmatprep.mubr.f32.mxu0 0.0
      %1437 = vmatmul.mubr.f32.gmra.mrb[0].mxu0 %v555
      %v1438 = vpop.f32.mrb[0].mxu0
      %v1439 = vadd.f32 %v1356, %v1438
      %v1440 = vpop.f32.mrb[0].mxu0
      %1441 = vdwg.mxu0
      %v1442 = vmax.f32 %v1424, 0.0
      %v1443 = vmax.f32 %v1429, 0.0
      %v1444 = vmax.f32 %v1434, 0.0
      %v1445 = vmax.f32 %v1439, 0.0
      %v1446 = vlaneseq
      %v1447 = vshrl.u32 %v1446, 7
      %v1448 = vsub.s32 0, %v1447
      %v1449 = vrot.slane %v303, %v1448
      %v1451 = vsel %vm404, %v1442, 0
      %v1454 = vsel %vm404, %v1443, 0
      %v1457 = vsel %vm404, %v1444, 0
      %v1460 = vsel %vm404, %v1445, 0
      %1462 = vmatprep.subr.mxu0 0.0
      %1463 = vmatpush1.msra.mxu0 %v299
      %1464 = vmatprep.subr.mxu0 0.0
      %1465 = vmatpush1.msra.mxu0 %v300
      %1466 = vmatprep.subr.mxu0 0.0
      %1467 = vmatpush1.msra.mxu0 %v301
      %1468 = vmatprep.subr.mxu0 0.0
      %1469 = vmatpush1.msra.mxu0 %v302
      %1470 = vmatprep.subr.mxu0 0.0
      %1471 = vmatpush1.msra.mxu0 0.0
      %1472 = vmatprep.subr.mxu0 0.0
      %1473 = vmatpush1.msra.mxu0 0.0
      %1474 = vmatprep.subr.mxu0 0.0
      %1475 = vmatpush1.msra.mxu0 0.0
      %1476 = vmatprep.subr.mxu0 0.0
      %1477 = vmatpush1.msra.mxu0 0.0
      %1478 = vmatprep.subr.mxu0 0.0
      %1479 = vmatpush1.msra.mxu0 0.0
      %1480 = vmatprep.subr.mxu0 0.0
      %1481 = vmatpush1.msra.mxu0 0.0
      %1482 = vmatprep.subr.mxu0 0.0
      %1483 = vmatpush1.msra.mxu0 0.0
      %1484 = vmatprep.subr.mxu0 0.0
      %1485 = vmatpush1.msra.mxu0 0.0
      %1486 = vmatprep.subr.mxu0 0.0
      %1487 = vmatpush1.msra.mxu0 0.0
      %1488 = vmatprep.subr.mxu0 0.0
      %1489 = vmatpush1.msra.mxu0 0.0
      %1490 = vmatprep.subr.mxu0 0.0
      %1491 = vmatpush1.msra.mxu0 0.0
      %1492 = vmatprep.subr.mxu0 0.0
      %1493 = vmatpush1.msra.mxu0 0.0
      %1494 = vmatprep.subr.mxu0 0.0
      %1495 = vmatpush1.msra.mxu0 0.0
      %1496 = vmatprep.subr.mxu0 0.0
      %1497 = vmatpush1.msra.mxu0 0.0
      %1498 = vmatprep.subr.mxu0 0.0
      %1499 = vmatpush1.msra.mxu0 0.0
      %1500 = vmatprep.subr.mxu0 0.0
      %1501 = vmatpush1.msra.mxu0 0.0
      %1502 = vmatprep.subr.mxu0 0.0
      %1503 = vmatpush1.msra.mxu0 0.0
      %1504 = vmatprep.subr.mxu0 0.0
      %1505 = vmatpush1.msra.mxu0 0.0
      %1506 = vmatprep.subr.mxu0 0.0
      %1507 = vmatpush1.msra.mxu0 0.0
      %1508 = vmatprep.subr.mxu0 0.0
      %1509 = vmatpush1.msra.mxu0 0.0
      %1510 = vmatprep.subr.mxu0 0.0
      %1511 = vmatpush1.msra.mxu0 0.0
      %1512 = vmatprep.subr.mxu0 0.0
      %1513 = vmatpush1.msra.mxu0 0.0
      %1514 = vmatprep.subr.mxu0 0.0
      %1515 = vmatpush1.msra.mxu0 0.0
      %1516 = vmatprep.subr.mxu0 0.0
      %1517 = vmatpush1.msra.mxu0 0.0
      %1518 = vmatprep.subr.mxu0 0.0
      %1519 = vmatpush1.msra.mxu0 0.0
      %1520 = vmatprep.subr.mxu0 0.0
      %1521 = vmatpush1.msra.mxu0 0.0
      %1522 = vmatprep.subr.mxu0 0.0
      %1523 = vmatpush1.msra.mxu0 0.0
      %1524 = vmatprep.subr.mxu0 0.0
      %1525 = vmatpush1.msra.mxu0 0.0
      %1526 = vmatprep.mubr.f32.mxu0 0.0
      %1527 = vmatmul.mubr.f32.gmra.mrb[0].mxu0 %v1451
      %v1528 = vpop.f32.mrb[0].mxu0
      %v1529 = vadd.f32 %v1449, %v1528
      %v1530 = vpop.f32.mrb[0].mxu0
      %1531 = vmatprep.mubr.f32.mxu0 0.0
      %1532 = vmatmul.mubr.f32.gmra.mrb[0].mxu0 %v1454
      %v1533 = vpop.f32.mrb[0].mxu0
      %v1534 = vadd.f32 %v1449, %v1533
      %v1535 = vpop.f32.mrb[0].mxu0
      %1536 = vmatprep.mubr.f32.mxu0 0.0
      %1537 = vmatmul.mubr.f32.gmra.mrb[0].mxu0 %v1457
      %v1538 = vpop.f32.mrb[0].mxu0
      %v1539 = vadd.f32 %v1449, %v1538
      %v1540 = vpop.f32.mrb[0].mxu0
      %1541 = vmatprep.mubr.f32.mxu0 0.0
      %1542 = vmatmul.mubr.f32.gmra.mrb[0].mxu0 %v1460
      %v1543 = vpop.f32.mrb[0].mxu0
      %v1544 = vadd.f32 %v1449, %v1543
      %v1545 = vpop.f32.mrb[0].mxu0
      %1546 = vdwg.mxu0
      %v1547 = vmax.f32 %v1529, 0.0
      %v1548 = vmax.f32 %v1534, 0.0
      %v1549 = vmax.f32 %v1539, 0.0
      %v1550 = vmax.f32 %v1544, 0.0
      %v1551 = vlaneseq
      %v1552 = vshrl.u32 %v1551, 7
      %v1553 = vsub.s32 0, %v1552
      %v1554 = vrot.slane %v308, %v1553
      %v1556 = vsel %vm404, %v1547, 0
      %v1559 = vsel %vm404, %v1548, 0
      %v1562 = vsel %vm404, %v1549, 0
      %v1565 = vsel %vm404, %v1550, 0
      %1567 = vmatprep.subr.mxu0 0.0
      %1568 = vmatpush1.msra.mxu0 %v304
      %1569 = vmatprep.subr.mxu0 0.0
      %1570 = vmatpush1.msra.mxu0 %v305
      %1571 = vmatprep.subr.mxu0 0.0
      %1572 = vmatpush1.msra.mxu0 %v306
      %1573 = vmatprep.subr.mxu0 0.0
      %1574 = vmatpush1.msra.mxu0 %v307
      %1575 = vmatprep.subr.mxu0 0.0
      %1576 = vmatpush1.msra.mxu0 0.0
      %1577 = vmatprep.subr.mxu0 0.0
      %1578 = vmatpush1.msra.mxu0 0.0
      %1579 = vmatprep.subr.mxu0 0.0
      %1580 = vmatpush1.msra.mxu0 0.0
      %1581 = vmatprep.subr.mxu0 0.0
      %1582 = vmatpush1.msra.mxu0 0.0
      %1583 = vmatprep.subr.mxu0 0.0
      %1584 = vmatpush1.msra.mxu0 0.0
      %1585 = vmatprep.subr.mxu0 0.0
      %1586 = vmatpush1.msra.mxu0 0.0
      %1587 = vmatprep.subr.mxu0 0.0
      %1588 = vmatpush1.msra.mxu0 0.0
      %1589 = vmatprep.subr.mxu0 0.0
      %1590 = vmatpush1.msra.mxu0 0.0
      %1591 = vmatprep.subr.mxu0 0.0
      %1592 = vmatpush1.msra.mxu0 0.0
      %1593 = vmatprep.subr.mxu0 0.0
      %1594 = vmatpush1.msra.mxu0 0.0
      %1595 = vmatprep.subr.mxu0 0.0
      %1596 = vmatpush1.msra.mxu0 0.0
      %1597 = vmatprep.subr.mxu0 0.0
      %1598 = vmatpush1.msra.mxu0 0.0
      %1599 = vmatprep.subr.mxu0 0.0
      %1600 = vmatpush1.msra.mxu0 0.0
      %1601 = vmatprep.subr.mxu0 0.0
      %1602 = vmatpush1.msra.mxu0 0.0
      %1603 = vmatprep.subr.mxu0 0.0
      %1604 = vmatpush1.msra.mxu0 0.0
      %1605 = vmatprep.subr.mxu0 0.0
      %1606 = vmatpush1.msra.mxu0 0.0
      %1607 = vmatprep.subr.mxu0 0.0
      %1608 = vmatpush1.msra.mxu0 0.0
      %1609 = vmatprep.subr.mxu0 0.0
      %1610 = vmatpush1.msra.mxu0 0.0
      %1611 = vmatprep.subr.mxu0 0.0
      %1612 = vmatpush1.msra.mxu0 0.0
      %1613 = vmatprep.subr.mxu0 0.0
      %1614 = vmatpush1.msra.mxu0 0.0
      %1615 = vmatprep.subr.mxu0 0.0
      %1616 = vmatpush1.msra.mxu0 0.0
      %1617 = vmatprep.subr.mxu0 0.0
      %1618 = vmatpush1.msra.mxu0 0.0
      %1619 = vmatprep.subr.mxu0 0.0
      %1620 = vmatpush1.msra.mxu0 0.0
      %1621 = vmatprep.subr.mxu0 0.0
      %1622 = vmatpush1.msra.mxu0 0.0
      %1623 = vmatprep.subr.mxu0 0.0
      %1624 = vmatpush1.msra.mxu0 0.0
      %1625 = vmatprep.subr.mxu0 0.0
      %1626 = vmatpush1.msra.mxu0 0.0
      %1627 = vmatprep.subr.mxu0 0.0
      %1628 = vmatpush1.msra.mxu0 0.0
      %1629 = vmatprep.subr.mxu0 0.0
      %1630 = vmatpush1.msra.mxu0 0.0
      %1631 = vmatprep.mubr.f32.mxu0 0.0
      %1632 = vmatmul.mubr.f32.gmra.mrb[0].mxu0 %v1556
      %v1633 = vpop.f32.mrb[0].mxu0
      %v1634 = vadd.f32 %v1554, %v1633
      %v1635 = vpop.f32.mrb[0].mxu0
      %1636 = vmatprep.mubr.f32.mxu0 0.0
      %1637 = vmatmul.mubr.f32.gmra.mrb[0].mxu0 %v1559
      %v1638 = vpop.f32.mrb[0].mxu0
      %v1639 = vadd.f32 %v1554, %v1638
      %v1640 = vpop.f32.mrb[0].mxu0
      %1641 = vmatprep.mubr.f32.mxu0 0.0
      %1642 = vmatmul.mubr.f32.gmra.mrb[0].mxu0 %v1562
      %v1643 = vpop.f32.mrb[0].mxu0
      %v1644 = vadd.f32 %v1554, %v1643
      %v1645 = vpop.f32.mrb[0].mxu0
      %1646 = vmatprep.mubr.f32.mxu0 0.0
      %1647 = vmatmul.mubr.f32.gmra.mrb[0].mxu0 %v1565
      %v1648 = vpop.f32.mrb[0].mxu0
      %v1649 = vadd.f32 %v1554, %v1648
      %v1650 = vpop.f32.mrb[0].mxu0
      %1651 = vdwg.mxu0
      %v1652 = vtanh.pop %v1634
      %v1653 = vtanh.pop %v1639
      %v1654 = vtanh.pop %v1644
      %v1655 = vtanh.pop %v1649
      %v1657 = vsel %vm404, %v1652, 0
      %v1660 = vsel %vm404, %v1653, 0
      %v1663 = vsel %vm404, %v1654, 0
      %v1666 = vsel %vm404, %v1655, 0
      %1668 = vmatprep.subr.mxu0 0.0
      %1669 = vmatpush1.msra.mxu0 %v309
      %1670 = vmatprep.subr.mxu0 0.0
      %1671 = vmatpush1.msra.mxu0 %v310
      %1672 = vmatprep.subr.mxu0 0.0
      %1673 = vmatpush1.msra.mxu0 %v311
      %1674 = vmatprep.subr.mxu0 0.0
      %1675 = vmatpush1.msra.mxu0 %v312
      %1676 = vmatprep.subr.mxu0 0.0
      %1677 = vmatpush1.msra.mxu0 0.0
      %1678 = vmatprep.subr.mxu0 0.0
      %1679 = vmatpush1.msra.mxu0 0.0
      %1680 = vmatprep.subr.mxu0 0.0
      %1681 = vmatpush1.msra.mxu0 0.0
      %1682 = vmatprep.subr.mxu0 0.0
      %1683 = vmatpush1.msra.mxu0 0.0
      %1684 = vmatprep.subr.mxu0 0.0
      %1685 = vmatpush1.msra.mxu0 0.0
      %1686 = vmatprep.subr.mxu0 0.0
      %1687 = vmatpush1.msra.mxu0 0.0
      %1688 = vmatprep.subr.mxu0 0.0
      %1689 = vmatpush1.msra.mxu0 0.0
      %1690 = vmatprep.subr.mxu0 0.0
      %1691 = vmatpush1.msra.mxu0 0.0
      %1692 = vmatprep.subr.mxu0 0.0
      %1693 = vmatpush1.msra.mxu0 0.0
      %1694 = vmatprep.subr.mxu0 0.0
      %1695 = vmatpush1.msra.mxu0 0.0
      %1696 = vmatprep.subr.mxu0 0.0
      %1697 = vmatpush1.msra.mxu0 0.0
      %1698 = vmatprep.subr.mxu0 0.0
      %1699 = vmatpush1.msra.mxu0 0.0
      %1700 = vmatprep.subr.mxu0 0.0
      %1701 = vmatpush1.msra.mxu0 0.0
      %1702 = vmatprep.subr.mxu0 0.0
      %1703 = vmatpush1.msra.mxu0 0.0
      %1704 = vmatprep.subr.mxu0 0.0
      %1705 = vmatpush1.msra.mxu0 0.0
      %1706 = vmatprep.subr.mxu0 0.0
      %1707 = vmatpush1.msra.mxu0 0.0
      %1708 = vmatprep.subr.mxu0 0.0
      %1709 = vmatpush1.msra.mxu0 0.0
      %1710 = vmatprep.subr.mxu0 0.0
      %1711 = vmatpush1.msra.mxu0 0.0
      %1712 = vmatprep.subr.mxu0 0.0
      %1713 = vmatpush1.msra.mxu0 0.0
      %1714 = vmatprep.subr.mxu0 0.0
      %1715 = vmatpush1.msra.mxu0 0.0
      %1716 = vmatprep.subr.mxu0 0.0
      %1717 = vmatpush1.msra.mxu0 0.0
      %1718 = vmatprep.subr.mxu0 0.0
      %1719 = vmatpush1.msra.mxu0 0.0
      %1720 = vmatprep.subr.mxu0 0.0
      %1721 = vmatpush1.msra.mxu0 0.0
      %1722 = vmatprep.subr.mxu0 0.0
      %1723 = vmatpush1.msra.mxu0 0.0
      %1724 = vmatprep.subr.mxu0 0.0
      %1725 = vmatpush1.msra.mxu0 0.0
      %1726 = vmatprep.subr.mxu0 0.0
      %1727 = vmatpush1.msra.mxu0 0.0
      %1728 = vmatprep.subr.mxu0 0.0
      %1729 = vmatpush1.msra.mxu0 0.0
      %1730 = vmatprep.subr.mxu0 0.0
      %1731 = vmatpush1.msra.mxu0 0.0
      %1732 = vmatprep.mubr.f32.mxu0 0.0
      %1733 = vmatmul.mubr.f32.gmra.mrb[0].mxu0 %v1657
      %v1734 = vpop.f32.mrb[0].mxu0
      %v1735 = vadd.f32 0.0, %v1734
      %v1736 = vpop.f32.mrb[0].mxu0
      %1737 = vmatprep.mubr.f32.mxu0 0.0
      %1738 = vmatmul.mubr.f32.gmra.mrb[0].mxu0 %v1660
      %v1739 = vpop.f32.mrb[0].mxu0
      %v1740 = vadd.f32 0.0, %v1739
      %v1741 = vpop.f32.mrb[0].mxu0
      %1742 = vmatprep.mubr.f32.mxu0 0.0
      %1743 = vmatmul.mubr.f32.gmra.mrb[0].mxu0 %v1663
      %v1744 = vpop.f32.mrb[0].mxu0
      %v1745 = vadd.f32 0.0, %v1744
      %v1746 = vpop.f32.mrb[0].mxu0
      %1747 = vmatprep.mubr.f32.mxu0 0.0
      %1748 = vmatmul.mubr.f32.gmra.mrb[0].mxu0 %v1666
      %v1749 = vpop.f32.mrb[0].mxu0
      %v1750 = vadd.f32 0.0, %v1749
      %v1751 = vpop.f32.mrb[0].mxu0
      %1752 = vdwg.mxu0
      %v1753 = vlaneseq
      %v1754 = vshrl.u32 %v1753, 7
      %v1755 = vsub.s32 0, %v1754
      %v1756 = vrot.slane %v313, %v1755
      %1757 = vmatprep.subr.mxu0 0.0
      %1758 = vmatpush1.msra.mxu0 %v1735
      %1759 = vmatprep.subr.mxu0 0.0
      %1760 = vmatpush1.msra.mxu0 %v1740
      %1761 = vmatprep.subr.mxu0 0.0
      %1762 = vmatpush1.msra.mxu0 %v1745
      %1763 = vmatprep.subr.mxu0 0.0
      %1764 = vmatpush1.msra.mxu0 %v1750
      %1765 = vmatprep.subr.mxu0 0.0
      %1766 = vmatpush1.msra.mxu0 0.0
      %1767 = vmatprep.subr.mxu0 0.0
      %1768 = vmatpush1.msra.mxu0 0.0
      %1769 = vmatprep.subr.mxu0 0.0
      %1770 = vmatpush1.msra.mxu0 0.0
      %1771 = vmatprep.subr.mxu0 0.0
      %1772 = vmatpush1.msra.mxu0 0.0
      %1773 = vmatprep.subr.mxu0 0.0
      %1774 = vmatpush1.msra.mxu0 0.0
      %1775 = vmatprep.subr.mxu0 0.0
      %1776 = vmatpush1.msra.mxu0 0.0
      %1777 = vmatprep.subr.mxu0 0.0
      %1778 = vmatpush1.msra.mxu0 0.0
      %1779 = vmatprep.subr.mxu0 0.0
      %1780 = vmatpush1.msra.mxu0 0.0
      %1781 = vmatprep.subr.mxu0 0.0
      %1782 = vmatpush1.msra.mxu0 0.0
      %1783 = vmatprep.subr.mxu0 0.0
      %1784 = vmatpush1.msra.mxu0 0.0
      %1785 = vmatprep.subr.mxu0 0.0
      %1786 = vmatpush1.msra.mxu0 0.0
      %1787 = vmatprep.subr.mxu0 0.0
      %1788 = vmatpush1.msra.mxu0 0.0
      %1789 = vmatprep.subr.mxu0 0.0
      %1790 = vmatpush1.msra.mxu0 0.0
      %1791 = vmatprep.subr.mxu0 0.0
      %1792 = vmatpush1.msra.mxu0 0.0
      %1793 = vmatprep.subr.mxu0 0.0
      %1794 = vmatpush1.msra.mxu0 0.0
      %1795 = vmatprep.subr.mxu0 0.0
      %1796 = vmatpush1.msra.mxu0 0.0
      %1797 = vmatprep.subr.mxu0 0.0
      %1798 = vmatpush1.msra.mxu0 0.0
      %1799 = vmatprep.subr.mxu0 0.0
      %1800 = vmatpush1.msra.mxu0 0.0
      %1801 = vmatprep.subr.mxu0 0.0
      %1802 = vmatpush1.msra.mxu0 0.0
      %1803 = vmatprep.subr.mxu0 0.0
      %1804 = vmatpush1.msra.mxu0 0.0
      %1805 = vmatprep.subr.mxu0 0.0
      %1806 = vmatpush1.msra.mxu0 0.0
      %1807 = vmatprep.subr.mxu0 0.0
      %1808 = vmatpush1.msra.mxu0 0.0
      %1809 = vmatprep.subr.mxu0 0.0
      %1810 = vmatpush1.msra.mxu0 0.0
      %1811 = vmatprep.subr.mxu0 0.0
      %1812 = vmatpush1.msra.mxu0 0.0
      %1813 = vmatprep.subr.mxu0 0.0
      %1814 = vmatpush1.msra.mxu0 0.0
      %1815 = vmatprep.subr.mxu0 0.0
      %1816 = vmatpush1.msra.mxu0 0.0
      %1817 = vmatprep.subr.mxu0 0.0
      %1818 = vmatpush1.msra.mxu0 0.0
      %1819 = vmatprep.subr.mxu0 0.0
      %1820 = vmatpush1.msra.mxu0 0.0
      %1821 = vmatprep.mubr.f32.mxu0 0.0
      %1822 = vmatmul.mubr.f32.gmra.mrb[0].mxu0 %v546
      %v1823 = vpop.f32.mrb[0].mxu0
      %v1824 = vadd.f32 %v1756, %v1823
      %v1825 = vpop.f32.mrb[0].mxu0
      %1826 = vmatprep.mubr.f32.mxu0 0.0
      %1827 = vmatmul.mubr.f32.gmra.mrb[0].mxu0 %v549
      %v1828 = vpop.f32.mrb[0].mxu0
      %v1829 = vadd.f32 %v1756, %v1828
      %v1830 = vpop.f32.mrb[0].mxu0
      %1831 = vmatprep.mubr.f32.mxu0 0.0
      %1832 = vmatmul.mubr.f32.gmra.mrb[0].mxu0 %v552
      %v1833 = vpop.f32.mrb[0].mxu0
      %v1834 = vadd.f32 %v1756, %v1833
      %v1835 = vpop.f32.mrb[0].mxu0
      %1836 = vmatprep.mubr.f32.mxu0 0.0
      %1837 = vmatmul.mubr.f32.gmra.mrb[0].mxu0 %v555
      %v1838 = vpop.f32.mrb[0].mxu0
      %v1839 = vadd.f32 %v1756, %v1838
      %v1840 = vpop.f32.mrb[0].mxu0
      %1841 = vdwg.mxu0
      %v1842 = vmax.f32 %v1824, 0.0
      %v1843 = vmax.f32 %v1829, 0.0
      %v1844 = vmax.f32 %v1834, 0.0
      %v1845 = vmax.f32 %v1839, 0.0
      %v1846 = vlaneseq
      %v1847 = vshrl.u32 %v1846, 7
      %v1848 = vsub.s32 0, %v1847
      %v1849 = vrot.slane %v318, %v1848
      %v1851 = vsel %vm404, %v1842, 0
      %v1854 = vsel %vm404, %v1843, 0
      %v1857 = vsel %vm404, %v1844, 0
      %v1860 = vsel %vm404, %v1845, 0
      %1862 = vmatprep.subr.mxu0 0.0
      %1863 = vmatpush1.msra.mxu0 %v314
      %1864 = vmatprep.subr.mxu0 0.0
      %1865 = vmatpush1.msra.mxu0 %v315
      %1866 = vmatprep.subr.mxu0 0.0
      %1867 = vmatpush1.msra.mxu0 %v316
      %1868 = vmatprep.subr.mxu0 0.0
      %1869 = vmatpush1.msra.mxu0 %v317
      %1870 = vmatprep.subr.mxu0 0.0
      %1871 = vmatpush1.msra.mxu0 0.0
      %1872 = vmatprep.subr.mxu0 0.0
      %1873 = vmatpush1.msra.mxu0 0.0
      %1874 = vmatprep.subr.mxu0 0.0
      %1875 = vmatpush1.msra.mxu0 0.0
      %1876 = vmatprep.subr.mxu0 0.0
      %1877 = vmatpush1.msra.mxu0 0.0
      %1878 = vmatprep.subr.mxu0 0.0
      %1879 = vmatpush1.msra.mxu0 0.0
      %1880 = vmatprep.subr.mxu0 0.0
      %1881 = vmatpush1.msra.mxu0 0.0
      %1882 = vmatprep.subr.mxu0 0.0
      %1883 = vmatpush1.msra.mxu0 0.0
      %1884 = vmatprep.subr.mxu0 0.0
      %1885 = vmatpush1.msra.mxu0 0.0
      %1886 = vmatprep.subr.mxu0 0.0
      %1887 = vmatpush1.msra.mxu0 0.0
      %1888 = vmatprep.subr.mxu0 0.0
      %1889 = vmatpush1.msra.mxu0 0.0
      %1890 = vmatprep.subr.mxu0 0.0
      %1891 = vmatpush1.msra.mxu0 0.0
      %1892 = vmatprep.subr.mxu0 0.0
      %1893 = vmatpush1.msra.mxu0 0.0
      %1894 = vmatprep.subr.mxu0 0.0
      %1895 = vmatpush1.msra.mxu0 0.0
      %1896 = vmatprep.subr.mxu0 0.0
      %1897 = vmatpush1.msra.mxu0 0.0
      %1898 = vmatprep.subr.mxu0 0.0
      %1899 = vmatpush1.msra.mxu0 0.0
      %1900 = vmatprep.subr.mxu0 0.0
      %1901 = vmatpush1.msra.mxu0 0.0
      %1902 = vmatprep.subr.mxu0 0.0
      %1903 = vmatpush1.msra.mxu0 0.0
      %1904 = vmatprep.subr.mxu0 0.0
      %1905 = vmatpush1.msra.mxu0 0.0
      %1906 = vmatprep.subr.mxu0 0.0
      %1907 = vmatpush1.msra.mxu0 0.0
      %1908 = vmatprep.subr.mxu0 0.0
      %1909 = vmatpush1.msra.mxu0 0.0
      %1910 = vmatprep.subr.mxu0 0.0
      %1911 = vmatpush1.msra.mxu0 0.0
      %1912 = vmatprep.subr.mxu0 0.0
      %1913 = vmatpush1.msra.mxu0 0.0
      %1914 = vmatprep.subr.mxu0 0.0
      %1915 = vmatpush1.msra.mxu0 0.0
      %1916 = vmatprep.subr.mxu0 0.0
      %1917 = vmatpush1.msra.mxu0 0.0
      %1918 = vmatprep.subr.mxu0 0.0
      %1919 = vmatpush1.msra.mxu0 0.0
      %1920 = vmatprep.subr.mxu0 0.0
      %1921 = vmatpush1.msra.mxu0 0.0
      %1922 = vmatprep.subr.mxu0 0.0
      %1923 = vmatpush1.msra.mxu0 0.0
      %1924 = vmatprep.subr.mxu0 0.0
      %1925 = vmatpush1.msra.mxu0 0.0
      %1926 = vmatprep.mubr.f32.mxu0 0.0
      %1927 = vmatmul.mubr.f32.gmra.mrb[0].mxu0 %v1851
      %v1928 = vpop.f32.mrb[0].mxu0
      %v1929 = vadd.f32 %v1849, %v1928
      %v1930 = vpop.f32.mrb[0].mxu0
      %1931 = vmatprep.mubr.f32.mxu0 0.0
      %1932 = vmatmul.mubr.f32.gmra.mrb[0].mxu0 %v1854
      %v1933 = vpop.f32.mrb[0].mxu0
      %v1934 = vadd.f32 %v1849, %v1933
      %v1935 = vpop.f32.mrb[0].mxu0
      %1936 = vmatprep.mubr.f32.mxu0 0.0
      %1937 = vmatmul.mubr.f32.gmra.mrb[0].mxu0 %v1857
      %v1938 = vpop.f32.mrb[0].mxu0
      %v1939 = vadd.f32 %v1849, %v1938
      %v1940 = vpop.f32.mrb[0].mxu0
      %1941 = vmatprep.mubr.f32.mxu0 0.0
      %1942 = vmatmul.mubr.f32.gmra.mrb[0].mxu0 %v1860
      %v1943 = vpop.f32.mrb[0].mxu0
      %v1944 = vadd.f32 %v1849, %v1943
      %v1945 = vpop.f32.mrb[0].mxu0
      %1946 = vdwg.mxu0
      %v1947 = vmax.f32 %v1929, 0.0
      %v1948 = vmax.f32 %v1934, 0.0
      %v1949 = vmax.f32 %v1939, 0.0
      %v1950 = vmax.f32 %v1944, 0.0
      %v1951 = vlaneseq
      %v1952 = vshrl.u32 %v1951, 7
      %v1953 = vsub.s32 0, %v1952
      %v1954 = vrot.slane %v323, %v1953
      %v1956 = vsel %vm404, %v1947, 0
      %v1959 = vsel %vm404, %v1948, 0
      %v1962 = vsel %vm404, %v1949, 0
      %v1965 = vsel %vm404, %v1950, 0
      %1967 = vmatprep.subr.mxu0 0.0
      %1968 = vmatpush1.msra.mxu0 %v319
      %1969 = vmatprep.subr.mxu0 0.0
      %1970 = vmatpush1.msra.mxu0 %v320
      %1971 = vmatprep.subr.mxu0 0.0
      %1972 = vmatpush1.msra.mxu0 %v321
      %1973 = vmatprep.subr.mxu0 0.0
      %1974 = vmatpush1.msra.mxu0 %v322
      %1975 = vmatprep.subr.mxu0 0.0
      %1976 = vmatpush1.msra.mxu0 0.0
      %1977 = vmatprep.subr.mxu0 0.0
      %1978 = vmatpush1.msra.mxu0 0.0
      %1979 = vmatprep.subr.mxu0 0.0
      %1980 = vmatpush1.msra.mxu0 0.0
      %1981 = vmatprep.subr.mxu0 0.0
      %1982 = vmatpush1.msra.mxu0 0.0
      %1983 = vmatprep.subr.mxu0 0.0
      %1984 = vmatpush1.msra.mxu0 0.0
      %1985 = vmatprep.subr.mxu0 0.0
      %1986 = vmatpush1.msra.mxu0 0.0
      %1987 = vmatprep.subr.mxu0 0.0
      %1988 = vmatpush1.msra.mxu0 0.0
      %1989 = vmatprep.subr.mxu0 0.0
      %1990 = vmatpush1.msra.mxu0 0.0
      %1991 = vmatprep.subr.mxu0 0.0
      %1992 = vmatpush1.msra.mxu0 0.0
      %1993 = vmatprep.subr.mxu0 0.0
      %1994 = vmatpush1.msra.mxu0 0.0
      %1995 = vmatprep.subr.mxu0 0.0
      %1996 = vmatpush1.msra.mxu0 0.0
      %1997 = vmatprep.subr.mxu0 0.0
      %1998 = vmatpush1.msra.mxu0 0.0
      %1999 = vmatprep.subr.mxu0 0.0
      %2000 = vmatpush1.msra.mxu0 0.0
      %2001 = vmatprep.subr.mxu0 0.0
      %2002 = vmatpush1.msra.mxu0 0.0
      %2003 = vmatprep.subr.mxu0 0.0
      %2004 = vmatpush1.msra.mxu0 0.0
      %2005 = vmatprep.subr.mxu0 0.0
      %2006 = vmatpush1.msra.mxu0 0.0
      %2007 = vmatprep.subr.mxu0 0.0
      %2008 = vmatpush1.msra.mxu0 0.0
      %2009 = vmatprep.subr.mxu0 0.0
      %2010 = vmatpush1.msra.mxu0 0.0
      %2011 = vmatprep.subr.mxu0 0.0
      %2012 = vmatpush1.msra.mxu0 0.0
      %2013 = vmatprep.subr.mxu0 0.0
      %2014 = vmatpush1.msra.mxu0 0.0
      %2015 = vmatprep.subr.mxu0 0.0
      %2016 = vmatpush1.msra.mxu0 0.0
      %2017 = vmatprep.subr.mxu0 0.0
      %2018 = vmatpush1.msra.mxu0 0.0
      %2019 = vmatprep.subr.mxu0 0.0
      %2020 = vmatpush1.msra.mxu0 0.0
      %2021 = vmatprep.subr.mxu0 0.0
      %2022 = vmatpush1.msra.mxu0 0.0
      %2023 = vmatprep.subr.mxu0 0.0
      %2024 = vmatpush1.msra.mxu0 0.0
      %2025 = vmatprep.subr.mxu0 0.0
      %2026 = vmatpush1.msra.mxu0 0.0
      %2027 = vmatprep.subr.mxu0 0.0
      %2028 = vmatpush1.msra.mxu0 0.0
      %2029 = vmatprep.subr.mxu0 0.0
      %2030 = vmatpush1.msra.mxu0 0.0
      %2031 = vmatprep.mubr.f32.mxu0 0.0
      %2032 = vmatmul.mubr.f32.gmra.mrb[0].mxu0 %v1956
      %v2033 = vpop.f32.mrb[0].mxu0
      %v2034 = vadd.f32 %v1954, %v2033
      %v2035 = vpop.f32.mrb[0].mxu0
      %2036 = vmatprep.mubr.f32.mxu0 0.0
      %2037 = vmatmul.mubr.f32.gmra.mrb[0].mxu0 %v1959
      %v2038 = vpop.f32.mrb[0].mxu0
      %v2039 = vadd.f32 %v1954, %v2038
      %v2040 = vpop.f32.mrb[0].mxu0
      %2041 = vmatprep.mubr.f32.mxu0 0.0
      %2042 = vmatmul.mubr.f32.gmra.mrb[0].mxu0 %v1962
      %v2043 = vpop.f32.mrb[0].mxu0
      %v2044 = vadd.f32 %v1954, %v2043
      %v2045 = vpop.f32.mrb[0].mxu0
      %2046 = vmatprep.mubr.f32.mxu0 0.0
      %2047 = vmatmul.mubr.f32.gmra.mrb[0].mxu0 %v1965
      %v2048 = vpop.f32.mrb[0].mxu0
      %v2049 = vadd.f32 %v1954, %v2048
      %v2050 = vpop.f32.mrb[0].mxu0
      %2051 = vdwg.mxu0
      %v2052 = vtanh.pop %v2034
      %v2053 = vtanh.pop %v2039
      %v2054 = vtanh.pop %v2044
      %v2055 = vtanh.pop %v2049
      %2057 = vset.pattern.permute.xlu0 0
      %2058 = vperm.xlu0 %2057, %v2052
      %v2059 = vpop.permute.xlu0 %2058
      %2062 = vset.pattern.permute.xlu0 0
      %2063 = vperm.xlu0 %2062, %v2053
      %v2064 = vpop.permute.xlu0 %2063
      %2067 = vset.pattern.permute.xlu0 0
      %2068 = vperm.xlu0 %2067, %v2054
      %v2069 = vpop.permute.xlu0 %2068
      %2072 = vset.pattern.permute.xlu0 0
      %2073 = vperm.xlu0 %2072, %v2055
      %v2074 = vpop.permute.xlu0 %2073
      %v2076 = vmul.f32 %v242, %v2059
      %v2077 = vmul.f32 %v243, %v2064
      %v2078 = vmul.f32 %v244, %v2069
      %v2079 = vmul.f32 %v245, %v2074
      %v2080 = vsel %vm404, %v2076, 0.0
      %v2081 = vsel %vm404, %v2077, 0.0
      %v2082 = vadd.f32 %v2080, %v2081
      %v2083 = vsel %vm404, %v2078, 0.0
      %v2084 = vadd.f32 %v2082, %v2083
      %v2085 = vsel %vm404, %v2079, 0.0
      %v2086 = vadd.f32 %v2084, %v2085
      %v2087 = vrot.slane %v2086, 4
      %v2088 = vadd.f32 %v2086, %v2087
      %v2089 = vrot.slane %v2088, 2
      %v2090 = vadd.f32 %v2088, %v2089
      %v2091 = vrot.slane %v2090, 1
      %v2092 = vadd.f32 %v2090, %v2091
      %vm2093 = vcmp.gt.f32.partialorder %v2059, %v2092
      %vm2094 = vcmp.gt.f32.partialorder %v2064, %v2092
      %vm2095 = vcmp.gt.f32.partialorder %v2069, %v2092
      %vm2096 = vcmp.gt.f32.partialorder %v2074, %v2092
      %vm2097 = vcmp.eq.f32.partialorder %v2059, %v2092
      %vm2098 = vcmp.eq.f32.partialorder %v2064, %v2092
      %vm2099 = vcmp.eq.f32.partialorder %v2069, %v2092
      %vm2100 = vcmp.eq.f32.partialorder %v2074, %v2092
      %vm2101 = vmand %vm2097, %vm246
      %vm2102 = vmand %vm2098, %vm247
      %vm2103 = vmand %vm2099, %vm248
      %vm2104 = vmand %vm2100, %vm249
      %vm2105 = vmor %vm2093, %vm2101
      %vm2106 = vmor %vm2094, %vm2102
      %vm2107 = vmor %vm2095, %vm2103
      %vm2108 = vmor %vm2096, %vm2104
      %v2109 = vsel %vm2105, 1, 0
      %v2110 = vsel %vm2106, 1, 0
      %v2111 = vsel %vm2107, 1, 0
      %v2112 = vsel %vm2108, 1, 0
      %v2113 = vcvt.s32.f32 %v2109
      %v2114 = vcvt.s32.f32 %v2110
      %v2115 = vcvt.s32.f32 %v2111
      %v2116 = vcvt.s32.f32 %v2112
      %v2117 = vsel %vm404, %v2113, 0.0
      %v2118 = vsel %vm404, %v2114, 0.0
      %v2119 = vadd.f32 %v2117, %v2118
      %v2120 = vsel %vm404, %v2115, 0.0
      %v2121 = vadd.f32 %v2119, %v2120
      %v2122 = vsel %vm404, %v2116, 0.0
      %v2123 = vadd.f32 %v2121, %v2122
      %v2124 = vrot.slane %v2123, 4
      %v2125 = vadd.f32 %v2123, %v2124
      %v2126 = vrot.slane %v2125, 2
      %v2127 = vadd.f32 %v2125, %v2126
      %v2128 = vrot.slane %v2127, 1
      %v2129 = vadd.f32 %v2127, %v2128
      %vm2130 = vcmp.eq.f32.partialorder %v2129, %v260
      %vm2131 = vcmp.eq.f32.partialorder %v2129, %v261
      %v2132 = vsel %vm2130, 1, 0
      %v2133 = vsel %vm2131, 1, 0
      %v2134 = vcvt.s32.f32 %v2132
      %v2135 = vcvt.s32.f32 %v2133
      %2136 = vmatprep.subr.mxu0 0.0
      %2137 = vmatpush1.msra.mxu0 %v328
      %2138 = vmatprep.subr.mxu0 0.0
      %2139 = vmatpush1.msra.mxu0 %v329
      %2140 = vmatprep.subr.mxu0 0.0
      %2141 = vmatpush1.msra.mxu0 %v330
      %2142 = vmatprep.subr.mxu0 0.0
      %2143 = vmatpush1.msra.mxu0 %v331
      %2144 = vmatprep.subr.mxu0 0.0
      %2145 = vmatpush1.msra.mxu0 0.0
      %2146 = vmatprep.subr.mxu0 0.0
      %2147 = vmatpush1.msra.mxu0 0.0
      %2148 = vmatprep.subr.mxu0 0.0
      %2149 = vmatpush1.msra.mxu0 0.0
      %2150 = vmatprep.subr.mxu0 0.0
      %2151 = vmatpush1.msra.mxu0 0.0
      %2152 = vmatprep.subr.mxu0 0.0
      %2153 = vmatpush1.msra.mxu0 0.0
      %2154 = vmatprep.subr.mxu0 0.0
      %2155 = vmatpush1.msra.mxu0 0.0
      %2156 = vmatprep.subr.mxu0 0.0
      %2157 = vmatpush1.msra.mxu0 0.0
      %2158 = vmatprep.subr.mxu0 0.0
      %2159 = vmatpush1.msra.mxu0 0.0
      %2160 = vmatprep.subr.mxu0 0.0
      %2161 = vmatpush1.msra.mxu0 0.0
      %2162 = vmatprep.subr.mxu0 0.0
      %2163 = vmatpush1.msra.mxu0 0.0
      %2164 = vmatprep.subr.mxu0 0.0
      %2165 = vmatpush1.msra.mxu0 0.0
      %2166 = vmatprep.subr.mxu0 0.0
      %2167 = vmatpush1.msra.mxu0 0.0
      %2168 = vmatprep.subr.mxu0 0.0
      %2169 = vmatpush1.msra.mxu0 0.0
      %2170 = vmatprep.subr.mxu0 0.0
      %2171 = vmatpush1.msra.mxu0 0.0
      %2172 = vmatprep.subr.mxu0 0.0
      %2173 = vmatpush1.msra.mxu0 0.0
      %2174 = vmatprep.subr.mxu0 0.0
      %2175 = vmatpush1.msra.mxu0 0.0
      %2176 = vmatprep.subr.mxu0 0.0
      %2177 = vmatpush1.msra.mxu0 0.0
      %2178 = vmatprep.subr.mxu0 0.0
      %2179 = vmatpush1.msra.mxu0 0.0
      %2180 = vmatprep.subr.mxu0 0.0
      %2181 = vmatpush1.msra.mxu0 0.0
      %2182 = vmatprep.subr.mxu0 0.0
      %2183 = vmatpush1.msra.mxu0 0.0
      %2184 = vmatprep.subr.mxu0 0.0
      %2185 = vmatpush1.msra.mxu0 0.0
      %2186 = vmatprep.subr.mxu0 0.0
      %2187 = vmatpush1.msra.mxu0 0.0
      %2188 = vmatprep.subr.mxu0 0.0
      %2189 = vmatpush1.msra.mxu0 0.0
      %2190 = vmatprep.subr.mxu0 0.0
      %2191 = vmatpush1.msra.mxu0 0.0
      %2192 = vmatprep.subr.mxu0 0.0
      %2193 = vmatpush1.msra.mxu0 0.0
      %2194 = vmatprep.subr.mxu0 0.0
      %2195 = vmatpush1.msra.mxu0 0.0
      %2196 = vmatprep.subr.mxu0 0.0
      %2197 = vmatpush1.msra.mxu0 0.0
      %2198 = vmatprep.subr.mxu0 0.0
      %2199 = vmatpush1.msra.mxu0 0.0
      %2200 = vmatprep.mubr.f32.mxu0 0.0
      %2201 = vmatmul.mubr.f32.gmra.mrb[0].mxu0 %v1257
      %v2202 = vpop.f32.mrb[0].mxu0
      %v2203 = vadd.f32 0.0, %v2202
      %v2204 = vpop.f32.mrb[0].mxu0
      %2205 = vmatprep.mubr.f32.mxu0 0.0
      %2206 = vmatmul.mubr.f32.gmra.mrb[0].mxu0 %v1260
      %v2207 = vpop.f32.mrb[0].mxu0
      %v2208 = vadd.f32 0.0, %v2207
      %v2209 = vpop.f32.mrb[0].mxu0
      %2210 = vmatprep.mubr.f32.mxu0 0.0
      %2211 = vmatmul.mubr.f32.gmra.mrb[0].mxu0 %v1263
      %v2212 = vpop.f32.mrb[0].mxu0
      %v2213 = vadd.f32 0.0, %v2212
      %v2214 = vpop.f32.mrb[0].mxu0
      %2215 = vmatprep.mubr.f32.mxu0 0.0
      %2216 = vmatmul.mubr.f32.gmra.mrb[0].mxu0 %v1266
      %v2217 = vpop.f32.mrb[0].mxu0
      %v2218 = vadd.f32 0.0, %v2217
      %v2219 = vpop.f32.mrb[0].mxu0
      %2220 = vdwg.mxu0
      %2221 = vmatprep.subr.mxu0 0.0
      %2222 = vmatpush1.msra.mxu0 %v324
      %2223 = vmatprep.subr.mxu0 0.0
      %2224 = vmatpush1.msra.mxu0 %v325
      %2225 = vmatprep.subr.mxu0 0.0
      %2226 = vmatpush1.msra.mxu0 %v326
      %2227 = vmatprep.subr.mxu0 0.0
      %2228 = vmatpush1.msra.mxu0 %v327
      %2229 = vmatprep.subr.mxu0 0.0
      %2230 = vmatpush1.msra.mxu0 0.0
      %2231 = vmatprep.subr.mxu0 0.0
      %2232 = vmatpush1.msra.mxu0 0.0
      %2233 = vmatprep.subr.mxu0 0.0
      %2234 = vmatpush1.msra.mxu0 0.0
      %2235 = vmatprep.subr.mxu0 0.0
      %2236 = vmatpush1.msra.mxu0 0.0
      %2237 = vmatprep.subr.mxu0 0.0
      %2238 = vmatpush1.msra.mxu0 0.0
      %2239 = vmatprep.subr.mxu0 0.0
      %2240 = vmatpush1.msra.mxu0 0.0
      %2241 = vmatprep.subr.mxu0 0.0
      %2242 = vmatpush1.msra.mxu0 0.0
      %2243 = vmatprep.subr.mxu0 0.0
      %2244 = vmatpush1.msra.mxu0 0.0
      %2245 = vmatprep.subr.mxu0 0.0
      %2246 = vmatpush1.msra.mxu0 0.0
      %2247 = vmatprep.subr.mxu0 0.0
      %2248 = vmatpush1.msra.mxu0 0.0
      %2249 = vmatprep.subr.mxu0 0.0
      %2250 = vmatpush1.msra.mxu0 0.0
      %2251 = vmatprep.subr.mxu0 0.0
      %2252 = vmatpush1.msra.mxu0 0.0
      %2253 = vmatprep.subr.mxu0 0.0
      %2254 = vmatpush1.msra.mxu0 0.0
      %2255 = vmatprep.subr.mxu0 0.0
      %2256 = vmatpush1.msra.mxu0 0.0
      %2257 = vmatprep.subr.mxu0 0.0
      %2258 = vmatpush1.msra.mxu0 0.0
      %2259 = vmatprep.subr.mxu0 0.0
      %2260 = vmatpush1.msra.mxu0 0.0
      %2261 = vmatprep.subr.mxu0 0.0
      %2262 = vmatpush1.msra.mxu0 0.0
      %2263 = vmatprep.subr.mxu0 0.0
      %2264 = vmatpush1.msra.mxu0 0.0
      %2265 = vmatprep.subr.mxu0 0.0
      %2266 = vmatpush1.msra.mxu0 0.0
      %2267 = vmatprep.subr.mxu0 0.0
      %2268 = vmatpush1.msra.mxu0 0.0
      %2269 = vmatprep.subr.mxu0 0.0
      %2270 = vmatpush1.msra.mxu0 0.0
      %2271 = vmatprep.subr.mxu0 0.0
      %2272 = vmatpush1.msra.mxu0 0.0
      %2273 = vmatprep.subr.mxu0 0.0
      %2274 = vmatpush1.msra.mxu0 0.0
      %2275 = vmatprep.subr.mxu0 0.0
      %2276 = vmatpush1.msra.mxu0 0.0
      %2277 = vmatprep.subr.mxu0 0.0
      %2278 = vmatpush1.msra.mxu0 0.0
      %2279 = vmatprep.subr.mxu0 0.0
      %2280 = vmatpush1.msra.mxu0 0.0
      %2281 = vmatprep.subr.mxu0 0.0
      %2282 = vmatpush1.msra.mxu0 0.0
      %2283 = vmatprep.subr.mxu0 0.0
      %2284 = vmatpush1.msra.mxu0 0.0
      %2285 = vmatprep.mubr.f32.mxu0 0.0
      %2286 = vmatmul.mubr.f32.gmra.mrb[0].mxu0 %v857
      %v2287 = vpop.f32.mrb[0].mxu0
      %v2288 = vadd.f32 %v2203, %v2287
      %v2289 = vpop.f32.mrb[0].mxu0
      %2290 = vmatprep.mubr.f32.mxu0 0.0
      %2291 = vmatmul.mubr.f32.gmra.mrb[0].mxu0 %v860
      %v2292 = vpop.f32.mrb[0].mxu0
      %v2293 = vadd.f32 %v2208, %v2292
      %v2294 = vpop.f32.mrb[0].mxu0
      %2295 = vmatprep.mubr.f32.mxu0 0.0
      %2296 = vmatmul.mubr.f32.gmra.mrb[0].mxu0 %v863
      %v2297 = vpop.f32.mrb[0].mxu0
      %v2298 = vadd.f32 %v2213, %v2297
      %v2299 = vpop.f32.mrb[0].mxu0
      %2300 = vmatprep.mubr.f32.mxu0 0.0
      %2301 = vmatmul.mubr.f32.gmra.mrb[0].mxu0 %v866
      %v2302 = vpop.f32.mrb[0].mxu0
      %v2303 = vadd.f32 %v2218, %v2302
      %v2304 = vpop.f32.mrb[0].mxu0
      %2305 = vdwg.mxu0
      %2306 = vmatprep.subr.mxu0 0.0
      %2307 = vmatpush1.msra.mxu0 %v332
      %2308 = vmatprep.subr.mxu0 0.0
      %2309 = vmatpush1.msra.mxu0 %v333
      %2310 = vmatprep.subr.mxu0 0.0
      %2311 = vmatpush1.msra.mxu0 %v334
      %2312 = vmatprep.subr.mxu0 0.0
      %2313 = vmatpush1.msra.mxu0 %v335
      %2314 = vmatprep.subr.mxu0 0.0
      %2315 = vmatpush1.msra.mxu0 0.0
      %2316 = vmatprep.subr.mxu0 0.0
      %2317 = vmatpush1.msra.mxu0 0.0
      %2318 = vmatprep.subr.mxu0 0.0
      %2319 = vmatpush1.msra.mxu0 0.0
      %2320 = vmatprep.subr.mxu0 0.0
      %2321 = vmatpush1.msra.mxu0 0.0
      %2322 = vmatprep.subr.mxu0 0.0
      %2323 = vmatpush1.msra.mxu0 0.0
      %2324 = vmatprep.subr.mxu0 0.0
      %2325 = vmatpush1.msra.mxu0 0.0
      %2326 = vmatprep.subr.mxu0 0.0
      %2327 = vmatpush1.msra.mxu0 0.0
      %2328 = vmatprep.subr.mxu0 0.0
      %2329 = vmatpush1.msra.mxu0 0.0
      %2330 = vmatprep.subr.mxu0 0.0
      %2331 = vmatpush1.msra.mxu0 0.0
      %2332 = vmatprep.subr.mxu0 0.0
      %2333 = vmatpush1.msra.mxu0 0.0
      %2334 = vmatprep.subr.mxu0 0.0
      %2335 = vmatpush1.msra.mxu0 0.0
      %2336 = vmatprep.subr.mxu0 0.0
      %2337 = vmatpush1.msra.mxu0 0.0
      %2338 = vmatprep.subr.mxu0 0.0
      %2339 = vmatpush1.msra.mxu0 0.0
      %2340 = vmatprep.subr.mxu0 0.0
      %2341 = vmatpush1.msra.mxu0 0.0
      %2342 = vmatprep.subr.mxu0 0.0
      %2343 = vmatpush1.msra.mxu0 0.0
      %2344 = vmatprep.subr.mxu0 0.0
      %2345 = vmatpush1.msra.mxu0 0.0
      %2346 = vmatprep.subr.mxu0 0.0
      %2347 = vmatpush1.msra.mxu0 0.0
      %2348 = vmatprep.subr.mxu0 0.0
      %2349 = vmatpush1.msra.mxu0 0.0
      %2350 = vmatprep.subr.mxu0 0.0
      %2351 = vmatpush1.msra.mxu0 0.0
      %2352 = vmatprep.subr.mxu0 0.0
      %2353 = vmatpush1.msra.mxu0 0.0
      %2354 = vmatprep.subr.mxu0 0.0
      %2355 = vmatpush1.msra.mxu0 0.0
      %2356 = vmatprep.subr.mxu0 0.0
      %2357 = vmatpush1.msra.mxu0 0.0
      %2358 = vmatprep.subr.mxu0 0.0
      %2359 = vmatpush1.msra.mxu0 0.0
      %2360 = vmatprep.subr.mxu0 0.0
      %2361 = vmatpush1.msra.mxu0 0.0
      %2362 = vmatprep.subr.mxu0 0.0
      %2363 = vmatpush1.msra.mxu0 0.0
      %2364 = vmatprep.subr.mxu0 0.0
      %2365 = vmatpush1.msra.mxu0 0.0
      %2366 = vmatprep.subr.mxu0 0.0
      %2367 = vmatpush1.msra.mxu0 0.0
      %2368 = vmatprep.subr.mxu0 0.0
      %2369 = vmatpush1.msra.mxu0 0.0
      %2370 = vmatprep.mubr.f32.mxu0 0.0
      %2371 = vmatmul.mubr.f32.gmra.mrb[0].mxu0 %v1657
      %v2372 = vpop.f32.mrb[0].mxu0
      %v2373 = vadd.f32 0.0, %v2372
      %v2374 = vpop.f32.mrb[0].mxu0
      %2375 = vmatprep.mubr.f32.mxu0 0.0
      %2376 = vmatmul.mubr.f32.gmra.mrb[0].mxu0 %v1660
      %v2377 = vpop.f32.mrb[0].mxu0
      %v2378 = vadd.f32 0.0, %v2377
      %v2379 = vpop.f32.mrb[0].mxu0
      %2380 = vmatprep.mubr.f32.mxu0 0.0
      %2381 = vmatmul.mubr.f32.gmra.mrb[0].mxu0 %v1663
      %v2382 = vpop.f32.mrb[0].mxu0
      %v2383 = vadd.f32 0.0, %v2382
      %v2384 = vpop.f32.mrb[0].mxu0
      %2385 = vmatprep.mubr.f32.mxu0 0.0
      %2386 = vmatmul.mubr.f32.gmra.mrb[0].mxu0 %v1666
      %v2387 = vpop.f32.mrb[0].mxu0
      %v2388 = vadd.f32 0.0, %v2387
      %v2389 = vpop.f32.mrb[0].mxu0
      %2390 = vdwg.mxu0
      %v2391 = vadd.f32 %v2288, %v2373
      %v2392 = vadd.f32 %v2293, %v2378
      %v2393 = vadd.f32 %v2298, %v2383
      %v2394 = vadd.f32 %v2303, %v2388
      %v2395 = vsel %vm404, %v2052, 0
      %v2397 = vsel %vm404, %v2053, 0
      %v2399 = vsel %vm404, %v2054, 0
      %v2401 = vsel %vm404, %v2055, 0
      %2403 = vmatprep.subr.mxu0 0.0
      %2404 = vmatpush1.msra.mxu0 %v336
      %2405 = vmatprep.subr.mxu0 0.0
      %2406 = vmatpush1.msra.mxu0 %v337
      %2407 = vmatprep.subr.mxu0 0.0
      %2408 = vmatpush1.msra.mxu0 %v338
      %2409 = vmatprep.subr.mxu0 0.0
      %2410 = vmatpush1.msra.mxu0 %v339
      %2411 = vmatprep.subr.mxu0 0.0
      %2412 = vmatpush1.msra.mxu0 0.0
      %2413 = vmatprep.subr.mxu0 0.0
      %2414 = vmatpush1.msra.mxu0 0.0
      %2415 = vmatprep.subr.mxu0 0.0
      %2416 = vmatpush1.msra.mxu0 0.0
      %2417 = vmatprep.subr.mxu0 0.0
      %2418 = vmatpush1.msra.mxu0 0.0
      %2419 = vmatprep.subr.mxu0 0.0
      %2420 = vmatpush1.msra.mxu0 0.0
      %2421 = vmatprep.subr.mxu0 0.0
      %2422 = vmatpush1.msra.mxu0 0.0
      %2423 = vmatprep.subr.mxu0 0.0
      %2424 = vmatpush1.msra.mxu0 0.0
      %2425 = vmatprep.subr.mxu0 0.0
      %2426 = vmatpush1.msra.mxu0 0.0
      %2427 = vmatprep.subr.mxu0 0.0
      %2428 = vmatpush1.msra.mxu0 0.0
      %2429 = vmatprep.subr.mxu0 0.0
      %2430 = vmatpush1.msra.mxu0 0.0
      %2431 = vmatprep.subr.mxu0 0.0
      %2432 = vmatpush1.msra.mxu0 0.0
      %2433 = vmatprep.subr.mxu0 0.0
      %2434 = vmatpush1.msra.mxu0 0.0
      %2435 = vmatprep.subr.mxu0 0.0
      %2436 = vmatpush1.msra.mxu0 0.0
      %2437 = vmatprep.subr.mxu0 0.0
      %2438 = vmatpush1.msra.mxu0 0.0
      %2439 = vmatprep.subr.mxu0 0.0
      %2440 = vmatpush1.msra.mxu0 0.0
      %2441 = vmatprep.subr.mxu0 0.0
      %2442 = vmatpush1.msra.mxu0 0.0
      %2443 = vmatprep.subr.mxu0 0.0
      %2444 = vmatpush1.msra.mxu0 0.0
      %2445 = vmatprep.subr.mxu0 0.0
      %2446 = vmatpush1.msra.mxu0 0.0
      %2447 = vmatprep.subr.mxu0 0.0
      %2448 = vmatpush1.msra.mxu0 0.0
      %2449 = vmatprep.subr.mxu0 0.0
      %2450 = vmatpush1.msra.mxu0 0.0
      %2451 = vmatprep.subr.mxu0 0.0
      %2452 = vmatpush1.msra.mxu0 0.0
      %2453 = vmatprep.subr.mxu0 0.0
      %2454 = vmatpush1.msra.mxu0 0.0
      %2455 = vmatprep.subr.mxu0 0.0
      %2456 = vmatpush1.msra.mxu0 0.0
      %2457 = vmatprep.subr.mxu0 0.0
      %2458 = vmatpush1.msra.mxu0 0.0
      %2459 = vmatprep.subr.mxu0 0.0
      %2460 = vmatpush1.msra.mxu0 0.0
      %2461 = vmatprep.subr.mxu0 0.0
      %2462 = vmatpush1.msra.mxu0 0.0
      %2463 = vmatprep.subr.mxu0 0.0
      %2464 = vmatpush1.msra.mxu0 0.0
      %2465 = vmatprep.subr.mxu0 0.0
      %2466 = vmatpush1.msra.mxu0 0.0
      %2467 = vmatprep.mubr.f32.mxu0 0.0
      %2468 = vmatmul.mubr.f32.gmra.mrb[0].mxu0 %v2395
      %v2469 = vpop.f32.mrb[0].mxu0
      %v2470 = vadd.f32 0.0, %v2469
      %v2471 = vpop.f32.mrb[0].mxu0
      %2472 = vmatprep.mubr.f32.mxu0 0.0
      %2473 = vmatmul.mubr.f32.gmra.mrb[0].mxu0 %v2397
      %v2474 = vpop.f32.mrb[0].mxu0
      %v2475 = vadd.f32 0.0, %v2474
      %v2476 = vpop.f32.mrb[0].mxu0
      %2477 = vmatprep.mubr.f32.mxu0 0.0
      %2478 = vmatmul.mubr.f32.gmra.mrb[0].mxu0 %v2399
      %v2479 = vpop.f32.mrb[0].mxu0
      %v2480 = vadd.f32 0.0, %v2479
      %v2481 = vpop.f32.mrb[0].mxu0
      %2482 = vmatprep.mubr.f32.mxu0 0.0
      %2483 = vmatmul.mubr.f32.gmra.mrb[0].mxu0 %v2401
      %v2484 = vpop.f32.mrb[0].mxu0
      %v2485 = vadd.f32 0.0, %v2484
      %v2486 = vpop.f32.mrb[0].mxu0
      %2487 = vdwg.mxu0
      %v2488 = vadd.f32 %v2391, %v2470
      %v2489 = vadd.f32 %v2392, %v2475
      %v2490 = vadd.f32 %v2393, %v2480
      %v2491 = vadd.f32 %v2394, %v2485
      %v2492 = vlaneseq
      %v2493 = vshrl.u32 %v2492, 7
      %v2494 = vsub.s32 0, %v2493
      %v2495 = vrot.slane %v340, %v2494
      %v2497 = vsel %vm404, %v2134, 0
      %v2500 = vsel %vm404, %v2135, 0
      %2502 = vmatprep.subr.mxu0 0.0
      %2503 = vmatpush1.msra.mxu0 %v2488
      %2504 = vmatprep.subr.mxu0 0.0
      %2505 = vmatpush1.msra.mxu0 %v2489
      %2506 = vmatprep.subr.mxu0 0.0
      %2507 = vmatpush1.msra.mxu0 %v2490
      %2508 = vmatprep.subr.mxu0 0.0
      %2509 = vmatpush1.msra.mxu0 %v2491
      %2510 = vmatprep.subr.mxu0 0.0
      %2511 = vmatpush1.msra.mxu0 0.0
      %2512 = vmatprep.subr.mxu0 0.0
      %2513 = vmatpush1.msra.mxu0 0.0
      %2514 = vmatprep.subr.mxu0 0.0
      %2515 = vmatpush1.msra.mxu0 0.0
      %2516 = vmatprep.subr.mxu0 0.0
      %2517 = vmatpush1.msra.mxu0 0.0
      %2518 = vmatprep.subr.mxu0 0.0
      %2519 = vmatpush1.msra.mxu0 0.0
      %2520 = vmatprep.subr.mxu0 0.0
      %2521 = vmatpush1.msra.mxu0 0.0
      %2522 = vmatprep.subr.mxu0 0.0
      %2523 = vmatpush1.msra.mxu0 0.0
      %2524 = vmatprep.subr.mxu0 0.0
      %2525 = vmatpush1.msra.mxu0 0.0
      %2526 = vmatprep.subr.mxu0 0.0
      %2527 = vmatpush1.msra.mxu0 0.0
      %2528 = vmatprep.subr.mxu0 0.0
      %2529 = vmatpush1.msra.mxu0 0.0
      %2530 = vmatprep.subr.mxu0 0.0
      %2531 = vmatpush1.msra.mxu0 0.0
      %2532 = vmatprep.subr.mxu0 0.0
      %2533 = vmatpush1.msra.mxu0 0.0
      %2534 = vmatprep.subr.mxu0 0.0
      %2535 = vmatpush1.msra.mxu0 0.0
      %2536 = vmatprep.subr.mxu0 0.0
      %2537 = vmatpush1.msra.mxu0 0.0
      %2538 = vmatprep.subr.mxu0 0.0
      %2539 = vmatpush1.msra.mxu0 0.0
      %2540 = vmatprep.subr.mxu0 0.0
      %2541 = vmatpush1.msra.mxu0 0.0
      %2542 = vmatprep.subr.mxu0 0.0
      %2543 = vmatpush1.msra.mxu0 0.0
      %2544 = vmatprep.subr.mxu0 0.0
      %2545 = vmatpush1.msra.mxu0 0.0
      %2546 = vmatprep.subr.mxu0 0.0
      %2547 = vmatpush1.msra.mxu0 0.0
      %2548 = vmatprep.subr.mxu0 0.0
      %2549 = vmatpush1.msra.mxu0 0.0
      %2550 = vmatprep.subr.mxu0 0.0
      %2551 = vmatpush1.msra.mxu0 0.0
      %2552 = vmatprep.subr.mxu0 0.0
      %2553 = vmatpush1.msra.mxu0 0.0
      %2554 = vmatprep.subr.mxu0 0.0
      %2555 = vmatpush1.msra.mxu0 0.0
      %2556 = vmatprep.subr.mxu0 0.0
      %2557 = vmatpush1.msra.mxu0 0.0
      %2558 = vmatprep.subr.mxu0 0.0
      %2559 = vmatpush1.msra.mxu0 0.0
      %2560 = vmatprep.subr.mxu0 0.0
      %2561 = vmatpush1.msra.mxu0 0.0
      %2562 = vmatprep.subr.mxu0 0.0
      %2563 = vmatpush1.msra.mxu0 0.0
      %2564 = vmatprep.subr.mxu0 0.0
      %2565 = vmatpush1.msra.mxu0 0.0
      %2566 = vmatprep.mubr.f32.mxu0 0.0
      %2567 = vmatmul.mubr.f32.gmra.mrb[0].mxu0 %v2497
      %v2568 = vpop.f32.mrb[0].mxu0
      %v2569 = vadd.f32 %v2495, %v2568
      %v2570 = vpop.f32.mrb[0].mxu0
      %2571 = vmatprep.mubr.f32.mxu0 0.0
      %2572 = vmatmul.mubr.f32.gmra.mrb[0].mxu0 %v2500
      %v2573 = vpop.f32.mrb[0].mxu0
      %v2574 = vadd.f32 %v2495, %v2573
      %v2575 = vpop.f32.mrb[0].mxu0
      %2576 = vdwg.mxu0
      %v2577 = vmax.f32 %v2569, 0.0
      %v2578 = vmax.f32 %v2574, 0.0
      %v2579 = vmax.f32 %v2577, %v2578
      %v2581 = vrot.slane %v2579, 1
      %v2582 = vsel %vm404, %v2581, 0
      %2584 = vmatprep.subr.mxu0 0.0
      %2585 = vmatpush1.msra.mxu0 %v345
      %2586 = vmatprep.subr.mxu0 0.0
      %2587 = vmatpush1.msra.mxu0 %v346
      %2588 = vmatprep.subr.mxu0 0.0
      %2589 = vmatpush1.msra.mxu0 %v347
      %2590 = vmatprep.subr.mxu0 0.0
      %2591 = vmatpush1.msra.mxu0 %v348
      %2592 = vmatprep.subr.mxu0 0.0
      %2593 = vmatpush1.msra.mxu0 0.0
      %2594 = vmatprep.subr.mxu0 0.0
      %2595 = vmatpush1.msra.mxu0 0.0
      %2596 = vmatprep.subr.mxu0 0.0
      %2597 = vmatpush1.msra.mxu0 0.0
      %2598 = vmatprep.subr.mxu0 0.0
      %2599 = vmatpush1.msra.mxu0 0.0
      %2600 = vmatprep.subr.mxu0 0.0
      %2601 = vmatpush1.msra.mxu0 0.0
      %2602 = vmatprep.subr.mxu0 0.0
      %2603 = vmatpush1.msra.mxu0 0.0
      %2604 = vmatprep.subr.mxu0 0.0
      %2605 = vmatpush1.msra.mxu0 0.0
      %2606 = vmatprep.subr.mxu0 0.0
      %2607 = vmatpush1.msra.mxu0 0.0
      %2608 = vmatprep.subr.mxu0 0.0
      %2609 = vmatpush1.msra.mxu0 0.0
      %2610 = vmatprep.subr.mxu0 0.0
      %2611 = vmatpush1.msra.mxu0 0.0
      %2612 = vmatprep.subr.mxu0 0.0
      %2613 = vmatpush1.msra.mxu0 0.0
      %2614 = vmatprep.subr.mxu0 0.0
      %2615 = vmatpush1.msra.mxu0 0.0
      %2616 = vmatprep.subr.mxu0 0.0
      %2617 = vmatpush1.msra.mxu0 0.0
      %2618 = vmatprep.subr.mxu0 0.0
      %2619 = vmatpush1.msra.mxu0 0.0
      %2620 = vmatprep.subr.mxu0 0.0
      %2621 = vmatpush1.msra.mxu0 0.0
      %2622 = vmatprep.subr.mxu0 0.0
      %2623 = vmatpush1.msra.mxu0 0.0
      %2624 = vmatprep.subr.mxu0 0.0
      %2625 = vmatpush1.msra.mxu0 0.0
      %2626 = vmatprep.subr.mxu0 0.0
      %2627 = vmatpush1.msra.mxu0 0.0
      %2628 = vmatprep.subr.mxu0 0.0
      %2629 = vmatpush1.msra.mxu0 0.0
      %2630 = vmatprep.subr.mxu0 0.0
      %2631 = vmatpush1.msra.mxu0 0.0
      %2632 = vmatprep.subr.mxu0 0.0
      %2633 = vmatpush1.msra.mxu0 0.0
      %2634 = vmatprep.subr.mxu0 0.0
      %2635 = vmatpush1.msra.mxu0 0.0
      %2636 = vmatprep.subr.mxu0 0.0
      %2637 = vmatpush1.msra.mxu0 0.0
      %2638 = vmatprep.subr.mxu0 0.0
      %2639 = vmatpush1.msra.mxu0 0.0
      %2640 = vmatprep.subr.mxu0 0.0
      %2641 = vmatpush1.msra.mxu0 0.0
      %2642 = vmatprep.subr.mxu0 0.0
      %2643 = vmatpush1.msra.mxu0 0.0
      %2644 = vmatprep.subr.mxu0 0.0
      %2645 = vmatpush1.msra.mxu0 0.0
      %2646 = vmatprep.subr.mxu0 0.0
      %2647 = vmatpush1.msra.mxu0 0.0
      %2648 = vmatprep.mubr.f32.mxu0 0.0
      %2649 = vmatmul.mubr.f32.gmra.mrb[0].mxu0 %v2582
      %v2650 = vpop.f32.mrb[0].mxu0
      %v2651 = vadd.f32 0.0, %v2650
      %v2652 = vpop.f32.mrb[0].mxu0
      %2653 = vdwg.mxu0
      %v2654 = vsel %vm404, %v2579, 0
      %2656 = vmatprep.subr.mxu0 0.0
      %2657 = vmatpush1.msra.mxu0 %v341
      %2658 = vmatprep.subr.mxu0 0.0
      %2659 = vmatpush1.msra.mxu0 %v342
      %2660 = vmatprep.subr.mxu0 0.0
      %2661 = vmatpush1.msra.mxu0 %v343
      %2662 = vmatprep.subr.mxu0 0.0
      %2663 = vmatpush1.msra.mxu0 %v344
      %2664 = vmatprep.subr.mxu0 0.0
      %2665 = vmatpush1.msra.mxu0 0.0
      %2666 = vmatprep.subr.mxu0 0.0
      %2667 = vmatpush1.msra.mxu0 0.0
      %2668 = vmatprep.subr.mxu0 0.0
      %2669 = vmatpush1.msra.mxu0 0.0
      %2670 = vmatprep.subr.mxu0 0.0
      %2671 = vmatpush1.msra.mxu0 0.0
      %2672 = vmatprep.subr.mxu0 0.0
      %2673 = vmatpush1.msra.mxu0 0.0
      %2674 = vmatprep.subr.mxu0 0.0
      %2675 = vmatpush1.msra.mxu0 0.0
      %2676 = vmatprep.subr.mxu0 0.0
      %2677 = vmatpush1.msra.mxu0 0.0
      %2678 = vmatprep.subr.mxu0 0.0
      %2679 = vmatpush1.msra.mxu0 0.0
      %2680 = vmatprep.subr.mxu0 0.0
      %2681 = vmatpush1.msra.mxu0 0.0
      %2682 = vmatprep.subr.mxu0 0.0
      %2683 = vmatpush1.msra.mxu0 0.0
      %2684 = vmatprep.subr.mxu0 0.0
      %2685 = vmatpush1.msra.mxu0 0.0
      %2686 = vmatprep.subr.mxu0 0.0
      %2687 = vmatpush1.msra.mxu0 0.0
      %2688 = vmatprep.subr.mxu0 0.0
      %2689 = vmatpush1.msra.mxu0 0.0
      %2690 = vmatprep.subr.mxu0 0.0
      %2691 = vmatpush1.msra.mxu0 0.0
      %2692 = vmatprep.subr.mxu0 0.0
      %2693 = vmatpush1.msra.mxu0 0.0
      %2694 = vmatprep.subr.mxu0 0.0
      %2695 = vmatpush1.msra.mxu0 0.0
      %2696 = vmatprep.subr.mxu0 0.0
      %2697 = vmatpush1.msra.mxu0 0.0
      %2698 = vmatprep.subr.mxu0 0.0
      %2699 = vmatpush1.msra.mxu0 0.0
      %2700 = vmatprep.subr.mxu0 0.0
      %2701 = vmatpush1.msra.mxu0 0.0
      %2702 = vmatprep.subr.mxu0 0.0
      %2703 = vmatpush1.msra.mxu0 0.0
      %2704 = vmatprep.subr.mxu0 0.0
      %2705 = vmatpush1.msra.mxu0 0.0
      %2706 = vmatprep.subr.mxu0 0.0
      %2707 = vmatpush1.msra.mxu0 0.0
      %2708 = vmatprep.subr.mxu0 0.0
      %2709 = vmatpush1.msra.mxu0 0.0
      %2710 = vmatprep.subr.mxu0 0.0
      %2711 = vmatpush1.msra.mxu0 0.0
      %2712 = vmatprep.subr.mxu0 0.0
      %2713 = vmatpush1.msra.mxu0 0.0
      %2714 = vmatprep.subr.mxu0 0.0
      %2715 = vmatpush1.msra.mxu0 0.0
      %2716 = vmatprep.subr.mxu0 0.0
      %2717 = vmatpush1.msra.mxu0 0.0
      %2718 = vmatprep.subr.mxu0 0.0
      %2719 = vmatpush1.msra.mxu0 0.0
      %2720 = vmatprep.mubr.f32.mxu0 0.0
      %2721 = vmatmul.mubr.f32.gmra.mrb[0].mxu0 %v2654
      %v2722 = vpop.f32.mrb[0].mxu0
      %v2723 = vadd.f32 %v2651, %v2722
      %v2724 = vpop.f32.mrb[0].mxu0
      %2725 = vdwg.mxu0
      %v2726 = vrot.slane %v2579, 2
      %v2727 = vsel %vm404, %v2726, 0
      %2729 = vmatprep.subr.mxu0 0.0
      %2730 = vmatpush1.msra.mxu0 %v349
      %2731 = vmatprep.subr.mxu0 0.0
      %2732 = vmatpush1.msra.mxu0 %v350
      %2733 = vmatprep.subr.mxu0 0.0
      %2734 = vmatpush1.msra.mxu0 %v351
      %2735 = vmatprep.subr.mxu0 0.0
      %2736 = vmatpush1.msra.mxu0 %v352
      %2737 = vmatprep.subr.mxu0 0.0
      %2738 = vmatpush1.msra.mxu0 0.0
      %2739 = vmatprep.subr.mxu0 0.0
      %2740 = vmatpush1.msra.mxu0 0.0
      %2741 = vmatprep.subr.mxu0 0.0
      %2742 = vmatpush1.msra.mxu0 0.0
      %2743 = vmatprep.subr.mxu0 0.0
      %2744 = vmatpush1.msra.mxu0 0.0
      %2745 = vmatprep.subr.mxu0 0.0
      %2746 = vmatpush1.msra.mxu0 0.0
      %2747 = vmatprep.subr.mxu0 0.0
      %2748 = vmatpush1.msra.mxu0 0.0
      %2749 = vmatprep.subr.mxu0 0.0
      %2750 = vmatpush1.msra.mxu0 0.0
      %2751 = vmatprep.subr.mxu0 0.0
      %2752 = vmatpush1.msra.mxu0 0.0
      %2753 = vmatprep.subr.mxu0 0.0
      %2754 = vmatpush1.msra.mxu0 0.0
      %2755 = vmatprep.subr.mxu0 0.0
      %2756 = vmatpush1.msra.mxu0 0.0
      %2757 = vmatprep.subr.mxu0 0.0
      %2758 = vmatpush1.msra.mxu0 0.0
      %2759 = vmatprep.subr.mxu0 0.0
      %2760 = vmatpush1.msra.mxu0 0.0
      %2761 = vmatprep.subr.mxu0 0.0
      %2762 = vmatpush1.msra.mxu0 0.0
      %2763 = vmatprep.subr.mxu0 0.0
      %2764 = vmatpush1.msra.mxu0 0.0
      %2765 = vmatprep.subr.mxu0 0.0
      %2766 = vmatpush1.msra.mxu0 0.0
      %2767 = vmatprep.subr.mxu0 0.0
      %2768 = vmatpush1.msra.mxu0 0.0
      %2769 = vmatprep.subr.mxu0 0.0
      %2770 = vmatpush1.msra.mxu0 0.0
      %2771 = vmatprep.subr.mxu0 0.0
      %2772 = vmatpush1.msra.mxu0 0.0
      %2773 = vmatprep.subr.mxu0 0.0
      %2774 = vmatpush1.msra.mxu0 0.0
      %2775 = vmatprep.subr.mxu0 0.0
      %2776 = vmatpush1.msra.mxu0 0.0
      %2777 = vmatprep.subr.mxu0 0.0
      %2778 = vmatpush1.msra.mxu0 0.0
      %2779 = vmatprep.subr.mxu0 0.0
      %2780 = vmatpush1.msra.mxu0 0.0
      %2781 = vmatprep.subr.mxu0 0.0
      %2782 = vmatpush1.msra.mxu0 0.0
      %2783 = vmatprep.subr.mxu0 0.0
      %2784 = vmatpush1.msra.mxu0 0.0
      %2785 = vmatprep.subr.mxu0 0.0
      %2786 = vmatpush1.msra.mxu0 0.0
      %2787 = vmatprep.subr.mxu0 0.0
      %2788 = vmatpush1.msra.mxu0 0.0
      %2789 = vmatprep.subr.mxu0 0.0
      %2790 = vmatpush1.msra.mxu0 0.0
      %2791 = vmatprep.subr.mxu0 0.0
      %2792 = vmatpush1.msra.mxu0 0.0
      %2793 = vmatprep.mubr.f32.mxu0 0.0
      %2794 = vmatmul.mubr.f32.gmra.mrb[0].mxu0 %v2727
      %v2795 = vpop.f32.mrb[0].mxu0
      %v2796 = vadd.f32 0.0, %v2795
      %v2797 = vpop.f32.mrb[0].mxu0
      %2798 = vdwg.mxu0
      %v2799 = vadd.f32 %v2723, %v2796
      %v2800 = vrot.slane %v2579, 3
      %v2801 = vsel %vm404, %v2800, 0
      %2803 = vmatprep.subr.mxu0 0.0
      %2804 = vmatpush1.msra.mxu0 %v353
      %2805 = vmatprep.subr.mxu0 0.0
      %2806 = vmatpush1.msra.mxu0 %v354
      %2807 = vmatprep.subr.mxu0 0.0
      %2808 = vmatpush1.msra.mxu0 %v355
      %2809 = vmatprep.subr.mxu0 0.0
      %2810 = vmatpush1.msra.mxu0 %v356
      %2811 = vmatprep.subr.mxu0 0.0
      %2812 = vmatpush1.msra.mxu0 0.0
      %2813 = vmatprep.subr.mxu0 0.0
      %2814 = vmatpush1.msra.mxu0 0.0
      %2815 = vmatprep.subr.mxu0 0.0
      %2816 = vmatpush1.msra.mxu0 0.0
      %2817 = vmatprep.subr.mxu0 0.0
      %2818 = vmatpush1.msra.mxu0 0.0
      %2819 = vmatprep.subr.mxu0 0.0
      %2820 = vmatpush1.msra.mxu0 0.0
      %2821 = vmatprep.subr.mxu0 0.0
      %2822 = vmatpush1.msra.mxu0 0.0
      %2823 = vmatprep.subr.mxu0 0.0
      %2824 = vmatpush1.msra.mxu0 0.0
      %2825 = vmatprep.subr.mxu0 0.0
      %2826 = vmatpush1.msra.mxu0 0.0
      %2827 = vmatprep.subr.mxu0 0.0
      %2828 = vmatpush1.msra.mxu0 0.0
      %2829 = vmatprep.subr.mxu0 0.0
      %2830 = vmatpush1.msra.mxu0 0.0
      %2831 = vmatprep.subr.mxu0 0.0
      %2832 = vmatpush1.msra.mxu0 0.0
      %2833 = vmatprep.subr.mxu0 0.0
      %2834 = vmatpush1.msra.mxu0 0.0
      %2835 = vmatprep.subr.mxu0 0.0
      %2836 = vmatpush1.msra.mxu0 0.0
      %2837 = vmatprep.subr.mxu0 0.0
      %2838 = vmatpush1.msra.mxu0 0.0
      %2839 = vmatprep.subr.mxu0 0.0
      %2840 = vmatpush1.msra.mxu0 0.0
      %2841 = vmatprep.subr.mxu0 0.0
      %2842 = vmatpush1.msra.mxu0 0.0
      %2843 = vmatprep.subr.mxu0 0.0
      %2844 = vmatpush1.msra.mxu0 0.0
      %2845 = vmatprep.subr.mxu0 0.0
      %2846 = vmatpush1.msra.mxu0 0.0
      %2847 = vmatprep.subr.mxu0 0.0
      %2848 = vmatpush1.msra.mxu0 0.0
      %2849 = vmatprep.subr.mxu0 0.0
      %2850 = vmatpush1.msra.mxu0 0.0
      %2851 = vmatprep.subr.mxu0 0.0
      %2852 = vmatpush1.msra.mxu0 0.0
      %2853 = vmatprep.subr.mxu0 0.0
      %2854 = vmatpush1.msra.mxu0 0.0
      %2855 = vmatprep.subr.mxu0 0.0
      %2856 = vmatpush1.msra.mxu0 0.0
      %2857 = vmatprep.subr.mxu0 0.0
      %2858 = vmatpush1.msra.mxu0 0.0
      %2859 = vmatprep.subr.mxu0 0.0
      %2860 = vmatpush1.msra.mxu0 0.0
      %2861 = vmatprep.subr.mxu0 0.0
      %2862 = vmatpush1.msra.mxu0 0.0
      %2863 = vmatprep.subr.mxu0 0.0
      %2864 = vmatpush1.msra.mxu0 0.0
      %2865 = vmatprep.subr.mxu0 0.0
      %2866 = vmatpush1.msra.mxu0 0.0
      %2867 = vmatprep.mubr.f32.mxu0 0.0
      %2868 = vmatmul.mubr.f32.gmra.mrb[0].mxu0 %v2801
      %v2869 = vpop.f32.mrb[0].mxu0
      %v2870 = vadd.f32 0.0, %v2869
      %v2871 = vpop.f32.mrb[0].mxu0
      %2872 = vdwg.mxu0
      %v2873 = vadd.f32 %v2799, %v2870
      %v2874 = vrot.slane %v2579, 4
      %v2875 = vsel %vm404, %v2874, 0
      %2877 = vmatprep.subr.mxu0 0.0
      %2878 = vmatpush1.msra.mxu0 %v357
      %2879 = vmatprep.subr.mxu0 0.0
      %2880 = vmatpush1.msra.mxu0 %v358
      %2881 = vmatprep.subr.mxu0 0.0
      %2882 = vmatpush1.msra.mxu0 %v359
      %2883 = vmatprep.subr.mxu0 0.0
      %2884 = vmatpush1.msra.mxu0 %v360
      %2885 = vmatprep.subr.mxu0 0.0
      %2886 = vmatpush1.msra.mxu0 0.0
      %2887 = vmatprep.subr.mxu0 0.0
      %2888 = vmatpush1.msra.mxu0 0.0
      %2889 = vmatprep.subr.mxu0 0.0
      %2890 = vmatpush1.msra.mxu0 0.0
      %2891 = vmatprep.subr.mxu0 0.0
      %2892 = vmatpush1.msra.mxu0 0.0
      %2893 = vmatprep.subr.mxu0 0.0
      %2894 = vmatpush1.msra.mxu0 0.0
      %2895 = vmatprep.subr.mxu0 0.0
      %2896 = vmatpush1.msra.mxu0 0.0
      %2897 = vmatprep.subr.mxu0 0.0
      %2898 = vmatpush1.msra.mxu0 0.0
      %2899 = vmatprep.subr.mxu0 0.0
      %2900 = vmatpush1.msra.mxu0 0.0
      %2901 = vmatprep.subr.mxu0 0.0
      %2902 = vmatpush1.msra.mxu0 0.0
      %2903 = vmatprep.subr.mxu0 0.0
      %2904 = vmatpush1.msra.mxu0 0.0
      %2905 = vmatprep.subr.mxu0 0.0
      %2906 = vmatpush1.msra.mxu0 0.0
      %2907 = vmatprep.subr.mxu0 0.0
      %2908 = vmatpush1.msra.mxu0 0.0
      %2909 = vmatprep.subr.mxu0 0.0
      %2910 = vmatpush1.msra.mxu0 0.0
      %2911 = vmatprep.subr.mxu0 0.0
      %2912 = vmatpush1.msra.mxu0 0.0
      %2913 = vmatprep.subr.mxu0 0.0
      %2914 = vmatpush1.msra.mxu0 0.0
      %2915 = vmatprep.subr.mxu0 0.0
      %2916 = vmatpush1.msra.mxu0 0.0
      %2917 = vmatprep.subr.mxu0 0.0
      %2918 = vmatpush1.msra.mxu0 0.0
      %2919 = vmatprep.subr.mxu0 0.0
      %2920 = vmatpush1.msra.mxu0 0.0
      %2921 = vmatprep.subr.mxu0 0.0
      %2922 = vmatpush1.msra.mxu0 0.0
      %2923 = vmatprep.subr.mxu0 0.0
      %2924 = vmatpush1.msra.mxu0 0.0
      %2925 = vmatprep.subr.mxu0 0.0
      %2926 = vmatpush1.msra.mxu0 0.0
      %2927 = vmatprep.subr.mxu0 0.0
      %2928 = vmatpush1.msra.mxu0 0.0
      %2929 = vmatprep.subr.mxu0 0.0
      %2930 = vmatpush1.msra.mxu0 0.0
      %2931 = vmatprep.subr.mxu0 0.0
      %2932 = vmatpush1.msra.mxu0 0.0
      %2933 = vmatprep.subr.mxu0 0.0
      %2934 = vmatpush1.msra.mxu0 0.0
      %2935 = vmatprep.subr.mxu0 0.0
      %2936 = vmatpush1.msra.mxu0 0.0
      %2937 = vmatprep.subr.mxu0 0.0
      %2938 = vmatpush1.msra.mxu0 0.0
      %2939 = vmatprep.subr.mxu0 0.0
      %2940 = vmatpush1.msra.mxu0 0.0
      %2941 = vmatprep.mubr.f32.mxu0 0.0
      %2942 = vmatmul.mubr.f32.gmra.mrb[0].mxu0 %v2875
      %v2943 = vpop.f32.mrb[0].mxu0
      %v2944 = vadd.f32 0.0, %v2943
      %v2945 = vpop.f32.mrb[0].mxu0
      %2946 = vdwg.mxu0
      %v2947 = vadd.f32 %v2873, %v2944
      %v2948 = vlaneseq
      %v2949 = vshrl.u32 %v2948, 7
      %v2950 = vsub.s32 0, %v2949
      %v2951 = vrot.slane %v361, %v2950
      %v2952 = vadd.f32 %v2947, %v2951
      %v2953 = vmax.f32 %v2952, 0.0
      %v2955 = vrot.slane %v2953, 1
      %v2956 = vsel %vm404, %v2955, 0
      %2958 = vmatprep.subr.mxu0 0.0
      %2959 = vmatpush1.msra.mxu0 %v366
      %2960 = vmatprep.subr.mxu0 0.0
      %2961 = vmatpush1.msra.mxu0 %v367
      %2962 = vmatprep.subr.mxu0 0.0
      %2963 = vmatpush1.msra.mxu0 %v368
      %2964 = vmatprep.subr.mxu0 0.0
      %2965 = vmatpush1.msra.mxu0 %v369
      %2966 = vmatprep.subr.mxu0 0.0
      %2967 = vmatpush1.msra.mxu0 0.0
      %2968 = vmatprep.subr.mxu0 0.0
      %2969 = vmatpush1.msra.mxu0 0.0
      %2970 = vmatprep.subr.mxu0 0.0
      %2971 = vmatpush1.msra.mxu0 0.0
      %2972 = vmatprep.subr.mxu0 0.0
      %2973 = vmatpush1.msra.mxu0 0.0
      %2974 = vmatprep.subr.mxu0 0.0
      %2975 = vmatpush1.msra.mxu0 0.0
      %2976 = vmatprep.subr.mxu0 0.0
      %2977 = vmatpush1.msra.mxu0 0.0
      %2978 = vmatprep.subr.mxu0 0.0
      %2979 = vmatpush1.msra.mxu0 0.0
      %2980 = vmatprep.subr.mxu0 0.0
      %2981 = vmatpush1.msra.mxu0 0.0
      %2982 = vmatprep.subr.mxu0 0.0
      %2983 = vmatpush1.msra.mxu0 0.0
      %2984 = vmatprep.subr.mxu0 0.0
      %2985 = vmatpush1.msra.mxu0 0.0
      %2986 = vmatprep.subr.mxu0 0.0
      %2987 = vmatpush1.msra.mxu0 0.0
      %2988 = vmatprep.subr.mxu0 0.0
      %2989 = vmatpush1.msra.mxu0 0.0
      %2990 = vmatprep.subr.mxu0 0.0
      %2991 = vmatpush1.msra.mxu0 0.0
      %2992 = vmatprep.subr.mxu0 0.0
      %2993 = vmatpush1.msra.mxu0 0.0
      %2994 = vmatprep.subr.mxu0 0.0
      %2995 = vmatpush1.msra.mxu0 0.0
      %2996 = vmatprep.subr.mxu0 0.0
      %2997 = vmatpush1.msra.mxu0 0.0
      %2998 = vmatprep.subr.mxu0 0.0
      %2999 = vmatpush1.msra.mxu0 0.0
      %3000 = vmatprep.subr.mxu0 0.0
      %3001 = vmatpush1.msra.mxu0 0.0
      %3002 = vmatprep.subr.mxu0 0.0
      %3003 = vmatpush1.msra.mxu0 0.0
      %3004 = vmatprep.subr.mxu0 0.0
      %3005 = vmatpush1.msra.mxu0 0.0
      %3006 = vmatprep.subr.mxu0 0.0
      %3007 = vmatpush1.msra.mxu0 0.0
      %3008 = vmatprep.subr.mxu0 0.0
      %3009 = vmatpush1.msra.mxu0 0.0
      %3010 = vmatprep.subr.mxu0 0.0
      %3011 = vmatpush1.msra.mxu0 0.0
      %3012 = vmatprep.subr.mxu0 0.0
      %3013 = vmatpush1.msra.mxu0 0.0
      %3014 = vmatprep.subr.mxu0 0.0
      %3015 = vmatpush1.msra.mxu0 0.0
      %3016 = vmatprep.subr.mxu0 0.0
      %3017 = vmatpush1.msra.mxu0 0.0
      %3018 = vmatprep.subr.mxu0 0.0
      %3019 = vmatpush1.msra.mxu0 0.0
      %3020 = vmatprep.subr.mxu0 0.0
      %3021 = vmatpush1.msra.mxu0 0.0
      %3022 = vmatprep.mubr.f32.mxu0 0.0
      %3023 = vmatmul.mubr.f32.gmra.mrb[0].mxu0 %v2956
      %v3024 = vpop.f32.mrb[0].mxu0
      %v3025 = vadd.f32 0.0, %v3024
      %v3026 = vpop.f32.mrb[0].mxu0
      %3027 = vdwg.mxu0
      %v3028 = vsel %vm404, %v2953, 0
      %3030 = vmatprep.subr.mxu0 0.0
      %3031 = vmatpush1.msra.mxu0 %v362
      %3032 = vmatprep.subr.mxu0 0.0
      %3033 = vmatpush1.msra.mxu0 %v363
      %3034 = vmatprep.subr.mxu0 0.0
      %3035 = vmatpush1.msra.mxu0 %v364
      %3036 = vmatprep.subr.mxu0 0.0
      %3037 = vmatpush1.msra.mxu0 %v365
      %3038 = vmatprep.subr.mxu0 0.0
      %3039 = vmatpush1.msra.mxu0 0.0
      %3040 = vmatprep.subr.mxu0 0.0
      %3041 = vmatpush1.msra.mxu0 0.0
      %3042 = vmatprep.subr.mxu0 0.0
      %3043 = vmatpush1.msra.mxu0 0.0
      %3044 = vmatprep.subr.mxu0 0.0
      %3045 = vmatpush1.msra.mxu0 0.0
      %3046 = vmatprep.subr.mxu0 0.0
      %3047 = vmatpush1.msra.mxu0 0.0
      %3048 = vmatprep.subr.mxu0 0.0
      %3049 = vmatpush1.msra.mxu0 0.0
      %3050 = vmatprep.subr.mxu0 0.0
      %3051 = vmatpush1.msra.mxu0 0.0
      %3052 = vmatprep.subr.mxu0 0.0
      %3053 = vmatpush1.msra.mxu0 0.0
      %3054 = vmatprep.subr.mxu0 0.0
      %3055 = vmatpush1.msra.mxu0 0.0
      %3056 = vmatprep.subr.mxu0 0.0
      %3057 = vmatpush1.msra.mxu0 0.0
      %3058 = vmatprep.subr.mxu0 0.0
      %3059 = vmatpush1.msra.mxu0 0.0
      %3060 = vmatprep.subr.mxu0 0.0
      %3061 = vmatpush1.msra.mxu0 0.0
      %3062 = vmatprep.subr.mxu0 0.0
      %3063 = vmatpush1.msra.mxu0 0.0
      %3064 = vmatprep.subr.mxu0 0.0
      %3065 = vmatpush1.msra.mxu0 0.0
      %3066 = vmatprep.subr.mxu0 0.0
      %3067 = vmatpush1.msra.mxu0 0.0
      %3068 = vmatprep.subr.mxu0 0.0
      %3069 = vmatpush1.msra.mxu0 0.0
      %3070 = vmatprep.subr.mxu0 0.0
      %3071 = vmatpush1.msra.mxu0 0.0
      %3072 = vmatprep.subr.mxu0 0.0
      %3073 = vmatpush1.msra.mxu0 0.0
      %3074 = vmatprep.subr.mxu0 0.0
      %3075 = vmatpush1.msra.mxu0 0.0
      %3076 = vmatprep.subr.mxu0 0.0
      %3077 = vmatpush1.msra.mxu0 0.0
      %3078 = vmatprep.subr.mxu0 0.0
      %3079 = vmatpush1.msra.mxu0 0.0
      %3080 = vmatprep.subr.mxu0 0.0
      %3081 = vmatpush1.msra.mxu0 0.0
      %3082 = vmatprep.subr.mxu0 0.0
      %3083 = vmatpush1.msra.mxu0 0.0
      %3084 = vmatprep.subr.mxu0 0.0
      %3085 = vmatpush1.msra.mxu0 0.0
      %3086 = vmatprep.subr.mxu0 0.0
      %3087 = vmatpush1.msra.mxu0 0.0
      %3088 = vmatprep.subr.mxu0 0.0
      %3089 = vmatpush1.msra.mxu0 0.0
      %3090 = vmatprep.subr.mxu0 0.0
      %3091 = vmatpush1.msra.mxu0 0.0
      %3092 = vmatprep.subr.mxu0 0.0
      %3093 = vmatpush1.msra.mxu0 0.0
      %3094 = vmatprep.mubr.f32.mxu0 0.0
      %3095 = vmatmul.mubr.f32.gmra.mrb[0].mxu0 %v3028
      %v3096 = vpop.f32.mrb[0].mxu0
      %v3097 = vadd.f32 %v3025, %v3096
      %v3098 = vpop.f32.mrb[0].mxu0
      %3099 = vdwg.mxu0
      %v3100 = vrot.slane %v2953, 2
      %v3101 = vsel %vm404, %v3100, 0
      %3103 = vmatprep.subr.mxu0 0.0
      %3104 = vmatpush1.msra.mxu0 %v370
      %3105 = vmatprep.subr.mxu0 0.0
      %3106 = vmatpush1.msra.mxu0 %v371
      %3107 = vmatprep.subr.mxu0 0.0
      %3108 = vmatpush1.msra.mxu0 %v372
      %3109 = vmatprep.subr.mxu0 0.0
      %3110 = vmatpush1.msra.mxu0 %v373
      %3111 = vmatprep.subr.mxu0 0.0
      %3112 = vmatpush1.msra.mxu0 0.0
      %3113 = vmatprep.subr.mxu0 0.0
      %3114 = vmatpush1.msra.mxu0 0.0
      %3115 = vmatprep.subr.mxu0 0.0
      %3116 = vmatpush1.msra.mxu0 0.0
      %3117 = vmatprep.subr.mxu0 0.0
      %3118 = vmatpush1.msra.mxu0 0.0
      %3119 = vmatprep.subr.mxu0 0.0
      %3120 = vmatpush1.msra.mxu0 0.0
      %3121 = vmatprep.subr.mxu0 0.0
      %3122 = vmatpush1.msra.mxu0 0.0
      %3123 = vmatprep.subr.mxu0 0.0
      %3124 = vmatpush1.msra.mxu0 0.0
      %3125 = vmatprep.subr.mxu0 0.0
      %3126 = vmatpush1.msra.mxu0 0.0
      %3127 = vmatprep.subr.mxu0 0.0
      %3128 = vmatpush1.msra.mxu0 0.0
      %3129 = vmatprep.subr.mxu0 0.0
      %3130 = vmatpush1.msra.mxu0 0.0
      %3131 = vmatprep.subr.mxu0 0.0
      %3132 = vmatpush1.msra.mxu0 0.0
      %3133 = vmatprep.subr.mxu0 0.0
      %3134 = vmatpush1.msra.mxu0 0.0
      %3135 = vmatprep.subr.mxu0 0.0
      %3136 = vmatpush1.msra.mxu0 0.0
      %3137 = vmatprep.subr.mxu0 0.0
      %3138 = vmatpush1.msra.mxu0 0.0
      %3139 = vmatprep.subr.mxu0 0.0
      %3140 = vmatpush1.msra.mxu0 0.0
      %3141 = vmatprep.subr.mxu0 0.0
      %3142 = vmatpush1.msra.mxu0 0.0
      %3143 = vmatprep.subr.mxu0 0.0
      %3144 = vmatpush1.msra.mxu0 0.0
      %3145 = vmatprep.subr.mxu0 0.0
      %3146 = vmatpush1.msra.mxu0 0.0
      %3147 = vmatprep.subr.mxu0 0.0
      %3148 = vmatpush1.msra.mxu0 0.0
      %3149 = vmatprep.subr.mxu0 0.0
      %3150 = vmatpush1.msra.mxu0 0.0
      %3151 = vmatprep.subr.mxu0 0.0
      %3152 = vmatpush1.msra.mxu0 0.0
      %3153 = vmatprep.subr.mxu0 0.0
      %3154 = vmatpush1.msra.mxu0 0.0
      %3155 = vmatprep.subr.mxu0 0.0
      %3156 = vmatpush1.msra.mxu0 0.0
      %3157 = vmatprep.subr.mxu0 0.0
      %3158 = vmatpush1.msra.mxu0 0.0
      %3159 = vmatprep.subr.mxu0 0.0
      %3160 = vmatpush1.msra.mxu0 0.0
      %3161 = vmatprep.subr.mxu0 0.0
      %3162 = vmatpush1.msra.mxu0 0.0
      %3163 = vmatprep.subr.mxu0 0.0
      %3164 = vmatpush1.msra.mxu0 0.0
      %3165 = vmatprep.subr.mxu0 0.0
      %3166 = vmatpush1.msra.mxu0 0.0
      %3167 = vmatprep.mubr.f32.mxu0 0.0
      %3168 = vmatmul.mubr.f32.gmra.mrb[0].mxu0 %v3101
      %v3169 = vpop.f32.mrb[0].mxu0
      %v3170 = vadd.f32 0.0, %v3169
      %v3171 = vpop.f32.mrb[0].mxu0
      %3172 = vdwg.mxu0
      %v3173 = vadd.f32 %v3097, %v3170
      %v3174 = vrot.slane %v2953, 3
      %v3175 = vsel %vm404, %v3174, 0
      %3177 = vmatprep.subr.mxu0 0.0
      %3178 = vmatpush1.msra.mxu0 %v374
      %3179 = vmatprep.subr.mxu0 0.0
      %3180 = vmatpush1.msra.mxu0 %v375
      %3181 = vmatprep.subr.mxu0 0.0
      %3182 = vmatpush1.msra.mxu0 %v376
      %3183 = vmatprep.subr.mxu0 0.0
      %3184 = vmatpush1.msra.mxu0 %v377
      %3185 = vmatprep.subr.mxu0 0.0
      %3186 = vmatpush1.msra.mxu0 0.0
      %3187 = vmatprep.subr.mxu0 0.0
      %3188 = vmatpush1.msra.mxu0 0.0
      %3189 = vmatprep.subr.mxu0 0.0
      %3190 = vmatpush1.msra.mxu0 0.0
      %3191 = vmatprep.subr.mxu0 0.0
      %3192 = vmatpush1.msra.mxu0 0.0
      %3193 = vmatprep.subr.mxu0 0.0
      %3194 = vmatpush1.msra.mxu0 0.0
      %3195 = vmatprep.subr.mxu0 0.0
      %3196 = vmatpush1.msra.mxu0 0.0
      %3197 = vmatprep.subr.mxu0 0.0
      %3198 = vmatpush1.msra.mxu0 0.0
      %3199 = vmatprep.subr.mxu0 0.0
      %3200 = vmatpush1.msra.mxu0 0.0
      %3201 = vmatprep.subr.mxu0 0.0
      %3202 = vmatpush1.msra.mxu0 0.0
      %3203 = vmatprep.subr.mxu0 0.0
      %3204 = vmatpush1.msra.mxu0 0.0
      %3205 = vmatprep.subr.mxu0 0.0
      %3206 = vmatpush1.msra.mxu0 0.0
      %3207 = vmatprep.subr.mxu0 0.0
      %3208 = vmatpush1.msra.mxu0 0.0
      %3209 = vmatprep.subr.mxu0 0.0
      %3210 = vmatpush1.msra.mxu0 0.0
      %3211 = vmatprep.subr.mxu0 0.0
      %3212 = vmatpush1.msra.mxu0 0.0
      %3213 = vmatprep.subr.mxu0 0.0
      %3214 = vmatpush1.msra.mxu0 0.0
      %3215 = vmatprep.subr.mxu0 0.0
      %3216 = vmatpush1.msra.mxu0 0.0
      %3217 = vmatprep.subr.mxu0 0.0
      %3218 = vmatpush1.msra.mxu0 0.0
      %3219 = vmatprep.subr.mxu0 0.0
      %3220 = vmatpush1.msra.mxu0 0.0
      %3221 = vmatprep.subr.mxu0 0.0
      %3222 = vmatpush1.msra.mxu0 0.0
      %3223 = vmatprep.subr.mxu0 0.0
      %3224 = vmatpush1.msra.mxu0 0.0
      %3225 = vmatprep.subr.mxu0 0.0
      %3226 = vmatpush1.msra.mxu0 0.0
      %3227 = vmatprep.subr.mxu0 0.0
      %3228 = vmatpush1.msra.mxu0 0.0
      %3229 = vmatprep.subr.mxu0 0.0
      %3230 = vmatpush1.msra.mxu0 0.0
      %3231 = vmatprep.subr.mxu0 0.0
      %3232 = vmatpush1.msra.mxu0 0.0
      %3233 = vmatprep.subr.mxu0 0.0
      %3234 = vmatpush1.msra.mxu0 0.0
      %3235 = vmatprep.subr.mxu0 0.0
      %3236 = vmatpush1.msra.mxu0 0.0
      %3237 = vmatprep.subr.mxu0 0.0
      %3238 = vmatpush1.msra.mxu0 0.0
      %3239 = vmatprep.subr.mxu0 0.0
      %3240 = vmatpush1.msra.mxu0 0.0
      %3241 = vmatprep.mubr.f32.mxu0 0.0
      %3242 = vmatmul.mubr.f32.gmra.mrb[0].mxu0 %v3175
      %v3243 = vpop.f32.mrb[0].mxu0
      %v3244 = vadd.f32 0.0, %v3243
      %v3245 = vpop.f32.mrb[0].mxu0
      %3246 = vdwg.mxu0
      %v3247 = vadd.f32 %v3173, %v3244
      %v3248 = vadd.f32 %v3247, %v378
      %v3249 = vmax.f32 %v3248, 0.0
      %3250 = vmatprep.subr.mxu0 0.0
      %3251 = vmatpush1.msra.mxu0 %v379
      %3252 = vmatprep.subr.mxu0 0.0
      %3253 = vmatpush1.msra.mxu0 %v380
      %3254 = vmatprep.subr.mxu0 0.0
      %3255 = vmatpush1.msra.mxu0 %v381
      %3256 = vmatprep.subr.mxu0 0.0
      %3257 = vmatpush1.msra.mxu0 %v382
      %3258 = vmatprep.subr.mxu0 0.0
      %3259 = vmatpush1.msra.mxu0 %v383
      %3260 = vmatprep.subr.mxu0 0.0
      %3261 = vmatpush1.msra.mxu0 %v384
      %3262 = vmatprep.subr.mxu0 0.0
      %3263 = vmatpush1.msra.mxu0 %v385
      %3264 = vmatprep.subr.mxu0 0.0
      %3265 = vmatpush1.msra.mxu0 %v386
      %3266 = vmatprep.subr.mxu0 0.0
      %3267 = vmatpush1.msra.mxu0 %v387
      %3268 = vmatprep.subr.mxu0 0.0
      %3269 = vmatpush1.msra.mxu0 %v388
      %3270 = vmatprep.subr.mxu0 0.0
      %3271 = vmatpush1.msra.mxu0 %v389
      %3272 = vmatprep.subr.mxu0 0.0
      %3273 = vmatpush1.msra.mxu0 %v390
      %3274 = vmatprep.subr.mxu0 0.0
      %3275 = vmatpush1.msra.mxu0 %v391
      %3276 = vmatprep.subr.mxu0 0.0
      %3277 = vmatpush1.msra.mxu0 %v392
      %3278 = vmatprep.subr.mxu0 0.0
      %3279 = vmatpush1.msra.mxu0 %v393
      %3280 = vmatprep.subr.mxu0 0.0
      %3281 = vmatpush1.msra.mxu0 %v394
      %3282 = vmatprep.subr.mxu0 0.0
      %3283 = vmatpush1.msra.mxu0 0.0
      %3284 = vmatprep.subr.mxu0 0.0
      %3285 = vmatpush1.msra.mxu0 0.0
      %3286 = vmatprep.subr.mxu0 0.0
      %3287 = vmatpush1.msra.mxu0 0.0
      %3288 = vmatprep.subr.mxu0 0.0
      %3289 = vmatpush1.msra.mxu0 0.0
      %3290 = vmatprep.subr.mxu0 0.0
      %3291 = vmatpush1.msra.mxu0 0.0
      %3292 = vmatprep.subr.mxu0 0.0
      %3293 = vmatpush1.msra.mxu0 0.0
      %3294 = vmatprep.subr.mxu0 0.0
      %3295 = vmatpush1.msra.mxu0 0.0
      %3296 = vmatprep.subr.mxu0 0.0
      %3297 = vmatpush1.msra.mxu0 0.0
      %3298 = vmatprep.subr.mxu0 0.0
      %3299 = vmatpush1.msra.mxu0 0.0
      %3300 = vmatprep.subr.mxu0 0.0
      %3301 = vmatpush1.msra.mxu0 0.0
      %3302 = vmatprep.subr.mxu0 0.0
      %3303 = vmatpush1.msra.mxu0 0.0
      %3304 = vmatprep.subr.mxu0 0.0
      %3305 = vmatpush1.msra.mxu0 0.0
      %3306 = vmatprep.subr.mxu0 0.0
      %3307 = vmatpush1.msra.mxu0 0.0
      %3308 = vmatprep.subr.mxu0 0.0
      %3309 = vmatpush1.msra.mxu0 0.0
      %3310 = vmatprep.subr.mxu0 0.0
      %3311 = vmatpush1.msra.mxu0 0.0
      %3312 = vmatprep.subr.mxu0 0.0
      %3313 = vmatpush1.msra.mxu0 0.0
      %3314 = vmatprep.mubr.f32.mxu0 0.0
      %3315 = vmatmul.mubr.f32.gmra.mrb[0].mxu0 %v3249
      %v3316 = vpop.f32.mrb[0].mxu0
      %v3317 = vadd.f32 %v395, %v3316
      %v3318 = vpop.f32.mrb[0].mxu0
      %3319 = vdwg.mxu0
      %vm3320 = vcmask 0
      %3321 = vst.msk [vmem:[%s225] sm:$0x1] %vm3320, %v3317
      %s3322 = scalar_lea.vmem %s213, 32
      %v3323 = vld [vmem:[%s3322] sm:$0xff]
      %v3324 = vld [vmem:[%s3322 + $0x8] sm:$0xff]
      %v3325 = vld [vmem:[%s3322 + $0x10] sm:$0xff]
      %v3326 = vld [vmem:[%s3322 + $0x18] sm:$0xff]
      %v3327 = vadd.f32 %v3323, %v242
      %v3328 = vadd.f32 %v3324, %v243
      %v3329 = vadd.f32 %v3325, %v244
      %v3330 = vadd.f32 %v3326, %v245
      %v3331 = vsel %vm404, %v3327, 0.0
      %3332 = vadd.xlane.f32.xlu0 %v3331
      %v3333 = vpop.xlane.xlu0 %3332
      %v3334 = vsel %vm404, %v3328, 0.0
      %3335 = vadd.xlane.f32.xlu0 %v3334
      %v3336 = vpop.xlane.xlu0 %3335
      %v3337 = vsel %vm404, %v3329, 0.0
      %3338 = vadd.xlane.f32.xlu0 %v3337
      %v3339 = vpop.xlane.xlu0 %3338
      %v3340 = vsel %vm404, %v3330, 0.0
      %3341 = vadd.xlane.f32.xlu0 %v3340
      %v3342 = vpop.xlane.xlu0 %3341
      %v3343 = vadd.f32 %v3331, %v3334
      %v3344 = vadd.f32 %v3343, %v3337
      %v3345 = vadd.f32 %v3344, %v3340
      %v3346 = vrot.slane %v3345, 4
      %v3347 = vadd.f32 %v3345, %v3346
      %v3348 = vrot.slane %v3347, 2
      %v3349 = vadd.f32 %v3347, %v3348
      %v3350 = vrot.slane %v3349, 1
      %v3351 = vadd.f32 %v3349, %v3350
      %v3352 = vrsqrt.pop %v3333
      %v3353 = vrsqrt.pop %v3336
      %v3354 = vrsqrt.pop %v3339
      %v3355 = vrsqrt.pop %v3342
      %v3356 = vmul.f32 %v3327, %v3352
      %v3357 = vmul.f32 %v3328, %v3353
      %v3358 = vmul.f32 %v3329, %v3354
      %v3359 = vmul.f32 %v3330, %v3355
      %v3360 = vrsqrt.pop %v3351
      %v3361 = vmul.f32 %v3356, %v3360
      %v3362 = vmul.f32 %v3357, %v3360
      %v3363 = vmul.f32 %v3358, %v3360
      %v3364 = vmul.f32 %v3359, %v3360
      %s3365 = scalar_lea.vmem %s220, 32
      %v3366 = vld [vmem:[%s3365] sm:$0xff]
      %v3367 = vld [vmem:[%s3365 + $0x8] sm:$0xff]
      %v3368 = vld [vmem:[%s3365 + $0x10] sm:$0xff]
      %v3369 = vld [vmem:[%s3365 + $0x18] sm:$0xff]
      %v3371 = vsel %vm443, %v3366, 0
      %v3374 = vsel %vm443, %v3367, 0
      %v3377 = vsel %vm443, %v3368, 0
      %v3380 = vsel %vm443, %v3369, 0
      %3382 = vmatprep.subr.mxu0 0.0
      %3383 = vmatpush1.msra.mxu0 %v262
      %3384 = vmatprep.subr.mxu0 0.0
      %3385 = vmatpush1.msra.mxu0 %v263
      %3386 = vmatprep.subr.mxu0 0.0
      %3387 = vmatpush1.msra.mxu0 %v264
      %3388 = vmatprep.subr.mxu0 0.0
      %3389 = vmatpush1.msra.mxu0 %v265
      %3390 = vmatprep.subr.mxu0 0.0
      %3391 = vmatpush1.msra.mxu0 %v266
      %3392 = vmatprep.subr.mxu0 0.0
      %3393 = vmatpush1.msra.mxu0 %v267
      %3394 = vmatprep.subr.mxu0 0.0
      %3395 = vmatpush1.msra.mxu0 0.0
      %3396 = vmatprep.subr.mxu0 0.0
      %3397 = vmatpush1.msra.mxu0 0.0
      %3398 = vmatprep.subr.mxu0 0.0
      %3399 = vmatpush1.msra.mxu0 0.0
      %3400 = vmatprep.subr.mxu0 0.0
      %3401 = vmatpush1.msra.mxu0 0.0
      %3402 = vmatprep.subr.mxu0 0.0
      %3403 = vmatpush1.msra.mxu0 0.0
      %3404 = vmatprep.subr.mxu0 0.0
      %3405 = vmatpush1.msra.mxu0 0.0
      %3406 = vmatprep.subr.mxu0 0.0
      %3407 = vmatpush1.msra.mxu0 0.0
      %3408 = vmatprep.subr.mxu0 0.0
      %3409 = vmatpush1.msra.mxu0 0.0
      %3410 = vmatprep.subr.mxu0 0.0
      %3411 = vmatpush1.msra.mxu0 0.0
      %3412 = vmatprep.subr.mxu0 0.0
      %3413 = vmatpush1.msra.mxu0 0.0
      %3414 = vmatprep.subr.mxu0 0.0
      %3415 = vmatpush1.msra.mxu0 0.0
      %3416 = vmatprep.subr.mxu0 0.0
      %3417 = vmatpush1.msra.mxu0 0.0
      %3418 = vmatprep.subr.mxu0 0.0
      %3419 = vmatpush1.msra.mxu0 0.0
      %3420 = vmatprep.subr.mxu0 0.0
      %3421 = vmatpush1.msra.mxu0 0.0
      %3422 = vmatprep.subr.mxu0 0.0
      %3423 = vmatpush1.msra.mxu0 0.0
      %3424 = vmatprep.subr.mxu0 0.0
      %3425 = vmatpush1.msra.mxu0 0.0
      %3426 = vmatprep.subr.mxu0 0.0
      %3427 = vmatpush1.msra.mxu0 0.0
      %3428 = vmatprep.subr.mxu0 0.0
      %3429 = vmatpush1.msra.mxu0 0.0
      %3430 = vmatprep.subr.mxu0 0.0
      %3431 = vmatpush1.msra.mxu0 0.0
      %3432 = vmatprep.subr.mxu0 0.0
      %3433 = vmatpush1.msra.mxu0 0.0
      %3434 = vmatprep.subr.mxu0 0.0
      %3435 = vmatpush1.msra.mxu0 0.0
      %3436 = vmatprep.subr.mxu0 0.0
      %3437 = vmatpush1.msra.mxu0 0.0
      %3438 = vmatprep.subr.mxu0 0.0
      %3439 = vmatpush1.msra.mxu0 0.0
      %3440 = vmatprep.subr.mxu0 0.0
      %3441 = vmatpush1.msra.mxu0 0.0
      %3442 = vmatprep.subr.mxu0 0.0
      %3443 = vmatpush1.msra.mxu0 0.0
      %3444 = vmatprep.subr.mxu0 0.0
      %3445 = vmatpush1.msra.mxu0 0.0
      %3446 = vmatprep.mubr.f32.mxu0 0.0
      %3447 = vmatmul.mubr.f32.gmra.mrb[0].mxu0 %v3371
      %v3448 = vpop.f32.mrb[0].mxu0
      %v3449 = vadd.f32 0.0, %v3448
      %v3450 = vpop.f32.mrb[0].mxu0
      %3451 = vmatprep.mubr.f32.mxu0 0.0
      %3452 = vmatmul.mubr.f32.gmra.mrb[0].mxu0 %v3374
      %v3453 = vpop.f32.mrb[0].mxu0
      %v3454 = vadd.f32 0.0, %v3453
      %v3455 = vpop.f32.mrb[0].mxu0
      %3456 = vmatprep.mubr.f32.mxu0 0.0
      %3457 = vmatmul.mubr.f32.gmra.mrb[0].mxu0 %v3377
      %v3458 = vpop.f32.mrb[0].mxu0
      %v3459 = vadd.f32 0.0, %v3458
      %v3460 = vpop.f32.mrb[0].mxu0
      %3461 = vmatprep.mubr.f32.mxu0 0.0
      %3462 = vmatmul.mubr.f32.gmra.mrb[0].mxu0 %v3380
      %v3463 = vpop.f32.mrb[0].mxu0
      %v3464 = vadd.f32 0.0, %v3463
      %v3465 = vpop.f32.mrb[0].mxu0
      %3466 = vdwg.mxu0
      %v3468 = vsel %vm404, %v3361, 0
      %v3471 = vsel %vm404, %v3362, 0
      %v3474 = vsel %vm404, %v3363, 0
      %v3477 = vsel %vm404, %v3364, 0
      %3479 = vmatprep.subr.mxu0 0.0
      %3480 = vmatpush1.msra.mxu0 %v3449
      %3481 = vmatprep.subr.mxu0 0.0
      %3482 = vmatpush1.msra.mxu0 %v3454
      %3483 = vmatprep.subr.mxu0 0.0
      %3484 = vmatpush1.msra.mxu0 %v3459
      %3485 = vmatprep.subr.mxu0 0.0
      %3486 = vmatpush1.msra.mxu0 %v3464
      %3487 = vmatprep.subr.mxu0 0.0
      %3488 = vmatpush1.msra.mxu0 0.0
      %3489 = vmatprep.subr.mxu0 0.0
      %3490 = vmatpush1.msra.mxu0 0.0
      %3491 = vmatprep.subr.mxu0 0.0
      %3492 = vmatpush1.msra.mxu0 0.0
      %3493 = vmatprep.subr.mxu0 0.0
      %3494 = vmatpush1.msra.mxu0 0.0
      %3495 = vmatprep.subr.mxu0 0.0
      %3496 = vmatpush1.msra.mxu0 0.0
      %3497 = vmatprep.subr.mxu0 0.0
      %3498 = vmatpush1.msra.mxu0 0.0
      %3499 = vmatprep.subr.mxu0 0.0
      %3500 = vmatpush1.msra.mxu0 0.0
      %3501 = vmatprep.subr.mxu0 0.0
      %3502 = vmatpush1.msra.mxu0 0.0
      %3503 = vmatprep.subr.mxu0 0.0
      %3504 = vmatpush1.msra.mxu0 0.0
      %3505 = vmatprep.subr.mxu0 0.0
      %3506 = vmatpush1.msra.mxu0 0.0
      %3507 = vmatprep.subr.mxu0 0.0
      %3508 = vmatpush1.msra.mxu0 0.0
      %3509 = vmatprep.subr.mxu0 0.0
      %3510 = vmatpush1.msra.mxu0 0.0
      %3511 = vmatprep.subr.mxu0 0.0
      %3512 = vmatpush1.msra.mxu0 0.0
      %3513 = vmatprep.subr.mxu0 0.0
      %3514 = vmatpush1.msra.mxu0 0.0
      %3515 = vmatprep.subr.mxu0 0.0
      %3516 = vmatpush1.msra.mxu0 0.0
      %3517 = vmatprep.subr.mxu0 0.0
      %3518 = vmatpush1.msra.mxu0 0.0
      %3519 = vmatprep.subr.mxu0 0.0
      %3520 = vmatpush1.msra.mxu0 0.0
      %3521 = vmatprep.subr.mxu0 0.0
      %3522 = vmatpush1.msra.mxu0 0.0
      %3523 = vmatprep.subr.mxu0 0.0
      %3524 = vmatpush1.msra.mxu0 0.0
      %3525 = vmatprep.subr.mxu0 0.0
      %3526 = vmatpush1.msra.mxu0 0.0
      %3527 = vmatprep.subr.mxu0 0.0
      %3528 = vmatpush1.msra.mxu0 0.0
      %3529 = vmatprep.subr.mxu0 0.0
      %3530 = vmatpush1.msra.mxu0 0.0
      %3531 = vmatprep.subr.mxu0 0.0
      %3532 = vmatpush1.msra.mxu0 0.0
      %3533 = vmatprep.subr.mxu0 0.0
      %3534 = vmatpush1.msra.mxu0 0.0
      %3535 = vmatprep.subr.mxu0 0.0
      %3536 = vmatpush1.msra.mxu0 0.0
      %3537 = vmatprep.subr.mxu0 0.0
      %3538 = vmatpush1.msra.mxu0 0.0
      %3539 = vmatprep.subr.mxu0 0.0
      %3540 = vmatpush1.msra.mxu0 0.0
      %3541 = vmatprep.subr.mxu0 0.0
      %3542 = vmatpush1.msra.mxu0 0.0
      %3543 = vmatprep.mubr.f32.mxu0 0.0
      %3544 = vmatmul.mubr.f32.gmra.mrb[0].mxu0 %v3468
      %v3545 = vpop.f32.mrb[0].mxu0
      %v3546 = vadd.f32 %v544, %v3545
      %v3547 = vpop.f32.mrb[0].mxu0
      %3548 = vmatprep.mubr.f32.mxu0 0.0
      %3549 = vmatmul.mubr.f32.gmra.mrb[0].mxu0 %v3471
      %v3550 = vpop.f32.mrb[0].mxu0
      %v3551 = vadd.f32 %v544, %v3550
      %v3552 = vpop.f32.mrb[0].mxu0
      %3553 = vmatprep.mubr.f32.mxu0 0.0
      %3554 = vmatmul.mubr.f32.gmra.mrb[0].mxu0 %v3474
      %v3555 = vpop.f32.mrb[0].mxu0
      %v3556 = vadd.f32 %v544, %v3555
      %v3557 = vpop.f32.mrb[0].mxu0
      %3558 = vmatprep.mubr.f32.mxu0 0.0
      %3559 = vmatmul.mubr.f32.gmra.mrb[0].mxu0 %v3477
      %v3560 = vpop.f32.mrb[0].mxu0
      %v3561 = vadd.f32 %v544, %v3560
      %v3562 = vpop.f32.mrb[0].mxu0
      %3563 = vdwg.mxu0
      %v3564 = vmax.f32 %v3546, 0.0
      %v3565 = vmax.f32 %v3551, 0.0
      %v3566 = vmax.f32 %v3556, 0.0
      %v3567 = vmax.f32 %v3561, 0.0
      %v3569 = vsel %vm404, %v3564, 0
      %v3572 = vsel %vm404, %v3565, 0
      %v3575 = vsel %vm404, %v3566, 0
      %v3578 = vsel %vm404, %v3567, 0
      %3580 = vmatprep.subr.mxu0 0.0
      %3581 = vmatpush1.msra.mxu0 %v269
      %3582 = vmatprep.subr.mxu0 0.0
      %3583 = vmatpush1.msra.mxu0 %v270
      %3584 = vmatprep.subr.mxu0 0.0
      %3585 = vmatpush1.msra.mxu0 %v271
      %3586 = vmatprep.subr.mxu0 0.0
      %3587 = vmatpush1.msra.mxu0 %v272
      %3588 = vmatprep.subr.mxu0 0.0
      %3589 = vmatpush1.msra.mxu0 0.0
      %3590 = vmatprep.subr.mxu0 0.0
      %3591 = vmatpush1.msra.mxu0 0.0
      %3592 = vmatprep.subr.mxu0 0.0
      %3593 = vmatpush1.msra.mxu0 0.0
      %3594 = vmatprep.subr.mxu0 0.0
      %3595 = vmatpush1.msra.mxu0 0.0
      %3596 = vmatprep.subr.mxu0 0.0
      %3597 = vmatpush1.msra.mxu0 0.0
      %3598 = vmatprep.subr.mxu0 0.0
      %3599 = vmatpush1.msra.mxu0 0.0
      %3600 = vmatprep.subr.mxu0 0.0
      %3601 = vmatpush1.msra.mxu0 0.0
      %3602 = vmatprep.subr.mxu0 0.0
      %3603 = vmatpush1.msra.mxu0 0.0
      %3604 = vmatprep.subr.mxu0 0.0
      %3605 = vmatpush1.msra.mxu0 0.0
      %3606 = vmatprep.subr.mxu0 0.0
      %3607 = vmatpush1.msra.mxu0 0.0
      %3608 = vmatprep.subr.mxu0 0.0
      %3609 = vmatpush1.msra.mxu0 0.0
      %3610 = vmatprep.subr.mxu0 0.0
      %3611 = vmatpush1.msra.mxu0 0.0
      %3612 = vmatprep.subr.mxu0 0.0
      %3613 = vmatpush1.msra.mxu0 0.0
      %3614 = vmatprep.subr.mxu0 0.0
      %3615 = vmatpush1.msra.mxu0 0.0
      %3616 = vmatprep.subr.mxu0 0.0
      %3617 = vmatpush1.msra.mxu0 0.0
      %3618 = vmatprep.subr.mxu0 0.0
      %3619 = vmatpush1.msra.mxu0 0.0
      %3620 = vmatprep.subr.mxu0 0.0
      %3621 = vmatpush1.msra.mxu0 0.0
      %3622 = vmatprep.subr.mxu0 0.0
      %3623 = vmatpush1.msra.mxu0 0.0
      %3624 = vmatprep.subr.mxu0 0.0
      %3625 = vmatpush1.msra.mxu0 0.0
      %3626 = vmatprep.subr.mxu0 0.0
      %3627 = vmatpush1.msra.mxu0 0.0
      %3628 = vmatprep.subr.mxu0 0.0
      %3629 = vmatpush1.msra.mxu0 0.0
      %3630 = vmatprep.subr.mxu0 0.0
      %3631 = vmatpush1.msra.mxu0 0.0
      %3632 = vmatprep.subr.mxu0 0.0
      %3633 = vmatpush1.msra.mxu0 0.0
      %3634 = vmatprep.subr.mxu0 0.0
      %3635 = vmatpush1.msra.mxu0 0.0
      %3636 = vmatprep.subr.mxu0 0.0
      %3637 = vmatpush1.msra.mxu0 0.0
      %3638 = vmatprep.subr.mxu0 0.0
      %3639 = vmatpush1.msra.mxu0 0.0
      %3640 = vmatprep.subr.mxu0 0.0
      %3641 = vmatpush1.msra.mxu0 0.0
      %3642 = vmatprep.subr.mxu0 0.0
      %3643 = vmatpush1.msra.mxu0 0.0
      %3644 = vmatprep.mubr.f32.mxu0 0.0
      %3645 = vmatmul.mubr.f32.gmra.mrb[0].mxu0 %v3569
      %v3646 = vpop.f32.mrb[0].mxu0
      %v3647 = vadd.f32 %v649, %v3646
      %v3648 = vpop.f32.mrb[0].mxu0
      %3649 = vmatprep.mubr.f32.mxu0 0.0
      %3650 = vmatmul.mubr.f32.gmra.mrb[0].mxu0 %v3572
      %v3651 = vpop.f32.mrb[0].mxu0
      %v3652 = vadd.f32 %v649, %v3651
      %v3653 = vpop.f32.mrb[0].mxu0
      %3654 = vmatprep.mubr.f32.mxu0 0.0
      %3655 = vmatmul.mubr.f32.gmra.mrb[0].mxu0 %v3575
      %v3656 = vpop.f32.mrb[0].mxu0
      %v3657 = vadd.f32 %v649, %v3656
      %v3658 = vpop.f32.mrb[0].mxu0
      %3659 = vmatprep.mubr.f32.mxu0 0.0
      %3660 = vmatmul.mubr.f32.gmra.mrb[0].mxu0 %v3578
      %v3661 = vpop.f32.mrb[0].mxu0
      %v3662 = vadd.f32 %v649, %v3661
      %v3663 = vpop.f32.mrb[0].mxu0
      %3664 = vdwg.mxu0
      %v3665 = vmax.f32 %v3647, 0.0
      %v3666 = vmax.f32 %v3652, 0.0
      %v3667 = vmax.f32 %v3657, 0.0
      %v3668 = vmax.f32 %v3662, 0.0
      %v3670 = vsel %vm404, %v3665, 0
      %v3673 = vsel %vm404, %v3666, 0
      %v3676 = vsel %vm404, %v3667, 0
      %v3679 = vsel %vm404, %v3668, 0
      %3681 = vmatprep.subr.mxu0 0.0
      %3682 = vmatpush1.msra.mxu0 %v274
      %3683 = vmatprep.subr.mxu0 0.0
      %3684 = vmatpush1.msra.mxu0 %v275
      %3685 = vmatprep.subr.mxu0 0.0
      %3686 = vmatpush1.msra.mxu0 %v276
      %3687 = vmatprep.subr.mxu0 0.0
      %3688 = vmatpush1.msra.mxu0 %v277
      %3689 = vmatprep.subr.mxu0 0.0
      %3690 = vmatpush1.msra.mxu0 0.0
      %3691 = vmatprep.subr.mxu0 0.0
      %3692 = vmatpush1.msra.mxu0 0.0
      %3693 = vmatprep.subr.mxu0 0.0
      %3694 = vmatpush1.msra.mxu0 0.0
      %3695 = vmatprep.subr.mxu0 0.0
      %3696 = vmatpush1.msra.mxu0 0.0
      %3697 = vmatprep.subr.mxu0 0.0
      %3698 = vmatpush1.msra.mxu0 0.0
      %3699 = vmatprep.subr.mxu0 0.0
      %3700 = vmatpush1.msra.mxu0 0.0
      %3701 = vmatprep.subr.mxu0 0.0
      %3702 = vmatpush1.msra.mxu0 0.0
      %3703 = vmatprep.subr.mxu0 0.0
      %3704 = vmatpush1.msra.mxu0 0.0
      %3705 = vmatprep.subr.mxu0 0.0
      %3706 = vmatpush1.msra.mxu0 0.0
      %3707 = vmatprep.subr.mxu0 0.0
      %3708 = vmatpush1.msra.mxu0 0.0
      %3709 = vmatprep.subr.mxu0 0.0
      %3710 = vmatpush1.msra.mxu0 0.0
      %3711 = vmatprep.subr.mxu0 0.0
      %3712 = vmatpush1.msra.mxu0 0.0
      %3713 = vmatprep.subr.mxu0 0.0
      %3714 = vmatpush1.msra.mxu0 0.0
      %3715 = vmatprep.subr.mxu0 0.0
      %3716 = vmatpush1.msra.mxu0 0.0
      %3717 = vmatprep.subr.mxu0 0.0
      %3718 = vmatpush1.msra.mxu0 0.0
      %3719 = vmatprep.subr.mxu0 0.0
      %3720 = vmatpush1.msra.mxu0 0.0
      %3721 = vmatprep.subr.mxu0 0.0
      %3722 = vmatpush1.msra.mxu0 0.0
      %3723 = vmatprep.subr.mxu0 0.0
      %3724 = vmatpush1.msra.mxu0 0.0
      %3725 = vmatprep.subr.mxu0 0.0
      %3726 = vmatpush1.msra.mxu0 0.0
      %3727 = vmatprep.subr.mxu0 0.0
      %3728 = vmatpush1.msra.mxu0 0.0
      %3729 = vmatprep.subr.mxu0 0.0
      %3730 = vmatpush1.msra.mxu0 0.0
      %3731 = vmatprep.subr.mxu0 0.0
      %3732 = vmatpush1.msra.mxu0 0.0
      %3733 = vmatprep.subr.mxu0 0.0
      %3734 = vmatpush1.msra.mxu0 0.0
      %3735 = vmatprep.subr.mxu0 0.0
      %3736 = vmatpush1.msra.mxu0 0.0
      %3737 = vmatprep.subr.mxu0 0.0
      %3738 = vmatpush1.msra.mxu0 0.0
      %3739 = vmatprep.subr.mxu0 0.0
      %3740 = vmatpush1.msra.mxu0 0.0
      %3741 = vmatprep.subr.mxu0 0.0
      %3742 = vmatpush1.msra.mxu0 0.0
      %3743 = vmatprep.subr.mxu0 0.0
      %3744 = vmatpush1.msra.mxu0 0.0
      %3745 = vmatprep.mubr.f32.mxu0 0.0
      %3746 = vmatmul.mubr.f32.gmra.mrb[0].mxu0 %v3670
      %v3747 = vpop.f32.mrb[0].mxu0
      %v3748 = vadd.f32 %v754, %v3747
      %v3749 = vpop.f32.mrb[0].mxu0
      %3750 = vmatprep.mubr.f32.mxu0 0.0
      %3751 = vmatmul.mubr.f32.gmra.mrb[0].mxu0 %v3673
      %v3752 = vpop.f32.mrb[0].mxu0
      %v3753 = vadd.f32 %v754, %v3752
      %v3754 = vpop.f32.mrb[0].mxu0
      %3755 = vmatprep.mubr.f32.mxu0 0.0
      %3756 = vmatmul.mubr.f32.gmra.mrb[0].mxu0 %v3676
      %v3757 = vpop.f32.mrb[0].mxu0
      %v3758 = vadd.f32 %v754, %v3757
      %v3759 = vpop.f32.mrb[0].mxu0
      %3760 = vmatprep.mubr.f32.mxu0 0.0
      %3761 = vmatmul.mubr.f32.gmra.mrb[0].mxu0 %v3679
      %v3762 = vpop.f32.mrb[0].mxu0
      %v3763 = vadd.f32 %v754, %v3762
      %v3764 = vpop.f32.mrb[0].mxu0
      %3765 = vdwg.mxu0
      %v3766 = vtanh.pop %v3748
      %v3767 = vtanh.pop %v3753
      %v3768 = vtanh.pop %v3758
      %v3769 = vtanh.pop %v3763
      %v3771 = vsel %vm404, %v3766, 0
      %v3774 = vsel %vm404, %v3767, 0
      %v3777 = vsel %vm404, %v3768, 0
      %v3780 = vsel %vm404, %v3769, 0
      %3782 = vmatprep.subr.mxu0 0.0
      %3783 = vmatpush1.msra.mxu0 %v279
      %3784 = vmatprep.subr.mxu0 0.0
      %3785 = vmatpush1.msra.mxu0 %v280
      %3786 = vmatprep.subr.mxu0 0.0
      %3787 = vmatpush1.msra.mxu0 %v281
      %3788 = vmatprep.subr.mxu0 0.0
      %3789 = vmatpush1.msra.mxu0 %v282
      %3790 = vmatprep.subr.mxu0 0.0
      %3791 = vmatpush1.msra.mxu0 0.0
      %3792 = vmatprep.subr.mxu0 0.0
      %3793 = vmatpush1.msra.mxu0 0.0
      %3794 = vmatprep.subr.mxu0 0.0
      %3795 = vmatpush1.msra.mxu0 0.0
      %3796 = vmatprep.subr.mxu0 0.0
      %3797 = vmatpush1.msra.mxu0 0.0
      %3798 = vmatprep.subr.mxu0 0.0
      %3799 = vmatpush1.msra.mxu0 0.0
      %3800 = vmatprep.subr.mxu0 0.0
      %3801 = vmatpush1.msra.mxu0 0.0
      %3802 = vmatprep.subr.mxu0 0.0
      %3803 = vmatpush1.msra.mxu0 0.0
      %3804 = vmatprep.subr.mxu0 0.0
      %3805 = vmatpush1.msra.mxu0 0.0
      %3806 = vmatprep.subr.mxu0 0.0
      %3807 = vmatpush1.msra.mxu0 0.0
      %3808 = vmatprep.subr.mxu0 0.0
      %3809 = vmatpush1.msra.mxu0 0.0
      %3810 = vmatprep.subr.mxu0 0.0
      %3811 = vmatpush1.msra.mxu0 0.0
      %3812 = vmatprep.subr.mxu0 0.0
      %3813 = vmatpush1.msra.mxu0 0.0
      %3814 = vmatprep.subr.mxu0 0.0
      %3815 = vmatpush1.msra.mxu0 0.0
      %3816 = vmatprep.subr.mxu0 0.0
      %3817 = vmatpush1.msra.mxu0 0.0
      %3818 = vmatprep.subr.mxu0 0.0
      %3819 = vmatpush1.msra.mxu0 0.0
      %3820 = vmatprep.subr.mxu0 0.0
      %3821 = vmatpush1.msra.mxu0 0.0
      %3822 = vmatprep.subr.mxu0 0.0
      %3823 = vmatpush1.msra.mxu0 0.0
      %3824 = vmatprep.subr.mxu0 0.0
      %3825 = vmatpush1.msra.mxu0 0.0
      %3826 = vmatprep.subr.mxu0 0.0
      %3827 = vmatpush1.msra.mxu0 0.0
      %3828 = vmatprep.subr.mxu0 0.0
      %3829 = vmatpush1.msra.mxu0 0.0
      %3830 = vmatprep.subr.mxu0 0.0
      %3831 = vmatpush1.msra.mxu0 0.0
      %3832 = vmatprep.subr.mxu0 0.0
      %3833 = vmatpush1.msra.mxu0 0.0
      %3834 = vmatprep.subr.mxu0 0.0
      %3835 = vmatpush1.msra.mxu0 0.0
      %3836 = vmatprep.subr.mxu0 0.0
      %3837 = vmatpush1.msra.mxu0 0.0
      %3838 = vmatprep.subr.mxu0 0.0
      %3839 = vmatpush1.msra.mxu0 0.0
      %3840 = vmatprep.subr.mxu0 0.0
      %3841 = vmatpush1.msra.mxu0 0.0
      %3842 = vmatprep.subr.mxu0 0.0
      %3843 = vmatpush1.msra.mxu0 0.0
      %3844 = vmatprep.subr.mxu0 0.0
      %3845 = vmatpush1.msra.mxu0 0.0
      %3846 = vmatprep.mubr.f32.mxu0 0.0
      %3847 = vmatmul.mubr.f32.gmra.mrb[0].mxu0 %v3771
      %v3848 = vpop.f32.mrb[0].mxu0
      %v3849 = vadd.f32 0.0, %v3848
      %v3850 = vpop.f32.mrb[0].mxu0
      %3851 = vmatprep.mubr.f32.mxu0 0.0
      %3852 = vmatmul.mubr.f32.gmra.mrb[0].mxu0 %v3774
      %v3853 = vpop.f32.mrb[0].mxu0
      %v3854 = vadd.f32 0.0, %v3853
      %v3855 = vpop.f32.mrb[0].mxu0
      %3856 = vmatprep.mubr.f32.mxu0 0.0
      %3857 = vmatmul.mubr.f32.gmra.mrb[0].mxu0 %v3777
      %v3858 = vpop.f32.mrb[0].mxu0
      %v3859 = vadd.f32 0.0, %v3858
      %v3860 = vpop.f32.mrb[0].mxu0
      %3861 = vmatprep.mubr.f32.mxu0 0.0
      %3862 = vmatmul.mubr.f32.gmra.mrb[0].mxu0 %v3780
      %v3863 = vpop.f32.mrb[0].mxu0
      %v3864 = vadd.f32 0.0, %v3863
      %v3865 = vpop.f32.mrb[0].mxu0
      %3866 = vdwg.mxu0
      %3867 = vmatprep.subr.mxu0 0.0
      %3868 = vmatpush1.msra.mxu0 %v3849
      %3869 = vmatprep.subr.mxu0 0.0
      %3870 = vmatpush1.msra.mxu0 %v3854
      %3871 = vmatprep.subr.mxu0 0.0
      %3872 = vmatpush1.msra.mxu0 %v3859
      %3873 = vmatprep.subr.mxu0 0.0
      %3874 = vmatpush1.msra.mxu0 %v3864
      %3875 = vmatprep.subr.mxu0 0.0
      %3876 = vmatpush1.msra.mxu0 0.0
      %3877 = vmatprep.subr.mxu0 0.0
      %3878 = vmatpush1.msra.mxu0 0.0
      %3879 = vmatprep.subr.mxu0 0.0
      %3880 = vmatpush1.msra.mxu0 0.0
      %3881 = vmatprep.subr.mxu0 0.0
      %3882 = vmatpush1.msra.mxu0 0.0
      %3883 = vmatprep.subr.mxu0 0.0
      %3884 = vmatpush1.msra.mxu0 0.0
      %3885 = vmatprep.subr.mxu0 0.0
      %3886 = vmatpush1.msra.mxu0 0.0
      %3887 = vmatprep.subr.mxu0 0.0
      %3888 = vmatpush1.msra.mxu0 0.0
      %3889 = vmatprep.subr.mxu0 0.0
      %3890 = vmatpush1.msra.mxu0 0.0
      %3891 = vmatprep.subr.mxu0 0.0
      %3892 = vmatpush1.msra.mxu0 0.0
      %3893 = vmatprep.subr.mxu0 0.0
      %3894 = vmatpush1.msra.mxu0 0.0
      %3895 = vmatprep.subr.mxu0 0.0
      %3896 = vmatpush1.msra.mxu0 0.0
      %3897 = vmatprep.subr.mxu0 0.0
      %3898 = vmatpush1.msra.mxu0 0.0
      %3899 = vmatprep.subr.mxu0 0.0
      %3900 = vmatpush1.msra.mxu0 0.0
      %3901 = vmatprep.subr.mxu0 0.0
      %3902 = vmatpush1.msra.mxu0 0.0
      %3903 = vmatprep.subr.mxu0 0.0
      %3904 = vmatpush1.msra.mxu0 0.0
      %3905 = vmatprep.subr.mxu0 0.0
      %3906 = vmatpush1.msra.mxu0 0.0
      %3907 = vmatprep.subr.mxu0 0.0
      %3908 = vmatpush1.msra.mxu0 0.0
      %3909 = vmatprep.subr.mxu0 0.0
      %3910 = vmatpush1.msra.mxu0 0.0
      %3911 = vmatprep.subr.mxu0 0.0
      %3912 = vmatpush1.msra.mxu0 0.0
      %3913 = vmatprep.subr.mxu0 0.0
      %3914 = vmatpush1.msra.mxu0 0.0
      %3915 = vmatprep.subr.mxu0 0.0
      %3916 = vmatpush1.msra.mxu0 0.0
      %3917 = vmatprep.subr.mxu0 0.0
      %3918 = vmatpush1.msra.mxu0 0.0
      %3919 = vmatprep.subr.mxu0 0.0
      %3920 = vmatpush1.msra.mxu0 0.0
      %3921 = vmatprep.subr.mxu0 0.0
      %3922 = vmatpush1.msra.mxu0 0.0
      %3923 = vmatprep.subr.mxu0 0.0
      %3924 = vmatpush1.msra.mxu0 0.0
      %3925 = vmatprep.subr.mxu0 0.0
      %3926 = vmatpush1.msra.mxu0 0.0
      %3927 = vmatprep.subr.mxu0 0.0
      %3928 = vmatpush1.msra.mxu0 0.0
      %3929 = vmatprep.subr.mxu0 0.0
      %3930 = vmatpush1.msra.mxu0 0.0
      %3931 = vmatprep.mubr.f32.mxu0 0.0
      %3932 = vmatmul.mubr.f32.gmra.mrb[0].mxu0 %v3468
      %v3933 = vpop.f32.mrb[0].mxu0
      %v3934 = vadd.f32 %v956, %v3933
      %v3935 = vpop.f32.mrb[0].mxu0
      %3936 = vmatprep.mubr.f32.mxu0 0.0
      %3937 = vmatmul.mubr.f32.gmra.mrb[0].mxu0 %v3471
      %v3938 = vpop.f32.mrb[0].mxu0
      %v3939 = vadd.f32 %v956, %v3938
      %v3940 = vpop.f32.mrb[0].mxu0
      %3941 = vmatprep.mubr.f32.mxu0 0.0
      %3942 = vmatmul.mubr.f32.gmra.mrb[0].mxu0 %v3474
      %v3943 = vpop.f32.mrb[0].mxu0
      %v3944 = vadd.f32 %v956, %v3943
      %v3945 = vpop.f32.mrb[0].mxu0
      %3946 = vmatprep.mubr.f32.mxu0 0.0
      %3947 = vmatmul.mubr.f32.gmra.mrb[0].mxu0 %v3477
      %v3948 = vpop.f32.mrb[0].mxu0
      %v3949 = vadd.f32 %v956, %v3948
      %v3950 = vpop.f32.mrb[0].mxu0
      %3951 = vdwg.mxu0
      %v3952 = vmax.f32 %v3934, 0.0
      %v3953 = vmax.f32 %v3939, 0.0
      %v3954 = vmax.f32 %v3944, 0.0
      %v3955 = vmax.f32 %v3949, 0.0
      %v3957 = vsel %vm404, %v3952, 0
      %v3960 = vsel %vm404, %v3953, 0
      %v3963 = vsel %vm404, %v3954, 0
      %v3966 = vsel %vm404, %v3955, 0
      %3968 = vmatprep.subr.mxu0 0.0
      %3969 = vmatpush1.msra.mxu0 %v284
      %3970 = vmatprep.subr.mxu0 0.0
      %3971 = vmatpush1.msra.mxu0 %v285
      %3972 = vmatprep.subr.mxu0 0.0
      %3973 = vmatpush1.msra.mxu0 %v286
      %3974 = vmatprep.subr.mxu0 0.0
      %3975 = vmatpush1.msra.mxu0 %v287
      %3976 = vmatprep.subr.mxu0 0.0
      %3977 = vmatpush1.msra.mxu0 0.0
      %3978 = vmatprep.subr.mxu0 0.0
      %3979 = vmatpush1.msra.mxu0 0.0
      %3980 = vmatprep.subr.mxu0 0.0
      %3981 = vmatpush1.msra.mxu0 0.0
      %3982 = vmatprep.subr.mxu0 0.0
      %3983 = vmatpush1.msra.mxu0 0.0
      %3984 = vmatprep.subr.mxu0 0.0
      %3985 = vmatpush1.msra.mxu0 0.0
      %3986 = vmatprep.subr.mxu0 0.0
      %3987 = vmatpush1.msra.mxu0 0.0
      %3988 = vmatprep.subr.mxu0 0.0
      %3989 = vmatpush1.msra.mxu0 0.0
      %3990 = vmatprep.subr.mxu0 0.0
      %3991 = vmatpush1.msra.mxu0 0.0
      %3992 = vmatprep.subr.mxu0 0.0
      %3993 = vmatpush1.msra.mxu0 0.0
      %3994 = vmatprep.subr.mxu0 0.0
      %3995 = vmatpush1.msra.mxu0 0.0
      %3996 = vmatprep.subr.mxu0 0.0
      %3997 = vmatpush1.msra.mxu0 0.0
      %3998 = vmatprep.subr.mxu0 0.0
      %3999 = vmatpush1.msra.mxu0 0.0
      %4000 = vmatprep.subr.mxu0 0.0
      %4001 = vmatpush1.msra.mxu0 0.0
      %4002 = vmatprep.subr.mxu0 0.0
      %4003 = vmatpush1.msra.mxu0 0.0
      %4004 = vmatprep.subr.mxu0 0.0
      %4005 = vmatpush1.msra.mxu0 0.0
      %4006 = vmatprep.subr.mxu0 0.0
      %4007 = vmatpush1.msra.mxu0 0.0
      %4008 = vmatprep.subr.mxu0 0.0
      %4009 = vmatpush1.msra.mxu0 0.0
      %4010 = vmatprep.subr.mxu0 0.0
      %4011 = vmatpush1.msra.mxu0 0.0
      %4012 = vmatprep.subr.mxu0 0.0
      %4013 = vmatpush1.msra.mxu0 0.0
      %4014 = vmatprep.subr.mxu0 0.0
      %4015 = vmatpush1.msra.mxu0 0.0
      %4016 = vmatprep.subr.mxu0 0.0
      %4017 = vmatpush1.msra.mxu0 0.0
      %4018 = vmatprep.subr.mxu0 0.0
      %4019 = vmatpush1.msra.mxu0 0.0
      %4020 = vmatprep.subr.mxu0 0.0
      %4021 = vmatpush1.msra.mxu0 0.0
      %4022 = vmatprep.subr.mxu0 0.0
      %4023 = vmatpush1.msra.mxu0 0.0
      %4024 = vmatprep.subr.mxu0 0.0
      %4025 = vmatpush1.msra.mxu0 0.0
      %4026 = vmatprep.subr.mxu0 0.0
      %4027 = vmatpush1.msra.mxu0 0.0
      %4028 = vmatprep.subr.mxu0 0.0
      %4029 = vmatpush1.msra.mxu0 0.0
      %4030 = vmatprep.subr.mxu0 0.0
      %4031 = vmatpush1.msra.mxu0 0.0
      %4032 = vmatprep.mubr.f32.mxu0 0.0
      %4033 = vmatmul.mubr.f32.gmra.mrb[0].mxu0 %v3957
      %v4034 = vpop.f32.mrb[0].mxu0
      %v4035 = vadd.f32 %v1049, %v4034
      %v4036 = vpop.f32.mrb[0].mxu0
      %4037 = vmatprep.mubr.f32.mxu0 0.0
      %4038 = vmatmul.mubr.f32.gmra.mrb[0].mxu0 %v3960
      %v4039 = vpop.f32.mrb[0].mxu0
      %v4040 = vadd.f32 %v1049, %v4039
      %v4041 = vpop.f32.mrb[0].mxu0
      %4042 = vmatprep.mubr.f32.mxu0 0.0
      %4043 = vmatmul.mubr.f32.gmra.mrb[0].mxu0 %v3963
      %v4044 = vpop.f32.mrb[0].mxu0
      %v4045 = vadd.f32 %v1049, %v4044
      %v4046 = vpop.f32.mrb[0].mxu0
      %4047 = vmatprep.mubr.f32.mxu0 0.0
      %4048 = vmatmul.mubr.f32.gmra.mrb[0].mxu0 %v3966
      %v4049 = vpop.f32.mrb[0].mxu0
      %v4050 = vadd.f32 %v1049, %v4049
      %v4051 = vpop.f32.mrb[0].mxu0
      %4052 = vdwg.mxu0
      %v4053 = vmax.f32 %v4035, 0.0
      %v4054 = vmax.f32 %v4040, 0.0
      %v4055 = vmax.f32 %v4045, 0.0
      %v4056 = vmax.f32 %v4050, 0.0
      %v4058 = vsel %vm404, %v4053, 0
      %v4061 = vsel %vm404, %v4054, 0
      %v4064 = vsel %vm404, %v4055, 0
      %v4067 = vsel %vm404, %v4056, 0
      %4069 = vmatprep.subr.mxu0 0.0
      %4070 = vmatpush1.msra.mxu0 %v289
      %4071 = vmatprep.subr.mxu0 0.0
      %4072 = vmatpush1.msra.mxu0 %v290
      %4073 = vmatprep.subr.mxu0 0.0
      %4074 = vmatpush1.msra.mxu0 %v291
      %4075 = vmatprep.subr.mxu0 0.0
      %4076 = vmatpush1.msra.mxu0 %v292
      %4077 = vmatprep.subr.mxu0 0.0
      %4078 = vmatpush1.msra.mxu0 0.0
      %4079 = vmatprep.subr.mxu0 0.0
      %4080 = vmatpush1.msra.mxu0 0.0
      %4081 = vmatprep.subr.mxu0 0.0
      %4082 = vmatpush1.msra.mxu0 0.0
      %4083 = vmatprep.subr.mxu0 0.0
      %4084 = vmatpush1.msra.mxu0 0.0
      %4085 = vmatprep.subr.mxu0 0.0
      %4086 = vmatpush1.msra.mxu0 0.0
      %4087 = vmatprep.subr.mxu0 0.0
      %4088 = vmatpush1.msra.mxu0 0.0
      %4089 = vmatprep.subr.mxu0 0.0
      %4090 = vmatpush1.msra.mxu0 0.0
      %4091 = vmatprep.subr.mxu0 0.0
      %4092 = vmatpush1.msra.mxu0 0.0
      %4093 = vmatprep.subr.mxu0 0.0
      %4094 = vmatpush1.msra.mxu0 0.0
      %4095 = vmatprep.subr.mxu0 0.0
      %4096 = vmatpush1.msra.mxu0 0.0
      %4097 = vmatprep.subr.mxu0 0.0
      %4098 = vmatpush1.msra.mxu0 0.0
      %4099 = vmatprep.subr.mxu0 0.0
      %4100 = vmatpush1.msra.mxu0 0.0
      %4101 = vmatprep.subr.mxu0 0.0
      %4102 = vmatpush1.msra.mxu0 0.0
      %4103 = vmatprep.subr.mxu0 0.0
      %4104 = vmatpush1.msra.mxu0 0.0
      %4105 = vmatprep.subr.mxu0 0.0
      %4106 = vmatpush1.msra.mxu0 0.0
      %4107 = vmatprep.subr.mxu0 0.0
      %4108 = vmatpush1.msra.mxu0 0.0
      %4109 = vmatprep.subr.mxu0 0.0
      %4110 = vmatpush1.msra.mxu0 0.0
      %4111 = vmatprep.subr.mxu0 0.0
      %4112 = vmatpush1.msra.mxu0 0.0
      %4113 = vmatprep.subr.mxu0 0.0
      %4114 = vmatpush1.msra.mxu0 0.0
      %4115 = vmatprep.subr.mxu0 0.0
      %4116 = vmatpush1.msra.mxu0 0.0
      %4117 = vmatprep.subr.mxu0 0.0
      %4118 = vmatpush1.msra.mxu0 0.0
      %4119 = vmatprep.subr.mxu0 0.0
      %4120 = vmatpush1.msra.mxu0 0.0
      %4121 = vmatprep.subr.mxu0 0.0
      %4122 = vmatpush1.msra.mxu0 0.0
      %4123 = vmatprep.subr.mxu0 0.0
      %4124 = vmatpush1.msra.mxu0 0.0
      %4125 = vmatprep.subr.mxu0 0.0
      %4126 = vmatpush1.msra.mxu0 0.0
      %4127 = vmatprep.subr.mxu0 0.0
      %4128 = vmatpush1.msra.mxu0 0.0
      %4129 = vmatprep.subr.mxu0 0.0
      %4130 = vmatpush1.msra.mxu0 0.0
      %4131 = vmatprep.subr.mxu0 0.0
      %4132 = vmatpush1.msra.mxu0 0.0
      %4133 = vmatprep.mubr.f32.mxu0 0.0
      %4134 = vmatmul.mubr.f32.gmra.mrb[0].mxu0 %v4058
      %v4135 = vpop.f32.mrb[0].mxu0
      %v4136 = vadd.f32 %v1154, %v4135
      %v4137 = vpop.f32.mrb[0].mxu0
      %4138 = vmatprep.mubr.f32.mxu0 0.0
      %4139 = vmatmul.mubr.f32.gmra.mrb[0].mxu0 %v4061
      %v4140 = vpop.f32.mrb[0].mxu0
      %v4141 = vadd.f32 %v1154, %v4140
      %v4142 = vpop.f32.mrb[0].mxu0
      %4143 = vmatprep.mubr.f32.mxu0 0.0
      %4144 = vmatmul.mubr.f32.gmra.mrb[0].mxu0 %v4064
      %v4145 = vpop.f32.mrb[0].mxu0
      %v4146 = vadd.f32 %v1154, %v4145
      %v4147 = vpop.f32.mrb[0].mxu0
      %4148 = vmatprep.mubr.f32.mxu0 0.0
      %4149 = vmatmul.mubr.f32.gmra.mrb[0].mxu0 %v4067
      %v4150 = vpop.f32.mrb[0].mxu0
      %v4151 = vadd.f32 %v1154, %v4150
      %v4152 = vpop.f32.mrb[0].mxu0
      %4153 = vdwg.mxu0
      %v4154 = vtanh.pop %v4136
      %v4155 = vtanh.pop %v4141
      %v4156 = vtanh.pop %v4146
      %v4157 = vtanh.pop %v4151
      %v4159 = vsel %vm404, %v4154, 0
      %v4162 = vsel %vm404, %v4155, 0
      %v4165 = vsel %vm404, %v4156, 0
      %v4168 = vsel %vm404, %v4157, 0
      %4170 = vmatprep.subr.mxu0 0.0
      %4171 = vmatpush1.msra.mxu0 %v294
      %4172 = vmatprep.subr.mxu0 0.0
      %4173 = vmatpush1.msra.mxu0 %v295
      %4174 = vmatprep.subr.mxu0 0.0
      %4175 = vmatpush1.msra.mxu0 %v296
      %4176 = vmatprep.subr.mxu0 0.0
      %4177 = vmatpush1.msra.mxu0 %v297
      %4178 = vmatprep.subr.mxu0 0.0
      %4179 = vmatpush1.msra.mxu0 0.0
      %4180 = vmatprep.subr.mxu0 0.0
      %4181 = vmatpush1.msra.mxu0 0.0
      %4182 = vmatprep.subr.mxu0 0.0
      %4183 = vmatpush1.msra.mxu0 0.0
      %4184 = vmatprep.subr.mxu0 0.0
      %4185 = vmatpush1.msra.mxu0 0.0
      %4186 = vmatprep.subr.mxu0 0.0
      %4187 = vmatpush1.msra.mxu0 0.0
      %4188 = vmatprep.subr.mxu0 0.0
      %4189 = vmatpush1.msra.mxu0 0.0
      %4190 = vmatprep.subr.mxu0 0.0
      %4191 = vmatpush1.msra.mxu0 0.0
      %4192 = vmatprep.subr.mxu0 0.0
      %4193 = vmatpush1.msra.mxu0 0.0
      %4194 = vmatprep.subr.mxu0 0.0
      %4195 = vmatpush1.msra.mxu0 0.0
      %4196 = vmatprep.subr.mxu0 0.0
      %4197 = vmatpush1.msra.mxu0 0.0
      %4198 = vmatprep.subr.mxu0 0.0
      %4199 = vmatpush1.msra.mxu0 0.0
      %4200 = vmatprep.subr.mxu0 0.0
      %4201 = vmatpush1.msra.mxu0 0.0
      %4202 = vmatprep.subr.mxu0 0.0
      %4203 = vmatpush1.msra.mxu0 0.0
      %4204 = vmatprep.subr.mxu0 0.0
      %4205 = vmatpush1.msra.mxu0 0.0
      %4206 = vmatprep.subr.mxu0 0.0
      %4207 = vmatpush1.msra.mxu0 0.0
      %4208 = vmatprep.subr.mxu0 0.0
      %4209 = vmatpush1.msra.mxu0 0.0
      %4210 = vmatprep.subr.mxu0 0.0
      %4211 = vmatpush1.msra.mxu0 0.0
      %4212 = vmatprep.subr.mxu0 0.0
      %4213 = vmatpush1.msra.mxu0 0.0
      %4214 = vmatprep.subr.mxu0 0.0
      %4215 = vmatpush1.msra.mxu0 0.0
      %4216 = vmatprep.subr.mxu0 0.0
      %4217 = vmatpush1.msra.mxu0 0.0
      %4218 = vmatprep.subr.mxu0 0.0
      %4219 = vmatpush1.msra.mxu0 0.0
      %4220 = vmatprep.subr.mxu0 0.0
      %4221 = vmatpush1.msra.mxu0 0.0
      %4222 = vmatprep.subr.mxu0 0.0
      %4223 = vmatpush1.msra.mxu0 0.0
      %4224 = vmatprep.subr.mxu0 0.0
      %4225 = vmatpush1.msra.mxu0 0.0
      %4226 = vmatprep.subr.mxu0 0.0
      %4227 = vmatpush1.msra.mxu0 0.0
      %4228 = vmatprep.subr.mxu0 0.0
      %4229 = vmatpush1.msra.mxu0 0.0
      %4230 = vmatprep.subr.mxu0 0.0
      %4231 = vmatpush1.msra.mxu0 0.0
      %4232 = vmatprep.subr.mxu0 0.0
      %4233 = vmatpush1.msra.mxu0 0.0
      %4234 = vmatprep.mubr.f32.mxu0 0.0
      %4235 = vmatmul.mubr.f32.gmra.mrb[0].mxu0 %v4159
      %v4236 = vpop.f32.mrb[0].mxu0
      %v4237 = vadd.f32 0.0, %v4236
      %v4238 = vpop.f32.mrb[0].mxu0
      %4239 = vmatprep.mubr.f32.mxu0 0.0
      %4240 = vmatmul.mubr.f32.gmra.mrb[0].mxu0 %v4162
      %v4241 = vpop.f32.mrb[0].mxu0
      %v4242 = vadd.f32 0.0, %v4241
      %v4243 = vpop.f32.mrb[0].mxu0
      %4244 = vmatprep.mubr.f32.mxu0 0.0
      %4245 = vmatmul.mubr.f32.gmra.mrb[0].mxu0 %v4165
      %v4246 = vpop.f32.mrb[0].mxu0
      %v4247 = vadd.f32 0.0, %v4246
      %v4248 = vpop.f32.mrb[0].mxu0
      %4249 = vmatprep.mubr.f32.mxu0 0.0
      %4250 = vmatmul.mubr.f32.gmra.mrb[0].mxu0 %v4168
      %v4251 = vpop.f32.mrb[0].mxu0
      %v4252 = vadd.f32 0.0, %v4251
      %v4253 = vpop.f32.mrb[0].mxu0
      %4254 = vdwg.mxu0
      %4255 = vmatprep.subr.mxu0 0.0
      %4256 = vmatpush1.msra.mxu0 %v4237
      %4257 = vmatprep.subr.mxu0 0.0
      %4258 = vmatpush1.msra.mxu0 %v4242
      %4259 = vmatprep.subr.mxu0 0.0
      %4260 = vmatpush1.msra.mxu0 %v4247
      %4261 = vmatprep.subr.mxu0 0.0
      %4262 = vmatpush1.msra.mxu0 %v4252
      %4263 = vmatprep.subr.mxu0 0.0
      %4264 = vmatpush1.msra.mxu0 0.0
      %4265 = vmatprep.subr.mxu0 0.0
      %4266 = vmatpush1.msra.mxu0 0.0
      %4267 = vmatprep.subr.mxu0 0.0
      %4268 = vmatpush1.msra.mxu0 0.0
      %4269 = vmatprep.subr.mxu0 0.0
      %4270 = vmatpush1.msra.mxu0 0.0
      %4271 = vmatprep.subr.mxu0 0.0
      %4272 = vmatpush1.msra.mxu0 0.0
      %4273 = vmatprep.subr.mxu0 0.0
      %4274 = vmatpush1.msra.mxu0 0.0
      %4275 = vmatprep.subr.mxu0 0.0
      %4276 = vmatpush1.msra.mxu0 0.0
      %4277 = vmatprep.subr.mxu0 0.0
      %4278 = vmatpush1.msra.mxu0 0.0
      %4279 = vmatprep.subr.mxu0 0.0
      %4280 = vmatpush1.msra.mxu0 0.0
      %4281 = vmatprep.subr.mxu0 0.0
      %4282 = vmatpush1.msra.mxu0 0.0
      %4283 = vmatprep.subr.mxu0 0.0
      %4284 = vmatpush1.msra.mxu0 0.0
      %4285 = vmatprep.subr.mxu0 0.0
      %4286 = vmatpush1.msra.mxu0 0.0
      %4287 = vmatprep.subr.mxu0 0.0
      %4288 = vmatpush1.msra.mxu0 0.0
      %4289 = vmatprep.subr.mxu0 0.0
      %4290 = vmatpush1.msra.mxu0 0.0
      %4291 = vmatprep.subr.mxu0 0.0
      %4292 = vmatpush1.msra.mxu0 0.0
      %4293 = vmatprep.subr.mxu0 0.0
      %4294 = vmatpush1.msra.mxu0 0.0
      %4295 = vmatprep.subr.mxu0 0.0
      %4296 = vmatpush1.msra.mxu0 0.0
      %4297 = vmatprep.subr.mxu0 0.0
      %4298 = vmatpush1.msra.mxu0 0.0
      %4299 = vmatprep.subr.mxu0 0.0
      %4300 = vmatpush1.msra.mxu0 0.0
      %4301 = vmatprep.subr.mxu0 0.0
      %4302 = vmatpush1.msra.mxu0 0.0
      %4303 = vmatprep.subr.mxu0 0.0
      %4304 = vmatpush1.msra.mxu0 0.0
      %4305 = vmatprep.subr.mxu0 0.0
      %4306 = vmatpush1.msra.mxu0 0.0
      %4307 = vmatprep.subr.mxu0 0.0
      %4308 = vmatpush1.msra.mxu0 0.0
      %4309 = vmatprep.subr.mxu0 0.0
      %4310 = vmatpush1.msra.mxu0 0.0
      %4311 = vmatprep.subr.mxu0 0.0
      %4312 = vmatpush1.msra.mxu0 0.0
      %4313 = vmatprep.subr.mxu0 0.0
      %4314 = vmatpush1.msra.mxu0 0.0
      %4315 = vmatprep.subr.mxu0 0.0
      %4316 = vmatpush1.msra.mxu0 0.0
      %4317 = vmatprep.subr.mxu0 0.0
      %4318 = vmatpush1.msra.mxu0 0.0
      %4319 = vmatprep.mubr.f32.mxu0 0.0
      %4320 = vmatmul.mubr.f32.gmra.mrb[0].mxu0 %v3468
      %v4321 = vpop.f32.mrb[0].mxu0
      %v4322 = vadd.f32 %v1356, %v4321
      %v4323 = vpop.f32.mrb[0].mxu0
      %4324 = vmatprep.mubr.f32.mxu0 0.0
      %4325 = vmatmul.mubr.f32.gmra.mrb[0].mxu0 %v3471
      %v4326 = vpop.f32.mrb[0].mxu0
      %v4327 = vadd.f32 %v1356, %v4326
      %v4328 = vpop.f32.mrb[0].mxu0
      %4329 = vmatprep.mubr.f32.mxu0 0.0
      %4330 = vmatmul.mubr.f32.gmra.mrb[0].mxu0 %v3474
      %v4331 = vpop.f32.mrb[0].mxu0
      %v4332 = vadd.f32 %v1356, %v4331
      %v4333 = vpop.f32.mrb[0].mxu0
      %4334 = vmatprep.mubr.f32.mxu0 0.0
      %4335 = vmatmul.mubr.f32.gmra.mrb[0].mxu0 %v3477
      %v4336 = vpop.f32.mrb[0].mxu0
      %v4337 = vadd.f32 %v1356, %v4336
      %v4338 = vpop.f32.mrb[0].mxu0
      %4339 = vdwg.mxu0
      %v4340 = vmax.f32 %v4322, 0.0
      %v4341 = vmax.f32 %v4327, 0.0
      %v4342 = vmax.f32 %v4332, 0.0
      %v4343 = vmax.f32 %v4337, 0.0
      %v4345 = vsel %vm404, %v4340, 0
      %v4348 = vsel %vm404, %v4341, 0
      %v4351 = vsel %vm404, %v4342, 0
      %v4354 = vsel %vm404, %v4343, 0
      %4356 = vmatprep.subr.mxu0 0.0
      %4357 = vmatpush1.msra.mxu0 %v299
      %4358 = vmatprep.subr.mxu0 0.0
      %4359 = vmatpush1.msra.mxu0 %v300
      %4360 = vmatprep.subr.mxu0 0.0
      %4361 = vmatpush1.msra.mxu0 %v301
      %4362 = vmatprep.subr.mxu0 0.0
      %4363 = vmatpush1.msra.mxu0 %v302
      %4364 = vmatprep.subr.mxu0 0.0
      %4365 = vmatpush1.msra.mxu0 0.0
      %4366 = vmatprep.subr.mxu0 0.0
      %4367 = vmatpush1.msra.mxu0 0.0
      %4368 = vmatprep.subr.mxu0 0.0
      %4369 = vmatpush1.msra.mxu0 0.0
      %4370 = vmatprep.subr.mxu0 0.0
      %4371 = vmatpush1.msra.mxu0 0.0
      %4372 = vmatprep.subr.mxu0 0.0
      %4373 = vmatpush1.msra.mxu0 0.0
      %4374 = vmatprep.subr.mxu0 0.0
      %4375 = vmatpush1.msra.mxu0 0.0
      %4376 = vmatprep.subr.mxu0 0.0
      %4377 = vmatpush1.msra.mxu0 0.0
      %4378 = vmatprep.subr.mxu0 0.0
      %4379 = vmatpush1.msra.mxu0 0.0
      %4380 = vmatprep.subr.mxu0 0.0
      %4381 = vmatpush1.msra.mxu0 0.0
      %4382 = vmatprep.subr.mxu0 0.0
      %4383 = vmatpush1.msra.mxu0 0.0
      %4384 = vmatprep.subr.mxu0 0.0
      %4385 = vmatpush1.msra.mxu0 0.0
      %4386 = vmatprep.subr.mxu0 0.0
      %4387 = vmatpush1.msra.mxu0 0.0
      %4388 = vmatprep.subr.mxu0 0.0
      %4389 = vmatpush1.msra.mxu0 0.0
      %4390 = vmatprep.subr.mxu0 0.0
      %4391 = vmatpush1.msra.mxu0 0.0
      %4392 = vmatprep.subr.mxu0 0.0
      %4393 = vmatpush1.msra.mxu0 0.0
      %4394 = vmatprep.subr.mxu0 0.0
      %4395 = vmatpush1.msra.mxu0 0.0
      %4396 = vmatprep.subr.mxu0 0.0
      %4397 = vmatpush1.msra.mxu0 0.0
      %4398 = vmatprep.subr.mxu0 0.0
      %4399 = vmatpush1.msra.mxu0 0.0
      %4400 = vmatprep.subr.mxu0 0.0
      %4401 = vmatpush1.msra.mxu0 0.0
      %4402 = vmatprep.subr.mxu0 0.0
      %4403 = vmatpush1.msra.mxu0 0.0
      %4404 = vmatprep.subr.mxu0 0.0
      %4405 = vmatpush1.msra.mxu0 0.0
      %4406 = vmatprep.subr.mxu0 0.0
      %4407 = vmatpush1.msra.mxu0 0.0
      %4408 = vmatprep.subr.mxu0 0.0
      %4409 = vmatpush1.msra.mxu0 0.0
      %4410 = vmatprep.subr.mxu0 0.0
      %4411 = vmatpush1.msra.mxu0 0.0
      %4412 = vmatprep.subr.mxu0 0.0
      %4413 = vmatpush1.msra.mxu0 0.0
      %4414 = vmatprep.subr.mxu0 0.0
      %4415 = vmatpush1.msra.mxu0 0.0
      %4416 = vmatprep.subr.mxu0 0.0
      %4417 = vmatpush1.msra.mxu0 0.0
      %4418 = vmatprep.subr.mxu0 0.0
      %4419 = vmatpush1.msra.mxu0 0.0
      %4420 = vmatprep.mubr.f32.mxu0 0.0
      %4421 = vmatmul.mubr.f32.gmra.mrb[0].mxu0 %v4345
      %v4422 = vpop.f32.mrb[0].mxu0
      %v4423 = vadd.f32 %v1449, %v4422
      %v4424 = vpop.f32.mrb[0].mxu0
      %4425 = vmatprep.mubr.f32.mxu0 0.0
      %4426 = vmatmul.mubr.f32.gmra.mrb[0].mxu0 %v4348
      %v4427 = vpop.f32.mrb[0].mxu0
      %v4428 = vadd.f32 %v1449, %v4427
      %v4429 = vpop.f32.mrb[0].mxu0
      %4430 = vmatprep.mubr.f32.mxu0 0.0
      %4431 = vmatmul.mubr.f32.gmra.mrb[0].mxu0 %v4351
      %v4432 = vpop.f32.mrb[0].mxu0
      %v4433 = vadd.f32 %v1449, %v4432
      %v4434 = vpop.f32.mrb[0].mxu0
      %4435 = vmatprep.mubr.f32.mxu0 0.0
      %4436 = vmatmul.mubr.f32.gmra.mrb[0].mxu0 %v4354
      %v4437 = vpop.f32.mrb[0].mxu0
      %v4438 = vadd.f32 %v1449, %v4437
      %v4439 = vpop.f32.mrb[0].mxu0
      %4440 = vdwg.mxu0
      %v4441 = vmax.f32 %v4423, 0.0
      %v4442 = vmax.f32 %v4428, 0.0
      %v4443 = vmax.f32 %v4433, 0.0
      %v4444 = vmax.f32 %v4438, 0.0
      %v4446 = vsel %vm404, %v4441, 0
      %v4449 = vsel %vm404, %v4442, 0
      %v4452 = vsel %vm404, %v4443, 0
      %v4455 = vsel %vm404, %v4444, 0
      %4457 = vmatprep.subr.mxu0 0.0
      %4458 = vmatpush1.msra.mxu0 %v304
      %4459 = vmatprep.subr.mxu0 0.0
      %4460 = vmatpush1.msra.mxu0 %v305
      %4461 = vmatprep.subr.mxu0 0.0
      %4462 = vmatpush1.msra.mxu0 %v306
      %4463 = vmatprep.subr.mxu0 0.0
      %4464 = vmatpush1.msra.mxu0 %v307
      %4465 = vmatprep.subr.mxu0 0.0
      %4466 = vmatpush1.msra.mxu0 0.0
      %4467 = vmatprep.subr.mxu0 0.0
      %4468 = vmatpush1.msra.mxu0 0.0
      %4469 = vmatprep.subr.mxu0 0.0
      %4470 = vmatpush1.msra.mxu0 0.0
      %4471 = vmatprep.subr.mxu0 0.0
      %4472 = vmatpush1.msra.mxu0 0.0
      %4473 = vmatprep.subr.mxu0 0.0
      %4474 = vmatpush1.msra.mxu0 0.0
      %4475 = vmatprep.subr.mxu0 0.0
      %4476 = vmatpush1.msra.mxu0 0.0
      %4477 = vmatprep.subr.mxu0 0.0
      %4478 = vmatpush1.msra.mxu0 0.0
      %4479 = vmatprep.subr.mxu0 0.0
      %4480 = vmatpush1.msra.mxu0 0.0
      %4481 = vmatprep.subr.mxu0 0.0
      %4482 = vmatpush1.msra.mxu0 0.0
      %4483 = vmatprep.subr.mxu0 0.0
      %4484 = vmatpush1.msra.mxu0 0.0
      %4485 = vmatprep.subr.mxu0 0.0
      %4486 = vmatpush1.msra.mxu0 0.0
      %4487 = vmatprep.subr.mxu0 0.0
      %4488 = vmatpush1.msra.mxu0 0.0
      %4489 = vmatprep.subr.mxu0 0.0
      %4490 = vmatpush1.msra.mxu0 0.0
      %4491 = vmatprep.subr.mxu0 0.0
      %4492 = vmatpush1.msra.mxu0 0.0
      %4493 = vmatprep.subr.mxu0 0.0
      %4494 = vmatpush1.msra.mxu0 0.0
      %4495 = vmatprep.subr.mxu0 0.0
      %4496 = vmatpush1.msra.mxu0 0.0
      %4497 = vmatprep.subr.mxu0 0.0
      %4498 = vmatpush1.msra.mxu0 0.0
      %4499 = vmatprep.subr.mxu0 0.0
      %4500 = vmatpush1.msra.mxu0 0.0
      %4501 = vmatprep.subr.mxu0 0.0
      %4502 = vmatpush1.msra.mxu0 0.0
      %4503 = vmatprep.subr.mxu0 0.0
      %4504 = vmatpush1.msra.mxu0 0.0
      %4505 = vmatprep.subr.mxu0 0.0
      %4506 = vmatpush1.msra.mxu0 0.0
      %4507 = vmatprep.subr.mxu0 0.0
      %4508 = vmatpush1.msra.mxu0 0.0
      %4509 = vmatprep.subr.mxu0 0.0
      %4510 = vmatpush1.msra.mxu0 0.0
      %4511 = vmatprep.subr.mxu0 0.0
      %4512 = vmatpush1.msra.mxu0 0.0
      %4513 = vmatprep.subr.mxu0 0.0
      %4514 = vmatpush1.msra.mxu0 0.0
      %4515 = vmatprep.subr.mxu0 0.0
      %4516 = vmatpush1.msra.mxu0 0.0
      %4517 = vmatprep.subr.mxu0 0.0
      %4518 = vmatpush1.msra.mxu0 0.0
      %4519 = vmatprep.subr.mxu0 0.0
      %4520 = vmatpush1.msra.mxu0 0.0
      %4521 = vmatprep.mubr.f32.mxu0 0.0
      %4522 = vmatmul.mubr.f32.gmra.mrb[0].mxu0 %v4446
      %v4523 = vpop.f32.mrb[0].mxu0
      %v4524 = vadd.f32 %v1554, %v4523
      %v4525 = vpop.f32.mrb[0].mxu0
      %4526 = vmatprep.mubr.f32.mxu0 0.0
      %4527 = vmatmul.mubr.f32.gmra.mrb[0].mxu0 %v4449
      %v4528 = vpop.f32.mrb[0].mxu0
      %v4529 = vadd.f32 %v1554, %v4528
      %v4530 = vpop.f32.mrb[0].mxu0
      %4531 = vmatprep.mubr.f32.mxu0 0.0
      %4532 = vmatmul.mubr.f32.gmra.mrb[0].mxu0 %v4452
      %v4533 = vpop.f32.mrb[0].mxu0
      %v4534 = vadd.f32 %v1554, %v4533
      %v4535 = vpop.f32.mrb[0].mxu0
      %4536 = vmatprep.mubr.f32.mxu0 0.0
      %4537 = vmatmul.mubr.f32.gmra.mrb[0].mxu0 %v4455
      %v4538 = vpop.f32.mrb[0].mxu0
      %v4539 = vadd.f32 %v1554, %v4538
      %v4540 = vpop.f32.mrb[0].mxu0
      %4541 = vdwg.mxu0
      %v4542 = vtanh.pop %v4524
      %v4543 = vtanh.pop %v4529
      %v4544 = vtanh.pop %v4534
      %v4545 = vtanh.pop %v4539
      %v4547 = vsel %vm404, %v4542, 0
      %v4550 = vsel %vm404, %v4543, 0
      %v4553 = vsel %vm404, %v4544, 0
      %v4556 = vsel %vm404, %v4545, 0
      %4558 = vmatprep.subr.mxu0 0.0
      %4559 = vmatpush1.msra.mxu0 %v309
      %4560 = vmatprep.subr.mxu0 0.0
      %4561 = vmatpush1.msra.mxu0 %v310
      %4562 = vmatprep.subr.mxu0 0.0
      %4563 = vmatpush1.msra.mxu0 %v311
      %4564 = vmatprep.subr.mxu0 0.0
      %4565 = vmatpush1.msra.mxu0 %v312
      %4566 = vmatprep.subr.mxu0 0.0
      %4567 = vmatpush1.msra.mxu0 0.0
      %4568 = vmatprep.subr.mxu0 0.0
      %4569 = vmatpush1.msra.mxu0 0.0
      %4570 = vmatprep.subr.mxu0 0.0
      %4571 = vmatpush1.msra.mxu0 0.0
      %4572 = vmatprep.subr.mxu0 0.0
      %4573 = vmatpush1.msra.mxu0 0.0
      %4574 = vmatprep.subr.mxu0 0.0
      %4575 = vmatpush1.msra.mxu0 0.0
      %4576 = vmatprep.subr.mxu0 0.0
      %4577 = vmatpush1.msra.mxu0 0.0
      %4578 = vmatprep.subr.mxu0 0.0
      %4579 = vmatpush1.msra.mxu0 0.0
      %4580 = vmatprep.subr.mxu0 0.0
      %4581 = vmatpush1.msra.mxu0 0.0
      %4582 = vmatprep.subr.mxu0 0.0
      %4583 = vmatpush1.msra.mxu0 0.0
      %4584 = vmatprep.subr.mxu0 0.0
      %4585 = vmatpush1.msra.mxu0 0.0
      %4586 = vmatprep.subr.mxu0 0.0
      %4587 = vmatpush1.msra.mxu0 0.0
      %4588 = vmatprep.subr.mxu0 0.0
      %4589 = vmatpush1.msra.mxu0 0.0
      %4590 = vmatprep.subr.mxu0 0.0
      %4591 = vmatpush1.msra.mxu0 0.0
      %4592 = vmatprep.subr.mxu0 0.0
      %4593 = vmatpush1.msra.mxu0 0.0
      %4594 = vmatprep.subr.mxu0 0.0
      %4595 = vmatpush1.msra.mxu0 0.0
      %4596 = vmatprep.subr.mxu0 0.0
      %4597 = vmatpush1.msra.mxu0 0.0
      %4598 = vmatprep.subr.mxu0 0.0
      %4599 = vmatpush1.msra.mxu0 0.0
      %4600 = vmatprep.subr.mxu0 0.0
      %4601 = vmatpush1.msra.mxu0 0.0
      %4602 = vmatprep.subr.mxu0 0.0
      %4603 = vmatpush1.msra.mxu0 0.0
      %4604 = vmatprep.subr.mxu0 0.0
      %4605 = vmatpush1.msra.mxu0 0.0
      %4606 = vmatprep.subr.mxu0 0.0
      %4607 = vmatpush1.msra.mxu0 0.0
      %4608 = vmatprep.subr.mxu0 0.0
      %4609 = vmatpush1.msra.mxu0 0.0
      %4610 = vmatprep.subr.mxu0 0.0
      %4611 = vmatpush1.msra.mxu0 0.0
      %4612 = vmatprep.subr.mxu0 0.0
      %4613 = vmatpush1.msra.mxu0 0.0
      %4614 = vmatprep.subr.mxu0 0.0
      %4615 = vmatpush1.msra.mxu0 0.0
      %4616 = vmatprep.subr.mxu0 0.0
      %4617 = vmatpush1.msra.mxu0 0.0
      %4618 = vmatprep.subr.mxu0 0.0
      %4619 = vmatpush1.msra.mxu0 0.0
      %4620 = vmatprep.subr.mxu0 0.0
      %4621 = vmatpush1.msra.mxu0 0.0
      %4622 = vmatprep.mubr.f32.mxu0 0.0
      %4623 = vmatmul.mubr.f32.gmra.mrb[0].mxu0 %v4547
      %v4624 = vpop.f32.mrb[0].mxu0
      %v4625 = vadd.f32 0.0, %v4624
      %v4626 = vpop.f32.mrb[0].mxu0
      %4627 = vmatprep.mubr.f32.mxu0 0.0
      %4628 = vmatmul.mubr.f32.gmra.mrb[0].mxu0 %v4550
      %v4629 = vpop.f32.mrb[0].mxu0
      %v4630 = vadd.f32 0.0, %v4629
      %v4631 = vpop.f32.mrb[0].mxu0
      %4632 = vmatprep.mubr.f32.mxu0 0.0
      %4633 = vmatmul.mubr.f32.gmra.mrb[0].mxu0 %v4553
      %v4634 = vpop.f32.mrb[0].mxu0
      %v4635 = vadd.f32 0.0, %v4634
      %v4636 = vpop.f32.mrb[0].mxu0
      %4637 = vmatprep.mubr.f32.mxu0 0.0
      %4638 = vmatmul.mubr.f32.gmra.mrb[0].mxu0 %v4556
      %v4639 = vpop.f32.mrb[0].mxu0
      %v4640 = vadd.f32 0.0, %v4639
      %v4641 = vpop.f32.mrb[0].mxu0
      %4642 = vdwg.mxu0
      %4643 = vmatprep.subr.mxu0 0.0
      %4644 = vmatpush1.msra.mxu0 %v4625
      %4645 = vmatprep.subr.mxu0 0.0
      %4646 = vmatpush1.msra.mxu0 %v4630
      %4647 = vmatprep.subr.mxu0 0.0
      %4648 = vmatpush1.msra.mxu0 %v4635
      %4649 = vmatprep.subr.mxu0 0.0
      %4650 = vmatpush1.msra.mxu0 %v4640
      %4651 = vmatprep.subr.mxu0 0.0
      %4652 = vmatpush1.msra.mxu0 0.0
      %4653 = vmatprep.subr.mxu0 0.0
      %4654 = vmatpush1.msra.mxu0 0.0
      %4655 = vmatprep.subr.mxu0 0.0
      %4656 = vmatpush1.msra.mxu0 0.0
      %4657 = vmatprep.subr.mxu0 0.0
      %4658 = vmatpush1.msra.mxu0 0.0
      %4659 = vmatprep.subr.mxu0 0.0
      %4660 = vmatpush1.msra.mxu0 0.0
      %4661 = vmatprep.subr.mxu0 0.0
      %4662 = vmatpush1.msra.mxu0 0.0
      %4663 = vmatprep.subr.mxu0 0.0
      %4664 = vmatpush1.msra.mxu0 0.0
      %4665 = vmatprep.subr.mxu0 0.0
      %4666 = vmatpush1.msra.mxu0 0.0
      %4667 = vmatprep.subr.mxu0 0.0
      %4668 = vmatpush1.msra.mxu0 0.0
      %4669 = vmatprep.subr.mxu0 0.0
      %4670 = vmatpush1.msra.mxu0 0.0
      %4671 = vmatprep.subr.mxu0 0.0
      %4672 = vmatpush1.msra.mxu0 0.0
      %4673 = vmatprep.subr.mxu0 0.0
      %4674 = vmatpush1.msra.mxu0 0.0
      %4675 = vmatprep.subr.mxu0 0.0
      %4676 = vmatpush1.msra.mxu0 0.0
      %4677 = vmatprep.subr.mxu0 0.0
      %4678 = vmatpush1.msra.mxu0 0.0
      %4679 = vmatprep.subr.mxu0 0.0
      %4680 = vmatpush1.msra.mxu0 0.0
      %4681 = vmatprep.subr.mxu0 0.0
      %4682 = vmatpush1.msra.mxu0 0.0
      %4683 = vmatprep.subr.mxu0 0.0
      %4684 = vmatpush1.msra.mxu0 0.0
      %4685 = vmatprep.subr.mxu0 0.0
      %4686 = vmatpush1.msra.mxu0 0.0
      %4687 = vmatprep.subr.mxu0 0.0
      %4688 = vmatpush1.msra.mxu0 0.0
      %4689 = vmatprep.subr.mxu0 0.0
      %4690 = vmatpush1.msra.mxu0 0.0
      %4691 = vmatprep.subr.mxu0 0.0
      %4692 = vmatpush1.msra.mxu0 0.0
      %4693 = vmatprep.subr.mxu0 0.0
      %4694 = vmatpush1.msra.mxu0 0.0
      %4695 = vmatprep.subr.mxu0 0.0
      %4696 = vmatpush1.msra.mxu0 0.0
      %4697 = vmatprep.subr.mxu0 0.0
      %4698 = vmatpush1.msra.mxu0 0.0
      %4699 = vmatprep.subr.mxu0 0.0
      %4700 = vmatpush1.msra.mxu0 0.0
      %4701 = vmatprep.subr.mxu0 0.0
      %4702 = vmatpush1.msra.mxu0 0.0
      %4703 = vmatprep.subr.mxu0 0.0
      %4704 = vmatpush1.msra.mxu0 0.0
      %4705 = vmatprep.subr.mxu0 0.0
      %4706 = vmatpush1.msra.mxu0 0.0
      %4707 = vmatprep.mubr.f32.mxu0 0.0
      %4708 = vmatmul.mubr.f32.gmra.mrb[0].mxu0 %v3468
      %v4709 = vpop.f32.mrb[0].mxu0
      %v4710 = vadd.f32 %v1756, %v4709
      %v4711 = vpop.f32.mrb[0].mxu0
      %4712 = vmatprep.mubr.f32.mxu0 0.0
      %4713 = vmatmul.mubr.f32.gmra.mrb[0].mxu0 %v3471
      %v4714 = vpop.f32.mrb[0].mxu0
      %v4715 = vadd.f32 %v1756, %v4714
      %v4716 = vpop.f32.mrb[0].mxu0
      %4717 = vmatprep.mubr.f32.mxu0 0.0
      %4718 = vmatmul.mubr.f32.gmra.mrb[0].mxu0 %v3474
      %v4719 = vpop.f32.mrb[0].mxu0
      %v4720 = vadd.f32 %v1756, %v4719
      %v4721 = vpop.f32.mrb[0].mxu0
      %4722 = vmatprep.mubr.f32.mxu0 0.0
      %4723 = vmatmul.mubr.f32.gmra.mrb[0].mxu0 %v3477
      %v4724 = vpop.f32.mrb[0].mxu0
      %v4725 = vadd.f32 %v1756, %v4724
      %v4726 = vpop.f32.mrb[0].mxu0
      %4727 = vdwg.mxu0
      %v4728 = vmax.f32 %v4710, 0.0
      %v4729 = vmax.f32 %v4715, 0.0
      %v4730 = vmax.f32 %v4720, 0.0
      %v4731 = vmax.f32 %v4725, 0.0
      %v4733 = vsel %vm404, %v4728, 0
      %v4736 = vsel %vm404, %v4729, 0
      %v4739 = vsel %vm404, %v4730, 0
      %v4742 = vsel %vm404, %v4731, 0
      %4744 = vmatprep.subr.mxu0 0.0
      %4745 = vmatpush1.msra.mxu0 %v314
      %4746 = vmatprep.subr.mxu0 0.0
      %4747 = vmatpush1.msra.mxu0 %v315
      %4748 = vmatprep.subr.mxu0 0.0
      %4749 = vmatpush1.msra.mxu0 %v316
      %4750 = vmatprep.subr.mxu0 0.0
      %4751 = vmatpush1.msra.mxu0 %v317
      %4752 = vmatprep.subr.mxu0 0.0
      %4753 = vmatpush1.msra.mxu0 0.0
      %4754 = vmatprep.subr.mxu0 0.0
      %4755 = vmatpush1.msra.mxu0 0.0
      %4756 = vmatprep.subr.mxu0 0.0
      %4757 = vmatpush1.msra.mxu0 0.0
      %4758 = vmatprep.subr.mxu0 0.0
      %4759 = vmatpush1.msra.mxu0 0.0
      %4760 = vmatprep.subr.mxu0 0.0
      %4761 = vmatpush1.msra.mxu0 0.0
      %4762 = vmatprep.subr.mxu0 0.0
      %4763 = vmatpush1.msra.mxu0 0.0
      %4764 = vmatprep.subr.mxu0 0.0
      %4765 = vmatpush1.msra.mxu0 0.0
      %4766 = vmatprep.subr.mxu0 0.0
      %4767 = vmatpush1.msra.mxu0 0.0
      %4768 = vmatprep.subr.mxu0 0.0
      %4769 = vmatpush1.msra.mxu0 0.0
      %4770 = vmatprep.subr.mxu0 0.0
      %4771 = vmatpush1.msra.mxu0 0.0
      %4772 = vmatprep.subr.mxu0 0.0
      %4773 = vmatpush1.msra.mxu0 0.0
      %4774 = vmatprep.subr.mxu0 0.0
      %4775 = vmatpush1.msra.mxu0 0.0
      %4776 = vmatprep.subr.mxu0 0.0
      %4777 = vmatpush1.msra.mxu0 0.0
      %4778 = vmatprep.subr.mxu0 0.0
      %4779 = vmatpush1.msra.mxu0 0.0
      %4780 = vmatprep.subr.mxu0 0.0
      %4781 = vmatpush1.msra.mxu0 0.0
      %4782 = vmatprep.subr.mxu0 0.0
      %4783 = vmatpush1.msra.mxu0 0.0
      %4784 = vmatprep.subr.mxu0 0.0
      %4785 = vmatpush1.msra.mxu0 0.0
      %4786 = vmatprep.subr.mxu0 0.0
      %4787 = vmatpush1.msra.mxu0 0.0
      %4788 = vmatprep.subr.mxu0 0.0
      %4789 = vmatpush1.msra.mxu0 0.0
      %4790 = vmatprep.subr.mxu0 0.0
      %4791 = vmatpush1.msra.mxu0 0.0
      %4792 = vmatprep.subr.mxu0 0.0
      %4793 = vmatpush1.msra.mxu0 0.0
      %4794 = vmatprep.subr.mxu0 0.0
      %4795 = vmatpush1.msra.mxu0 0.0
      %4796 = vmatprep.subr.mxu0 0.0
      %4797 = vmatpush1.msra.mxu0 0.0
      %4798 = vmatprep.subr.mxu0 0.0
      %4799 = vmatpush1.msra.mxu0 0.0
      %4800 = vmatprep.subr.mxu0 0.0
      %4801 = vmatpush1.msra.mxu0 0.0
      %4802 = vmatprep.subr.mxu0 0.0
      %4803 = vmatpush1.msra.mxu0 0.0
      %4804 = vmatprep.subr.mxu0 0.0
      %4805 = vmatpush1.msra.mxu0 0.0
      %4806 = vmatprep.subr.mxu0 0.0
      %4807 = vmatpush1.msra.mxu0 0.0
      %4808 = vmatprep.mubr.f32.mxu0 0.0
      %4809 = vmatmul.mubr.f32.gmra.mrb[0].mxu0 %v4733
      %v4810 = vpop.f32.mrb[0].mxu0
      %v4811 = vadd.f32 %v1849, %v4810
      %v4812 = vpop.f32.mrb[0].mxu0
      %4813 = vmatprep.mubr.f32.mxu0 0.0
      %4814 = vmatmul.mubr.f32.gmra.mrb[0].mxu0 %v4736
      %v4815 = vpop.f32.mrb[0].mxu0
      %v4816 = vadd.f32 %v1849, %v4815
      %v4817 = vpop.f32.mrb[0].mxu0
      %4818 = vmatprep.mubr.f32.mxu0 0.0
      %4819 = vmatmul.mubr.f32.gmra.mrb[0].mxu0 %v4739
      %v4820 = vpop.f32.mrb[0].mxu0
      %v4821 = vadd.f32 %v1849, %v4820
      %v4822 = vpop.f32.mrb[0].mxu0
      %4823 = vmatprep.mubr.f32.mxu0 0.0
      %4824 = vmatmul.mubr.f32.gmra.mrb[0].mxu0 %v4742
      %v4825 = vpop.f32.mrb[0].mxu0
      %v4826 = vadd.f32 %v1849, %v4825
      %v4827 = vpop.f32.mrb[0].mxu0
      %4828 = vdwg.mxu0
      %v4829 = vmax.f32 %v4811, 0.0
      %v4830 = vmax.f32 %v4816, 0.0
      %v4831 = vmax.f32 %v4821, 0.0
      %v4832 = vmax.f32 %v4826, 0.0
      %v4834 = vsel %vm404, %v4829, 0
      %v4837 = vsel %vm404, %v4830, 0
      %v4840 = vsel %vm404, %v4831, 0
      %v4843 = vsel %vm404, %v4832, 0
      %4845 = vmatprep.subr.mxu0 0.0
      %4846 = vmatpush1.msra.mxu0 %v319
      %4847 = vmatprep.subr.mxu0 0.0
      %4848 = vmatpush1.msra.mxu0 %v320
      %4849 = vmatprep.subr.mxu0 0.0
      %4850 = vmatpush1.msra.mxu0 %v321
      %4851 = vmatprep.subr.mxu0 0.0
      %4852 = vmatpush1.msra.mxu0 %v322
      %4853 = vmatprep.subr.mxu0 0.0
      %4854 = vmatpush1.msra.mxu0 0.0
      %4855 = vmatprep.subr.mxu0 0.0
      %4856 = vmatpush1.msra.mxu0 0.0
      %4857 = vmatprep.subr.mxu0 0.0
      %4858 = vmatpush1.msra.mxu0 0.0
      %4859 = vmatprep.subr.mxu0 0.0
      %4860 = vmatpush1.msra.mxu0 0.0
      %4861 = vmatprep.subr.mxu0 0.0
      %4862 = vmatpush1.msra.mxu0 0.0
      %4863 = vmatprep.subr.mxu0 0.0
      %4864 = vmatpush1.msra.mxu0 0.0
      %4865 = vmatprep.subr.mxu0 0.0
      %4866 = vmatpush1.msra.mxu0 0.0
      %4867 = vmatprep.subr.mxu0 0.0
      %4868 = vmatpush1.msra.mxu0 0.0
      %4869 = vmatprep.subr.mxu0 0.0
      %4870 = vmatpush1.msra.mxu0 0.0
      %4871 = vmatprep.subr.mxu0 0.0
      %4872 = vmatpush1.msra.mxu0 0.0
      %4873 = vmatprep.subr.mxu0 0.0
      %4874 = vmatpush1.msra.mxu0 0.0
      %4875 = vmatprep.subr.mxu0 0.0
      %4876 = vmatpush1.msra.mxu0 0.0
      %4877 = vmatprep.subr.mxu0 0.0
      %4878 = vmatpush1.msra.mxu0 0.0
      %4879 = vmatprep.subr.mxu0 0.0
      %4880 = vmatpush1.msra.mxu0 0.0
      %4881 = vmatprep.subr.mxu0 0.0
      %4882 = vmatpush1.msra.mxu0 0.0
      %4883 = vmatprep.subr.mxu0 0.0
      %4884 = vmatpush1.msra.mxu0 0.0
      %4885 = vmatprep.subr.mxu0 0.0
      %4886 = vmatpush1.msra.mxu0 0.0
      %4887 = vmatprep.subr.mxu0 0.0
      %4888 = vmatpush1.msra.mxu0 0.0
      %4889 = vmatprep.subr.mxu0 0.0
      %4890 = vmatpush1.msra.mxu0 0.0
      %4891 = vmatprep.subr.mxu0 0.0
      %4892 = vmatpush1.msra.mxu0 0.0
      %4893 = vmatprep.subr.mxu0 0.0
      %4894 = vmatpush1.msra.mxu0 0.0
      %4895 = vmatprep.subr.mxu0 0.0
      %4896 = vmatpush1.msra.mxu0 0.0
      %4897 = vmatprep.subr.mxu0 0.0
      %4898 = vmatpush1.msra.mxu0 0.0
      %4899 = vmatprep.subr.mxu0 0.0
      %4900 = vmatpush1.msra.mxu0 0.0
      %4901 = vmatprep.subr.mxu0 0.0
      %4902 = vmatpush1.msra.mxu0 0.0
      %4903 = vmatprep.subr.mxu0 0.0
      %4904 = vmatpush1.msra.mxu0 0.0
      %4905 = vmatprep.subr.mxu0 0.0
      %4906 = vmatpush1.msra.mxu0 0.0
      %4907 = vmatprep.subr.mxu0 0.0
      %4908 = vmatpush1.msra.mxu0 0.0
      %4909 = vmatprep.mubr.f32.mxu0 0.0
      %4910 = vmatmul.mubr.f32.gmra.mrb[0].mxu0 %v4834
      %v4911 = vpop.f32.mrb[0].mxu0
      %v4912 = vadd.f32 %v1954, %v4911
      %v4913 = vpop.f32.mrb[0].mxu0
      %4914 = vmatprep.mubr.f32.mxu0 0.0
      %4915 = vmatmul.mubr.f32.gmra.mrb[0].mxu0 %v4837
      %v4916 = vpop.f32.mrb[0].mxu0
      %v4917 = vadd.f32 %v1954, %v4916
      %v4918 = vpop.f32.mrb[0].mxu0
      %4919 = vmatprep.mubr.f32.mxu0 0.0
      %4920 = vmatmul.mubr.f32.gmra.mrb[0].mxu0 %v4840
      %v4921 = vpop.f32.mrb[0].mxu0
      %v4922 = vadd.f32 %v1954, %v4921
      %v4923 = vpop.f32.mrb[0].mxu0
      %4924 = vmatprep.mubr.f32.mxu0 0.0
      %4925 = vmatmul.mubr.f32.gmra.mrb[0].mxu0 %v4843
      %v4926 = vpop.f32.mrb[0].mxu0
      %v4927 = vadd.f32 %v1954, %v4926
      %v4928 = vpop.f32.mrb[0].mxu0
      %4929 = vdwg.mxu0
      %v4930 = vtanh.pop %v4912
      %v4931 = vtanh.pop %v4917
      %v4932 = vtanh.pop %v4922
      %v4933 = vtanh.pop %v4927
      %4935 = vset.pattern.permute.xlu0 0
      %4936 = vperm.xlu0 %4935, %v4930
      %v4937 = vpop.permute.xlu0 %4936
      %4940 = vset.pattern.permute.xlu0 0
      %4941 = vperm.xlu0 %4940, %v4931
      %v4942 = vpop.permute.xlu0 %4941
      %4945 = vset.pattern.permute.xlu0 0
      %4946 = vperm.xlu0 %4945, %v4932
      %v4947 = vpop.permute.xlu0 %4946
      %4950 = vset.pattern.permute.xlu0 0
      %4951 = vperm.xlu0 %4950, %v4933
      %v4952 = vpop.permute.xlu0 %4951
      %v4954 = vmul.f32 %v242, %v4937
      %v4955 = vmul.f32 %v243, %v4942
      %v4956 = vmul.f32 %v244, %v4947
      %v4957 = vmul.f32 %v245, %v4952
      %v4958 = vsel %vm404, %v4954, 0.0
      %v4959 = vsel %vm404, %v4955, 0.0
      %v4960 = vadd.f32 %v4958, %v4959
      %v4961 = vsel %vm404, %v4956, 0.0
      %v4962 = vadd.f32 %v4960, %v4961
      %v4963 = vsel %vm404, %v4957, 0.0
      %v4964 = vadd.f32 %v4962, %v4963
      %v4965 = vrot.slane %v4964, 4
      %v4966 = vadd.f32 %v4964, %v4965
      %v4967 = vrot.slane %v4966, 2
      %v4968 = vadd.f32 %v4966, %v4967
      %v4969 = vrot.slane %v4968, 1
      %v4970 = vadd.f32 %v4968, %v4969
      %vm4971 = vcmp.gt.f32.partialorder %v4937, %v4970
      %vm4972 = vcmp.gt.f32.partialorder %v4942, %v4970
      %vm4973 = vcmp.gt.f32.partialorder %v4947, %v4970
      %vm4974 = vcmp.gt.f32.partialorder %v4952, %v4970
      %vm4975 = vcmp.eq.f32.partialorder %v4937, %v4970
      %vm4976 = vcmp.eq.f32.partialorder %v4942, %v4970
      %vm4977 = vcmp.eq.f32.partialorder %v4947, %v4970
      %vm4978 = vcmp.eq.f32.partialorder %v4952, %v4970
      %vm4979 = vmand %vm4975, %vm246
      %vm4980 = vmand %vm4976, %vm247
      %vm4981 = vmand %vm4977, %vm248
      %vm4982 = vmand %vm4978, %vm249
      %vm4983 = vmor %vm4971, %vm4979
      %vm4984 = vmor %vm4972, %vm4980
      %vm4985 = vmor %vm4973, %vm4981
      %vm4986 = vmor %vm4974, %vm4982
      %v4987 = vsel %vm4983, 1, 0
      %v4988 = vsel %vm4984, 1, 0
      %v4989 = vsel %vm4985, 1, 0
      %v4990 = vsel %vm4986, 1, 0
      %v4991 = vcvt.s32.f32 %v4987
      %v4992 = vcvt.s32.f32 %v4988
      %v4993 = vcvt.s32.f32 %v4989
      %v4994 = vcvt.s32.f32 %v4990
      %v4995 = vsel %vm404, %v4991, 0.0
      %v4996 = vsel %vm404, %v4992, 0.0
      %v4997 = vadd.f32 %v4995, %v4996
      %v4998 = vsel %vm404, %v4993, 0.0
      %v4999 = vadd.f32 %v4997, %v4998
      %v5000 = vsel %vm404, %v4994, 0.0
      %v5001 = vadd.f32 %v4999, %v5000
      %v5002 = vrot.slane %v5001, 4
      %v5003 = vadd.f32 %v5001, %v5002
      %v5004 = vrot.slane %v5003, 2
      %v5005 = vadd.f32 %v5003, %v5004
      %v5006 = vrot.slane %v5005, 1
      %v5007 = vadd.f32 %v5005, %v5006
      %vm5008 = vcmp.eq.f32.partialorder %v5007, %v260
      %vm5009 = vcmp.eq.f32.partialorder %v5007, %v261
      %v5010 = vsel %vm5008, 1, 0
      %v5011 = vsel %vm5009, 1, 0
      %v5012 = vcvt.s32.f32 %v5010
      %v5013 = vcvt.s32.f32 %v5011
      %5014 = vmatprep.subr.mxu0 0.0
      %5015 = vmatpush1.msra.mxu0 %v328
      %5016 = vmatprep.subr.mxu0 0.0
      %5017 = vmatpush1.msra.mxu0 %v329
      %5018 = vmatprep.subr.mxu0 0.0
      %5019 = vmatpush1.msra.mxu0 %v330
      %5020 = vmatprep.subr.mxu0 0.0
      %5021 = vmatpush1.msra.mxu0 %v331
      %5022 = vmatprep.subr.mxu0 0.0
      %5023 = vmatpush1.msra.mxu0 0.0
      %5024 = vmatprep.subr.mxu0 0.0
      %5025 = vmatpush1.msra.mxu0 0.0
      %5026 = vmatprep.subr.mxu0 0.0
      %5027 = vmatpush1.msra.mxu0 0.0
      %5028 = vmatprep.subr.mxu0 0.0
      %5029 = vmatpush1.msra.mxu0 0.0
      %5030 = vmatprep.subr.mxu0 0.0
      %5031 = vmatpush1.msra.mxu0 0.0
      %5032 = vmatprep.subr.mxu0 0.0
      %5033 = vmatpush1.msra.mxu0 0.0
      %5034 = vmatprep.subr.mxu0 0.0
      %5035 = vmatpush1.msra.mxu0 0.0
      %5036 = vmatprep.subr.mxu0 0.0
      %5037 = vmatpush1.msra.mxu0 0.0
      %5038 = vmatprep.subr.mxu0 0.0
      %5039 = vmatpush1.msra.mxu0 0.0
      %5040 = vmatprep.subr.mxu0 0.0
      %5041 = vmatpush1.msra.mxu0 0.0
      %5042 = vmatprep.subr.mxu0 0.0
      %5043 = vmatpush1.msra.mxu0 0.0
      %5044 = vmatprep.subr.mxu0 0.0
      %5045 = vmatpush1.msra.mxu0 0.0
      %5046 = vmatprep.subr.mxu0 0.0
      %5047 = vmatpush1.msra.mxu0 0.0
      %5048 = vmatprep.subr.mxu0 0.0
      %5049 = vmatpush1.msra.mxu0 0.0
      %5050 = vmatprep.subr.mxu0 0.0
      %5051 = vmatpush1.msra.mxu0 0.0
      %5052 = vmatprep.subr.mxu0 0.0
      %5053 = vmatpush1.msra.mxu0 0.0
      %5054 = vmatprep.subr.mxu0 0.0
      %5055 = vmatpush1.msra.mxu0 0.0
      %5056 = vmatprep.subr.mxu0 0.0
      %5057 = vmatpush1.msra.mxu0 0.0
      %5058 = vmatprep.subr.mxu0 0.0
      %5059 = vmatpush1.msra.mxu0 0.0
      %5060 = vmatprep.subr.mxu0 0.0
      %5061 = vmatpush1.msra.mxu0 0.0
      %5062 = vmatprep.subr.mxu0 0.0
      %5063 = vmatpush1.msra.mxu0 0.0
      %5064 = vmatprep.subr.mxu0 0.0
      %5065 = vmatpush1.msra.mxu0 0.0
      %5066 = vmatprep.subr.mxu0 0.0
      %5067 = vmatpush1.msra.mxu0 0.0
      %5068 = vmatprep.subr.mxu0 0.0
      %5069 = vmatpush1.msra.mxu0 0.0
      %5070 = vmatprep.subr.mxu0 0.0
      %5071 = vmatpush1.msra.mxu0 0.0
      %5072 = vmatprep.subr.mxu0 0.0
      %5073 = vmatpush1.msra.mxu0 0.0
      %5074 = vmatprep.subr.mxu0 0.0
      %5075 = vmatpush1.msra.mxu0 0.0
      %5076 = vmatprep.subr.mxu0 0.0
      %5077 = vmatpush1.msra.mxu0 0.0
      %5078 = vmatprep.mubr.f32.mxu0 0.0
      %5079 = vmatmul.mubr.f32.gmra.mrb[0].mxu0 %v4159
      %v5080 = vpop.f32.mrb[0].mxu0
      %v5081 = vadd.f32 0.0, %v5080
      %v5082 = vpop.f32.mrb[0].mxu0
      %5083 = vmatprep.mubr.f32.mxu0 0.0
      %5084 = vmatmul.mubr.f32.gmra.mrb[0].mxu0 %v4162
      %v5085 = vpop.f32.mrb[0].mxu0
      %v5086 = vadd.f32 0.0, %v5085
      %v5087 = vpop.f32.mrb[0].mxu0
      %5088 = vmatprep.mubr.f32.mxu0 0.0
      %5089 = vmatmul.mubr.f32.gmra.mrb[0].mxu0 %v4165
      %v5090 = vpop.f32.mrb[0].mxu0
      %v5091 = vadd.f32 0.0, %v5090
      %v5092 = vpop.f32.mrb[0].mxu0
      %5093 = vmatprep.mubr.f32.mxu0 0.0
      %5094 = vmatmul.mubr.f32.gmra.mrb[0].mxu0 %v4168
      %v5095 = vpop.f32.mrb[0].mxu0
      %v5096 = vadd.f32 0.0, %v5095
      %v5097 = vpop.f32.mrb[0].mxu0
      %5098 = vdwg.mxu0
      %5099 = vmatprep.subr.mxu0 0.0
      %5100 = vmatpush1.msra.mxu0 %v324
      %5101 = vmatprep.subr.mxu0 0.0
      %5102 = vmatpush1.msra.mxu0 %v325
      %5103 = vmatprep.subr.mxu0 0.0
      %5104 = vmatpush1.msra.mxu0 %v326
      %5105 = vmatprep.subr.mxu0 0.0
      %5106 = vmatpush1.msra.mxu0 %v327
      %5107 = vmatprep.subr.mxu0 0.0
      %5108 = vmatpush1.msra.mxu0 0.0
      %5109 = vmatprep.subr.mxu0 0.0
      %5110 = vmatpush1.msra.mxu0 0.0
      %5111 = vmatprep.subr.mxu0 0.0
      %5112 = vmatpush1.msra.mxu0 0.0
      %5113 = vmatprep.subr.mxu0 0.0
      %5114 = vmatpush1.msra.mxu0 0.0
      %5115 = vmatprep.subr.mxu0 0.0
      %5116 = vmatpush1.msra.mxu0 0.0
      %5117 = vmatprep.subr.mxu0 0.0
      %5118 = vmatpush1.msra.mxu0 0.0
      %5119 = vmatprep.subr.mxu0 0.0
      %5120 = vmatpush1.msra.mxu0 0.0
      %5121 = vmatprep.subr.mxu0 0.0
      %5122 = vmatpush1.msra.mxu0 0.0
      %5123 = vmatprep.subr.mxu0 0.0
      %5124 = vmatpush1.msra.mxu0 0.0
      %5125 = vmatprep.subr.mxu0 0.0
      %5126 = vmatpush1.msra.mxu0 0.0
      %5127 = vmatprep.subr.mxu0 0.0
      %5128 = vmatpush1.msra.mxu0 0.0
      %5129 = vmatprep.subr.mxu0 0.0
      %5130 = vmatpush1.msra.mxu0 0.0
      %5131 = vmatprep.subr.mxu0 0.0
      %5132 = vmatpush1.msra.mxu0 0.0
      %5133 = vmatprep.subr.mxu0 0.0
      %5134 = vmatpush1.msra.mxu0 0.0
      %5135 = vmatprep.subr.mxu0 0.0
      %5136 = vmatpush1.msra.mxu0 0.0
      %5137 = vmatprep.subr.mxu0 0.0
      %5138 = vmatpush1.msra.mxu0 0.0
      %5139 = vmatprep.subr.mxu0 0.0
      %5140 = vmatpush1.msra.mxu0 0.0
      %5141 = vmatprep.subr.mxu0 0.0
      %5142 = vmatpush1.msra.mxu0 0.0
      %5143 = vmatprep.subr.mxu0 0.0
      %5144 = vmatpush1.msra.mxu0 0.0
      %5145 = vmatprep.subr.mxu0 0.0
      %5146 = vmatpush1.msra.mxu0 0.0
      %5147 = vmatprep.subr.mxu0 0.0
      %5148 = vmatpush1.msra.mxu0 0.0
      %5149 = vmatprep.subr.mxu0 0.0
      %5150 = vmatpush1.msra.mxu0 0.0
      %5151 = vmatprep.subr.mxu0 0.0
      %5152 = vmatpush1.msra.mxu0 0.0
      %5153 = vmatprep.subr.mxu0 0.0
      %5154 = vmatpush1.msra.mxu0 0.0
      %5155 = vmatprep.subr.mxu0 0.0
      %5156 = vmatpush1.msra.mxu0 0.0
      %5157 = vmatprep.subr.mxu0 0.0
      %5158 = vmatpush1.msra.mxu0 0.0
      %5159 = vmatprep.subr.mxu0 0.0
      %5160 = vmatpush1.msra.mxu0 0.0
      %5161 = vmatprep.subr.mxu0 0.0
      %5162 = vmatpush1.msra.mxu0 0.0
      %5163 = vmatprep.mubr.f32.mxu0 0.0
      %5164 = vmatmul.mubr.f32.gmra.mrb[0].mxu0 %v3771
      %v5165 = vpop.f32.mrb[0].mxu0
      %v5166 = vadd.f32 %v5081, %v5165
      %v5167 = vpop.f32.mrb[0].mxu0
      %5168 = vmatprep.mubr.f32.mxu0 0.0
      %5169 = vmatmul.mubr.f32.gmra.mrb[0].mxu0 %v3774
      %v5170 = vpop.f32.mrb[0].mxu0
      %v5171 = vadd.f32 %v5086, %v5170
      %v5172 = vpop.f32.mrb[0].mxu0
      %5173 = vmatprep.mubr.f32.mxu0 0.0
      %5174 = vmatmul.mubr.f32.gmra.mrb[0].mxu0 %v3777
      %v5175 = vpop.f32.mrb[0].mxu0
      %v5176 = vadd.f32 %v5091, %v5175
      %v5177 = vpop.f32.mrb[0].mxu0
      %5178 = vmatprep.mubr.f32.mxu0 0.0
      %5179 = vmatmul.mubr.f32.gmra.mrb[0].mxu0 %v3780
      %v5180 = vpop.f32.mrb[0].mxu0
      %v5181 = vadd.f32 %v5096, %v5180
      %v5182 = vpop.f32.mrb[0].mxu0
      %5183 = vdwg.mxu0
      %5184 = vmatprep.subr.mxu0 0.0
      %5185 = vmatpush1.msra.mxu0 %v332
      %5186 = vmatprep.subr.mxu0 0.0
      %5187 = vmatpush1.msra.mxu0 %v333
      %5188 = vmatprep.subr.mxu0 0.0
      %5189 = vmatpush1.msra.mxu0 %v334
      %5190 = vmatprep.subr.mxu0 0.0
      %5191 = vmatpush1.msra.mxu0 %v335
      %5192 = vmatprep.subr.mxu0 0.0
      %5193 = vmatpush1.msra.mxu0 0.0
      %5194 = vmatprep.subr.mxu0 0.0
      %5195 = vmatpush1.msra.mxu0 0.0
      %5196 = vmatprep.subr.mxu0 0.0
      %5197 = vmatpush1.msra.mxu0 0.0
      %5198 = vmatprep.subr.mxu0 0.0
      %5199 = vmatpush1.msra.mxu0 0.0
      %5200 = vmatprep.subr.mxu0 0.0
      %5201 = vmatpush1.msra.mxu0 0.0
      %5202 = vmatprep.subr.mxu0 0.0
      %5203 = vmatpush1.msra.mxu0 0.0
      %5204 = vmatprep.subr.mxu0 0.0
      %5205 = vmatpush1.msra.mxu0 0.0
      %5206 = vmatprep.subr.mxu0 0.0
      %5207 = vmatpush1.msra.mxu0 0.0
      %5208 = vmatprep.subr.mxu0 0.0
      %5209 = vmatpush1.msra.mxu0 0.0
      %5210 = vmatprep.subr.mxu0 0.0
      %5211 = vmatpush1.msra.mxu0 0.0
      %5212 = vmatprep.subr.mxu0 0.0
      %5213 = vmatpush1.msra.mxu0 0.0
      %5214 = vmatprep.subr.mxu0 0.0
      %5215 = vmatpush1.msra.mxu0 0.0
      %5216 = vmatprep.subr.mxu0 0.0
      %5217 = vmatpush1.msra.mxu0 0.0
      %5218 = vmatprep.subr.mxu0 0.0
      %5219 = vmatpush1.msra.mxu0 0.0
      %5220 = vmatprep.subr.mxu0 0.0
      %5221 = vmatpush1.msra.mxu0 0.0
      %5222 = vmatprep.subr.mxu0 0.0
      %5223 = vmatpush1.msra.mxu0 0.0
      %5224 = vmatprep.subr.mxu0 0.0
      %5225 = vmatpush1.msra.mxu0 0.0
      %5226 = vmatprep.subr.mxu0 0.0
      %5227 = vmatpush1.msra.mxu0 0.0
      %5228 = vmatprep.subr.mxu0 0.0
      %5229 = vmatpush1.msra.mxu0 0.0
      %5230 = vmatprep.subr.mxu0 0.0
      %5231 = vmatpush1.msra.mxu0 0.0
      %5232 = vmatprep.subr.mxu0 0.0
      %5233 = vmatpush1.msra.mxu0 0.0
      %5234 = vmatprep.subr.mxu0 0.0
      %5235 = vmatpush1.msra.mxu0 0.0
      %5236 = vmatprep.subr.mxu0 0.0
      %5237 = vmatpush1.msra.mxu0 0.0
      %5238 = vmatprep.subr.mxu0 0.0
      %5239 = vmatpush1.msra.mxu0 0.0
      %5240 = vmatprep.subr.mxu0 0.0
      %5241 = vmatpush1.msra.mxu0 0.0
      %5242 = vmatprep.subr.mxu0 0.0
      %5243 = vmatpush1.msra.mxu0 0.0
      %5244 = vmatprep.subr.mxu0 0.0
      %5245 = vmatpush1.msra.mxu0 0.0
      %5246 = vmatprep.subr.mxu0 0.0
      %5247 = vmatpush1.msra.mxu0 0.0
      %5248 = vmatprep.mubr.f32.mxu0 0.0
      %5249 = vmatmul.mubr.f32.gmra.mrb[0].mxu0 %v4547
      %v5250 = vpop.f32.mrb[0].mxu0
      %v5251 = vadd.f32 0.0, %v5250
      %v5252 = vpop.f32.mrb[0].mxu0
      %5253 = vmatprep.mubr.f32.mxu0 0.0
      %5254 = vmatmul.mubr.f32.gmra.mrb[0].mxu0 %v4550
      %v5255 = vpop.f32.mrb[0].mxu0
      %v5256 = vadd.f32 0.0, %v5255
      %v5257 = vpop.f32.mrb[0].mxu0
      %5258 = vmatprep.mubr.f32.mxu0 0.0
      %5259 = vmatmul.mubr.f32.gmra.mrb[0].mxu0 %v4553
      %v5260 = vpop.f32.mrb[0].mxu0
      %v5261 = vadd.f32 0.0, %v5260
      %v5262 = vpop.f32.mrb[0].mxu0
      %5263 = vmatprep.mubr.f32.mxu0 0.0
      %5264 = vmatmul.mubr.f32.gmra.mrb[0].mxu0 %v4556
      %v5265 = vpop.f32.mrb[0].mxu0
      %v5266 = vadd.f32 0.0, %v5265
      %v5267 = vpop.f32.mrb[0].mxu0
      %5268 = vdwg.mxu0
      %v5269 = vadd.f32 %v5166, %v5251
      %v5270 = vadd.f32 %v5171, %v5256
      %v5271 = vadd.f32 %v5176, %v5261
      %v5272 = vadd.f32 %v5181, %v5266
      %v5273 = vsel %vm404, %v4930, 0
      %v5275 = vsel %vm404, %v4931, 0
      %v5277 = vsel %vm404, %v4932, 0
      %v5279 = vsel %vm404, %v4933, 0
      %5281 = vmatprep.subr.mxu0 0.0
      %5282 = vmatpush1.msra.mxu0 %v336
      %5283 = vmatprep.subr.mxu0 0.0
      %5284 = vmatpush1.msra.mxu0 %v337
      %5285 = vmatprep.subr.mxu0 0.0
      %5286 = vmatpush1.msra.mxu0 %v338
      %5287 = vmatprep.subr.mxu0 0.0
      %5288 = vmatpush1.msra.mxu0 %v339
      %5289 = vmatprep.subr.mxu0 0.0
      %5290 = vmatpush1.msra.mxu0 0.0
      %5291 = vmatprep.subr.mxu0 0.0
      %5292 = vmatpush1.msra.mxu0 0.0
      %5293 = vmatprep.subr.mxu0 0.0
      %5294 = vmatpush1.msra.mxu0 0.0
      %5295 = vmatprep.subr.mxu0 0.0
      %5296 = vmatpush1.msra.mxu0 0.0
      %5297 = vmatprep.subr.mxu0 0.0
      %5298 = vmatpush1.msra.mxu0 0.0
      %5299 = vmatprep.subr.mxu0 0.0
      %5300 = vmatpush1.msra.mxu0 0.0
      %5301 = vmatprep.subr.mxu0 0.0
      %5302 = vmatpush1.msra.mxu0 0.0
      %5303 = vmatprep.subr.mxu0 0.0
      %5304 = vmatpush1.msra.mxu0 0.0
      %5305 = vmatprep.subr.mxu0 0.0
      %5306 = vmatpush1.msra.mxu0 0.0
      %5307 = vmatprep.subr.mxu0 0.0
      %5308 = vmatpush1.msra.mxu0 0.0
      %5309 = vmatprep.subr.mxu0 0.0
      %5310 = vmatpush1.msra.mxu0 0.0
      %5311 = vmatprep.subr.mxu0 0.0
      %5312 = vmatpush1.msra.mxu0 0.0
      %5313 = vmatprep.subr.mxu0 0.0
      %5314 = vmatpush1.msra.mxu0 0.0
      %5315 = vmatprep.subr.mxu0 0.0
      %5316 = vmatpush1.msra.mxu0 0.0
      %5317 = vmatprep.subr.mxu0 0.0
      %5318 = vmatpush1.msra.mxu0 0.0
      %5319 = vmatprep.subr.mxu0 0.0
      %5320 = vmatpush1.msra.mxu0 0.0
      %5321 = vmatprep.subr.mxu0 0.0
      %5322 = vmatpush1.msra.mxu0 0.0
      %5323 = vmatprep.subr.mxu0 0.0
      %5324 = vmatpush1.msra.mxu0 0.0
      %5325 = vmatprep.subr.mxu0 0.0
      %5326 = vmatpush1.msra.mxu0 0.0
      %5327 = vmatprep.subr.mxu0 0.0
      %5328 = vmatpush1.msra.mxu0 0.0
      %5329 = vmatprep.subr.mxu0 0.0
      %5330 = vmatpush1.msra.mxu0 0.0
      %5331 = vmatprep.subr.mxu0 0.0
      %5332 = vmatpush1.msra.mxu0 0.0
      %5333 = vmatprep.subr.mxu0 0.0
      %5334 = vmatpush1.msra.mxu0 0.0
      %5335 = vmatprep.subr.mxu0 0.0
      %5336 = vmatpush1.msra.mxu0 0.0
      %5337 = vmatprep.subr.mxu0 0.0
      %5338 = vmatpush1.msra.mxu0 0.0
      %5339 = vmatprep.subr.mxu0 0.0
      %5340 = vmatpush1.msra.mxu0 0.0
      %5341 = vmatprep.subr.mxu0 0.0
      %5342 = vmatpush1.msra.mxu0 0.0
      %5343 = vmatprep.subr.mxu0 0.0
      %5344 = vmatpush1.msra.mxu0 0.0
      %5345 = vmatprep.mubr.f32.mxu0 0.0
      %5346 = vmatmul.mubr.f32.gmra.mrb[0].mxu0 %v5273
      %v5347 = vpop.f32.mrb[0].mxu0
      %v5348 = vadd.f32 0.0, %v5347
      %v5349 = vpop.f32.mrb[0].mxu0
      %5350 = vmatprep.mubr.f32.mxu0 0.0
      %5351 = vmatmul.mubr.f32.gmra.mrb[0].mxu0 %v5275
      %v5352 = vpop.f32.mrb[0].mxu0
      %v5353 = vadd.f32 0.0, %v5352
      %v5354 = vpop.f32.mrb[0].mxu0
      %5355 = vmatprep.mubr.f32.mxu0 0.0
      %5356 = vmatmul.mubr.f32.gmra.mrb[0].mxu0 %v5277
      %v5357 = vpop.f32.mrb[0].mxu0
      %v5358 = vadd.f32 0.0, %v5357
      %v5359 = vpop.f32.mrb[0].mxu0
      %5360 = vmatprep.mubr.f32.mxu0 0.0
      %5361 = vmatmul.mubr.f32.gmra.mrb[0].mxu0 %v5279
      %v5362 = vpop.f32.mrb[0].mxu0
      %v5363 = vadd.f32 0.0, %v5362
      %v5364 = vpop.f32.mrb[0].mxu0
      %5365 = vdwg.mxu0
      %v5366 = vadd.f32 %v5269, %v5348
      %v5367 = vadd.f32 %v5270, %v5353
      %v5368 = vadd.f32 %v5271, %v5358
      %v5369 = vadd.f32 %v5272, %v5363
      %v5371 = vsel %vm404, %v5012, 0
      %v5374 = vsel %vm404, %v5013, 0
      %5376 = vmatprep.subr.mxu0 0.0
      %5377 = vmatpush1.msra.mxu0 %v5366
      %5378 = vmatprep.subr.mxu0 0.0
      %5379 = vmatpush1.msra.mxu0 %v5367
      %5380 = vmatprep.subr.mxu0 0.0
      %5381 = vmatpush1.msra.mxu0 %v5368
      %5382 = vmatprep.subr.mxu0 0.0
      %5383 = vmatpush1.msra.mxu0 %v5369
      %5384 = vmatprep.subr.mxu0 0.0
      %5385 = vmatpush1.msra.mxu0 0.0
      %5386 = vmatprep.subr.mxu0 0.0
      %5387 = vmatpush1.msra.mxu0 0.0
      %5388 = vmatprep.subr.mxu0 0.0
      %5389 = vmatpush1.msra.mxu0 0.0
      %5390 = vmatprep.subr.mxu0 0.0
      %5391 = vmatpush1.msra.mxu0 0.0
      %5392 = vmatprep.subr.mxu0 0.0
      %5393 = vmatpush1.msra.mxu0 0.0
      %5394 = vmatprep.subr.mxu0 0.0
      %5395 = vmatpush1.msra.mxu0 0.0
      %5396 = vmatprep.subr.mxu0 0.0
      %5397 = vmatpush1.msra.mxu0 0.0
      %5398 = vmatprep.subr.mxu0 0.0
      %5399 = vmatpush1.msra.mxu0 0.0
      %5400 = vmatprep.subr.mxu0 0.0
      %5401 = vmatpush1.msra.mxu0 0.0
      %5402 = vmatprep.subr.mxu0 0.0
      %5403 = vmatpush1.msra.mxu0 0.0
      %5404 = vmatprep.subr.mxu0 0.0
      %5405 = vmatpush1.msra.mxu0 0.0
      %5406 = vmatprep.subr.mxu0 0.0
      %5407 = vmatpush1.msra.mxu0 0.0
      %5408 = vmatprep.subr.mxu0 0.0
      %5409 = vmatpush1.msra.mxu0 0.0
      %5410 = vmatprep.subr.mxu0 0.0
      %5411 = vmatpush1.msra.mxu0 0.0
      %5412 = vmatprep.subr.mxu0 0.0
      %5413 = vmatpush1.msra.mxu0 0.0
      %5414 = vmatprep.subr.mxu0 0.0
      %5415 = vmatpush1.msra.mxu0 0.0
      %5416 = vmatprep.subr.mxu0 0.0
      %5417 = vmatpush1.msra.mxu0 0.0
      %5418 = vmatprep.subr.mxu0 0.0
      %5419 = vmatpush1.msra.mxu0 0.0
      %5420 = vmatprep.subr.mxu0 0.0
      %5421 = vmatpush1.msra.mxu0 0.0
      %5422 = vmatprep.subr.mxu0 0.0
      %5423 = vmatpush1.msra.mxu0 0.0
      %5424 = vmatprep.subr.mxu0 0.0
      %5425 = vmatpush1.msra.mxu0 0.0
      %5426 = vmatprep.subr.mxu0 0.0
      %5427 = vmatpush1.msra.mxu0 0.0
      %5428 = vmatprep.subr.mxu0 0.0
      %5429 = vmatpush1.msra.mxu0 0.0
      %5430 = vmatprep.subr.mxu0 0.0
      %5431 = vmatpush1.msra.mxu0 0.0
      %5432 = vmatprep.subr.mxu0 0.0
      %5433 = vmatpush1.msra.mxu0 0.0
      %5434 = vmatprep.subr.mxu0 0.0
      %5435 = vmatpush1.msra.mxu0 0.0
      %5436 = vmatprep.subr.mxu0 0.0
      %5437 = vmatpush1.msra.mxu0 0.0
      %5438 = vmatprep.subr.mxu0 0.0
      %5439 = vmatpush1.msra.mxu0 0.0
      %5440 = vmatprep.mubr.f32.mxu0 0.0
      %5441 = vmatmul.mubr.f32.gmra.mrb[0].mxu0 %v5371
      %v5442 = vpop.f32.mrb[0].mxu0
      %v5443 = vadd.f32 %v2495, %v5442
      %v5444 = vpop.f32.mrb[0].mxu0
      %5445 = vmatprep.mubr.f32.mxu0 0.0
      %5446 = vmatmul.mubr.f32.gmra.mrb[0].mxu0 %v5374
      %v5447 = vpop.f32.mrb[0].mxu0
      %v5448 = vadd.f32 %v2495, %v5447
      %v5449 = vpop.f32.mrb[0].mxu0
      %5450 = vdwg.mxu0
      %v5451 = vmax.f32 %v5443, 0.0
      %v5452 = vmax.f32 %v5448, 0.0
      %v5453 = vmax.f32 %v5451, %v5452
      %v5455 = vrot.slane %v5453, 1
      %v5456 = vsel %vm404, %v5455, 0
      %5458 = vmatprep.subr.mxu0 0.0
      %5459 = vmatpush1.msra.mxu0 %v345
      %5460 = vmatprep.subr.mxu0 0.0
      %5461 = vmatpush1.msra.mxu0 %v346
      %5462 = vmatprep.subr.mxu0 0.0
      %5463 = vmatpush1.msra.mxu0 %v347
      %5464 = vmatprep.subr.mxu0 0.0
      %5465 = vmatpush1.msra.mxu0 %v348
      %5466 = vmatprep.subr.mxu0 0.0
      %5467 = vmatpush1.msra.mxu0 0.0
      %5468 = vmatprep.subr.mxu0 0.0
      %5469 = vmatpush1.msra.mxu0 0.0
      %5470 = vmatprep.subr.mxu0 0.0
      %5471 = vmatpush1.msra.mxu0 0.0
      %5472 = vmatprep.subr.mxu0 0.0
      %5473 = vmatpush1.msra.mxu0 0.0
      %5474 = vmatprep.subr.mxu0 0.0
      %5475 = vmatpush1.msra.mxu0 0.0
      %5476 = vmatprep.subr.mxu0 0.0
      %5477 = vmatpush1.msra.mxu0 0.0
      %5478 = vmatprep.subr.mxu0 0.0
      %5479 = vmatpush1.msra.mxu0 0.0
      %5480 = vmatprep.subr.mxu0 0.0
      %5481 = vmatpush1.msra.mxu0 0.0
      %5482 = vmatprep.subr.mxu0 0.0
      %5483 = vmatpush1.msra.mxu0 0.0
      %5484 = vmatprep.subr.mxu0 0.0
      %5485 = vmatpush1.msra.mxu0 0.0
      %5486 = vmatprep.subr.mxu0 0.0
      %5487 = vmatpush1.msra.mxu0 0.0
      %5488 = vmatprep.subr.mxu0 0.0
      %5489 = vmatpush1.msra.mxu0 0.0
      %5490 = vmatprep.subr.mxu0 0.0
      %5491 = vmatpush1.msra.mxu0 0.0
      %5492 = vmatprep.subr.mxu0 0.0
      %5493 = vmatpush1.msra.mxu0 0.0
      %5494 = vmatprep.subr.mxu0 0.0
      %5495 = vmatpush1.msra.mxu0 0.0
      %5496 = vmatprep.subr.mxu0 0.0
      %5497 = vmatpush1.msra.mxu0 0.0
      %5498 = vmatprep.subr.mxu0 0.0
      %5499 = vmatpush1.msra.mxu0 0.0
      %5500 = vmatprep.subr.mxu0 0.0
      %5501 = vmatpush1.msra.mxu0 0.0
      %5502 = vmatprep.subr.mxu0 0.0
      %5503 = vmatpush1.msra.mxu0 0.0
      %5504 = vmatprep.subr.mxu0 0.0
      %5505 = vmatpush1.msra.mxu0 0.0
      %5506 = vmatprep.subr.mxu0 0.0
      %5507 = vmatpush1.msra.mxu0 0.0
      %5508 = vmatprep.subr.mxu0 0.0
      %5509 = vmatpush1.msra.mxu0 0.0
      %5510 = vmatprep.subr.mxu0 0.0
      %5511 = vmatpush1.msra.mxu0 0.0
      %5512 = vmatprep.subr.mxu0 0.0
      %5513 = vmatpush1.msra.mxu0 0.0
      %5514 = vmatprep.subr.mxu0 0.0
      %5515 = vmatpush1.msra.mxu0 0.0
      %5516 = vmatprep.subr.mxu0 0.0
      %5517 = vmatpush1.msra.mxu0 0.0
      %5518 = vmatprep.subr.mxu0 0.0
      %5519 = vmatpush1.msra.mxu0 0.0
      %5520 = vmatprep.subr.mxu0 0.0
      %5521 = vmatpush1.msra.mxu0 0.0
      %5522 = vmatprep.mubr.f32.mxu0 0.0
      %5523 = vmatmul.mubr.f32.gmra.mrb[0].mxu0 %v5456
      %v5524 = vpop.f32.mrb[0].mxu0
      %v5525 = vadd.f32 0.0, %v5524
      %v5526 = vpop.f32.mrb[0].mxu0
      %5527 = vdwg.mxu0
      %v5528 = vsel %vm404, %v5453, 0
      %5530 = vmatprep.subr.mxu0 0.0
      %5531 = vmatpush1.msra.mxu0 %v341
      %5532 = vmatprep.subr.mxu0 0.0
      %5533 = vmatpush1.msra.mxu0 %v342
      %5534 = vmatprep.subr.mxu0 0.0
      %5535 = vmatpush1.msra.mxu0 %v343
      %5536 = vmatprep.subr.mxu0 0.0
      %5537 = vmatpush1.msra.mxu0 %v344
      %5538 = vmatprep.subr.mxu0 0.0
      %5539 = vmatpush1.msra.mxu0 0.0
      %5540 = vmatprep.subr.mxu0 0.0
      %5541 = vmatpush1.msra.mxu0 0.0
      %5542 = vmatprep.subr.mxu0 0.0
      %5543 = vmatpush1.msra.mxu0 0.0
      %5544 = vmatprep.subr.mxu0 0.0
      %5545 = vmatpush1.msra.mxu0 0.0
      %5546 = vmatprep.subr.mxu0 0.0
      %5547 = vmatpush1.msra.mxu0 0.0
      %5548 = vmatprep.subr.mxu0 0.0
      %5549 = vmatpush1.msra.mxu0 0.0
      %5550 = vmatprep.subr.mxu0 0.0
      %5551 = vmatpush1.msra.mxu0 0.0
      %5552 = vmatprep.subr.mxu0 0.0
      %5553 = vmatpush1.msra.mxu0 0.0
      %5554 = vmatprep.subr.mxu0 0.0
      %5555 = vmatpush1.msra.mxu0 0.0
      %5556 = vmatprep.subr.mxu0 0.0
      %5557 = vmatpush1.msra.mxu0 0.0
      %5558 = vmatprep.subr.mxu0 0.0
      %5559 = vmatpush1.msra.mxu0 0.0
      %5560 = vmatprep.subr.mxu0 0.0
      %5561 = vmatpush1.msra.mxu0 0.0
      %5562 = vmatprep.subr.mxu0 0.0
      %5563 = vmatpush1.msra.mxu0 0.0
      %5564 = vmatprep.subr.mxu0 0.0
      %5565 = vmatpush1.msra.mxu0 0.0
      %5566 = vmatprep.subr.mxu0 0.0
      %5567 = vmatpush1.msra.mxu0 0.0
      %5568 = vmatprep.subr.mxu0 0.0
      %5569 = vmatpush1.msra.mxu0 0.0
      %5570 = vmatprep.subr.mxu0 0.0
      %5571 = vmatpush1.msra.mxu0 0.0
      %5572 = vmatprep.subr.mxu0 0.0
      %5573 = vmatpush1.msra.mxu0 0.0
      %5574 = vmatprep.subr.mxu0 0.0
      %5575 = vmatpush1.msra.mxu0 0.0
      %5576 = vmatprep.subr.mxu0 0.0
      %5577 = vmatpush1.msra.mxu0 0.0
      %5578 = vmatprep.subr.mxu0 0.0
      %5579 = vmatpush1.msra.mxu0 0.0
      %5580 = vmatprep.subr.mxu0 0.0
      %5581 = vmatpush1.msra.mxu0 0.0
      %5582 = vmatprep.subr.mxu0 0.0
      %5583 = vmatpush1.msra.mxu0 0.0
      %5584 = vmatprep.subr.mxu0 0.0
      %5585 = vmatpush1.msra.mxu0 0.0
      %5586 = vmatprep.subr.mxu0 0.0
      %5587 = vmatpush1.msra.mxu0 0.0
      %5588 = vmatprep.subr.mxu0 0.0
      %5589 = vmatpush1.msra.mxu0 0.0
      %5590 = vmatprep.subr.mxu0 0.0
      %5591 = vmatpush1.msra.mxu0 0.0
      %5592 = vmatprep.subr.mxu0 0.0
      %5593 = vmatpush1.msra.mxu0 0.0
      %5594 = vmatprep.mubr.f32.mxu0 0.0
      %5595 = vmatmul.mubr.f32.gmra.mrb[0].mxu0 %v5528
      %v5596 = vpop.f32.mrb[0].mxu0
      %v5597 = vadd.f32 %v5525, %v5596
      %v5598 = vpop.f32.mrb[0].mxu0
      %5599 = vdwg.mxu0
      %v5600 = vrot.slane %v5453, 2
      %v5601 = vsel %vm404, %v5600, 0
      %5603 = vmatprep.subr.mxu0 0.0
      %5604 = vmatpush1.msra.mxu0 %v349
      %5605 = vmatprep.subr.mxu0 0.0
      %5606 = vmatpush1.msra.mxu0 %v350
      %5607 = vmatprep.subr.mxu0 0.0
      %5608 = vmatpush1.msra.mxu0 %v351
      %5609 = vmatprep.subr.mxu0 0.0
      %5610 = vmatpush1.msra.mxu0 %v352
      %5611 = vmatprep.subr.mxu0 0.0
      %5612 = vmatpush1.msra.mxu0 0.0
      %5613 = vmatprep.subr.mxu0 0.0
      %5614 = vmatpush1.msra.mxu0 0.0
      %5615 = vmatprep.subr.mxu0 0.0
      %5616 = vmatpush1.msra.mxu0 0.0
      %5617 = vmatprep.subr.mxu0 0.0
      %5618 = vmatpush1.msra.mxu0 0.0
      %5619 = vmatprep.subr.mxu0 0.0
      %5620 = vmatpush1.msra.mxu0 0.0
      %5621 = vmatprep.subr.mxu0 0.0
      %5622 = vmatpush1.msra.mxu0 0.0
      %5623 = vmatprep.subr.mxu0 0.0
      %5624 = vmatpush1.msra.mxu0 0.0
      %5625 = vmatprep.subr.mxu0 0.0
      %5626 = vmatpush1.msra.mxu0 0.0
      %5627 = vmatprep.subr.mxu0 0.0
      %5628 = vmatpush1.msra.mxu0 0.0
      %5629 = vmatprep.subr.mxu0 0.0
      %5630 = vmatpush1.msra.mxu0 0.0
      %5631 = vmatprep.subr.mxu0 0.0
      %5632 = vmatpush1.msra.mxu0 0.0
      %5633 = vmatprep.subr.mxu0 0.0
      %5634 = vmatpush1.msra.mxu0 0.0
      %5635 = vmatprep.subr.mxu0 0.0
      %5636 = vmatpush1.msra.mxu0 0.0
      %5637 = vmatprep.subr.mxu0 0.0
      %5638 = vmatpush1.msra.mxu0 0.0
      %5639 = vmatprep.subr.mxu0 0.0
      %5640 = vmatpush1.msra.mxu0 0.0
      %5641 = vmatprep.subr.mxu0 0.0
      %5642 = vmatpush1.msra.mxu0 0.0
      %5643 = vmatprep.subr.mxu0 0.0
      %5644 = vmatpush1.msra.mxu0 0.0
      %5645 = vmatprep.subr.mxu0 0.0
      %5646 = vmatpush1.msra.mxu0 0.0
      %5647 = vmatprep.subr.mxu0 0.0
      %5648 = vmatpush1.msra.mxu0 0.0
      %5649 = vmatprep.subr.mxu0 0.0
      %5650 = vmatpush1.msra.mxu0 0.0
      %5651 = vmatprep.subr.mxu0 0.0
      %5652 = vmatpush1.msra.mxu0 0.0
      %5653 = vmatprep.subr.mxu0 0.0
      %5654 = vmatpush1.msra.mxu0 0.0
      %5655 = vmatprep.subr.mxu0 0.0
      %5656 = vmatpush1.msra.mxu0 0.0
      %5657 = vmatprep.subr.mxu0 0.0
      %5658 = vmatpush1.msra.mxu0 0.0
      %5659 = vmatprep.subr.mxu0 0.0
      %5660 = vmatpush1.msra.mxu0 0.0
      %5661 = vmatprep.subr.mxu0 0.0
      %5662 = vmatpush1.msra.mxu0 0.0
      %5663 = vmatprep.subr.mxu0 0.0
      %5664 = vmatpush1.msra.mxu0 0.0
      %5665 = vmatprep.subr.mxu0 0.0
      %5666 = vmatpush1.msra.mxu0 0.0
      %5667 = vmatprep.mubr.f32.mxu0 0.0
      %5668 = vmatmul.mubr.f32.gmra.mrb[0].mxu0 %v5601
      %v5669 = vpop.f32.mrb[0].mxu0
      %v5670 = vadd.f32 0.0, %v5669
      %v5671 = vpop.f32.mrb[0].mxu0
      %5672 = vdwg.mxu0
      %v5673 = vadd.f32 %v5597, %v5670
      %v5674 = vrot.slane %v5453, 3
      %v5675 = vsel %vm404, %v5674, 0
      %5677 = vmatprep.subr.mxu0 0.0
      %5678 = vmatpush1.msra.mxu0 %v353
      %5679 = vmatprep.subr.mxu0 0.0
      %5680 = vmatpush1.msra.mxu0 %v354
      %5681 = vmatprep.subr.mxu0 0.0
      %5682 = vmatpush1.msra.mxu0 %v355
      %5683 = vmatprep.subr.mxu0 0.0
      %5684 = vmatpush1.msra.mxu0 %v356
      %5685 = vmatprep.subr.mxu0 0.0
      %5686 = vmatpush1.msra.mxu0 0.0
      %5687 = vmatprep.subr.mxu0 0.0
      %5688 = vmatpush1.msra.mxu0 0.0
      %5689 = vmatprep.subr.mxu0 0.0
      %5690 = vmatpush1.msra.mxu0 0.0
      %5691 = vmatprep.subr.mxu0 0.0
      %5692 = vmatpush1.msra.mxu0 0.0
      %5693 = vmatprep.subr.mxu0 0.0
      %5694 = vmatpush1.msra.mxu0 0.0
      %5695 = vmatprep.subr.mxu0 0.0
      %5696 = vmatpush1.msra.mxu0 0.0
      %5697 = vmatprep.subr.mxu0 0.0
      %5698 = vmatpush1.msra.mxu0 0.0
      %5699 = vmatprep.subr.mxu0 0.0
      %5700 = vmatpush1.msra.mxu0 0.0
      %5701 = vmatprep.subr.mxu0 0.0
      %5702 = vmatpush1.msra.mxu0 0.0
      %5703 = vmatprep.subr.mxu0 0.0
      %5704 = vmatpush1.msra.mxu0 0.0
      %5705 = vmatprep.subr.mxu0 0.0
      %5706 = vmatpush1.msra.mxu0 0.0
      %5707 = vmatprep.subr.mxu0 0.0
      %5708 = vmatpush1.msra.mxu0 0.0
      %5709 = vmatprep.subr.mxu0 0.0
      %5710 = vmatpush1.msra.mxu0 0.0
      %5711 = vmatprep.subr.mxu0 0.0
      %5712 = vmatpush1.msra.mxu0 0.0
      %5713 = vmatprep.subr.mxu0 0.0
      %5714 = vmatpush1.msra.mxu0 0.0
      %5715 = vmatprep.subr.mxu0 0.0
      %5716 = vmatpush1.msra.mxu0 0.0
      %5717 = vmatprep.subr.mxu0 0.0
      %5718 = vmatpush1.msra.mxu0 0.0
      %5719 = vmatprep.subr.mxu0 0.0
      %5720 = vmatpush1.msra.mxu0 0.0
      %5721 = vmatprep.subr.mxu0 0.0
      %5722 = vmatpush1.msra.mxu0 0.0
      %5723 = vmatprep.subr.mxu0 0.0
      %5724 = vmatpush1.msra.mxu0 0.0
      %5725 = vmatprep.subr.mxu0 0.0
      %5726 = vmatpush1.msra.mxu0 0.0
      %5727 = vmatprep.subr.mxu0 0.0
      %5728 = vmatpush1.msra.mxu0 0.0
      %5729 = vmatprep.subr.mxu0 0.0
      %5730 = vmatpush1.msra.mxu0 0.0
      %5731 = vmatprep.subr.mxu0 0.0
      %5732 = vmatpush1.msra.mxu0 0.0
      %5733 = vmatprep.subr.mxu0 0.0
      %5734 = vmatpush1.msra.mxu0 0.0
      %5735 = vmatprep.subr.mxu0 0.0
      %5736 = vmatpush1.msra.mxu0 0.0
      %5737 = vmatprep.subr.mxu0 0.0
      %5738 = vmatpush1.msra.mxu0 0.0
      %5739 = vmatprep.subr.mxu0 0.0
      %5740 = vmatpush1.msra.mxu0 0.0
      %5741 = vmatprep.mubr.f32.mxu0 0.0
      %5742 = vmatmul.mubr.f32.gmra.mrb[0].mxu0 %v5675
      %v5743 = vpop.f32.mrb[0].mxu0
      %v5744 = vadd.f32 0.0, %v5743
      %v5745 = vpop.f32.mrb[0].mxu0
      %5746 = vdwg.mxu0
      %v5747 = vadd.f32 %v5673, %v5744
      %v5748 = vrot.slane %v5453, 4
      %v5749 = vsel %vm404, %v5748, 0
      %5751 = vmatprep.subr.mxu0 0.0
      %5752 = vmatpush1.msra.mxu0 %v357
      %5753 = vmatprep.subr.mxu0 0.0
      %5754 = vmatpush1.msra.mxu0 %v358
      %5755 = vmatprep.subr.mxu0 0.0
      %5756 = vmatpush1.msra.mxu0 %v359
      %5757 = vmatprep.subr.mxu0 0.0
      %5758 = vmatpush1.msra.mxu0 %v360
      %5759 = vmatprep.subr.mxu0 0.0
      %5760 = vmatpush1.msra.mxu0 0.0
      %5761 = vmatprep.subr.mxu0 0.0
      %5762 = vmatpush1.msra.mxu0 0.0
      %5763 = vmatprep.subr.mxu0 0.0
      %5764 = vmatpush1.msra.mxu0 0.0
      %5765 = vmatprep.subr.mxu0 0.0
      %5766 = vmatpush1.msra.mxu0 0.0
      %5767 = vmatprep.subr.mxu0 0.0
      %5768 = vmatpush1.msra.mxu0 0.0
      %5769 = vmatprep.subr.mxu0 0.0
      %5770 = vmatpush1.msra.mxu0 0.0
      %5771 = vmatprep.subr.mxu0 0.0
      %5772 = vmatpush1.msra.mxu0 0.0
      %5773 = vmatprep.subr.mxu0 0.0
      %5774 = vmatpush1.msra.mxu0 0.0
      %5775 = vmatprep.subr.mxu0 0.0
      %5776 = vmatpush1.msra.mxu0 0.0
      %5777 = vmatprep.subr.mxu0 0.0
      %5778 = vmatpush1.msra.mxu0 0.0
      %5779 = vmatprep.subr.mxu0 0.0
      %5780 = vmatpush1.msra.mxu0 0.0
      %5781 = vmatprep.subr.mxu0 0.0
      %5782 = vmatpush1.msra.mxu0 0.0
      %5783 = vmatprep.subr.mxu0 0.0
      %5784 = vmatpush1.msra.mxu0 0.0
      %5785 = vmatprep.subr.mxu0 0.0
      %5786 = vmatpush1.msra.mxu0 0.0
      %5787 = vmatprep.subr.mxu0 0.0
      %5788 = vmatpush1.msra.mxu0 0.0
      %5789 = vmatprep.subr.mxu0 0.0
      %5790 = vmatpush1.msra.mxu0 0.0
      %5791 = vmatprep.subr.mxu0 0.0
      %5792 = vmatpush1.msra.mxu0 0.0
      %5793 = vmatprep.subr.mxu0 0.0
      %5794 = vmatpush1.msra.mxu0 0.0
      %5795 = vmatprep.subr.mxu0 0.0
      %5796 = vmatpush1.msra.mxu0 0.0
      %5797 = vmatprep.subr.mxu0 0.0
      %5798 = vmatpush1.msra.mxu0 0.0
      %5799 = vmatprep.subr.mxu0 0.0
      %5800 = vmatpush1.msra.mxu0 0.0
      %5801 = vmatprep.subr.mxu0 0.0
      %5802 = vmatpush1.msra.mxu0 0.0
      %5803 = vmatprep.subr.mxu0 0.0
      %5804 = vmatpush1.msra.mxu0 0.0
      %5805 = vmatprep.subr.mxu0 0.0
      %5806 = vmatpush1.msra.mxu0 0.0
      %5807 = vmatprep.subr.mxu0 0.0
      %5808 = vmatpush1.msra.mxu0 0.0
      %5809 = vmatprep.subr.mxu0 0.0
      %5810 = vmatpush1.msra.mxu0 0.0
      %5811 = vmatprep.subr.mxu0 0.0
      %5812 = vmatpush1.msra.mxu0 0.0
      %5813 = vmatprep.subr.mxu0 0.0
      %5814 = vmatpush1.msra.mxu0 0.0
      %5815 = vmatprep.mubr.f32.mxu0 0.0
      %5816 = vmatmul.mubr.f32.gmra.mrb[0].mxu0 %v5749
      %v5817 = vpop.f32.mrb[0].mxu0
      %v5818 = vadd.f32 0.0, %v5817
      %v5819 = vpop.f32.mrb[0].mxu0
      %5820 = vdwg.mxu0
      %v5821 = vadd.f32 %v5747, %v5818
      %v5822 = vadd.f32 %v5821, %v2951
      %v5823 = vmax.f32 %v5822, 0.0
      %v5825 = vrot.slane %v5823, 1
      %v5826 = vsel %vm404, %v5825, 0
      %5828 = vmatprep.subr.mxu0 0.0
      %5829 = vmatpush1.msra.mxu0 %v366
      %5830 = vmatprep.subr.mxu0 0.0
      %5831 = vmatpush1.msra.mxu0 %v367
      %5832 = vmatprep.subr.mxu0 0.0
      %5833 = vmatpush1.msra.mxu0 %v368
      %5834 = vmatprep.subr.mxu0 0.0
      %5835 = vmatpush1.msra.mxu0 %v369
      %5836 = vmatprep.subr.mxu0 0.0
      %5837 = vmatpush1.msra.mxu0 0.0
      %5838 = vmatprep.subr.mxu0 0.0
      %5839 = vmatpush1.msra.mxu0 0.0
      %5840 = vmatprep.subr.mxu0 0.0
      %5841 = vmatpush1.msra.mxu0 0.0
      %5842 = vmatprep.subr.mxu0 0.0
      %5843 = vmatpush1.msra.mxu0 0.0
      %5844 = vmatprep.subr.mxu0 0.0
      %5845 = vmatpush1.msra.mxu0 0.0
      %5846 = vmatprep.subr.mxu0 0.0
      %5847 = vmatpush1.msra.mxu0 0.0
      %5848 = vmatprep.subr.mxu0 0.0
      %5849 = vmatpush1.msra.mxu0 0.0
      %5850 = vmatprep.subr.mxu0 0.0
      %5851 = vmatpush1.msra.mxu0 0.0
      %5852 = vmatprep.subr.mxu0 0.0
      %5853 = vmatpush1.msra.mxu0 0.0
      %5854 = vmatprep.subr.mxu0 0.0
      %5855 = vmatpush1.msra.mxu0 0.0
      %5856 = vmatprep.subr.mxu0 0.0
      %5857 = vmatpush1.msra.mxu0 0.0
      %5858 = vmatprep.subr.mxu0 0.0
      %5859 = vmatpush1.msra.mxu0 0.0
      %5860 = vmatprep.subr.mxu0 0.0
      %5861 = vmatpush1.msra.mxu0 0.0
      %5862 = vmatprep.subr.mxu0 0.0
      %5863 = vmatpush1.msra.mxu0 0.0
      %5864 = vmatprep.subr.mxu0 0.0
      %5865 = vmatpush1.msra.mxu0 0.0
      %5866 = vmatprep.subr.mxu0 0.0
      %5867 = vmatpush1.msra.mxu0 0.0
      %5868 = vmatprep.subr.mxu0 0.0
      %5869 = vmatpush1.msra.mxu0 0.0
      %5870 = vmatprep.subr.mxu0 0.0
      %5871 = vmatpush1.msra.mxu0 0.0
      %5872 = vmatprep.subr.mxu0 0.0
      %5873 = vmatpush1.msra.mxu0 0.0
      %5874 = vmatprep.subr.mxu0 0.0
      %5875 = vmatpush1.msra.mxu0 0.0
      %5876 = vmatprep.subr.mxu0 0.0
      %5877 = vmatpush1.msra.mxu0 0.0
      %5878 = vmatprep.subr.mxu0 0.0
      %5879 = vmatpush1.msra.mxu0 0.0
      %5880 = vmatprep.subr.mxu0 0.0
      %5881 = vmatpush1.msra.mxu0 0.0
      %5882 = vmatprep.subr.mxu0 0.0
      %5883 = vmatpush1.msra.mxu0 0.0
      %5884 = vmatprep.subr.mxu0 0.0
      %5885 = vmatpush1.msra.mxu0 0.0
      %5886 = vmatprep.subr.mxu0 0.0
      %5887 = vmatpush1.msra.mxu0 0.0
      %5888 = vmatprep.subr.mxu0 0.0
      %5889 = vmatpush1.msra.mxu0 0.0
      %5890 = vmatprep.subr.mxu0 0.0
      %5891 = vmatpush1.msra.mxu0 0.0
      %5892 = vmatprep.mubr.f32.mxu0 0.0
      %5893 = vmatmul.mubr.f32.gmra.mrb[0].mxu0 %v5826
      %v5894 = vpop.f32.mrb[0].mxu0
      %v5895 = vadd.f32 0.0, %v5894
      %v5896 = vpop.f32.mrb[0].mxu0
      %5897 = vdwg.mxu0
      %v5898 = vsel %vm404, %v5823, 0
      %5900 = vmatprep.subr.mxu0 0.0
      %5901 = vmatpush1.msra.mxu0 %v362
      %5902 = vmatprep.subr.mxu0 0.0
      %5903 = vmatpush1.msra.mxu0 %v363
      %5904 = vmatprep.subr.mxu0 0.0
      %5905 = vmatpush1.msra.mxu0 %v364
      %5906 = vmatprep.subr.mxu0 0.0
      %5907 = vmatpush1.msra.mxu0 %v365
      %5908 = vmatprep.subr.mxu0 0.0
      %5909 = vmatpush1.msra.mxu0 0.0
      %5910 = vmatprep.subr.mxu0 0.0
      %5911 = vmatpush1.msra.mxu0 0.0
      %5912 = vmatprep.subr.mxu0 0.0
      %5913 = vmatpush1.msra.mxu0 0.0
      %5914 = vmatprep.subr.mxu0 0.0
      %5915 = vmatpush1.msra.mxu0 0.0
      %5916 = vmatprep.subr.mxu0 0.0
      %5917 = vmatpush1.msra.mxu0 0.0
      %5918 = vmatprep.subr.mxu0 0.0
      %5919 = vmatpush1.msra.mxu0 0.0
      %5920 = vmatprep.subr.mxu0 0.0
      %5921 = vmatpush1.msra.mxu0 0.0
      %5922 = vmatprep.subr.mxu0 0.0
      %5923 = vmatpush1.msra.mxu0 0.0
      %5924 = vmatprep.subr.mxu0 0.0
      %5925 = vmatpush1.msra.mxu0 0.0
      %5926 = vmatprep.subr.mxu0 0.0
      %5927 = vmatpush1.msra.mxu0 0.0
      %5928 = vmatprep.subr.mxu0 0.0
      %5929 = vmatpush1.msra.mxu0 0.0
      %5930 = vmatprep.subr.mxu0 0.0
      %5931 = vmatpush1.msra.mxu0 0.0
      %5932 = vmatprep.subr.mxu0 0.0
      %5933 = vmatpush1.msra.mxu0 0.0
      %5934 = vmatprep.subr.mxu0 0.0
      %5935 = vmatpush1.msra.mxu0 0.0
      %5936 = vmatprep.subr.mxu0 0.0
      %5937 = vmatpush1.msra.mxu0 0.0
      %5938 = vmatprep.subr.mxu0 0.0
      %5939 = vmatpush1.msra.mxu0 0.0
      %5940 = vmatprep.subr.mxu0 0.0
      %5941 = vmatpush1.msra.mxu0 0.0
      %5942 = vmatprep.subr.mxu0 0.0
      %5943 = vmatpush1.msra.mxu0 0.0
      %5944 = vmatprep.subr.mxu0 0.0
      %5945 = vmatpush1.msra.mxu0 0.0
      %5946 = vmatprep.subr.mxu0 0.0
      %5947 = vmatpush1.msra.mxu0 0.0
      %5948 = vmatprep.subr.mxu0 0.0
      %5949 = vmatpush1.msra.mxu0 0.0
      %5950 = vmatprep.subr.mxu0 0.0
      %5951 = vmatpush1.msra.mxu0 0.0
      %5952 = vmatprep.subr.mxu0 0.0
      %5953 = vmatpush1.msra.mxu0 0.0
      %5954 = vmatprep.subr.mxu0 0.0
      %5955 = vmatpush1.msra.mxu0 0.0
      %5956 = vmatprep.subr.mxu0 0.0
      %5957 = vmatpush1.msra.mxu0 0.0
      %5958 = vmatprep.subr.mxu0 0.0
      %5959 = vmatpush1.msra.mxu0 0.0
      %5960 = vmatprep.subr.mxu0 0.0
      %5961 = vmatpush1.msra.mxu0 0.0
      %5962 = vmatprep.subr.mxu0 0.0
      %5963 = vmatpush1.msra.mxu0 0.0
      %5964 = vmatprep.mubr.f32.mxu0 0.0
      %5965 = vmatmul.mubr.f32.gmra.mrb[0].mxu0 %v5898
      %v5966 = vpop.f32.mrb[0].mxu0
      %v5967 = vadd.f32 %v5895, %v5966
      %v5968 = vpop.f32.mrb[0].mxu0
      %5969 = vdwg.mxu0
      %v5970 = vrot.slane %v5823, 2
      %v5971 = vsel %vm404, %v5970, 0
      %5973 = vmatprep.subr.mxu0 0.0
      %5974 = vmatpush1.msra.mxu0 %v370
      %5975 = vmatprep.subr.mxu0 0.0
      %5976 = vmatpush1.msra.mxu0 %v371
      %5977 = vmatprep.subr.mxu0 0.0
      %5978 = vmatpush1.msra.mxu0 %v372
      %5979 = vmatprep.subr.mxu0 0.0
      %5980 = vmatpush1.msra.mxu0 %v373
      %5981 = vmatprep.subr.mxu0 0.0
      %5982 = vmatpush1.msra.mxu0 0.0
      %5983 = vmatprep.subr.mxu0 0.0
      %5984 = vmatpush1.msra.mxu0 0.0
      %5985 = vmatprep.subr.mxu0 0.0
      %5986 = vmatpush1.msra.mxu0 0.0
      %5987 = vmatprep.subr.mxu0 0.0
      %5988 = vmatpush1.msra.mxu0 0.0
      %5989 = vmatprep.subr.mxu0 0.0
      %5990 = vmatpush1.msra.mxu0 0.0
      %5991 = vmatprep.subr.mxu0 0.0
      %5992 = vmatpush1.msra.mxu0 0.0
      %5993 = vmatprep.subr.mxu0 0.0
      %5994 = vmatpush1.msra.mxu0 0.0
      %5995 = vmatprep.subr.mxu0 0.0
      %5996 = vmatpush1.msra.mxu0 0.0
      %5997 = vmatprep.subr.mxu0 0.0
      %5998 = vmatpush1.msra.mxu0 0.0
      %5999 = vmatprep.subr.mxu0 0.0
      %6000 = vmatpush1.msra.mxu0 0.0
      %6001 = vmatprep.subr.mxu0 0.0
      %6002 = vmatpush1.msra.mxu0 0.0
      %6003 = vmatprep.subr.mxu0 0.0
      %6004 = vmatpush1.msra.mxu0 0.0
      %6005 = vmatprep.subr.mxu0 0.0
      %6006 = vmatpush1.msra.mxu0 0.0
      %6007 = vmatprep.subr.mxu0 0.0
      %6008 = vmatpush1.msra.mxu0 0.0
      %6009 = vmatprep.subr.mxu0 0.0
      %6010 = vmatpush1.msra.mxu0 0.0
      %6011 = vmatprep.subr.mxu0 0.0
      %6012 = vmatpush1.msra.mxu0 0.0
      %6013 = vmatprep.subr.mxu0 0.0
      %6014 = vmatpush1.msra.mxu0 0.0
      %6015 = vmatprep.subr.mxu0 0.0
      %6016 = vmatpush1.msra.mxu0 0.0
      %6017 = vmatprep.subr.mxu0 0.0
      %6018 = vmatpush1.msra.mxu0 0.0
      %6019 = vmatprep.subr.mxu0 0.0
      %6020 = vmatpush1.msra.mxu0 0.0
      %6021 = vmatprep.subr.mxu0 0.0
      %6022 = vmatpush1.msra.mxu0 0.0
      %6023 = vmatprep.subr.mxu0 0.0
      %6024 = vmatpush1.msra.mxu0 0.0
      %6025 = vmatprep.subr.mxu0 0.0
      %6026 = vmatpush1.msra.mxu0 0.0
      %6027 = vmatprep.subr.mxu0 0.0
      %6028 = vmatpush1.msra.mxu0 0.0
      %6029 = vmatprep.subr.mxu0 0.0
      %6030 = vmatpush1.msra.mxu0 0.0
      %6031 = vmatprep.subr.mxu0 0.0
      %6032 = vmatpush1.msra.mxu0 0.0
      %6033 = vmatprep.subr.mxu0 0.0
      %6034 = vmatpush1.msra.mxu0 0.0
      %6035 = vmatprep.subr.mxu0 0.0
      %6036 = vmatpush1.msra.mxu0 0.0
      %6037 = vmatprep.mubr.f32.mxu0 0.0
      %6038 = vmatmul.mubr.f32.gmra.mrb[0].mxu0 %v5971
      %v6039 = vpop.f32.mrb[0].mxu0
      %v6040 = vadd.f32 0.0, %v6039
      %v6041 = vpop.f32.mrb[0].mxu0
      %6042 = vdwg.mxu0
      %v6043 = vadd.f32 %v5967, %v6040
      %v6044 = vrot.slane %v5823, 3
      %v6045 = vsel %vm404, %v6044, 0
      %6047 = vmatprep.subr.mxu0 0.0
      %6048 = vmatpush1.msra.mxu0 %v374
      %6049 = vmatprep.subr.mxu0 0.0
      %6050 = vmatpush1.msra.mxu0 %v375
      %6051 = vmatprep.subr.mxu0 0.0
      %6052 = vmatpush1.msra.mxu0 %v376
      %6053 = vmatprep.subr.mxu0 0.0
      %6054 = vmatpush1.msra.mxu0 %v377
      %6055 = vmatprep.subr.mxu0 0.0
      %6056 = vmatpush1.msra.mxu0 0.0
      %6057 = vmatprep.subr.mxu0 0.0
      %6058 = vmatpush1.msra.mxu0 0.0
      %6059 = vmatprep.subr.mxu0 0.0
      %6060 = vmatpush1.msra.mxu0 0.0
      %6061 = vmatprep.subr.mxu0 0.0
      %6062 = vmatpush1.msra.mxu0 0.0
      %6063 = vmatprep.subr.mxu0 0.0
      %6064 = vmatpush1.msra.mxu0 0.0
      %6065 = vmatprep.subr.mxu0 0.0
      %6066 = vmatpush1.msra.mxu0 0.0
      %6067 = vmatprep.subr.mxu0 0.0
      %6068 = vmatpush1.msra.mxu0 0.0
      %6069 = vmatprep.subr.mxu0 0.0
      %6070 = vmatpush1.msra.mxu0 0.0
      %6071 = vmatprep.subr.mxu0 0.0
      %6072 = vmatpush1.msra.mxu0 0.0
      %6073 = vmatprep.subr.mxu0 0.0
      %6074 = vmatpush1.msra.mxu0 0.0
      %6075 = vmatprep.subr.mxu0 0.0
      %6076 = vmatpush1.msra.mxu0 0.0
      %6077 = vmatprep.subr.mxu0 0.0
      %6078 = vmatpush1.msra.mxu0 0.0
      %6079 = vmatprep.subr.mxu0 0.0
      %6080 = vmatpush1.msra.mxu0 0.0
      %6081 = vmatprep.subr.mxu0 0.0
      %6082 = vmatpush1.msra.mxu0 0.0
      %6083 = vmatprep.subr.mxu0 0.0
      %6084 = vmatpush1.msra.mxu0 0.0
      %6085 = vmatprep.subr.mxu0 0.0
      %6086 = vmatpush1.msra.mxu0 0.0
      %6087 = vmatprep.subr.mxu0 0.0
      %6088 = vmatpush1.msra.mxu0 0.0
      %6089 = vmatprep.subr.mxu0 0.0
      %6090 = vmatpush1.msra.mxu0 0.0
      %6091 = vmatprep.subr.mxu0 0.0
      %6092 = vmatpush1.msra.mxu0 0.0
      %6093 = vmatprep.subr.mxu0 0.0
      %6094 = vmatpush1.msra.mxu0 0.0
      %6095 = vmatprep.subr.mxu0 0.0
      %6096 = vmatpush1.msra.mxu0 0.0
      %6097 = vmatprep.subr.mxu0 0.0
      %6098 = vmatpush1.msra.mxu0 0.0
      %6099 = vmatprep.subr.mxu0 0.0
      %6100 = vmatpush1.msra.mxu0 0.0
      %6101 = vmatprep.subr.mxu0 0.0
      %6102 = vmatpush1.msra.mxu0 0.0
      %6103 = vmatprep.subr.mxu0 0.0
      %6104 = vmatpush1.msra.mxu0 0.0
      %6105 = vmatprep.subr.mxu0 0.0
      %6106 = vmatpush1.msra.mxu0 0.0
      %6107 = vmatprep.subr.mxu0 0.0
      %6108 = vmatpush1.msra.mxu0 0.0
      %6109 = vmatprep.subr.mxu0 0.0
      %6110 = vmatpush1.msra.mxu0 0.0
      %6111 = vmatprep.mubr.f32.mxu0 0.0
      %6112 = vmatmul.mubr.f32.gmra.mrb[0].mxu0 %v6045
      %v6113 = vpop.f32.mrb[0].mxu0
      %v6114 = vadd.f32 0.0, %v6113
      %v6115 = vpop.f32.mrb[0].mxu0
      %6116 = vdwg.mxu0
      %v6117 = vadd.f32 %v6043, %v6114
      %v6118 = vadd.f32 %v6117, %v378
      %v6119 = vmax.f32 %v6118, 0.0
      %6120 = vmatprep.subr.mxu0 0.0
      %6121 = vmatpush1.msra.mxu0 %v379
      %6122 = vmatprep.subr.mxu0 0.0
      %6123 = vmatpush1.msra.mxu0 %v380
      %6124 = vmatprep.subr.mxu0 0.0
      %6125 = vmatpush1.msra.mxu0 %v381
      %6126 = vmatprep.subr.mxu0 0.0
      %6127 = vmatpush1.msra.mxu0 %v382
      %6128 = vmatprep.subr.mxu0 0.0
      %6129 = vmatpush1.msra.mxu0 %v383
      %6130 = vmatprep.subr.mxu0 0.0
      %6131 = vmatpush1.msra.mxu0 %v384
      %6132 = vmatprep.subr.mxu0 0.0
      %6133 = vmatpush1.msra.mxu0 %v385
      %6134 = vmatprep.subr.mxu0 0.0
      %6135 = vmatpush1.msra.mxu0 %v386
      %6136 = vmatprep.subr.mxu0 0.0
      %6137 = vmatpush1.msra.mxu0 %v387
      %6138 = vmatprep.subr.mxu0 0.0
      %6139 = vmatpush1.msra.mxu0 %v388
      %6140 = vmatprep.subr.mxu0 0.0
      %6141 = vmatpush1.msra.mxu0 %v389
      %6142 = vmatprep.subr.mxu0 0.0
      %6143 = vmatpush1.msra.mxu0 %v390
      %6144 = vmatprep.subr.mxu0 0.0
      %6145 = vmatpush1.msra.mxu0 %v391
      %6146 = vmatprep.subr.mxu0 0.0
      %6147 = vmatpush1.msra.mxu0 %v392
      %6148 = vmatprep.subr.mxu0 0.0
      %6149 = vmatpush1.msra.mxu0 %v393
      %6150 = vmatprep.subr.mxu0 0.0
      %6151 = vmatpush1.msra.mxu0 %v394
      %6152 = vmatprep.subr.mxu0 0.0
      %6153 = vmatpush1.msra.mxu0 0.0
      %6154 = vmatprep.subr.mxu0 0.0
      %6155 = vmatpush1.msra.mxu0 0.0
      %6156 = vmatprep.subr.mxu0 0.0
      %6157 = vmatpush1.msra.mxu0 0.0
      %6158 = vmatprep.subr.mxu0 0.0
      %6159 = vmatpush1.msra.mxu0 0.0
      %6160 = vmatprep.subr.mxu0 0.0
      %6161 = vmatpush1.msra.mxu0 0.0
      %6162 = vmatprep.subr.mxu0 0.0
      %6163 = vmatpush1.msra.mxu0 0.0
      %6164 = vmatprep.subr.mxu0 0.0
      %6165 = vmatpush1.msra.mxu0 0.0
      %6166 = vmatprep.subr.mxu0 0.0
      %6167 = vmatpush1.msra.mxu0 0.0
      %6168 = vmatprep.subr.mxu0 0.0
      %6169 = vmatpush1.msra.mxu0 0.0
      %6170 = vmatprep.subr.mxu0 0.0
      %6171 = vmatpush1.msra.mxu0 0.0
      %6172 = vmatprep.subr.mxu0 0.0
      %6173 = vmatpush1.msra.mxu0 0.0
      %6174 = vmatprep.subr.mxu0 0.0
      %6175 = vmatpush1.msra.mxu0 0.0
      %6176 = vmatprep.subr.mxu0 0.0
      %6177 = vmatpush1.msra.mxu0 0.0
      %6178 = vmatprep.subr.mxu0 0.0
      %6179 = vmatpush1.msra.mxu0 0.0
      %6180 = vmatprep.subr.mxu0 0.0
      %6181 = vmatpush1.msra.mxu0 0.0
      %6182 = vmatprep.subr.mxu0 0.0
      %6183 = vmatpush1.msra.mxu0 0.0
      %6184 = vmatprep.mubr.f32.mxu0 0.0
      %6185 = vmatmul.mubr.f32.gmra.mrb[0].mxu0 %v6119
      %v6186 = vpop.f32.mrb[0].mxu0
      %v6187 = vadd.f32 %v395, %v6186
      %v6188 = vpop.f32.mrb[0].mxu0
      %6189 = vdwg.mxu0
      %s6190 = scalar_lea.vmem %s225, 1
      %6191 = vst.msk [vmem:[%s6190] sm:$0x1] %vm3320, %v6187
      %s6192 = smul.u32 2, %s15
      %p6193 = scmp.lt.s32.totalorder %s6192, 3
      %s6194 = scalar_select %p6193, %s6192, 3
      %s6195 = scalar_lea.vmem %s4, %s6194
      // Predicated region
      $region37: #{dgcnn_forward.1} parent=35 // pred_check
        %p6196 = pneg %p127
      $region38: #{dgcnn_forward.1} parent=35 // pred_check_branch
        %6198 = sbr.rel (%p6196) target = $region40
      $region39: #{dgcnn_forward.1} parent=35 // pred_region
        %s6199 = smul.u32 2, %s15
      $region40: #{dgcnn_forward.1} parent=35 // pred_fallthru
        _
    $region36: #{dgcnn_forward.1} parent=5 // pred_fallthru
      _
    %p6200 = scmp.le.s32.totalorder 2, %s10
    // Predicated region
    $region41: #{dgcnn_forward.1} parent=5 // pred_check
      %p6201 = pneg %p6200
    $region42: #{dgcnn_forward.1} parent=5 // pred_check_branch
      %6203 = sbr.rel (%p6201) target = $region44
    $region43: #{dgcnn_forward.1} parent=5 // pred_region
      %s6204 = ssub.s32 %s10, 2
      // Predicated region
      $region45: #{dgcnn_forward.1} parent=43 // pred_check
        %p6205 = pneg %p133
      $region46: #{dgcnn_forward.1} parent=43 // pred_check_branch
        %6207 = sbr.rel (%p6205) target = $region48
      $region47: #{dgcnn_forward.1} parent=43 // pred_region
        %s6208 = smul.u32 2, %s16
        %p6209 = scmp.lt.s32.totalorder %s6208, 3
        %s6210 = scalar_select %p6209, %s6208, 3
        %s6211 = scalar_lea.vmem %s4, %s6210
      $region48: #{dgcnn_forward.1} parent=43 // pred_fallthru
        _
    $region44: #{dgcnn_forward.1} parent=5 // pred_fallthru
      _
  $region6: #{dgcnn_forward.1} parent=0 // loop_footer
    %s14 = sadd.s32 1, %s10
  $region7: #{dgcnn_forward.1} parent=0 // loop_footer_branch
    %9 = sbr.rel target = $region3
  $region8: #{dgcnn_forward.1} parent=0 // loop_exit
    _

</llo_original>
